<compile_context>
chip_gen: v7x
topology: tpu7x:2x2x1
jax: 0.10.0
libtpu: 0.0.40
codegen_flags: <defaults>
</compile_context>

<pallas_src>
import math
import numpy as np
import jax
import jax.numpy as jnp
from jax import lax
from jax.experimental import pallas as pl
from jax.experimental.pallas import tpu as pltpu

EFFECTIVE_SIZE = 7  # hard-coded to 7 inside Scale_SteerCNNs.__init__


# --------------------------------------------------------------------------
# Steerable basis construction (host-side numpy glue, mirrors the PyTorch code)
# --------------------------------------------------------------------------
def hermite_poly(X, n):
    coeff = [0] * n + [1]
    return np.polynomial.hermite_e.hermeval(X, coeff)


def onescale_grid_hermite_gaussian(size, scale, max_order=None):
    max_order = max_order or size - 1
    X = np.linspace(-(size // 2), size // 2, size)
    Y = np.linspace(-(size // 2), size // 2, size)
    order_y, order_x = np.indices([max_order + 1, max_order + 1])
    G = np.exp(-X ** 2 / (2 * scale ** 2)) / scale
    basis_x = np.stack([G * hermite_poly(X / scale, n) for n in order_x.ravel()])
    basis_y = np.stack([G * hermite_poly(Y / scale, n) for n in order_y.ravel()])
    # outer product per basis function: (F, size, 1) x (F, 1, size) -> (F, size, size)
    return basis_x[:, :, None] * basis_y[:, None, :]


def steerable_A(size, scales, effective_size):
    max_order = effective_size - 1
    max_scale = max(scales)
    basis_tensors = []
    for scale in scales:
        size_before_pad = int(size * scale / max_scale) // 2 * 2 + 1
        basis = onescale_grid_hermite_gaussian(size_before_pad, scale, max_order)
        pad = (size - size_before_pad) // 2
        basis = np.pad(basis, ((0, 0), (pad, pad), (pad, pad)))
        basis_tensors.append(basis)
    return np.stack(basis_tensors, 1)  # (F, S, k, k)


def normalize_basis_by_min_scale(basis):
    norm = np.sqrt((basis ** 2).sum(axis=(2, 3), keepdims=True))[:, [0]]
    return basis / norm


# --------------------------------------------------------------------------
# Pallas kernel: per-(scale, batch) 2D conv as a single im2col matmul
# --------------------------------------------------------------------------
def _ses_conv_kernel_factory(Ho, Wo, K, Cin, Cout, relu):
    HW = Ho * Wo

    def kernel(x_ref, w_ref, b_ref, o_ref, patch_ref):
        # x_ref    : (1, 1, Hp, Wp, Cin)    padded input for one (batch, scale)
        # w_ref    : (1, Cout, K*K*Cin)     per-scale filter, (dy,dx,ci)-ordered
        # b_ref    : (Cout, 1)
        # o_ref    : (1, 1, Cout, Ho*Wo)    lane-dense output tile
        # patch_ref: VMEM scratch (Ho*Wo, K*K*Cin) im2col buffer

        # ---- build the im2col patch: K*K static slab copies (store path), no matmuls
        for dy in range(K):
            for dx in range(K):
                t = dy * K + dx
                slab = x_ref[0, 0, dy:dy + Ho, dx:dx + Wo, :]        # (Ho, Wo, Cin)
                # (Ho, Wo, Cin) -> (Ho*Wo, Cin) is a layout no-op (Wo is a sublane
                # multiple); the write is a static lane-slice into the patch.
                patch_ref[:, t * Cin:(t + 1) * Cin] = jnp.reshape(slab, (HW, Cin))

        # ---- one deep matmul on the MXU, producing a lane-dense (Cout, Ho*Wo) tile
        # (A @ B^T form: contract the last dims of both operands, as in q @ k^T)
        acc = lax.dot_general(
            w_ref[0], patch_ref[...],
            dimension_numbers=(((1,), (1,)), ((), ())),
            preferred_element_type=jnp.float32)                      # (Cout, Ho*Wo)

        acc = acc + b_ref[...]                                       # bias once per tile
        if relu:
            acc = jnp.maximum(acc, 0.0)
        o_ref[0, 0] = acc.astype(o_ref.dtype)                        # single static store

    return kernel


def ses_scale_conv(x, w_t, bias, K, padding, relu):
    """Per-scale conv2d.

    x    : [B, S_x, H, W, Cin] channels-last activations.
    w_t  : [S, Cout, K*K*Cin]  per-scale filters, contraction axis ordered (dy, dx, ci).
    bias : [Cout]

    If S_x == 1 and S > 1 (first Z2->H layer), the single input scale is shared
    across all S filter scales via the index_map (no broadcast materialized in HBM).

    Returns [B, S, Cout, Ho*Wo] (channels-first, spatially flattened, lane-dense).
    """
    B, S_x, H, W, Cin = x.shape
    S, Cout, KKC = w_t.shape
    assert KKC == K * K * Cin
    share_input = (S_x == 1 and S > 1)
    assert share_input or S_x == S

    xp = jnp.pad(x, ((0, 0), (0, 0), (padding, padding), (padding, padding), (0, 0)))
    Hp, Wp = H + 2 * padding, W + 2 * padding
    Ho, Wo = Hp - K + 1, Wp - K + 1

    kernel = _ses_conv_kernel_factory(Ho, Wo, K, Cin, Cout, relu)

    if share_input:
        x_map = lambda s, b: (b, 0, 0, 0, 0)   # all scales read the same input block
    else:
        x_map = lambda s, b: (b, s, 0, 0, 0)

    return pl.pallas_call(
        kernel,
        out_shape=jax.ShapeDtypeStruct((B, S, Cout, Ho * Wo), jnp.float32),
        grid=(S, B),  # S outer, B inner: per-scale filter stays VMEM-resident over B
        in_specs=[
            pl.BlockSpec((1, 1, Hp, Wp, Cin), x_map),
            pl.BlockSpec((1, Cout, KKC), lambda s, b: (s, 0, 0)),
            pl.BlockSpec((Cout, 1), lambda s, b: (0, 0)),
        ],
        out_specs=pl.BlockSpec((1, 1, Cout, Ho * Wo), lambda s, b: (b, s, 0, 0)),
        scratch_shapes=[pltpu.VMEM((Ho * Wo, KKC), jnp.float32)],
        compiler_params=pltpu.CompilerParams(
            dimension_semantics=("parallel", "parallel")),
    )(xp, w_t, jnp.reshape(bias, (Cout, 1)))


# --------------------------------------------------------------------------
# Parameter construction (deterministic, mirrors module __init__ shapes)
# --------------------------------------------------------------------------
def _make_layer(key, cin, cout, kernel_size, layer_scales, relu):
    basis = normalize_basis_by_min_scale(
        steerable_A(kernel_size, layer_scales, EFFECTIVE_SIZE)).astype(np.float32)
    num_funcs = basis.shape[0]                      # = EFFECTIVE_SIZE ** 2 = 49
    S = len(layer_scales)
    K = kernel_size
    fan_in = cin * num_funcs
    bound = 1.0 / math.sqrt(fan_in)                 # kaiming_uniform(a=sqrt(5))
    w = jax.random.uniform(key, (cout, cin, num_funcs), jnp.float32, -bound, bound)
    # Per-scale conv filter: F[s, dy, dx, ci, co] = sum_f w[co, ci, f] * basis[f, s, dy, dx]
    # pre-flattened to the kernel's contraction layout [S, Cout, (dy, dx, ci)].
    w_t = jnp.einsum('oif,fskl->sokli', w, jnp.asarray(basis)).reshape(S, cout, K * K * cin)
    bias = jnp.zeros((cout,), jnp.float32)
    return dict(W=w_t, b=bias, relu=relu)


def build_scale_steer_cnn_params(key, in_channels, out_channels, hidden_dim,
                                 kernel_size, num_layers, scales):
    scales = [round(s, 3) for s in scales]
    keys = jax.random.split(key, num_layers)
    layers = [_make_layer(keys[0], in_channels, hidden_dim, kernel_size, scales, True)]
    for i in range(num_layers - 2):
        layers.append(_make_layer(keys[1 + i], hidden_dim, hidden_dim,
                                  kernel_size, scales, True))
    # final SESConv_H_H uses scales=[1.0] and final_layer=True (no ReLU)
    layers.append(_make_layer(keys[-1], hidden_dim, out_channels,
                              kernel_size, [1.0], False))
    return layers


# --------------------------------------------------------------------------
# Forward pass (== Scale_SteerCNNs.forward)
# --------------------------------------------------------------------------
def scale_steer_cnn_forward(x_nchw, layers, kernel_size):
    K = kernel_size
    padding = K // 2
    B, C, H, W = x_nchw.shape

    # channels-last with a size-1 scale dim; layer 0 shares this single block
    # across all scales via its index_map (no S-fold broadcast in HBM).
    x = jnp.transpose(x_nchw, (0, 2, 3, 1))[:, None]          # [B, 1, H, W, C]

    n = len(layers)
    Ho, Wo = H + 2 * padding - K + 1, W + 2 * padding - K + 1  # == H, W for odd K
    for li, lyr in enumerate(layers):
        last = (li == n - 1)
        if last:
            # Final SESConv_H_H with scales=[1.0] consumes only input scale 0.
            x = x[:, 0:1]
        y = ses_scale_conv(x, lyr['W'], lyr['b'], K, padding, lyr['relu'])
        # y: [B, S, Cout, Ho*Wo]
        S, Cout = y.shape[1], y.shape[2]
        if last:
            # [B, 1, Cout, H*W] -> NCHW (this is also the torch .squeeze(2))
            return jnp.reshape(y, (B, Cout, Ho, Wo))
        # back to channels-last for the next layer's im2col (layout plumbing in XLA)
        x = jnp.reshape(jnp.transpose(y, (0, 1, 3, 2)), (B, S, Ho, Wo, Cout))


# --------------------------------------------------------------------------
if __name__ == "__main__":
    B, Cin, H, W = 2, 4, 16, 16
    hidden_dim, Cout = 16, 4
    kernel_size, num_layers = 7, 3
    scales = [1.0, 1.41]

    key = jax.random.PRNGKey(0)
    kx, kp = jax.random.split(key)
    x = jax.random.normal(kx, (B, Cin, H, W), jnp.float32)

    layers = build_scale_steer_cnn_params(kp, Cin, Cout, hidden_dim,
                                          kernel_size, num_layers, scales)
    y = scale_steer_cnn_forward(x, layers, kernel_size)
    y = jax.block_until_ready(y)

    assert y.shape == (B, Cout, H, W), y.shape
    assert bool(jnp.all(jnp.isfinite(y)))
    print("KERNEL_OK")
</pallas_src>

<mosaic_0001>
module attributes {stable_mosaic.version = 11 : i64} {
  func.func @kernel(%arg0: i32, %arg1: i32, %arg2: memref<1x1x22x22x4xf32, #tpu.memory_space<vmem>>, %arg3: memref<1x16x196xf32, #tpu.memory_space<vmem>>, %arg4: memref<16x1xf32, #tpu.memory_space<vmem>>, %arg5: memref<1x1x16x256xf32, #tpu.memory_space<vmem>>, %arg6: memref<256x196xf32, #tpu.memory_space<vmem>>) attributes {dimension_semantics = [#tpu.dimension_semantics<parallel>, #tpu.dimension_semantics<parallel>], iteration_bounds = array<i64: 2, 2>, scalar_prefetch = 0 : i64, scratch_operands = 1 : i64, tpu.core_type = #tpu.core_type<tc>, window_params = [{transform_indices = @transform_0, window_bounds = array<i64: 1, 1, 22, 22, 4>}, {transform_indices = @transform_1, window_bounds = array<i64: 1, 16, 196>}, {pipeline_mode = #tpu.pipeline_mode<synchronous>, transform_indices = @transform_2, window_bounds = array<i64: 16, 1>}, {transform_indices = @transform_3, window_bounds = array<i64: 1, 1, 16, 256>}]} {
    %c0 = arith.constant 0 : index
    %c0_0 = arith.constant 0 : index
    %c0_1 = arith.constant 0 : index
    %c0_2 = arith.constant 0 : index
    %c0_3 = arith.constant 0 : index
    %0 = vector.load %arg2[%c0, %c0_0, %c0_1, %c0_2, %c0_3] : memref<1x1x22x22x4xf32, #tpu.memory_space<vmem>>, vector<1x1x16x16x4xf32>
    %1 = vector.shape_cast %0 : vector<1x1x16x16x4xf32> to vector<16x16x4xf32>
    %2 = vector.shape_cast %1 : vector<16x16x4xf32> to vector<256x4xf32>
    %c0_4 = arith.constant 0 : index
    %c0_5 = arith.constant 0 : index
    %3 = vector.load %arg6[%c0_4, %c0_5] : memref<256x196xf32, #tpu.memory_space<vmem>>, vector<256x4xf32>
    tpu.vector_store %arg6[%c0_4, %c0_5], %2 {strides = array<i32>} : memref<256x196xf32, #tpu.memory_space<vmem>>, vector<256x4xf32>,
    %c0_6 = arith.constant 0 : index
    %c0_7 = arith.constant 0 : index
    %c0_8 = arith.constant 0 : index
    %c1 = arith.constant 1 : index
    %c0_9 = arith.constant 0 : index
    %4 = vector.load %arg2[%c0_6, %c0_7, %c0_8, %c1, %c0_9] : memref<1x1x22x22x4xf32, #tpu.memory_space<vmem>>, vector<1x1x16x16x4xf32>
    %5 = vector.shape_cast %4 : vector<1x1x16x16x4xf32> to vector<16x16x4xf32>
    %6 = vector.shape_cast %5 : vector<16x16x4xf32> to vector<256x4xf32>
    %c0_10 = arith.constant 0 : index
    %c4 = arith.constant 4 : index
    %7 = vector.load %arg6[%c0_10, %c4] : memref<256x196xf32, #tpu.memory_space<vmem>>, vector<256x4xf32>
    tpu.vector_store %arg6[%c0_10, %c4], %6 {strides = array<i32>} : memref<256x196xf32, #tpu.memory_space<vmem>>, vector<256x4xf32>,
    %c0_11 = arith.constant 0 : index
    %c0_12 = arith.constant 0 : index
    %c0_13 = arith.constant 0 : index
    %c2 = arith.constant 2 : index
    %c0_14 = arith.constant 0 : index
    %8 = vector.load %arg2[%c0_11, %c0_12, %c0_13, %c2, %c0_14] : memref<1x1x22x22x4xf32, #tpu.memory_space<vmem>>, vector<1x1x16x16x4xf32>
    %9 = vector.shape_cast %8 : vector<1x1x16x16x4xf32> to vector<16x16x4xf32>
    %10 = vector.shape_cast %9 : vector<16x16x4xf32> to vector<256x4xf32>
    %c0_15 = arith.constant 0 : index
    %c8 = arith.constant 8 : index
    %11 = vector.load %arg6[%c0_15, %c8] : memref<256x196xf32, #tpu.memory_space<vmem>>, vector<256x4xf32>
    tpu.vector_store %arg6[%c0_15, %c8], %10 {strides = array<i32>} : memref<256x196xf32, #tpu.memory_space<vmem>>, vector<256x4xf32>,
    %c0_16 = arith.constant 0 : index
    %c0_17 = arith.constant 0 : index
    %c0_18 = arith.constant 0 : index
    %c3 = arith.constant 3 : index
    %c0_19 = arith.constant 0 : index
    %12 = vector.load %arg2[%c0_16, %c0_17, %c0_18, %c3, %c0_19] : memref<1x1x22x22x4xf32, #tpu.memory_space<vmem>>, vector<1x1x16x16x4xf32>
    %13 = vector.shape_cast %12 : vector<1x1x16x16x4xf32> to vector<16x16x4xf32>
    %14 = vector.shape_cast %13 : vector<16x16x4xf32> to vector<256x4xf32>
    %c0_20 = arith.constant 0 : index
    %c12 = arith.constant 12 : index
    %15 = vector.load %arg6[%c0_20, %c12] : memref<256x196xf32, #tpu.memory_space<vmem>>, vector<256x4xf32>
    tpu.vector_store %arg6[%c0_20, %c12], %14 {strides = array<i32>} : memref<256x196xf32, #tpu.memory_space<vmem>>, vector<256x4xf32>,
    %c0_21 = arith.constant 0 : index
    %c0_22 = arith.constant 0 : index
    %c0_23 = arith.constant 0 : index
    %c4_24 = arith.constant 4 : index
    %c0_25 = arith.constant 0 : index
    %16 = vector.load %arg2[%c0_21, %c0_22, %c0_23, %c4_24, %c0_25] : memref<1x1x22x22x4xf32, #tpu.memory_space<vmem>>, vector<1x1x16x16x4xf32>
    %17 = vector.shape_cast %16 : vector<1x1x16x16x4xf32> to vector<16x16x4xf32>
    %18 = vector.shape_cast %17 : vector<16x16x4xf32> to vector<256x4xf32>
    %c0_26 = arith.constant 0 : index
    %c16 = arith.constant 16 : index
    %19 = vector.load %arg6[%c0_26, %c16] : memref<256x196xf32, #tpu.memory_space<vmem>>, vector<256x4xf32>
    tpu.vector_store %arg6[%c0_26, %c16], %18 {strides = array<i32>} : memref<256x196xf32, #tpu.memory_space<vmem>>, vector<256x4xf32>,
    %c0_27 = arith.constant 0 : index
    %c0_28 = arith.constant 0 : index
    %c0_29 = arith.constant 0 : index
    %c5 = arith.constant 5 : index
    %c0_30 = arith.constant 0 : index
    %20 = vector.load %arg2[%c0_27, %c0_28, %c0_29, %c5, %c0_30] : memref<1x1x22x22x4xf32, #tpu.memory_space<vmem>>, vector<1x1x16x16x4xf32>
    %21 = vector.shape_cast %20 : vector<1x1x16x16x4xf32> to vector<16x16x4xf32>
    %22 = vector.shape_cast %21 : vector<16x16x4xf32> to vector<256x4xf32>
    %c0_31 = arith.constant 0 : index
    %c20 = arith.constant 20 : index
    %23 = vector.load %arg6[%c0_31, %c20] : memref<256x196xf32, #tpu.memory_space<vmem>>, vector<256x4xf32>
    tpu.vector_store %arg6[%c0_31, %c20], %22 {strides = array<i32>} : memref<256x196xf32, #tpu.memory_space<vmem>>, vector<256x4xf32>,
    %c0_32 = arith.constant 0 : index
    %c0_33 = arith.constant 0 : index
    %c0_34 = arith.constant 0 : index
    %c6 = arith.constant 6 : index
    %c0_35 = arith.constant 0 : index
    %24 = vector.load %arg2[%c0_32, %c0_33, %c0_34, %c6, %c0_35] : memref<1x1x22x22x4xf32, #tpu.memory_space<vmem>>, vector<1x1x16x16x4xf32>
    %25 = vector.shape_cast %24 : vector<1x1x16x16x4xf32> to vector<16x16x4xf32>
    %26 = vector.shape_cast %25 : vector<16x16x4xf32> to vector<256x4xf32>
    %c0_36 = arith.constant 0 : index
    %c24 = arith.constant 24 : index
    %27 = vector.load %arg6[%c0_36, %c24] : memref<256x196xf32, #tpu.memory_space<vmem>>, vector<256x4xf32>
    tpu.vector_store %arg6[%c0_36, %c24], %26 {strides = array<i32>} : memref<256x196xf32, #tpu.memory_space<vmem>>, vector<256x4xf32>,
    %c0_37 = arith.constant 0 : index
    %c0_38 = arith.constant 0 : index
    %c1_39 = arith.constant 1 : index
    %c0_40 = arith.constant 0 : index
    %c0_41 = arith.constant 0 : index
    %28 = vector.load %arg2[%c0_37, %c0_38, %c1_39, %c0_40, %c0_41] : memref<1x1x22x22x4xf32, #tpu.memory_space<vmem>>, vector<1x1x16x16x4xf32>
    %29 = vector.shape_cast %28 : vector<1x1x16x16x4xf32> to vector<16x16x4xf32>
    %30 = vector.shape_cast %29 : vector<16x16x4xf32> to vector<256x4xf32>
    %c0_42 = arith.constant 0 : index
    %c28 = arith.constant 28 : index
    %31 = vector.load %arg6[%c0_42, %c28] : memref<256x196xf32, #tpu.memory_space<vmem>>, vector<256x4xf32>
    tpu.vector_store %arg6[%c0_42, %c28], %30 {strides = array<i32>} : memref<256x196xf32, #tpu.memory_space<vmem>>, vector<256x4xf32>,
    %c0_43 = arith.constant 0 : index
    %c0_44 = arith.constant 0 : index
    %c1_45 = arith.constant 1 : index
    %c1_46 = arith.constant 1 : index
    %c0_47 = arith.constant 0 : index
    %32 = vector.load %arg2[%c0_43, %c0_44, %c1_45, %c1_46, %c0_47] : memref<1x1x22x22x4xf32, #tpu.memory_space<vmem>>, vector<1x1x16x16x4xf32>
    %33 = vector.shape_cast %32 : vector<1x1x16x16x4xf32> to vector<16x16x4xf32>
    %34 = vector.shape_cast %33 : vector<16x16x4xf32> to vector<256x4xf32>
    %c0_48 = arith.constant 0 : index
    %c32 = arith.constant 32 : index
    %35 = vector.load %arg6[%c0_48, %c32] : memref<256x196xf32, #tpu.memory_space<vmem>>, vector<256x4xf32>
    tpu.vector_store %arg6[%c0_48, %c32], %34 {strides = array<i32>} : memref<256x196xf32, #tpu.memory_space<vmem>>, vector<256x4xf32>,
    %c0_49 = arith.constant 0 : index
    %c0_50 = arith.constant 0 : index
    %c1_51 = arith.constant 1 : index
    %c2_52 = arith.constant 2 : index
    %c0_53 = arith.constant 0 : index
    %36 = vector.load %arg2[%c0_49, %c0_50, %c1_51, %c2_52, %c0_53] : memref<1x1x22x22x4xf32, #tpu.memory_space<vmem>>, vector<1x1x16x16x4xf32>
    %37 = vector.shape_cast %36 : vector<1x1x16x16x4xf32> to vector<16x16x4xf32>
    %38 = vector.shape_cast %37 : vector<16x16x4xf32> to vector<256x4xf32>
    %c0_54 = arith.constant 0 : index
    %c36 = arith.constant 36 : index
    %39 = vector.load %arg6[%c0_54, %c36] : memref<256x196xf32, #tpu.memory_space<vmem>>, vector<256x4xf32>
    tpu.vector_store %arg6[%c0_54, %c36], %38 {strides = array<i32>} : memref<256x196xf32, #tpu.memory_space<vmem>>, vector<256x4xf32>,
    %c0_55 = arith.constant 0 : index
    %c0_56 = arith.constant 0 : index
    %c1_57 = arith.constant 1 : index
    %c3_58 = arith.constant 3 : index
    %c0_59 = arith.constant 0 : index
    %40 = vector.load %arg2[%c0_55, %c0_56, %c1_57, %c3_58, %c0_59] : memref<1x1x22x22x4xf32, #tpu.memory_space<vmem>>, vector<1x1x16x16x4xf32>
    %41 = vector.shape_cast %40 : vector<1x1x16x16x4xf32> to vector<16x16x4xf32>
    %42 = vector.shape_cast %41 : vector<16x16x4xf32> to vector<256x4xf32>
    %c0_60 = arith.constant 0 : index
    %c40 = arith.constant 40 : index
    %43 = vector.load %arg6[%c0_60, %c40] : memref<256x196xf32, #tpu.memory_space<vmem>>, vector<256x4xf32>
    tpu.vector_store %arg6[%c0_60, %c40], %42 {strides = array<i32>} : memref<256x196xf32, #tpu.memory_space<vmem>>, vector<256x4xf32>,
    %c0_61 = arith.constant 0 : index
    %c0_62 = arith.constant 0 : index
    %c1_63 = arith.constant 1 : index
    %c4_64 = arith.constant 4 : index
    %c0_65 = arith.constant 0 : index
    %44 = vector.load %arg2[%c0_61, %c0_62, %c1_63, %c4_64, %c0_65] : memref<1x1x22x22x4xf32, #tpu.memory_space<vmem>>, vector<1x1x16x16x4xf32>
    %45 = vector.shape_cast %44 : vector<1x1x16x16x4xf32> to vector<16x16x4xf32>
    %46 = vector.shape_cast %45 : vector<16x16x4xf32> to vector<256x4xf32>
    %c0_66 = arith.constant 0 : index
    %c44 = arith.constant 44 : index
    %47 = vector.load %arg6[%c0_66, %c44] : memref<256x196xf32, #tpu.memory_space<vmem>>, vector<256x4xf32>
    tpu.vector_store %arg6[%c0_66, %c44], %46 {strides = array<i32>} : memref<256x196xf32, #tpu.memory_space<vmem>>, vector<256x4xf32>,
    %c0_67 = arith.constant 0 : index
    %c0_68 = arith.constant 0 : index
    %c1_69 = arith.constant 1 : index
    %c5_70 = arith.constant 5 : index
    %c0_71 = arith.constant 0 : index
    %48 = vector.load %arg2[%c0_67, %c0_68, %c1_69, %c5_70, %c0_71] : memref<1x1x22x22x4xf32, #tpu.memory_space<vmem>>, vector<1x1x16x16x4xf32>
    %49 = vector.shape_cast %48 : vector<1x1x16x16x4xf32> to vector<16x16x4xf32>
    %50 = vector.shape_cast %49 : vector<16x16x4xf32> to vector<256x4xf32>
    %c0_72 = arith.constant 0 : index
    %c48 = arith.constant 48 : index
    %51 = vector.load %arg6[%c0_72, %c48] : memref<256x196xf32, #tpu.memory_space<vmem>>, vector<256x4xf32>
    tpu.vector_store %arg6[%c0_72, %c48], %50 {strides = array<i32>} : memref<256x196xf32, #tpu.memory_space<vmem>>, vector<256x4xf32>,
    %c0_73 = arith.constant 0 : index
    %c0_74 = arith.constant 0 : index
    %c1_75 = arith.constant 1 : index
    %c6_76 = arith.constant 6 : index
    %c0_77 = arith.constant 0 : index
    %52 = vector.load %arg2[%c0_73, %c0_74, %c1_75, %c6_76, %c0_77] : memref<1x1x22x22x4xf32, #tpu.memory_space<vmem>>, vector<1x1x16x16x4xf32>
    %53 = vector.shape_cast %52 : vector<1x1x16x16x4xf32> to vector<16x16x4xf32>
    %54 = vector.shape_cast %53 : vector<16x16x4xf32> to vector<256x4xf32>
    %c0_78 = arith.constant 0 : index
    %c52 = arith.constant 52 : index
    %55 = vector.load %arg6[%c0_78, %c52] : memref<256x196xf32, #tpu.memory_space<vmem>>, vector<256x4xf32>
    tpu.vector_store %arg6[%c0_78, %c52], %54 {strides = array<i32>} : memref<256x196xf32, #tpu.memory_space<vmem>>, vector<256x4xf32>,
    %c0_79 = arith.constant 0 : index
    %c0_80 = arith.constant 0 : index
    %c2_81 = arith.constant 2 : index
    %c0_82 = arith.constant 0 : index
    %c0_83 = arith.constant 0 : index
    %56 = vector.load %arg2[%c0_79, %c0_80, %c2_81, %c0_82, %c0_83] : memref<1x1x22x22x4xf32, #tpu.memory_space<vmem>>, vector<1x1x16x16x4xf32>
    %57 = vector.shape_cast %56 : vector<1x1x16x16x4xf32> to vector<16x16x4xf32>
    %58 = vector.shape_cast %57 : vector<16x16x4xf32> to vector<256x4xf32>
    %c0_84 = arith.constant 0 : index
    %c56 = arith.constant 56 : index
    %59 = vector.load %arg6[%c0_84, %c56] : memref<256x196xf32, #tpu.memory_space<vmem>>, vector<256x4xf32>
    tpu.vector_store %arg6[%c0_84, %c56], %58 {strides = array<i32>} : memref<256x196xf32, #tpu.memory_space<vmem>>, vector<256x4xf32>,
    %c0_85 = arith.constant 0 : index
    %c0_86 = arith.constant 0 : index
    %c2_87 = arith.constant 2 : index
    %c1_88 = arith.constant 1 : index
    %c0_89 = arith.constant 0 : index
    %60 = vector.load %arg2[%c0_85, %c0_86, %c2_87, %c1_88, %c0_89] : memref<1x1x22x22x4xf32, #tpu.memory_space<vmem>>, vector<1x1x16x16x4xf32>
    %61 = vector.shape_cast %60 : vector<1x1x16x16x4xf32> to vector<16x16x4xf32>
    %62 = vector.shape_cast %61 : vector<16x16x4xf32> to vector<256x4xf32>
    %c0_90 = arith.constant 0 : index
    %c60 = arith.constant 60 : index
    %63 = vector.load %arg6[%c0_90, %c60] : memref<256x196xf32, #tpu.memory_space<vmem>>, vector<256x4xf32>
    tpu.vector_store %arg6[%c0_90, %c60], %62 {strides = array<i32>} : memref<256x196xf32, #tpu.memory_space<vmem>>, vector<256x4xf32>,
    %c0_91 = arith.constant 0 : index
    %c0_92 = arith.constant 0 : index
    %c2_93 = arith.constant 2 : index
    %c2_94 = arith.constant 2 : index
    %c0_95 = arith.constant 0 : index
    %64 = vector.load %arg2[%c0_91, %c0_92, %c2_93, %c2_94, %c0_95] : memref<1x1x22x22x4xf32, #tpu.memory_space<vmem>>, vector<1x1x16x16x4xf32>
    %65 = vector.shape_cast %64 : vector<1x1x16x16x4xf32> to vector<16x16x4xf32>
    %66 = vector.shape_cast %65 : vector<16x16x4xf32> to vector<256x4xf32>
    %c0_96 = arith.constant 0 : index
    %c64 = arith.constant 64 : index
    %67 = vector.load %arg6[%c0_96, %c64] : memref<256x196xf32, #tpu.memory_space<vmem>>, vector<256x4xf32>
    tpu.vector_store %arg6[%c0_96, %c64], %66 {strides = array<i32>} : memref<256x196xf32, #tpu.memory_space<vmem>>, vector<256x4xf32>,
    %c0_97 = arith.constant 0 : index
    %c0_98 = arith.constant 0 : index
    %c2_99 = arith.constant 2 : index
    %c3_100 = arith.constant 3 : index
    %c0_101 = arith.constant 0 : index
    %68 = vector.load %arg2[%c0_97, %c0_98, %c2_99, %c3_100, %c0_101] : memref<1x1x22x22x4xf32, #tpu.memory_space<vmem>>, vector<1x1x16x16x4xf32>
    %69 = vector.shape_cast %68 : vector<1x1x16x16x4xf32> to vector<16x16x4xf32>
    %70 = vector.shape_cast %69 : vector<16x16x4xf32> to vector<256x4xf32>
    %c0_102 = arith.constant 0 : index
    %c68 = arith.constant 68 : index
    %71 = vector.load %arg6[%c0_102, %c68] : memref<256x196xf32, #tpu.memory_space<vmem>>, vector<256x4xf32>
    tpu.vector_store %arg6[%c0_102, %c68], %70 {strides = array<i32>} : memref<256x196xf32, #tpu.memory_space<vmem>>, vector<256x4xf32>,
    %c0_103 = arith.constant 0 : index
    %c0_104 = arith.constant 0 : index
    %c2_105 = arith.constant 2 : index
    %c4_106 = arith.constant 4 : index
    %c0_107 = arith.constant 0 : index
    %72 = vector.load %arg2[%c0_103, %c0_104, %c2_105, %c4_106, %c0_107] : memref<1x1x22x22x4xf32, #tpu.memory_space<vmem>>, vector<1x1x16x16x4xf32>
    %73 = vector.shape_cast %72 : vector<1x1x16x16x4xf32> to vector<16x16x4xf32>
    %74 = vector.shape_cast %73 : vector<16x16x4xf32> to vector<256x4xf32>
    %c0_108 = arith.constant 0 : index
    %c72 = arith.constant 72 : index
    %75 = vector.load %arg6[%c0_108, %c72] : memref<256x196xf32, #tpu.memory_space<vmem>>, vector<256x4xf32>
    tpu.vector_store %arg6[%c0_108, %c72], %74 {strides = array<i32>} : memref<256x196xf32, #tpu.memory_space<vmem>>, vector<256x4xf32>,
    %c0_109 = arith.constant 0 : index
    %c0_110 = arith.constant 0 : index
    %c2_111 = arith.constant 2 : index
    %c5_112 = arith.constant 5 : index
    %c0_113 = arith.constant 0 : index
    %76 = vector.load %arg2[%c0_109, %c0_110, %c2_111, %c5_112, %c0_113] : memref<1x1x22x22x4xf32, #tpu.memory_space<vmem>>, vector<1x1x16x16x4xf32>
    %77 = vector.shape_cast %76 : vector<1x1x16x16x4xf32> to vector<16x16x4xf32>
    %78 = vector.shape_cast %77 : vector<16x16x4xf32> to vector<256x4xf32>
    %c0_114 = arith.constant 0 : index
    %c76 = arith.constant 76 : index
    %79 = vector.load %arg6[%c0_114, %c76] : memref<256x196xf32, #tpu.memory_space<vmem>>, vector<256x4xf32>
    tpu.vector_store %arg6[%c0_114, %c76], %78 {strides = array<i32>} : memref<256x196xf32, #tpu.memory_space<vmem>>, vector<256x4xf32>,
    %c0_115 = arith.constant 0 : index
    %c0_116 = arith.constant 0 : index
    %c2_117 = arith.constant 2 : index
    %c6_118 = arith.constant 6 : index
    %c0_119 = arith.constant 0 : index
    %80 = vector.load %arg2[%c0_115, %c0_116, %c2_117, %c6_118, %c0_119] : memref<1x1x22x22x4xf32, #tpu.memory_space<vmem>>, vector<1x1x16x16x4xf32>
    %81 = vector.shape_cast %80 : vector<1x1x16x16x4xf32> to vector<16x16x4xf32>
    %82 = vector.shape_cast %81 : vector<16x16x4xf32> to vector<256x4xf32>
    %c0_120 = arith.constant 0 : index
    %c80 = arith.constant 80 : index
    %83 = vector.load %arg6[%c0_120, %c80] : memref<256x196xf32, #tpu.memory_space<vmem>>, vector<256x4xf32>
    tpu.vector_store %arg6[%c0_120, %c80], %82 {strides = array<i32>} : memref<256x196xf32, #tpu.memory_space<vmem>>, vector<256x4xf32>,
    %c0_121 = arith.constant 0 : index
    %c0_122 = arith.constant 0 : index
    %c3_123 = arith.constant 3 : index
    %c0_124 = arith.constant 0 : index
    %c0_125 = arith.constant 0 : index
    %84 = vector.load %arg2[%c0_121, %c0_122, %c3_123, %c0_124, %c0_125] : memref<1x1x22x22x4xf32, #tpu.memory_space<vmem>>, vector<1x1x16x16x4xf32>
    %85 = vector.shape_cast %84 : vector<1x1x16x16x4xf32> to vector<16x16x4xf32>
    %86 = vector.shape_cast %85 : vector<16x16x4xf32> to vector<256x4xf32>
    %c0_126 = arith.constant 0 : index
    %c84 = arith.constant 84 : index
    %87 = vector.load %arg6[%c0_126, %c84] : memref<256x196xf32, #tpu.memory_space<vmem>>, vector<256x4xf32>
    tpu.vector_store %arg6[%c0_126, %c84], %86 {strides = array<i32>} : memref<256x196xf32, #tpu.memory_space<vmem>>, vector<256x4xf32>,
    %c0_127 = arith.constant 0 : index
    %c0_128 = arith.constant 0 : index
    %c3_129 = arith.constant 3 : index
    %c1_130 = arith.constant 1 : index
    %c0_131 = arith.constant 0 : index
    %88 = vector.load %arg2[%c0_127, %c0_128, %c3_129, %c1_130, %c0_131] : memref<1x1x22x22x4xf32, #tpu.memory_space<vmem>>, vector<1x1x16x16x4xf32>
    %89 = vector.shape_cast %88 : vector<1x1x16x16x4xf32> to vector<16x16x4xf32>
    %90 = vector.shape_cast %89 : vector<16x16x4xf32> to vector<256x4xf32>
    %c0_132 = arith.constant 0 : index
    %c88 = arith.constant 88 : index
    %91 = vector.load %arg6[%c0_132, %c88] : memref<256x196xf32, #tpu.memory_space<vmem>>, vector<256x4xf32>
    tpu.vector_store %arg6[%c0_132, %c88], %90 {strides = array<i32>} : memref<256x196xf32, #tpu.memory_space<vmem>>, vector<256x4xf32>,
    %c0_133 = arith.constant 0 : index
    %c0_134 = arith.constant 0 : index
    %c3_135 = arith.constant 3 : index
    %c2_136 = arith.constant 2 : index
    %c0_137 = arith.constant 0 : index
    %92 = vector.load %arg2[%c0_133, %c0_134, %c3_135, %c2_136, %c0_137] : memref<1x1x22x22x4xf32, #tpu.memory_space<vmem>>, vector<1x1x16x16x4xf32>
    %93 = vector.shape_cast %92 : vector<1x1x16x16x4xf32> to vector<16x16x4xf32>
    %94 = vector.shape_cast %93 : vector<16x16x4xf32> to vector<256x4xf32>
    %c0_138 = arith.constant 0 : index
    %c92 = arith.constant 92 : index
    %95 = vector.load %arg6[%c0_138, %c92] : memref<256x196xf32, #tpu.memory_space<vmem>>, vector<256x4xf32>
    tpu.vector_store %arg6[%c0_138, %c92], %94 {strides = array<i32>} : memref<256x196xf32, #tpu.memory_space<vmem>>, vector<256x4xf32>,
    %c0_139 = arith.constant 0 : index
    %c0_140 = arith.constant 0 : index
    %c3_141 = arith.constant 3 : index
    %c3_142 = arith.constant 3 : index
    %c0_143 = arith.constant 0 : index
    %96 = vector.load %arg2[%c0_139, %c0_140, %c3_141, %c3_142, %c0_143] : memref<1x1x22x22x4xf32, #tpu.memory_space<vmem>>, vector<1x1x16x16x4xf32>
    %97 = vector.shape_cast %96 : vector<1x1x16x16x4xf32> to vector<16x16x4xf32>
    %98 = vector.shape_cast %97 : vector<16x16x4xf32> to vector<256x4xf32>
    %c0_144 = arith.constant 0 : index
    %c96 = arith.constant 96 : index
    %99 = vector.load %arg6[%c0_144, %c96] : memref<256x196xf32, #tpu.memory_space<vmem>>, vector<256x4xf32>
    tpu.vector_store %arg6[%c0_144, %c96], %98 {strides = array<i32>} : memref<256x196xf32, #tpu.memory_space<vmem>>, vector<256x4xf32>,
    %c0_145 = arith.constant 0 : index
    %c0_146 = arith.constant 0 : index
    %c3_147 = arith.constant 3 : index
    %c4_148 = arith.constant 4 : index
    %c0_149 = arith.constant 0 : index
    %100 = vector.load %arg2[%c0_145, %c0_146, %c3_147, %c4_148, %c0_149] : memref<1x1x22x22x4xf32, #tpu.memory_space<vmem>>, vector<1x1x16x16x4xf32>
    %101 = vector.shape_cast %100 : vector<1x1x16x16x4xf32> to vector<16x16x4xf32>
    %102 = vector.shape_cast %101 : vector<16x16x4xf32> to vector<256x4xf32>
    %c0_150 = arith.constant 0 : index
    %c100 = arith.constant 100 : index
    %103 = vector.load %arg6[%c0_150, %c100] : memref<256x196xf32, #tpu.memory_space<vmem>>, vector<256x4xf32>
    tpu.vector_store %arg6[%c0_150, %c100], %102 {strides = array<i32>} : memref<256x196xf32, #tpu.memory_space<vmem>>, vector<256x4xf32>,
    %c0_151 = arith.constant 0 : index
    %c0_152 = arith.constant 0 : index
    %c3_153 = arith.constant 3 : index
    %c5_154 = arith.constant 5 : index
    %c0_155 = arith.constant 0 : index
    %104 = vector.load %arg2[%c0_151, %c0_152, %c3_153, %c5_154, %c0_155] : memref<1x1x22x22x4xf32, #tpu.memory_space<vmem>>, vector<1x1x16x16x4xf32>
    %105 = vector.shape_cast %104 : vector<1x1x16x16x4xf32> to vector<16x16x4xf32>
    %106 = vector.shape_cast %105 : vector<16x16x4xf32> to vector<256x4xf32>
    %c0_156 = arith.constant 0 : index
    %c104 = arith.constant 104 : index
    %107 = vector.load %arg6[%c0_156, %c104] : memref<256x196xf32, #tpu.memory_space<vmem>>, vector<256x4xf32>
    tpu.vector_store %arg6[%c0_156, %c104], %106 {strides = array<i32>} : memref<256x196xf32, #tpu.memory_space<vmem>>, vector<256x4xf32>,
    %c0_157 = arith.constant 0 : index
    %c0_158 = arith.constant 0 : index
    %c3_159 = arith.constant 3 : index
    %c6_160 = arith.constant 6 : index
    %c0_161 = arith.constant 0 : index
    %108 = vector.load %arg2[%c0_157, %c0_158, %c3_159, %c6_160, %c0_161] : memref<1x1x22x22x4xf32, #tpu.memory_space<vmem>>, vector<1x1x16x16x4xf32>
    %109 = vector.shape_cast %108 : vector<1x1x16x16x4xf32> to vector<16x16x4xf32>
    %110 = vector.shape_cast %109 : vector<16x16x4xf32> to vector<256x4xf32>
    %c0_162 = arith.constant 0 : index
    %c108 = arith.constant 108 : index
    %111 = vector.load %arg6[%c0_162, %c108] : memref<256x196xf32, #tpu.memory_space<vmem>>, vector<256x4xf32>
    tpu.vector_store %arg6[%c0_162, %c108], %110 {strides = array<i32>} : memref<256x196xf32, #tpu.memory_space<vmem>>, vector<256x4xf32>,
    %c0_163 = arith.constant 0 : index
    %c0_164 = arith.constant 0 : index
    %c4_165 = arith.constant 4 : index
    %c0_166 = arith.constant 0 : index
    %c0_167 = arith.constant 0 : index
    %112 = vector.load %arg2[%c0_163, %c0_164, %c4_165, %c0_166, %c0_167] : memref<1x1x22x22x4xf32, #tpu.memory_space<vmem>>, vector<1x1x16x16x4xf32>
    %113 = vector.shape_cast %112 : vector<1x1x16x16x4xf32> to vector<16x16x4xf32>
    %114 = vector.shape_cast %113 : vector<16x16x4xf32> to vector<256x4xf32>
    %c0_168 = arith.constant 0 : index
    %c112 = arith.constant 112 : index
    %115 = vector.load %arg6[%c0_168, %c112] : memref<256x196xf32, #tpu.memory_space<vmem>>, vector<256x4xf32>
    tpu.vector_store %arg6[%c0_168, %c112], %114 {strides = array<i32>} : memref<256x196xf32, #tpu.memory_space<vmem>>, vector<256x4xf32>,
    %c0_169 = arith.constant 0 : index
    %c0_170 = arith.constant 0 : index
    %c4_171 = arith.constant 4 : index
    %c1_172 = arith.constant 1 : index
    %c0_173 = arith.constant 0 : index
    %116 = vector.load %arg2[%c0_169, %c0_170, %c4_171, %c1_172, %c0_173] : memref<1x1x22x22x4xf32, #tpu.memory_space<vmem>>, vector<1x1x16x16x4xf32>
    %117 = vector.shape_cast %116 : vector<1x1x16x16x4xf32> to vector<16x16x4xf32>
    %118 = vector.shape_cast %117 : vector<16x16x4xf32> to vector<256x4xf32>
    %c0_174 = arith.constant 0 : index
    %c116 = arith.constant 116 : index
    %119 = vector.load %arg6[%c0_174, %c116] : memref<256x196xf32, #tpu.memory_space<vmem>>, vector<256x4xf32>
    tpu.vector_store %arg6[%c0_174, %c116], %118 {strides = array<i32>} : memref<256x196xf32, #tpu.memory_space<vmem>>, vector<256x4xf32>,
    %c0_175 = arith.constant 0 : index
    %c0_176 = arith.constant 0 : index
    %c4_177 = arith.constant 4 : index
    %c2_178 = arith.constant 2 : index
    %c0_179 = arith.constant 0 : index
    %120 = vector.load %arg2[%c0_175, %c0_176, %c4_177, %c2_178, %c0_179] : memref<1x1x22x22x4xf32, #tpu.memory_space<vmem>>, vector<1x1x16x16x4xf32>
    %121 = vector.shape_cast %120 : vector<1x1x16x16x4xf32> to vector<16x16x4xf32>
    %122 = vector.shape_cast %121 : vector<16x16x4xf32> to vector<256x4xf32>
    %c0_180 = arith.constant 0 : index
    %c120 = arith.constant 120 : index
    %123 = vector.load %arg6[%c0_180, %c120] : memref<256x196xf32, #tpu.memory_space<vmem>>, vector<256x4xf32>
    tpu.vector_store %arg6[%c0_180, %c120], %122 {strides = array<i32>} : memref<256x196xf32, #tpu.memory_space<vmem>>, vector<256x4xf32>,
    %c0_181 = arith.constant 0 : index
    %c0_182 = arith.constant 0 : index
    %c4_183 = arith.constant 4 : index
    %c3_184 = arith.constant 3 : index
    %c0_185 = arith.constant 0 : index
    %124 = vector.load %arg2[%c0_181, %c0_182, %c4_183, %c3_184, %c0_185] : memref<1x1x22x22x4xf32, #tpu.memory_space<vmem>>, vector<1x1x16x16x4xf32>
    %125 = vector.shape_cast %124 : vector<1x1x16x16x4xf32> to vector<16x16x4xf32>
    %126 = vector.shape_cast %125 : vector<16x16x4xf32> to vector<256x4xf32>
    %c0_186 = arith.constant 0 : index
    %c124 = arith.constant 124 : index
    %127 = vector.load %arg6[%c0_186, %c124] : memref<256x196xf32, #tpu.memory_space<vmem>>, vector<256x4xf32>
    tpu.vector_store %arg6[%c0_186, %c124], %126 {strides = array<i32>} : memref<256x196xf32, #tpu.memory_space<vmem>>, vector<256x4xf32>,
    %c0_187 = arith.constant 0 : index
    %c0_188 = arith.constant 0 : index
    %c4_189 = arith.constant 4 : index
    %c4_190 = arith.constant 4 : index
    %c0_191 = arith.constant 0 : index
    %128 = vector.load %arg2[%c0_187, %c0_188, %c4_189, %c4_190, %c0_191] : memref<1x1x22x22x4xf32, #tpu.memory_space<vmem>>, vector<1x1x16x16x4xf32>
    %129 = vector.shape_cast %128 : vector<1x1x16x16x4xf32> to vector<16x16x4xf32>
    %130 = vector.shape_cast %129 : vector<16x16x4xf32> to vector<256x4xf32>
    %c0_192 = arith.constant 0 : index
    %c128 = arith.constant 128 : index
    %131 = vector.load %arg6[%c0_192, %c128] : memref<256x196xf32, #tpu.memory_space<vmem>>, vector<256x4xf32>
    tpu.vector_store %arg6[%c0_192, %c128], %130 {strides = array<i32>} : memref<256x196xf32, #tpu.memory_space<vmem>>, vector<256x4xf32>,
    %c0_193 = arith.constant 0 : index
    %c0_194 = arith.constant 0 : index
    %c4_195 = arith.constant 4 : index
    %c5_196 = arith.constant 5 : index
    %c0_197 = arith.constant 0 : index
    %132 = vector.load %arg2[%c0_193, %c0_194, %c4_195, %c5_196, %c0_197] : memref<1x1x22x22x4xf32, #tpu.memory_space<vmem>>, vector<1x1x16x16x4xf32>
    %133 = vector.shape_cast %132 : vector<1x1x16x16x4xf32> to vector<16x16x4xf32>
    %134 = vector.shape_cast %133 : vector<16x16x4xf32> to vector<256x4xf32>
    %c0_198 = arith.constant 0 : index
    %c132 = arith.constant 132 : index
    %135 = vector.load %arg6[%c0_198, %c132] : memref<256x196xf32, #tpu.memory_space<vmem>>, vector<256x4xf32>
    tpu.vector_store %arg6[%c0_198, %c132], %134 {strides = array<i32>} : memref<256x196xf32, #tpu.memory_space<vmem>>, vector<256x4xf32>,
    %c0_199 = arith.constant 0 : index
    %c0_200 = arith.constant 0 : index
    %c4_201 = arith.constant 4 : index
    %c6_202 = arith.constant 6 : index
    %c0_203 = arith.constant 0 : index
    %136 = vector.load %arg2[%c0_199, %c0_200, %c4_201, %c6_202, %c0_203] : memref<1x1x22x22x4xf32, #tpu.memory_space<vmem>>, vector<1x1x16x16x4xf32>
    %137 = vector.shape_cast %136 : vector<1x1x16x16x4xf32> to vector<16x16x4xf32>
    %138 = vector.shape_cast %137 : vector<16x16x4xf32> to vector<256x4xf32>
    %c0_204 = arith.constant 0 : index
    %c136 = arith.constant 136 : index
    %139 = vector.load %arg6[%c0_204, %c136] : memref<256x196xf32, #tpu.memory_space<vmem>>, vector<256x4xf32>
    tpu.vector_store %arg6[%c0_204, %c136], %138 {strides = array<i32>} : memref<256x196xf32, #tpu.memory_space<vmem>>, vector<256x4xf32>,
    %c0_205 = arith.constant 0 : index
    %c0_206 = arith.constant 0 : index
    %c5_207 = arith.constant 5 : index
    %c0_208 = arith.constant 0 : index
    %c0_209 = arith.constant 0 : index
    %140 = vector.load %arg2[%c0_205, %c0_206, %c5_207, %c0_208, %c0_209] : memref<1x1x22x22x4xf32, #tpu.memory_space<vmem>>, vector<1x1x16x16x4xf32>
    %141 = vector.shape_cast %140 : vector<1x1x16x16x4xf32> to vector<16x16x4xf32>
    %142 = vector.shape_cast %141 : vector<16x16x4xf32> to vector<256x4xf32>
    %c0_210 = arith.constant 0 : index
    %c140 = arith.constant 140 : index
    %143 = vector.load %arg6[%c0_210, %c140] : memref<256x196xf32, #tpu.memory_space<vmem>>, vector<256x4xf32>
    tpu.vector_store %arg6[%c0_210, %c140], %142 {strides = array<i32>} : memref<256x196xf32, #tpu.memory_space<vmem>>, vector<256x4xf32>,
    %c0_211 = arith.constant 0 : index
    %c0_212 = arith.constant 0 : index
    %c5_213 = arith.constant 5 : index
    %c1_214 = arith.constant 1 : index
    %c0_215 = arith.constant 0 : index
    %144 = vector.load %arg2[%c0_211, %c0_212, %c5_213, %c1_214, %c0_215] : memref<1x1x22x22x4xf32, #tpu.memory_space<vmem>>, vector<1x1x16x16x4xf32>
    %145 = vector.shape_cast %144 : vector<1x1x16x16x4xf32> to vector<16x16x4xf32>
    %146 = vector.shape_cast %145 : vector<16x16x4xf32> to vector<256x4xf32>
    %c0_216 = arith.constant 0 : index
    %c144 = arith.constant 144 : index
    %147 = vector.load %arg6[%c0_216, %c144] : memref<256x196xf32, #tpu.memory_space<vmem>>, vector<256x4xf32>
    tpu.vector_store %arg6[%c0_216, %c144], %146 {strides = array<i32>} : memref<256x196xf32, #tpu.memory_space<vmem>>, vector<256x4xf32>,
    %c0_217 = arith.constant 0 : index
    %c0_218 = arith.constant 0 : index
    %c5_219 = arith.constant 5 : index
    %c2_220 = arith.constant 2 : index
    %c0_221 = arith.constant 0 : index
    %148 = vector.load %arg2[%c0_217, %c0_218, %c5_219, %c2_220, %c0_221] : memref<1x1x22x22x4xf32, #tpu.memory_space<vmem>>, vector<1x1x16x16x4xf32>
    %149 = vector.shape_cast %148 : vector<1x1x16x16x4xf32> to vector<16x16x4xf32>
    %150 = vector.shape_cast %149 : vector<16x16x4xf32> to vector<256x4xf32>
    %c0_222 = arith.constant 0 : index
    %c148 = arith.constant 148 : index
    %151 = vector.load %arg6[%c0_222, %c148] : memref<256x196xf32, #tpu.memory_space<vmem>>, vector<256x4xf32>
    tpu.vector_store %arg6[%c0_222, %c148], %150 {strides = array<i32>} : memref<256x196xf32, #tpu.memory_space<vmem>>, vector<256x4xf32>,
    %c0_223 = arith.constant 0 : index
    %c0_224 = arith.constant 0 : index
    %c5_225 = arith.constant 5 : index
    %c3_226 = arith.constant 3 : index
    %c0_227 = arith.constant 0 : index
    %152 = vector.load %arg2[%c0_223, %c0_224, %c5_225, %c3_226, %c0_227] : memref<1x1x22x22x4xf32, #tpu.memory_space<vmem>>, vector<1x1x16x16x4xf32>
    %153 = vector.shape_cast %152 : vector<1x1x16x16x4xf32> to vector<16x16x4xf32>
    %154 = vector.shape_cast %153 : vector<16x16x4xf32> to vector<256x4xf32>
    %c0_228 = arith.constant 0 : index
    %c152 = arith.constant 152 : index
    %155 = vector.load %arg6[%c0_228, %c152] : memref<256x196xf32, #tpu.memory_space<vmem>>, vector<256x4xf32>
    tpu.vector_store %arg6[%c0_228, %c152], %154 {strides = array<i32>} : memref<256x196xf32, #tpu.memory_space<vmem>>, vector<256x4xf32>,
    %c0_229 = arith.constant 0 : index
    %c0_230 = arith.constant 0 : index
    %c5_231 = arith.constant 5 : index
    %c4_232 = arith.constant 4 : index
    %c0_233 = arith.constant 0 : index
    %156 = vector.load %arg2[%c0_229, %c0_230, %c5_231, %c4_232, %c0_233] : memref<1x1x22x22x4xf32, #tpu.memory_space<vmem>>, vector<1x1x16x16x4xf32>
    %157 = vector.shape_cast %156 : vector<1x1x16x16x4xf32> to vector<16x16x4xf32>
    %158 = vector.shape_cast %157 : vector<16x16x4xf32> to vector<256x4xf32>
    %c0_234 = arith.constant 0 : index
    %c156 = arith.constant 156 : index
    %159 = vector.load %arg6[%c0_234, %c156] : memref<256x196xf32, #tpu.memory_space<vmem>>, vector<256x4xf32>
    tpu.vector_store %arg6[%c0_234, %c156], %158 {strides = array<i32>} : memref<256x196xf32, #tpu.memory_space<vmem>>, vector<256x4xf32>,
    %c0_235 = arith.constant 0 : index
    %c0_236 = arith.constant 0 : index
    %c5_237 = arith.constant 5 : index
    %c5_238 = arith.constant 5 : index
    %c0_239 = arith.constant 0 : index
    %160 = vector.load %arg2[%c0_235, %c0_236, %c5_237, %c5_238, %c0_239] : memref<1x1x22x22x4xf32, #tpu.memory_space<vmem>>, vector<1x1x16x16x4xf32>
    %161 = vector.shape_cast %160 : vector<1x1x16x16x4xf32> to vector<16x16x4xf32>
    %162 = vector.shape_cast %161 : vector<16x16x4xf32> to vector<256x4xf32>
    %c0_240 = arith.constant 0 : index
    %c160 = arith.constant 160 : index
    %163 = vector.load %arg6[%c0_240, %c160] : memref<256x196xf32, #tpu.memory_space<vmem>>, vector<256x4xf32>
    tpu.vector_store %arg6[%c0_240, %c160], %162 {strides = array<i32>} : memref<256x196xf32, #tpu.memory_space<vmem>>, vector<256x4xf32>,
    %c0_241 = arith.constant 0 : index
    %c0_242 = arith.constant 0 : index
    %c5_243 = arith.constant 5 : index
    %c6_244 = arith.constant 6 : index
    %c0_245 = arith.constant 0 : index
    %164 = vector.load %arg2[%c0_241, %c0_242, %c5_243, %c6_244, %c0_245] : memref<1x1x22x22x4xf32, #tpu.memory_space<vmem>>, vector<1x1x16x16x4xf32>
    %165 = vector.shape_cast %164 : vector<1x1x16x16x4xf32> to vector<16x16x4xf32>
    %166 = vector.shape_cast %165 : vector<16x16x4xf32> to vector<256x4xf32>
    %c0_246 = arith.constant 0 : index
    %c164 = arith.constant 164 : index
    %167 = vector.load %arg6[%c0_246, %c164] : memref<256x196xf32, #tpu.memory_space<vmem>>, vector<256x4xf32>
    tpu.vector_store %arg6[%c0_246, %c164], %166 {strides = array<i32>} : memref<256x196xf32, #tpu.memory_space<vmem>>, vector<256x4xf32>,
    %c0_247 = arith.constant 0 : index
    %c0_248 = arith.constant 0 : index
    %c6_249 = arith.constant 6 : index
    %c0_250 = arith.constant 0 : index
    %c0_251 = arith.constant 0 : index
    %168 = vector.load %arg2[%c0_247, %c0_248, %c6_249, %c0_250, %c0_251] : memref<1x1x22x22x4xf32, #tpu.memory_space<vmem>>, vector<1x1x16x16x4xf32>
    %169 = vector.shape_cast %168 : vector<1x1x16x16x4xf32> to vector<16x16x4xf32>
    %170 = vector.shape_cast %169 : vector<16x16x4xf32> to vector<256x4xf32>
    %c0_252 = arith.constant 0 : index
    %c168 = arith.constant 168 : index
    %171 = vector.load %arg6[%c0_252, %c168] : memref<256x196xf32, #tpu.memory_space<vmem>>, vector<256x4xf32>
    tpu.vector_store %arg6[%c0_252, %c168], %170 {strides = array<i32>} : memref<256x196xf32, #tpu.memory_space<vmem>>, vector<256x4xf32>,
    %c0_253 = arith.constant 0 : index
    %c0_254 = arith.constant 0 : index
    %c6_255 = arith.constant 6 : index
    %c1_256 = arith.constant 1 : index
    %c0_257 = arith.constant 0 : index
    %172 = vector.load %arg2[%c0_253, %c0_254, %c6_255, %c1_256, %c0_257] : memref<1x1x22x22x4xf32, #tpu.memory_space<vmem>>, vector<1x1x16x16x4xf32>
    %173 = vector.shape_cast %172 : vector<1x1x16x16x4xf32> to vector<16x16x4xf32>
    %174 = vector.shape_cast %173 : vector<16x16x4xf32> to vector<256x4xf32>
    %c0_258 = arith.constant 0 : index
    %c172 = arith.constant 172 : index
    %175 = vector.load %arg6[%c0_258, %c172] : memref<256x196xf32, #tpu.memory_space<vmem>>, vector<256x4xf32>
    tpu.vector_store %arg6[%c0_258, %c172], %174 {strides = array<i32>} : memref<256x196xf32, #tpu.memory_space<vmem>>, vector<256x4xf32>,
    %c0_259 = arith.constant 0 : index
    %c0_260 = arith.constant 0 : index
    %c6_261 = arith.constant 6 : index
    %c2_262 = arith.constant 2 : index
    %c0_263 = arith.constant 0 : index
    %176 = vector.load %arg2[%c0_259, %c0_260, %c6_261, %c2_262, %c0_263] : memref<1x1x22x22x4xf32, #tpu.memory_space<vmem>>, vector<1x1x16x16x4xf32>
    %177 = vector.shape_cast %176 : vector<1x1x16x16x4xf32> to vector<16x16x4xf32>
    %178 = vector.shape_cast %177 : vector<16x16x4xf32> to vector<256x4xf32>
    %c0_264 = arith.constant 0 : index
    %c176 = arith.constant 176 : index
    %179 = vector.load %arg6[%c0_264, %c176] : memref<256x196xf32, #tpu.memory_space<vmem>>, vector<256x4xf32>
    tpu.vector_store %arg6[%c0_264, %c176], %178 {strides = array<i32>} : memref<256x196xf32, #tpu.memory_space<vmem>>, vector<256x4xf32>,
    %c0_265 = arith.constant 0 : index
    %c0_266 = arith.constant 0 : index
    %c6_267 = arith.constant 6 : index
    %c3_268 = arith.constant 3 : index
    %c0_269 = arith.constant 0 : index
    %180 = vector.load %arg2[%c0_265, %c0_266, %c6_267, %c3_268, %c0_269] : memref<1x1x22x22x4xf32, #tpu.memory_space<vmem>>, vector<1x1x16x16x4xf32>
    %181 = vector.shape_cast %180 : vector<1x1x16x16x4xf32> to vector<16x16x4xf32>
    %182 = vector.shape_cast %181 : vector<16x16x4xf32> to vector<256x4xf32>
    %c0_270 = arith.constant 0 : index
    %c180 = arith.constant 180 : index
    %183 = vector.load %arg6[%c0_270, %c180] : memref<256x196xf32, #tpu.memory_space<vmem>>, vector<256x4xf32>
    tpu.vector_store %arg6[%c0_270, %c180], %182 {strides = array<i32>} : memref<256x196xf32, #tpu.memory_space<vmem>>, vector<256x4xf32>,
    %c0_271 = arith.constant 0 : index
    %c0_272 = arith.constant 0 : index
    %c6_273 = arith.constant 6 : index
    %c4_274 = arith.constant 4 : index
    %c0_275 = arith.constant 0 : index
    %184 = vector.load %arg2[%c0_271, %c0_272, %c6_273, %c4_274, %c0_275] : memref<1x1x22x22x4xf32, #tpu.memory_space<vmem>>, vector<1x1x16x16x4xf32>
    %185 = vector.shape_cast %184 : vector<1x1x16x16x4xf32> to vector<16x16x4xf32>
    %186 = vector.shape_cast %185 : vector<16x16x4xf32> to vector<256x4xf32>
    %c0_276 = arith.constant 0 : index
    %c184 = arith.constant 184 : index
    %187 = vector.load %arg6[%c0_276, %c184] : memref<256x196xf32, #tpu.memory_space<vmem>>, vector<256x4xf32>
    tpu.vector_store %arg6[%c0_276, %c184], %186 {strides = array<i32>} : memref<256x196xf32, #tpu.memory_space<vmem>>, vector<256x4xf32>,
    %c0_277 = arith.constant 0 : index
    %c0_278 = arith.constant 0 : index
    %c6_279 = arith.constant 6 : index
    %c5_280 = arith.constant 5 : index
    %c0_281 = arith.constant 0 : index
    %188 = vector.load %arg2[%c0_277, %c0_278, %c6_279, %c5_280, %c0_281] : memref<1x1x22x22x4xf32, #tpu.memory_space<vmem>>, vector<1x1x16x16x4xf32>
    %189 = vector.shape_cast %188 : vector<1x1x16x16x4xf32> to vector<16x16x4xf32>
    %190 = vector.shape_cast %189 : vector<16x16x4xf32> to vector<256x4xf32>
    %c0_282 = arith.constant 0 : index
    %c188 = arith.constant 188 : index
    %191 = vector.load %arg6[%c0_282, %c188] : memref<256x196xf32, #tpu.memory_space<vmem>>, vector<256x4xf32>
    tpu.vector_store %arg6[%c0_282, %c188], %190 {strides = array<i32>} : memref<256x196xf32, #tpu.memory_space<vmem>>, vector<256x4xf32>,
    %c0_283 = arith.constant 0 : index
    %c0_284 = arith.constant 0 : index
    %c6_285 = arith.constant 6 : index
    %c6_286 = arith.constant 6 : index
    %c0_287 = arith.constant 0 : index
    %192 = vector.load %arg2[%c0_283, %c0_284, %c6_285, %c6_286, %c0_287] : memref<1x1x22x22x4xf32, #tpu.memory_space<vmem>>, vector<1x1x16x16x4xf32>
    %193 = vector.shape_cast %192 : vector<1x1x16x16x4xf32> to vector<16x16x4xf32>
    %194 = vector.shape_cast %193 : vector<16x16x4xf32> to vector<256x4xf32>
    %c0_288 = arith.constant 0 : index
    %c192 = arith.constant 192 : index
    %195 = vector.load %arg6[%c0_288, %c192] : memref<256x196xf32, #tpu.memory_space<vmem>>, vector<256x4xf32>
    tpu.vector_store %arg6[%c0_288, %c192], %194 {strides = array<i32>} : memref<256x196xf32, #tpu.memory_space<vmem>>, vector<256x4xf32>,
    %c0_289 = arith.constant 0 : index
    %c0_290 = arith.constant 0 : index
    %c0_291 = arith.constant 0 : index
    %196 = vector.load %arg3[%c0_289, %c0_290, %c0_291] : memref<1x16x196xf32, #tpu.memory_space<vmem>>, vector<1x16x196xf32>
    %197 = vector.shape_cast %196 : vector<1x16x196xf32> to vector<16x196xf32>
    %c0_292 = arith.constant 0 : index
    %c0_293 = arith.constant 0 : index
    %198 = vector.load %arg6[%c0_292, %c0_293] : memref<256x196xf32, #tpu.memory_space<vmem>>, vector<256x196xf32>
    %cst = arith.constant dense<0.000000e+00> : vector<16x256xf32>
    %199 = tpu.matmul %197, %198, %cst {dimension_numbers = #tpu.dot_dimension_numbers<[1], [1], [0], [0], [0, 0, 1, 0], [], []>} : vector<16x196xf32>, vector<256x196xf32>, vector<16x256xf32> -> vector<16x256xf32>
    %c0_294 = arith.constant 0 : index
    %c0_295 = arith.constant 0 : index
    %200 = vector.load %arg4[%c0_294, %c0_295] : memref<16x1xf32, #tpu.memory_space<vmem>>, vector<16x1xf32>
    %201 = vector.broadcast %200 : vector<16x1xf32> to vector<16x256xf32>
    %202 = arith.addf %199, %201 : vector<16x256xf32>
    %cst_296 = arith.constant 0.000000e+00 : f32
    %203 = vector.broadcast %cst_296 : f32 to vector<16x256xf32>
    %204 = arith.maximumf %202, %203 : vector<16x256xf32>
    %c0_297 = arith.constant 0 : index
    %c0_298 = arith.constant 0 : index
    %c0_299 = arith.constant 0 : index
    %c0_300 = arith.constant 0 : index
    %205 = vector.load %arg5[%c0_297, %c0_298, %c0_299, %c0_300] : memref<1x1x16x256xf32, #tpu.memory_space<vmem>>, vector<1x1x16x256xf32>
    %206 = vector.shape_cast %205 : vector<1x1x16x256xf32> to vector<16x256xf32>
    %207 = vector.shape_cast %204 : vector<16x256xf32> to vector<1x1x16x256xf32>
    tpu.vector_store %arg5[%c0_297, %c0_298, %c0_299, %c0_300], %207 {strides = array<i32>} : memref<1x1x16x256xf32, #tpu.memory_space<vmem>>, vector<1x1x16x256xf32>,
    return
  }
  func.func @transform_0(%arg0: i32, %arg1: i32) -> (i32, i32, i32, i32, i32) {
    %c0_i32 = arith.constant 0 : i32
    %c0_i32_0 = arith.constant 0 : i32
    %c0_i32_1 = arith.constant 0 : i32
    %c0_i32_2 = arith.constant 0 : i32
    %c0_i32_3 = arith.constant 0 : i32
    return %arg1, %c0_i32, %c0_i32_0, %c0_i32_1, %c0_i32_2 : i32, i32, i32, i32, i32
  }
  func.func @transform_1(%arg0: i32, %arg1: i32) -> (i32, i32, i32) {
    %c0_i32 = arith.constant 0 : i32
    %c0_i32_0 = arith.constant 0 : i32
    %c0_i32_1 = arith.constant 0 : i32
    return %arg0, %c0_i32, %c0_i32_0 : i32, i32, i32
  }
  func.func @transform_2(%arg0: i32, %arg1: i32) -> (i32, i32) {
    %c0_i32 = arith.constant 0 : i32
    %c0_i32_0 = arith.constant 0 : i32
    %c0_i32_1 = arith.constant 0 : i32
    return %c0_i32, %c0_i32_0 : i32, i32
  }
  func.func @transform_3(%arg0: i32, %arg1: i32) -> (i32, i32, i32, i32) {
    %c0_i32 = arith.constant 0 : i32
    %c0_i32_0 = arith.constant 0 : i32
    %c0_i32_1 = arith.constant 0 : i32
    return %arg1, %arg0, %c0_i32, %c0_i32_0 : i32, i32, i32, i32
  }
}

</mosaic_0001>

<llo_original>
// kernel: tpu_custom_call.1
$region0: #{tpu_custom_call.1}
  #allocation0 [shape = 'u32[]', space=smem, size = 0x4, offset = 0x4, fixed_abs, tag = 'smem constant byte address 0x4 - core index']
  #allocation1 [shape = 'u32[144,128]{1,0:T(1,128)}', space=vmem, size = 0x12000, scoped, tag = 'internal scratch']
  #allocation2 [shape = 'f32[256,196]{1,0:T(8,128)}', space=vmem, size = 0x40000, scoped, tag = 'scratch operand']
  %s0 = inlined_call_operand.vmem [shape: f32[2,1,22,22,4], index: 0, kind: input, shape index: {}]
  %s1 = inlined_call_operand.vmem [shape: f32[2,16,196], index: 1, kind: input, shape index: {}]
  %s2 = inlined_call_operand.vmem [shape: f32[16,1], index: 2, kind: input, shape index: {}]
  %s3 = inlined_call_operand.hbm [shape: f32[2,2,16,256], index: 3, kind: output, shape index: {}]
  %s4 = sld [smem:[#allocation0]]
  $region45: #{tpu_custom_call.1} parent=0
    _
  %s6 = ssub.s32 1, %s4
  %s7 = scalar_select 0, %s6, %s4
  $region1: #{tpu_custom_call.1} parent=0
    #allocation3 [shape = 'u8[32768]{0}', space=vmem, size = 0x8000, scoped, tag = 'output window, operand 0']
    #allocation4 [shape = 's32[2]{0}', space=sflag, size = 0x8, scoped, tag = 'scoped memory for tpu_custom_call.1']
    %8 = vsyncpa [#allocation4], 0
    %s9 = scalar_lea.sflag [#allocation4], 1
    %10 = vsyncpa %s9, 0
    loop: start=0, step=1, limit=6
    $region2: #{tpu_custom_call.1} parent=1 // loop_pre_header
      _
    $region3: #{tpu_custom_call.1} parent=1 // loop_header
      %s12 = sphi 0, %s16
      %p13 = scmp.ge.s32.totalorder %s12, 6
      %s19 = sphi 0, %s31
      %s20 = sphi 0, %s27
      %s21 = sphi 0, %s19
      %s22 = sphi 0, %s20
      %s23 = sphi 0, %s21
      %s24 = sphi 0, %s22
      %s34 = sphi 0, %s36
      %s37 = sphi 0, %s34
      %s38 = sphi 0, %s37
      %s54 = sphi 0, %s38
      %s60 = sphi 0, %s62
      %s63 = sphi 0, %s60
      %s64 = sphi 0, %s63
      %s80 = sphi 0, %s64
      %s84 = sphi 0, %s84
      %s86 = sphi 0, %s84
      %s87 = sphi 0, %s86
      %s101 = sphi 0, %s87
      %s109 = sphi 0, %s111
      %s112 = sphi 0, %s109
      %s113 = sphi 0, %s112
      %s129 = sphi 0, %s113
    $region4: #{tpu_custom_call.1} parent=1 // loop_header_branch
      %15 = sbr.rel (%p13) target = $region8
    $region5: #{tpu_custom_call.1} parent=1 // loop_body
      %s17 = ssub.s32 %s12, 1
      %s18 = ssub.s32 %s12, 2
      %s25 = sadd.s32 1, %s20
      %p26 = scmp.ge.s32.totalorder %s25, 2
      %s27 = scalar_select %p26, 0, %s25
      %s28 = sadd.s32 1, %s19
      %s29 = scalar_select %p26, %s28, %s19
      %p30 = scmp.ge.s32.totalorder %s29, 2
      %s31 = scalar_select %p30, 0, %s29
      %s32 = ssub.s32 %s20, %s27
      %p33 = scmp.eq.s32.totalorder %s32, 0
      %s35 = sadd.s32 %s34, 1
      %s36 = scalar_select %p33, %s34, %s35
      %p39 = pneg %p33
      %p40 = scmp.eq.s32.totalorder %s12, 3
      %p41 = por %p39, %p40
      %p42 = scmp.ne.s32.totalorder %s34, %s37
      %p43 = scmp.eq.s32.totalorder %s12, 0
      %p44 = por %p42, %p43
      %p45 = scmp.ne.s32.totalorder %s34, %s37
      %p46 = scmp.eq.s32.totalorder %s17, 3
      %p47 = por %p45, %p46
      %p48 = scmp.ne.s32.totalorder %s37, %s38
      %p49 = scmp.eq.s32.totalorder %s17, 0
      %p50 = por %p48, %p49
      %p51 = scmp.ne.s32.totalorder %s37, %s38
      %p52 = scmp.eq.s32.totalorder %s18, 3
      %p53 = por %p51, %p52
      %p55 = scmp.ne.s32.totalorder %s38, %s54
      %p56 = scmp.eq.s32.totalorder %s18, 0
      %p57 = por %p55, %p56
      %s58 = ssub.s32 %s19, %s31
      %p59 = scmp.eq.s32.totalorder %s58, 0
      %s61 = sadd.s32 %s60, 1
      %s62 = scalar_select %p59, %s60, %s61
      %p65 = pneg %p59
      %p66 = scmp.eq.s32.totalorder %s12, 3
      %p67 = por %p65, %p66
      %p68 = scmp.ne.s32.totalorder %s60, %s63
      %p69 = scmp.eq.s32.totalorder %s12, 0
      %p70 = por %p68, %p69
      %p71 = scmp.ne.s32.totalorder %s60, %s63
      %p72 = scmp.eq.s32.totalorder %s17, 3
      %p73 = por %p71, %p72
      %p74 = scmp.ne.s32.totalorder %s63, %s64
      %p75 = scmp.eq.s32.totalorder %s17, 0
      %p76 = por %p74, %p75
      %p77 = scmp.ne.s32.totalorder %s63, %s64
      %p78 = scmp.eq.s32.totalorder %s18, 3
      %p79 = por %p77, %p78
      %p81 = scmp.ne.s32.totalorder %s64, %s80
      %p82 = scmp.eq.s32.totalorder %s18, 0
      %p83 = por %p81, %p82
      %s85 = sadd.s32 %s84, 1
      %p88 = scmp.eq.s32.totalorder %s12, 3
      %p89 = scmp.ne.s32.totalorder %s84, %s86
      %p90 = scmp.eq.s32.totalorder %s12, 0
      %p91 = por %p89, %p90
      %p92 = scmp.ne.s32.totalorder %s84, %s86
      %p93 = scmp.eq.s32.totalorder %s17, 3
      %p94 = por %p92, %p93
      %p95 = scmp.ne.s32.totalorder %s86, %s87
      %p96 = scmp.eq.s32.totalorder %s17, 0
      %p97 = por %p95, %p96
      %p98 = scmp.ne.s32.totalorder %s86, %s87
      %p99 = scmp.eq.s32.totalorder %s18, 3
      %p100 = por %p98, %p99
      %p102 = scmp.ne.s32.totalorder %s87, %s101
      %p103 = scmp.eq.s32.totalorder %s18, 0
      %p104 = por %p102, %p103
      %s105 = ssub.s32 %s20, %s27
      %s106 = ssub.s32 %s19, %s31
      %s107 = sor.u32 %s105, %s106
      %p108 = scmp.eq.s32.totalorder %s107, 0
      %s110 = sadd.s32 %s109, 1
      %s111 = scalar_select %p108, %s109, %s110
      %p114 = pneg %p108
      %p115 = scmp.eq.s32.totalorder %s12, 3
      %p116 = por %p114, %p115
      %p117 = scmp.ne.s32.totalorder %s109, %s112
      %p118 = scmp.eq.s32.totalorder %s12, 0
      %p119 = por %p117, %p118
      %p120 = scmp.ne.s32.totalorder %s109, %s112
      %p121 = scmp.eq.s32.totalorder %s17, 3
      %p122 = por %p120, %p121
      %p123 = scmp.ne.s32.totalorder %s112, %s113
      %p124 = scmp.eq.s32.totalorder %s17, 0
      %p125 = por %p123, %p124
      %p126 = scmp.ne.s32.totalorder %s112, %s113
      %p127 = scmp.eq.s32.totalorder %s18, 3
      %p128 = por %p126, %p127
      %p130 = scmp.ne.s32.totalorder %s113, %s129
      %p131 = scmp.eq.s32.totalorder %s18, 0
      %p132 = por %p130, %p131
      %p133 = scmp.le.s32.totalorder 1, %s12
      %p134 = scmp.lt.s32.totalorder %s12, 5
      %p135 = pnand %p133, %p134
      %p136 = pneg %p135
      // Predicated region
      $region9: #{tpu_custom_call.1} parent=5 // pred_check
        _
      $region10: #{tpu_custom_call.1} parent=5 // pred_check_branch
        %138 = sbr.rel (%p135) target = $region12
      $region11: #{tpu_custom_call.1} parent=5 // pred_region
        %s139 = ssub.s32 %s12, 1
        // Predicated region
        $region13: #{tpu_custom_call.1} parent=11 // pred_check
          %p140 = pneg %p97
        $region14: #{tpu_custom_call.1} parent=11 // pred_check_branch
          %142 = sbr.rel (%p140) target = $region16
        $region15: #{tpu_custom_call.1} parent=11 // pred_region
          _
        $region16: #{tpu_custom_call.1} parent=11 // pred_fallthru
          _
      $region12: #{tpu_custom_call.1} parent=5 // pred_fallthru
        _
      %p143 = scmp.lt.s32.totalorder %s12, 4
      // Predicated region
      $region17: #{tpu_custom_call.1} parent=5 // pred_check
        %p144 = pneg %p143
      $region18: #{tpu_custom_call.1} parent=5 // pred_check_branch
        %146 = sbr.rel (%p144) target = $region20
      $region19: #{tpu_custom_call.1} parent=5 // pred_region
        // Predicated region
        $region21: #{tpu_custom_call.1} parent=19 // pred_check
          %p147 = pneg %p44
        $region22: #{tpu_custom_call.1} parent=19 // pred_check_branch
          %149 = sbr.rel (%p147) target = $region24
        $region23: #{tpu_custom_call.1} parent=19 // pred_region
          %p150 = scmp.lt.s32.totalorder %s20, 1
          %s151 = scalar_select %p150, %s20, 1
          %s152 = smul.addr %s151, 66
          %s153 = smul.addr %s152, 8
          %s154 = scalar_lea.vmem %s0, %s153
        $region24: #{tpu_custom_call.1} parent=19 // pred_fallthru
          _
        // Predicated region
        $region25: #{tpu_custom_call.1} parent=19 // pred_check
          %p155 = pneg %p70
        $region26: #{tpu_custom_call.1} parent=19 // pred_check_branch
          %157 = sbr.rel (%p155) target = $region28
        $region27: #{tpu_custom_call.1} parent=19 // pred_region
          %p158 = scmp.lt.s32.totalorder %s19, 1
          %s159 = scalar_select %p158, %s19, 1
          %s160 = smul.addr %s159, 4
          %s161 = smul.addr %s160, 8
          %s162 = scalar_lea.vmem %s1, %s161
        $region28: #{tpu_custom_call.1} parent=19 // pred_fallthru
          _
      $region20: #{tpu_custom_call.1} parent=5 // pred_fallthru
        _
      %p163 = scmp.le.s32.totalorder 1, %s12
      %p164 = scmp.lt.s32.totalorder %s12, 5
      %p165 = pnand %p163, %p164
      %p166 = pneg %p165
      // Predicated region
      $region29: #{tpu_custom_call.1} parent=5 // pred_check
        _
      $region30: #{tpu_custom_call.1} parent=5 // pred_check_branch
        %168 = sbr.rel (%p165) target = $region32
      $region31: #{tpu_custom_call.1} parent=5 // pred_region
        %s169 = ssub.s32 %s12, 1
        %p170 = scmp.lt.s32.totalorder %s22, 1
        %s171 = scalar_select %p170, %s22, 1
        %s172 = smul.addr %s171, 66
        %s173 = smul.addr %s172, 8
        %s174 = scalar_lea.vmem %s0, %s173
        %p175 = pneg %p50
        %p176 = pneg %p47
        %p177 = scmp.lt.s32.totalorder %s21, 1
        %s178 = scalar_select %p177, %s21, 1
        %s179 = smul.addr %s178, 4
        %s180 = smul.addr %s179, 8
        %s181 = scalar_lea.vmem %s1, %s180
        %p182 = pneg %p76
        %p183 = pneg %p73
        %p184 = pneg %p97
        %p185 = pneg %p94
        %p186 = pneg %p125
        %p187 = pneg %p122
        %s188 = sand.u32 %s112, 1
        %s189 = scalar_lea.sflag [#allocation4], %s188
        %s190 = sand.u32 %s112, 1
        %s191 = smul.addr %s190, 32
        %s192 = scalar_lea.vmem [#allocation3], %s191
        %p193 = scmp.lt.s32.totalorder %s22, 1
        %s194 = scalar_select %p193, %s22, 1
        %s195 = smul.addr %s194, 66
        %s196 = smul.addr %s195, 8
        %s197 = scalar_lea.vmem %s0, %s196
        %p198 = scmp.lt.s32.totalorder %s21, 1
        %s199 = scalar_select %p198, %s21, 1
        %s200 = smul.addr %s199, 4
        %s201 = smul.addr %s200, 8
        %s202 = scalar_lea.vmem %s1, %s201
        %v203 = vld [vmem:[%s197] sm:$0xff]
        %v204 = vld [vmem:[%s197 + $0x8] sm:$0xff]
        %v205 = vld [vmem:[%s197 + $0x18] sm:$0xff]
        %v206 = vld [vmem:[%s197 + $0x20] sm:$0xff]
        %v207 = vld [vmem:[%s197 + $0x30] sm:$0xff]
        %v208 = vld [vmem:[%s197 + $0x38] sm:$0xff]
        %v209 = vld [vmem:[%s197 + $0x48] sm:$0xff]
        %v210 = vld [vmem:[%s197 + $0x50] sm:$0xff]
        %v211 = vld [vmem:[%s197 + $0x60] sm:$0xff]
        %v212 = vld [vmem:[%s197 + $0x68] sm:$0xff]
        %v213 = vld [vmem:[%s197 + $0x78] sm:$0xff]
        %v214 = vld [vmem:[%s197 + $0x80] sm:$0xff]
        %v215 = vld [vmem:[%s197 + $0x90] sm:$0xff]
        %v216 = vld [vmem:[%s197 + $0x98] sm:$0xff]
        %v217 = vld [vmem:[%s197 + $0xa8] sm:$0xff]
        %v218 = vld [vmem:[%s197 + $0xb0] sm:$0xff]
        %v219 = vld [vmem:[%s197 + $0xc0] sm:$0xff]
        %v220 = vld [vmem:[%s197 + $0xc8] sm:$0xff]
        %v221 = vld [vmem:[%s197 + $0xd8] sm:$0xff]
        %v222 = vld [vmem:[%s197 + $0xe0] sm:$0xff]
        %v223 = vld [vmem:[%s197 + $0xf0] sm:$0xff]
        %v224 = vld [vmem:[%s197 + $0xf8] sm:$0xff]
        %v225 = vld [vmem:[%s197 + $0x108] sm:$0xff]
        %v226 = vld [vmem:[%s197 + $0x110] sm:$0xff]
        %v227 = vld [vmem:[%s197 + $0x120] sm:$0xff]
        %v228 = vld [vmem:[%s197 + $0x128] sm:$0xff]
        %v229 = vld [vmem:[%s197 + $0x138] sm:$0xff]
        %v230 = vld [vmem:[%s197 + $0x140] sm:$0xff]
        %v231 = vld [vmem:[%s197 + $0x150] sm:$0xff]
        %v232 = vld [vmem:[%s197 + $0x158] sm:$0xff]
        %v233 = vld [vmem:[%s197 + $0x168] sm:$0xff]
        %v234 = vld [vmem:[%s197 + $0x170] sm:$0xff]
        %vm235 = vcmask 31744
        %236 = vst.msk [vmem:[#allocation2] sm:$0xff] %vm235, %v203
        %237 = vst.msk [vmem:[#allocation2 + $0x10] sm:$0xff] %vm235, %v204
        %238 = vst.msk [vmem:[#allocation2 + $0x20] sm:$0xff] %vm235, %v205
        %239 = vst.msk [vmem:[#allocation2 + $0x30] sm:$0xff] %vm235, %v206
        %240 = vst.msk [vmem:[#allocation2 + $0x40] sm:$0xff] %vm235, %v207
        %241 = vst.msk [vmem:[#allocation2 + $0x50] sm:$0xff] %vm235, %v208
        %242 = vst.msk [vmem:[#allocation2 + $0x60] sm:$0xff] %vm235, %v209
        %243 = vst.msk [vmem:[#allocation2 + $0x70] sm:$0xff] %vm235, %v210
        %244 = vst.msk [vmem:[#allocation2 + $0x80] sm:$0xff] %vm235, %v211
        %245 = vst.msk [vmem:[#allocation2 + $0x90] sm:$0xff] %vm235, %v212
        %246 = vst.msk [vmem:[#allocation2 + $0xa0] sm:$0xff] %vm235, %v213
        %247 = vst.msk [vmem:[#allocation2 + $0xb0] sm:$0xff] %vm235, %v214
        %248 = vst.msk [vmem:[#allocation2 + $0xc0] sm:$0xff] %vm235, %v215
        %249 = vst.msk [vmem:[#allocation2 + $0xd0] sm:$0xff] %vm235, %v216
        %250 = vst.msk [vmem:[#allocation2 + $0xe0] sm:$0xff] %vm235, %v217
        %251 = vst.msk [vmem:[#allocation2 + $0xf0] sm:$0xff] %vm235, %v218
        %252 = vst.msk [vmem:[#allocation2 + $0x100] sm:$0xff] %vm235, %v219
        %253 = vst.msk [vmem:[#allocation2 + $0x110] sm:$0xff] %vm235, %v220
        %254 = vst.msk [vmem:[#allocation2 + $0x120] sm:$0xff] %vm235, %v221
        %255 = vst.msk [vmem:[#allocation2 + $0x130] sm:$0xff] %vm235, %v222
        %256 = vst.msk [vmem:[#allocation2 + $0x140] sm:$0xff] %vm235, %v223
        %257 = vst.msk [vmem:[#allocation2 + $0x150] sm:$0xff] %vm235, %v224
        %258 = vst.msk [vmem:[#allocation2 + $0x160] sm:$0xff] %vm235, %v225
        %259 = vst.msk [vmem:[#allocation2 + $0x170] sm:$0xff] %vm235, %v226
        %260 = vst.msk [vmem:[#allocation2 + $0x180] sm:$0xff] %vm235, %v227
        %261 = vst.msk [vmem:[#allocation2 + $0x190] sm:$0xff] %vm235, %v228
        %262 = vst.msk [vmem:[#allocation2 + $0x1a0] sm:$0xff] %vm235, %v229
        %263 = vst.msk [vmem:[#allocation2 + $0x1b0] sm:$0xff] %vm235, %v230
        %264 = vst.msk [vmem:[#allocation2 + $0x1c0] sm:$0xff] %vm235, %v231
        %265 = vst.msk [vmem:[#allocation2 + $0x1d0] sm:$0xff] %vm235, %v232
        %266 = vst.msk [vmem:[#allocation2 + $0x1e0] sm:$0xff] %vm235, %v233
        %267 = vst.msk [vmem:[#allocation2 + $0x1f0] sm:$0xff] %vm235, %v234
        %v268 = vld [vmem:[%s197 + $0x1] sm:$0xff]
        %v269 = vld [vmem:[%s197 + $0x9] sm:$0xff]
        %v270 = vld [vmem:[%s197 + $0x19] sm:$0xff]
        %v271 = vld [vmem:[%s197 + $0x21] sm:$0xff]
        %v272 = vld [vmem:[%s197 + $0x31] sm:$0xff]
        %v273 = vld [vmem:[%s197 + $0x39] sm:$0xff]
        %v274 = vld [vmem:[%s197 + $0x49] sm:$0xff]
        %v275 = vld [vmem:[%s197 + $0x51] sm:$0xff]
        %v276 = vld [vmem:[%s197 + $0x61] sm:$0xff]
        %v277 = vld [vmem:[%s197 + $0x69] sm:$0xff]
        %v278 = vld [vmem:[%s197 + $0x79] sm:$0xff]
        %v279 = vld [vmem:[%s197 + $0x81] sm:$0xff]
        %v280 = vld [vmem:[%s197 + $0x91] sm:$0xff]
        %v281 = vld [vmem:[%s197 + $0x99] sm:$0xff]
        %v282 = vld [vmem:[%s197 + $0xa9] sm:$0xff]
        %v283 = vld [vmem:[%s197 + $0xb1] sm:$0xff]
        %v284 = vld [vmem:[%s197 + $0xc1] sm:$0xff]
        %v285 = vld [vmem:[%s197 + $0xc9] sm:$0xff]
        %v286 = vld [vmem:[%s197 + $0xd9] sm:$0xff]
        %v287 = vld [vmem:[%s197 + $0xe1] sm:$0xff]
        %v288 = vld [vmem:[%s197 + $0xf1] sm:$0xff]
        %v289 = vld [vmem:[%s197 + $0xf9] sm:$0xff]
        %v290 = vld [vmem:[%s197 + $0x109] sm:$0xff]
        %v291 = vld [vmem:[%s197 + $0x111] sm:$0xff]
        %v292 = vld [vmem:[%s197 + $0x121] sm:$0xff]
        %v293 = vld [vmem:[%s197 + $0x129] sm:$0xff]
        %v294 = vld [vmem:[%s197 + $0x139] sm:$0xff]
        %v295 = vld [vmem:[%s197 + $0x141] sm:$0xff]
        %v296 = vld [vmem:[%s197 + $0x151] sm:$0xff]
        %v297 = vld [vmem:[%s197 + $0x159] sm:$0xff]
        %v298 = vld [vmem:[%s197 + $0x169] sm:$0xff]
        %v299 = vld [vmem:[%s197 + $0x171] sm:$0xff]
        %332 = vrot.lane.b32.xlu0 %v268, 4
        %v333 = vpop.permute.xlu0 %332
        %334 = vrot.lane.b32.xlu0 %v269, 4
        %v335 = vpop.permute.xlu0 %334
        %336 = vrot.lane.b32.xlu0 %v270, 4
        %v337 = vpop.permute.xlu0 %336
        %338 = vrot.lane.b32.xlu0 %v271, 4
        %v339 = vpop.permute.xlu0 %338
        %340 = vrot.lane.b32.xlu0 %v272, 4
        %v341 = vpop.permute.xlu0 %340
        %342 = vrot.lane.b32.xlu0 %v273, 4
        %v343 = vpop.permute.xlu0 %342
        %344 = vrot.lane.b32.xlu0 %v274, 4
        %v345 = vpop.permute.xlu0 %344
        %346 = vrot.lane.b32.xlu0 %v275, 4
        %v347 = vpop.permute.xlu0 %346
        %348 = vrot.lane.b32.xlu0 %v276, 4
        %v349 = vpop.permute.xlu0 %348
        %350 = vrot.lane.b32.xlu0 %v277, 4
        %v351 = vpop.permute.xlu0 %350
        %352 = vrot.lane.b32.xlu0 %v278, 4
        %v353 = vpop.permute.xlu0 %352
        %354 = vrot.lane.b32.xlu0 %v279, 4
        %v355 = vpop.permute.xlu0 %354
        %356 = vrot.lane.b32.xlu0 %v280, 4
        %v357 = vpop.permute.xlu0 %356
        %358 = vrot.lane.b32.xlu0 %v281, 4
        %v359 = vpop.permute.xlu0 %358
        %360 = vrot.lane.b32.xlu0 %v282, 4
        %v361 = vpop.permute.xlu0 %360
        %362 = vrot.lane.b32.xlu0 %v283, 4
        %v363 = vpop.permute.xlu0 %362
        %364 = vrot.lane.b32.xlu0 %v284, 4
        %v365 = vpop.permute.xlu0 %364
        %366 = vrot.lane.b32.xlu0 %v285, 4
        %v367 = vpop.permute.xlu0 %366
        %368 = vrot.lane.b32.xlu0 %v286, 4
        %v369 = vpop.permute.xlu0 %368
        %370 = vrot.lane.b32.xlu0 %v287, 4
        %v371 = vpop.permute.xlu0 %370
        %372 = vrot.lane.b32.xlu0 %v288, 4
        %v373 = vpop.permute.xlu0 %372
        %374 = vrot.lane.b32.xlu0 %v289, 4
        %v375 = vpop.permute.xlu0 %374
        %376 = vrot.lane.b32.xlu0 %v290, 4
        %v377 = vpop.permute.xlu0 %376
        %378 = vrot.lane.b32.xlu0 %v291, 4
        %v379 = vpop.permute.xlu0 %378
        %380 = vrot.lane.b32.xlu0 %v292, 4
        %v381 = vpop.permute.xlu0 %380
        %382 = vrot.lane.b32.xlu0 %v293, 4
        %v383 = vpop.permute.xlu0 %382
        %384 = vrot.lane.b32.xlu0 %v294, 4
        %v385 = vpop.permute.xlu0 %384
        %386 = vrot.lane.b32.xlu0 %v295, 4
        %v387 = vpop.permute.xlu0 %386
        %388 = vrot.lane.b32.xlu0 %v296, 4
        %v389 = vpop.permute.xlu0 %388
        %390 = vrot.lane.b32.xlu0 %v297, 4
        %v391 = vpop.permute.xlu0 %390
        %392 = vrot.lane.b32.xlu0 %v298, 4
        %v393 = vpop.permute.xlu0 %392
        %394 = vrot.lane.b32.xlu0 %v299, 4
        %v395 = vpop.permute.xlu0 %394
        %vm428 = vcmask 64544
        %429 = vst.msk [vmem:[#allocation2] sm:$0xff] %vm428, %v333
        %430 = vst.msk [vmem:[#allocation2 + $0x10] sm:$0xff] %vm428, %v335
        %431 = vst.msk [vmem:[#allocation2 + $0x20] sm:$0xff] %vm428, %v337
        %432 = vst.msk [vmem:[#allocation2 + $0x30] sm:$0xff] %vm428, %v339
        %433 = vst.msk [vmem:[#allocation2 + $0x40] sm:$0xff] %vm428, %v341
        %434 = vst.msk [vmem:[#allocation2 + $0x50] sm:$0xff] %vm428, %v343
        %435 = vst.msk [vmem:[#allocation2 + $0x60] sm:$0xff] %vm428, %v345
        %436 = vst.msk [vmem:[#allocation2 + $0x70] sm:$0xff] %vm428, %v347
        %437 = vst.msk [vmem:[#allocation2 + $0x80] sm:$0xff] %vm428, %v349
        %438 = vst.msk [vmem:[#allocation2 + $0x90] sm:$0xff] %vm428, %v351
        %439 = vst.msk [vmem:[#allocation2 + $0xa0] sm:$0xff] %vm428, %v353
        %440 = vst.msk [vmem:[#allocation2 + $0xb0] sm:$0xff] %vm428, %v355
        %441 = vst.msk [vmem:[#allocation2 + $0xc0] sm:$0xff] %vm428, %v357
        %442 = vst.msk [vmem:[#allocation2 + $0xd0] sm:$0xff] %vm428, %v359
        %443 = vst.msk [vmem:[#allocation2 + $0xe0] sm:$0xff] %vm428, %v361
        %444 = vst.msk [vmem:[#allocation2 + $0xf0] sm:$0xff] %vm428, %v363
        %445 = vst.msk [vmem:[#allocation2 + $0x100] sm:$0xff] %vm428, %v365
        %446 = vst.msk [vmem:[#allocation2 + $0x110] sm:$0xff] %vm428, %v367
        %447 = vst.msk [vmem:[#allocation2 + $0x120] sm:$0xff] %vm428, %v369
        %448 = vst.msk [vmem:[#allocation2 + $0x130] sm:$0xff] %vm428, %v371
        %449 = vst.msk [vmem:[#allocation2 + $0x140] sm:$0xff] %vm428, %v373
        %450 = vst.msk [vmem:[#allocation2 + $0x150] sm:$0xff] %vm428, %v375
        %451 = vst.msk [vmem:[#allocation2 + $0x160] sm:$0xff] %vm428, %v377
        %452 = vst.msk [vmem:[#allocation2 + $0x170] sm:$0xff] %vm428, %v379
        %453 = vst.msk [vmem:[#allocation2 + $0x180] sm:$0xff] %vm428, %v381
        %454 = vst.msk [vmem:[#allocation2 + $0x190] sm:$0xff] %vm428, %v383
        %455 = vst.msk [vmem:[#allocation2 + $0x1a0] sm:$0xff] %vm428, %v385
        %456 = vst.msk [vmem:[#allocation2 + $0x1b0] sm:$0xff] %vm428, %v387
        %457 = vst.msk [vmem:[#allocation2 + $0x1c0] sm:$0xff] %vm428, %v389
        %458 = vst.msk [vmem:[#allocation2 + $0x1d0] sm:$0xff] %vm428, %v391
        %459 = vst.msk [vmem:[#allocation2 + $0x1e0] sm:$0xff] %vm428, %v393
        %460 = vst.msk [vmem:[#allocation2 + $0x1f0] sm:$0xff] %vm428, %v395
        %v461 = vld [vmem:[%s197 + $0x2] sm:$0xff]
        %v462 = vld [vmem:[%s197 + $0xa] sm:$0xff]
        %v463 = vld [vmem:[%s197 + $0x1a] sm:$0xff]
        %v464 = vld [vmem:[%s197 + $0x22] sm:$0xff]
        %v465 = vld [vmem:[%s197 + $0x32] sm:$0xff]
        %v466 = vld [vmem:[%s197 + $0x3a] sm:$0xff]
        %v467 = vld [vmem:[%s197 + $0x4a] sm:$0xff]
        %v468 = vld [vmem:[%s197 + $0x52] sm:$0xff]
        %v469 = vld [vmem:[%s197 + $0x62] sm:$0xff]
        %v470 = vld [vmem:[%s197 + $0x6a] sm:$0xff]
        %v471 = vld [vmem:[%s197 + $0x7a] sm:$0xff]
        %v472 = vld [vmem:[%s197 + $0x82] sm:$0xff]
        %v473 = vld [vmem:[%s197 + $0x92] sm:$0xff]
        %v474 = vld [vmem:[%s197 + $0x9a] sm:$0xff]
        %v475 = vld [vmem:[%s197 + $0xaa] sm:$0xff]
        %v476 = vld [vmem:[%s197 + $0xb2] sm:$0xff]
        %v477 = vld [vmem:[%s197 + $0xc2] sm:$0xff]
        %v478 = vld [vmem:[%s197 + $0xca] sm:$0xff]
        %v479 = vld [vmem:[%s197 + $0xda] sm:$0xff]
        %v480 = vld [vmem:[%s197 + $0xe2] sm:$0xff]
        %v481 = vld [vmem:[%s197 + $0xf2] sm:$0xff]
        %v482 = vld [vmem:[%s197 + $0xfa] sm:$0xff]
        %v483 = vld [vmem:[%s197 + $0x10a] sm:$0xff]
        %v484 = vld [vmem:[%s197 + $0x112] sm:$0xff]
        %v485 = vld [vmem:[%s197 + $0x122] sm:$0xff]
        %v486 = vld [vmem:[%s197 + $0x12a] sm:$0xff]
        %v487 = vld [vmem:[%s197 + $0x13a] sm:$0xff]
        %v488 = vld [vmem:[%s197 + $0x142] sm:$0xff]
        %v489 = vld [vmem:[%s197 + $0x152] sm:$0xff]
        %v490 = vld [vmem:[%s197 + $0x15a] sm:$0xff]
        %v491 = vld [vmem:[%s197 + $0x16a] sm:$0xff]
        %v492 = vld [vmem:[%s197 + $0x172] sm:$0xff]
        %525 = vrot.lane.b32.xlu0 %v461, 8
        %v526 = vpop.permute.xlu0 %525
        %527 = vrot.lane.b32.xlu0 %v462, 8
        %v528 = vpop.permute.xlu0 %527
        %529 = vrot.lane.b32.xlu0 %v463, 8
        %v530 = vpop.permute.xlu0 %529
        %531 = vrot.lane.b32.xlu0 %v464, 8
        %v532 = vpop.permute.xlu0 %531
        %533 = vrot.lane.b32.xlu0 %v465, 8
        %v534 = vpop.permute.xlu0 %533
        %535 = vrot.lane.b32.xlu0 %v466, 8
        %v536 = vpop.permute.xlu0 %535
        %537 = vrot.lane.b32.xlu0 %v467, 8
        %v538 = vpop.permute.xlu0 %537
        %539 = vrot.lane.b32.xlu0 %v468, 8
        %v540 = vpop.permute.xlu0 %539
        %541 = vrot.lane.b32.xlu0 %v469, 8
        %v542 = vpop.permute.xlu0 %541
        %543 = vrot.lane.b32.xlu0 %v470, 8
        %v544 = vpop.permute.xlu0 %543
        %545 = vrot.lane.b32.xlu0 %v471, 8
        %v546 = vpop.permute.xlu0 %545
        %547 = vrot.lane.b32.xlu0 %v472, 8
        %v548 = vpop.permute.xlu0 %547
        %549 = vrot.lane.b32.xlu0 %v473, 8
        %v550 = vpop.permute.xlu0 %549
        %551 = vrot.lane.b32.xlu0 %v474, 8
        %v552 = vpop.permute.xlu0 %551
        %553 = vrot.lane.b32.xlu0 %v475, 8
        %v554 = vpop.permute.xlu0 %553
        %555 = vrot.lane.b32.xlu0 %v476, 8
        %v556 = vpop.permute.xlu0 %555
        %557 = vrot.lane.b32.xlu0 %v477, 8
        %v558 = vpop.permute.xlu0 %557
        %559 = vrot.lane.b32.xlu0 %v478, 8
        %v560 = vpop.permute.xlu0 %559
        %561 = vrot.lane.b32.xlu0 %v479, 8
        %v562 = vpop.permute.xlu0 %561
        %563 = vrot.lane.b32.xlu0 %v480, 8
        %v564 = vpop.permute.xlu0 %563
        %565 = vrot.lane.b32.xlu0 %v481, 8
        %v566 = vpop.permute.xlu0 %565
        %567 = vrot.lane.b32.xlu0 %v482, 8
        %v568 = vpop.permute.xlu0 %567
        %569 = vrot.lane.b32.xlu0 %v483, 8
        %v570 = vpop.permute.xlu0 %569
        %571 = vrot.lane.b32.xlu0 %v484, 8
        %v572 = vpop.permute.xlu0 %571
        %573 = vrot.lane.b32.xlu0 %v485, 8
        %v574 = vpop.permute.xlu0 %573
        %575 = vrot.lane.b32.xlu0 %v486, 8
        %v576 = vpop.permute.xlu0 %575
        %577 = vrot.lane.b32.xlu0 %v487, 8
        %v578 = vpop.permute.xlu0 %577
        %579 = vrot.lane.b32.xlu0 %v488, 8
        %v580 = vpop.permute.xlu0 %579
        %581 = vrot.lane.b32.xlu0 %v489, 8
        %v582 = vpop.permute.xlu0 %581
        %583 = vrot.lane.b32.xlu0 %v490, 8
        %v584 = vpop.permute.xlu0 %583
        %585 = vrot.lane.b32.xlu0 %v491, 8
        %v586 = vpop.permute.xlu0 %585
        %587 = vrot.lane.b32.xlu0 %v492, 8
        %v588 = vpop.permute.xlu0 %587
        %vm621 = vcmask 97344
        %622 = vst.msk [vmem:[#allocation2] sm:$0xff] %vm621, %v526
        %623 = vst.msk [vmem:[#allocation2 + $0x10] sm:$0xff] %vm621, %v528
        %624 = vst.msk [vmem:[#allocation2 + $0x20] sm:$0xff] %vm621, %v530
        %625 = vst.msk [vmem:[#allocation2 + $0x30] sm:$0xff] %vm621, %v532
        %626 = vst.msk [vmem:[#allocation2 + $0x40] sm:$0xff] %vm621, %v534
        %627 = vst.msk [vmem:[#allocation2 + $0x50] sm:$0xff] %vm621, %v536
        %628 = vst.msk [vmem:[#allocation2 + $0x60] sm:$0xff] %vm621, %v538
        %629 = vst.msk [vmem:[#allocation2 + $0x70] sm:$0xff] %vm621, %v540
        %630 = vst.msk [vmem:[#allocation2 + $0x80] sm:$0xff] %vm621, %v542
        %631 = vst.msk [vmem:[#allocation2 + $0x90] sm:$0xff] %vm621, %v544
        %632 = vst.msk [vmem:[#allocation2 + $0xa0] sm:$0xff] %vm621, %v546
        %633 = vst.msk [vmem:[#allocation2 + $0xb0] sm:$0xff] %vm621, %v548
        %634 = vst.msk [vmem:[#allocation2 + $0xc0] sm:$0xff] %vm621, %v550
        %635 = vst.msk [vmem:[#allocation2 + $0xd0] sm:$0xff] %vm621, %v552
        %636 = vst.msk [vmem:[#allocation2 + $0xe0] sm:$0xff] %vm621, %v554
        %637 = vst.msk [vmem:[#allocation2 + $0xf0] sm:$0xff] %vm621, %v556
        %638 = vst.msk [vmem:[#allocation2 + $0x100] sm:$0xff] %vm621, %v558
        %639 = vst.msk [vmem:[#allocation2 + $0x110] sm:$0xff] %vm621, %v560
        %640 = vst.msk [vmem:[#allocation2 + $0x120] sm:$0xff] %vm621, %v562
        %641 = vst.msk [vmem:[#allocation2 + $0x130] sm:$0xff] %vm621, %v564
        %642 = vst.msk [vmem:[#allocation2 + $0x140] sm:$0xff] %vm621, %v566
        %643 = vst.msk [vmem:[#allocation2 + $0x150] sm:$0xff] %vm621, %v568
        %644 = vst.msk [vmem:[#allocation2 + $0x160] sm:$0xff] %vm621, %v570
        %645 = vst.msk [vmem:[#allocation2 + $0x170] sm:$0xff] %vm621, %v572
        %646 = vst.msk [vmem:[#allocation2 + $0x180] sm:$0xff] %vm621, %v574
        %647 = vst.msk [vmem:[#allocation2 + $0x190] sm:$0xff] %vm621, %v576
        %648 = vst.msk [vmem:[#allocation2 + $0x1a0] sm:$0xff] %vm621, %v578
        %649 = vst.msk [vmem:[#allocation2 + $0x1b0] sm:$0xff] %vm621, %v580
        %650 = vst.msk [vmem:[#allocation2 + $0x1c0] sm:$0xff] %vm621, %v582
        %651 = vst.msk [vmem:[#allocation2 + $0x1d0] sm:$0xff] %vm621, %v584
        %652 = vst.msk [vmem:[#allocation2 + $0x1e0] sm:$0xff] %vm621, %v586
        %653 = vst.msk [vmem:[#allocation2 + $0x1f0] sm:$0xff] %vm621, %v588
        %v654 = vld [vmem:[%s197 + $0x3] sm:$0xff]
        %v655 = vld [vmem:[%s197 + $0xb] sm:$0xff]
        %v656 = vld [vmem:[%s197 + $0x1b] sm:$0xff]
        %v657 = vld [vmem:[%s197 + $0x23] sm:$0xff]
        %v658 = vld [vmem:[%s197 + $0x33] sm:$0xff]
        %v659 = vld [vmem:[%s197 + $0x3b] sm:$0xff]
        %v660 = vld [vmem:[%s197 + $0x4b] sm:$0xff]
        %v661 = vld [vmem:[%s197 + $0x53] sm:$0xff]
        %v662 = vld [vmem:[%s197 + $0x63] sm:$0xff]
        %v663 = vld [vmem:[%s197 + $0x6b] sm:$0xff]
        %v664 = vld [vmem:[%s197 + $0x7b] sm:$0xff]
        %v665 = vld [vmem:[%s197 + $0x83] sm:$0xff]
        %v666 = vld [vmem:[%s197 + $0x93] sm:$0xff]
        %v667 = vld [vmem:[%s197 + $0x9b] sm:$0xff]
        %v668 = vld [vmem:[%s197 + $0xab] sm:$0xff]
        %v669 = vld [vmem:[%s197 + $0xb3] sm:$0xff]
        %v670 = vld [vmem:[%s197 + $0xc3] sm:$0xff]
        %v671 = vld [vmem:[%s197 + $0xcb] sm:$0xff]
        %v672 = vld [vmem:[%s197 + $0xdb] sm:$0xff]
        %v673 = vld [vmem:[%s197 + $0xe3] sm:$0xff]
        %v674 = vld [vmem:[%s197 + $0xf3] sm:$0xff]
        %v675 = vld [vmem:[%s197 + $0xfb] sm:$0xff]
        %v676 = vld [vmem:[%s197 + $0x10b] sm:$0xff]
        %v677 = vld [vmem:[%s197 + $0x113] sm:$0xff]
        %v678 = vld [vmem:[%s197 + $0x123] sm:$0xff]
        %v679 = vld [vmem:[%s197 + $0x12b] sm:$0xff]
        %v680 = vld [vmem:[%s197 + $0x13b] sm:$0xff]
        %v681 = vld [vmem:[%s197 + $0x143] sm:$0xff]
        %v682 = vld [vmem:[%s197 + $0x153] sm:$0xff]
        %v683 = vld [vmem:[%s197 + $0x15b] sm:$0xff]
        %v684 = vld [vmem:[%s197 + $0x16b] sm:$0xff]
        %v685 = vld [vmem:[%s197 + $0x173] sm:$0xff]
        %718 = vrot.lane.b32.xlu0 %v654, 12
        %v719 = vpop.permute.xlu0 %718
        %720 = vrot.lane.b32.xlu0 %v655, 12
        %v721 = vpop.permute.xlu0 %720
        %722 = vrot.lane.b32.xlu0 %v656, 12
        %v723 = vpop.permute.xlu0 %722
        %724 = vrot.lane.b32.xlu0 %v657, 12
        %v725 = vpop.permute.xlu0 %724
        %726 = vrot.lane.b32.xlu0 %v658, 12
        %v727 = vpop.permute.xlu0 %726
        %728 = vrot.lane.b32.xlu0 %v659, 12
        %v729 = vpop.permute.xlu0 %728
        %730 = vrot.lane.b32.xlu0 %v660, 12
        %v731 = vpop.permute.xlu0 %730
        %732 = vrot.lane.b32.xlu0 %v661, 12
        %v733 = vpop.permute.xlu0 %732
        %734 = vrot.lane.b32.xlu0 %v662, 12
        %v735 = vpop.permute.xlu0 %734
        %736 = vrot.lane.b32.xlu0 %v663, 12
        %v737 = vpop.permute.xlu0 %736
        %738 = vrot.lane.b32.xlu0 %v664, 12
        %v739 = vpop.permute.xlu0 %738
        %740 = vrot.lane.b32.xlu0 %v665, 12
        %v741 = vpop.permute.xlu0 %740
        %742 = vrot.lane.b32.xlu0 %v666, 12
        %v743 = vpop.permute.xlu0 %742
        %744 = vrot.lane.b32.xlu0 %v667, 12
        %v745 = vpop.permute.xlu0 %744
        %746 = vrot.lane.b32.xlu0 %v668, 12
        %v747 = vpop.permute.xlu0 %746
        %748 = vrot.lane.b32.xlu0 %v669, 12
        %v749 = vpop.permute.xlu0 %748
        %750 = vrot.lane.b32.xlu0 %v670, 12
        %v751 = vpop.permute.xlu0 %750
        %752 = vrot.lane.b32.xlu0 %v671, 12
        %v753 = vpop.permute.xlu0 %752
        %754 = vrot.lane.b32.xlu0 %v672, 12
        %v755 = vpop.permute.xlu0 %754
        %756 = vrot.lane.b32.xlu0 %v673, 12
        %v757 = vpop.permute.xlu0 %756
        %758 = vrot.lane.b32.xlu0 %v674, 12
        %v759 = vpop.permute.xlu0 %758
        %760 = vrot.lane.b32.xlu0 %v675, 12
        %v761 = vpop.permute.xlu0 %760
        %762 = vrot.lane.b32.xlu0 %v676, 12
        %v763 = vpop.permute.xlu0 %762
        %764 = vrot.lane.b32.xlu0 %v677, 12
        %v765 = vpop.permute.xlu0 %764
        %766 = vrot.lane.b32.xlu0 %v678, 12
        %v767 = vpop.permute.xlu0 %766
        %768 = vrot.lane.b32.xlu0 %v679, 12
        %v769 = vpop.permute.xlu0 %768
        %770 = vrot.lane.b32.xlu0 %v680, 12
        %v771 = vpop.permute.xlu0 %770
        %772 = vrot.lane.b32.xlu0 %v681, 12
        %v773 = vpop.permute.xlu0 %772
        %774 = vrot.lane.b32.xlu0 %v682, 12
        %v775 = vpop.permute.xlu0 %774
        %776 = vrot.lane.b32.xlu0 %v683, 12
        %v777 = vpop.permute.xlu0 %776
        %778 = vrot.lane.b32.xlu0 %v684, 12
        %v779 = vpop.permute.xlu0 %778
        %780 = vrot.lane.b32.xlu0 %v685, 12
        %v781 = vpop.permute.xlu0 %780
        %vm814 = vcmask 130144
        %815 = vst.msk [vmem:[#allocation2] sm:$0xff] %vm814, %v719
        %816 = vst.msk [vmem:[#allocation2 + $0x10] sm:$0xff] %vm814, %v721
        %817 = vst.msk [vmem:[#allocation2 + $0x20] sm:$0xff] %vm814, %v723
        %818 = vst.msk [vmem:[#allocation2 + $0x30] sm:$0xff] %vm814, %v725
        %819 = vst.msk [vmem:[#allocation2 + $0x40] sm:$0xff] %vm814, %v727
        %820 = vst.msk [vmem:[#allocation2 + $0x50] sm:$0xff] %vm814, %v729
        %821 = vst.msk [vmem:[#allocation2 + $0x60] sm:$0xff] %vm814, %v731
        %822 = vst.msk [vmem:[#allocation2 + $0x70] sm:$0xff] %vm814, %v733
        %823 = vst.msk [vmem:[#allocation2 + $0x80] sm:$0xff] %vm814, %v735
        %824 = vst.msk [vmem:[#allocation2 + $0x90] sm:$0xff] %vm814, %v737
        %825 = vst.msk [vmem:[#allocation2 + $0xa0] sm:$0xff] %vm814, %v739
        %826 = vst.msk [vmem:[#allocation2 + $0xb0] sm:$0xff] %vm814, %v741
        %827 = vst.msk [vmem:[#allocation2 + $0xc0] sm:$0xff] %vm814, %v743
        %828 = vst.msk [vmem:[#allocation2 + $0xd0] sm:$0xff] %vm814, %v745
        %829 = vst.msk [vmem:[#allocation2 + $0xe0] sm:$0xff] %vm814, %v747
        %830 = vst.msk [vmem:[#allocation2 + $0xf0] sm:$0xff] %vm814, %v749
        %831 = vst.msk [vmem:[#allocation2 + $0x100] sm:$0xff] %vm814, %v751
        %832 = vst.msk [vmem:[#allocation2 + $0x110] sm:$0xff] %vm814, %v753
        %833 = vst.msk [vmem:[#allocation2 + $0x120] sm:$0xff] %vm814, %v755
        %834 = vst.msk [vmem:[#allocation2 + $0x130] sm:$0xff] %vm814, %v757
        %835 = vst.msk [vmem:[#allocation2 + $0x140] sm:$0xff] %vm814, %v759
        %836 = vst.msk [vmem:[#allocation2 + $0x150] sm:$0xff] %vm814, %v761
        %837 = vst.msk [vmem:[#allocation2 + $0x160] sm:$0xff] %vm814, %v763
        %838 = vst.msk [vmem:[#allocation2 + $0x170] sm:$0xff] %vm814, %v765
        %839 = vst.msk [vmem:[#allocation2 + $0x180] sm:$0xff] %vm814, %v767
        %840 = vst.msk [vmem:[#allocation2 + $0x190] sm:$0xff] %vm814, %v769
        %841 = vst.msk [vmem:[#allocation2 + $0x1a0] sm:$0xff] %vm814, %v771
        %842 = vst.msk [vmem:[#allocation2 + $0x1b0] sm:$0xff] %vm814, %v773
        %843 = vst.msk [vmem:[#allocation2 + $0x1c0] sm:$0xff] %vm814, %v775
        %844 = vst.msk [vmem:[#allocation2 + $0x1d0] sm:$0xff] %vm814, %v777
        %845 = vst.msk [vmem:[#allocation2 + $0x1e0] sm:$0xff] %vm814, %v779
        %846 = vst.msk [vmem:[#allocation2 + $0x1f0] sm:$0xff] %vm814, %v781
        %v847 = vld [vmem:[%s197 + $0x4] sm:$0xff]
        %v848 = vld [vmem:[%s197 + $0xc] sm:$0xff]
        %v849 = vld [vmem:[%s197 + $0x1c] sm:$0xff]
        %v850 = vld [vmem:[%s197 + $0x24] sm:$0xff]
        %v851 = vld [vmem:[%s197 + $0x34] sm:$0xff]
        %v852 = vld [vmem:[%s197 + $0x3c] sm:$0xff]
        %v853 = vld [vmem:[%s197 + $0x4c] sm:$0xff]
        %v854 = vld [vmem:[%s197 + $0x54] sm:$0xff]
        %v855 = vld [vmem:[%s197 + $0x64] sm:$0xff]
        %v856 = vld [vmem:[%s197 + $0x6c] sm:$0xff]
        %v857 = vld [vmem:[%s197 + $0x7c] sm:$0xff]
        %v858 = vld [vmem:[%s197 + $0x84] sm:$0xff]
        %v859 = vld [vmem:[%s197 + $0x94] sm:$0xff]
        %v860 = vld [vmem:[%s197 + $0x9c] sm:$0xff]
        %v861 = vld [vmem:[%s197 + $0xac] sm:$0xff]
        %v862 = vld [vmem:[%s197 + $0xb4] sm:$0xff]
        %v863 = vld [vmem:[%s197 + $0xc4] sm:$0xff]
        %v864 = vld [vmem:[%s197 + $0xcc] sm:$0xff]
        %v865 = vld [vmem:[%s197 + $0xdc] sm:$0xff]
        %v866 = vld [vmem:[%s197 + $0xe4] sm:$0xff]
        %v867 = vld [vmem:[%s197 + $0xf4] sm:$0xff]
        %v868 = vld [vmem:[%s197 + $0xfc] sm:$0xff]
        %v869 = vld [vmem:[%s197 + $0x10c] sm:$0xff]
        %v870 = vld [vmem:[%s197 + $0x114] sm:$0xff]
        %v871 = vld [vmem:[%s197 + $0x124] sm:$0xff]
        %v872 = vld [vmem:[%s197 + $0x12c] sm:$0xff]
        %v873 = vld [vmem:[%s197 + $0x13c] sm:$0xff]
        %v874 = vld [vmem:[%s197 + $0x144] sm:$0xff]
        %v875 = vld [vmem:[%s197 + $0x154] sm:$0xff]
        %v876 = vld [vmem:[%s197 + $0x15c] sm:$0xff]
        %v877 = vld [vmem:[%s197 + $0x16c] sm:$0xff]
        %v878 = vld [vmem:[%s197 + $0x174] sm:$0xff]
        %911 = vrot.lane.b32.xlu0 %v847, 16
        %v912 = vpop.permute.xlu0 %911
        %913 = vrot.lane.b32.xlu0 %v848, 16
        %v914 = vpop.permute.xlu0 %913
        %915 = vrot.lane.b32.xlu0 %v849, 16
        %v916 = vpop.permute.xlu0 %915
        %917 = vrot.lane.b32.xlu0 %v850, 16
        %v918 = vpop.permute.xlu0 %917
        %919 = vrot.lane.b32.xlu0 %v851, 16
        %v920 = vpop.permute.xlu0 %919
        %921 = vrot.lane.b32.xlu0 %v852, 16
        %v922 = vpop.permute.xlu0 %921
        %923 = vrot.lane.b32.xlu0 %v853, 16
        %v924 = vpop.permute.xlu0 %923
        %925 = vrot.lane.b32.xlu0 %v854, 16
        %v926 = vpop.permute.xlu0 %925
        %927 = vrot.lane.b32.xlu0 %v855, 16
        %v928 = vpop.permute.xlu0 %927
        %929 = vrot.lane.b32.xlu0 %v856, 16
        %v930 = vpop.permute.xlu0 %929
        %931 = vrot.lane.b32.xlu0 %v857, 16
        %v932 = vpop.permute.xlu0 %931
        %933 = vrot.lane.b32.xlu0 %v858, 16
        %v934 = vpop.permute.xlu0 %933
        %935 = vrot.lane.b32.xlu0 %v859, 16
        %v936 = vpop.permute.xlu0 %935
        %937 = vrot.lane.b32.xlu0 %v860, 16
        %v938 = vpop.permute.xlu0 %937
        %939 = vrot.lane.b32.xlu0 %v861, 16
        %v940 = vpop.permute.xlu0 %939
        %941 = vrot.lane.b32.xlu0 %v862, 16
        %v942 = vpop.permute.xlu0 %941
        %943 = vrot.lane.b32.xlu0 %v863, 16
        %v944 = vpop.permute.xlu0 %943
        %945 = vrot.lane.b32.xlu0 %v864, 16
        %v946 = vpop.permute.xlu0 %945
        %947 = vrot.lane.b32.xlu0 %v865, 16
        %v948 = vpop.permute.xlu0 %947
        %949 = vrot.lane.b32.xlu0 %v866, 16
        %v950 = vpop.permute.xlu0 %949
        %951 = vrot.lane.b32.xlu0 %v867, 16
        %v952 = vpop.permute.xlu0 %951
        %953 = vrot.lane.b32.xlu0 %v868, 16
        %v954 = vpop.permute.xlu0 %953
        %955 = vrot.lane.b32.xlu0 %v869, 16
        %v956 = vpop.permute.xlu0 %955
        %957 = vrot.lane.b32.xlu0 %v870, 16
        %v958 = vpop.permute.xlu0 %957
        %959 = vrot.lane.b32.xlu0 %v871, 16
        %v960 = vpop.permute.xlu0 %959
        %961 = vrot.lane.b32.xlu0 %v872, 16
        %v962 = vpop.permute.xlu0 %961
        %963 = vrot.lane.b32.xlu0 %v873, 16
        %v964 = vpop.permute.xlu0 %963
        %965 = vrot.lane.b32.xlu0 %v874, 16
        %v966 = vpop.permute.xlu0 %965
        %967 = vrot.lane.b32.xlu0 %v875, 16
        %v968 = vpop.permute.xlu0 %967
        %969 = vrot.lane.b32.xlu0 %v876, 16
        %v970 = vpop.permute.xlu0 %969
        %971 = vrot.lane.b32.xlu0 %v877, 16
        %v972 = vpop.permute.xlu0 %971
        %973 = vrot.lane.b32.xlu0 %v878, 16
        %v974 = vpop.permute.xlu0 %973
        %vm1007 = vcmask 162944
        %1008 = vst.msk [vmem:[#allocation2] sm:$0xff] %vm1007, %v912
        %1009 = vst.msk [vmem:[#allocation2 + $0x10] sm:$0xff] %vm1007, %v914
        %1010 = vst.msk [vmem:[#allocation2 + $0x20] sm:$0xff] %vm1007, %v916
        %1011 = vst.msk [vmem:[#allocation2 + $0x30] sm:$0xff] %vm1007, %v918
        %1012 = vst.msk [vmem:[#allocation2 + $0x40] sm:$0xff] %vm1007, %v920
        %1013 = vst.msk [vmem:[#allocation2 + $0x50] sm:$0xff] %vm1007, %v922
        %1014 = vst.msk [vmem:[#allocation2 + $0x60] sm:$0xff] %vm1007, %v924
        %1015 = vst.msk [vmem:[#allocation2 + $0x70] sm:$0xff] %vm1007, %v926
        %1016 = vst.msk [vmem:[#allocation2 + $0x80] sm:$0xff] %vm1007, %v928
        %1017 = vst.msk [vmem:[#allocation2 + $0x90] sm:$0xff] %vm1007, %v930
        %1018 = vst.msk [vmem:[#allocation2 + $0xa0] sm:$0xff] %vm1007, %v932
        %1019 = vst.msk [vmem:[#allocation2 + $0xb0] sm:$0xff] %vm1007, %v934
        %1020 = vst.msk [vmem:[#allocation2 + $0xc0] sm:$0xff] %vm1007, %v936
        %1021 = vst.msk [vmem:[#allocation2 + $0xd0] sm:$0xff] %vm1007, %v938
        %1022 = vst.msk [vmem:[#allocation2 + $0xe0] sm:$0xff] %vm1007, %v940
        %1023 = vst.msk [vmem:[#allocation2 + $0xf0] sm:$0xff] %vm1007, %v942
        %1024 = vst.msk [vmem:[#allocation2 + $0x100] sm:$0xff] %vm1007, %v944
        %1025 = vst.msk [vmem:[#allocation2 + $0x110] sm:$0xff] %vm1007, %v946
        %1026 = vst.msk [vmem:[#allocation2 + $0x120] sm:$0xff] %vm1007, %v948
        %1027 = vst.msk [vmem:[#allocation2 + $0x130] sm:$0xff] %vm1007, %v950
        %1028 = vst.msk [vmem:[#allocation2 + $0x140] sm:$0xff] %vm1007, %v952
        %1029 = vst.msk [vmem:[#allocation2 + $0x150] sm:$0xff] %vm1007, %v954
        %1030 = vst.msk [vmem:[#allocation2 + $0x160] sm:$0xff] %vm1007, %v956
        %1031 = vst.msk [vmem:[#allocation2 + $0x170] sm:$0xff] %vm1007, %v958
        %1032 = vst.msk [vmem:[#allocation2 + $0x180] sm:$0xff] %vm1007, %v960
        %1033 = vst.msk [vmem:[#allocation2 + $0x190] sm:$0xff] %vm1007, %v962
        %1034 = vst.msk [vmem:[#allocation2 + $0x1a0] sm:$0xff] %vm1007, %v964
        %1035 = vst.msk [vmem:[#allocation2 + $0x1b0] sm:$0xff] %vm1007, %v966
        %1036 = vst.msk [vmem:[#allocation2 + $0x1c0] sm:$0xff] %vm1007, %v968
        %1037 = vst.msk [vmem:[#allocation2 + $0x1d0] sm:$0xff] %vm1007, %v970
        %1038 = vst.msk [vmem:[#allocation2 + $0x1e0] sm:$0xff] %vm1007, %v972
        %1039 = vst.msk [vmem:[#allocation2 + $0x1f0] sm:$0xff] %vm1007, %v974
        %v1040 = vld [vmem:[%s197 + $0x5] sm:$0xff]
        %v1041 = vld [vmem:[%s197 + $0xd] sm:$0xff]
        %v1042 = vld [vmem:[%s197 + $0x1d] sm:$0xff]
        %v1043 = vld [vmem:[%s197 + $0x25] sm:$0xff]
        %v1044 = vld [vmem:[%s197 + $0x35] sm:$0xff]
        %v1045 = vld [vmem:[%s197 + $0x3d] sm:$0xff]
        %v1046 = vld [vmem:[%s197 + $0x4d] sm:$0xff]
        %v1047 = vld [vmem:[%s197 + $0x55] sm:$0xff]
        %v1048 = vld [vmem:[%s197 + $0x65] sm:$0xff]
        %v1049 = vld [vmem:[%s197 + $0x6d] sm:$0xff]
        %v1050 = vld [vmem:[%s197 + $0x7d] sm:$0xff]
        %v1051 = vld [vmem:[%s197 + $0x85] sm:$0xff]
        %v1052 = vld [vmem:[%s197 + $0x95] sm:$0xff]
        %v1053 = vld [vmem:[%s197 + $0x9d] sm:$0xff]
        %v1054 = vld [vmem:[%s197 + $0xad] sm:$0xff]
        %v1055 = vld [vmem:[%s197 + $0xb5] sm:$0xff]
        %v1056 = vld [vmem:[%s197 + $0xc5] sm:$0xff]
        %v1057 = vld [vmem:[%s197 + $0xcd] sm:$0xff]
        %v1058 = vld [vmem:[%s197 + $0xdd] sm:$0xff]
        %v1059 = vld [vmem:[%s197 + $0xe5] sm:$0xff]
        %v1060 = vld [vmem:[%s197 + $0xf5] sm:$0xff]
        %v1061 = vld [vmem:[%s197 + $0xfd] sm:$0xff]
        %v1062 = vld [vmem:[%s197 + $0x10d] sm:$0xff]
        %v1063 = vld [vmem:[%s197 + $0x115] sm:$0xff]
        %v1064 = vld [vmem:[%s197 + $0x125] sm:$0xff]
        %v1065 = vld [vmem:[%s197 + $0x12d] sm:$0xff]
        %v1066 = vld [vmem:[%s197 + $0x13d] sm:$0xff]
        %v1067 = vld [vmem:[%s197 + $0x145] sm:$0xff]
        %v1068 = vld [vmem:[%s197 + $0x155] sm:$0xff]
        %v1069 = vld [vmem:[%s197 + $0x15d] sm:$0xff]
        %v1070 = vld [vmem:[%s197 + $0x16d] sm:$0xff]
        %v1071 = vld [vmem:[%s197 + $0x175] sm:$0xff]
        %1104 = vrot.lane.b32.xlu0 %v1040, 20
        %v1105 = vpop.permute.xlu0 %1104
        %1106 = vrot.lane.b32.xlu0 %v1041, 20
        %v1107 = vpop.permute.xlu0 %1106
        %1108 = vrot.lane.b32.xlu0 %v1042, 20
        %v1109 = vpop.permute.xlu0 %1108
        %1110 = vrot.lane.b32.xlu0 %v1043, 20
        %v1111 = vpop.permute.xlu0 %1110
        %1112 = vrot.lane.b32.xlu0 %v1044, 20
        %v1113 = vpop.permute.xlu0 %1112
        %1114 = vrot.lane.b32.xlu0 %v1045, 20
        %v1115 = vpop.permute.xlu0 %1114
        %1116 = vrot.lane.b32.xlu0 %v1046, 20
        %v1117 = vpop.permute.xlu0 %1116
        %1118 = vrot.lane.b32.xlu0 %v1047, 20
        %v1119 = vpop.permute.xlu0 %1118
        %1120 = vrot.lane.b32.xlu0 %v1048, 20
        %v1121 = vpop.permute.xlu0 %1120
        %1122 = vrot.lane.b32.xlu0 %v1049, 20
        %v1123 = vpop.permute.xlu0 %1122
        %1124 = vrot.lane.b32.xlu0 %v1050, 20
        %v1125 = vpop.permute.xlu0 %1124
        %1126 = vrot.lane.b32.xlu0 %v1051, 20
        %v1127 = vpop.permute.xlu0 %1126
        %1128 = vrot.lane.b32.xlu0 %v1052, 20
        %v1129 = vpop.permute.xlu0 %1128
        %1130 = vrot.lane.b32.xlu0 %v1053, 20
        %v1131 = vpop.permute.xlu0 %1130
        %1132 = vrot.lane.b32.xlu0 %v1054, 20
        %v1133 = vpop.permute.xlu0 %1132
        %1134 = vrot.lane.b32.xlu0 %v1055, 20
        %v1135 = vpop.permute.xlu0 %1134
        %1136 = vrot.lane.b32.xlu0 %v1056, 20
        %v1137 = vpop.permute.xlu0 %1136
        %1138 = vrot.lane.b32.xlu0 %v1057, 20
        %v1139 = vpop.permute.xlu0 %1138
        %1140 = vrot.lane.b32.xlu0 %v1058, 20
        %v1141 = vpop.permute.xlu0 %1140
        %1142 = vrot.lane.b32.xlu0 %v1059, 20
        %v1143 = vpop.permute.xlu0 %1142
        %1144 = vrot.lane.b32.xlu0 %v1060, 20
        %v1145 = vpop.permute.xlu0 %1144
        %1146 = vrot.lane.b32.xlu0 %v1061, 20
        %v1147 = vpop.permute.xlu0 %1146
        %1148 = vrot.lane.b32.xlu0 %v1062, 20
        %v1149 = vpop.permute.xlu0 %1148
        %1150 = vrot.lane.b32.xlu0 %v1063, 20
        %v1151 = vpop.permute.xlu0 %1150
        %1152 = vrot.lane.b32.xlu0 %v1064, 20
        %v1153 = vpop.permute.xlu0 %1152
        %1154 = vrot.lane.b32.xlu0 %v1065, 20
        %v1155 = vpop.permute.xlu0 %1154
        %1156 = vrot.lane.b32.xlu0 %v1066, 20
        %v1157 = vpop.permute.xlu0 %1156
        %1158 = vrot.lane.b32.xlu0 %v1067, 20
        %v1159 = vpop.permute.xlu0 %1158
        %1160 = vrot.lane.b32.xlu0 %v1068, 20
        %v1161 = vpop.permute.xlu0 %1160
        %1162 = vrot.lane.b32.xlu0 %v1069, 20
        %v1163 = vpop.permute.xlu0 %1162
        %1164 = vrot.lane.b32.xlu0 %v1070, 20
        %v1165 = vpop.permute.xlu0 %1164
        %1166 = vrot.lane.b32.xlu0 %v1071, 20
        %v1167 = vpop.permute.xlu0 %1166
        %vm1200 = vcmask 195744
        %1201 = vst.msk [vmem:[#allocation2] sm:$0xff] %vm1200, %v1105
        %1202 = vst.msk [vmem:[#allocation2 + $0x10] sm:$0xff] %vm1200, %v1107
        %1203 = vst.msk [vmem:[#allocation2 + $0x20] sm:$0xff] %vm1200, %v1109
        %1204 = vst.msk [vmem:[#allocation2 + $0x30] sm:$0xff] %vm1200, %v1111
        %1205 = vst.msk [vmem:[#allocation2 + $0x40] sm:$0xff] %vm1200, %v1113
        %1206 = vst.msk [vmem:[#allocation2 + $0x50] sm:$0xff] %vm1200, %v1115
        %1207 = vst.msk [vmem:[#allocation2 + $0x60] sm:$0xff] %vm1200, %v1117
        %1208 = vst.msk [vmem:[#allocation2 + $0x70] sm:$0xff] %vm1200, %v1119
        %1209 = vst.msk [vmem:[#allocation2 + $0x80] sm:$0xff] %vm1200, %v1121
        %1210 = vst.msk [vmem:[#allocation2 + $0x90] sm:$0xff] %vm1200, %v1123
        %1211 = vst.msk [vmem:[#allocation2 + $0xa0] sm:$0xff] %vm1200, %v1125
        %1212 = vst.msk [vmem:[#allocation2 + $0xb0] sm:$0xff] %vm1200, %v1127
        %1213 = vst.msk [vmem:[#allocation2 + $0xc0] sm:$0xff] %vm1200, %v1129
        %1214 = vst.msk [vmem:[#allocation2 + $0xd0] sm:$0xff] %vm1200, %v1131
        %1215 = vst.msk [vmem:[#allocation2 + $0xe0] sm:$0xff] %vm1200, %v1133
        %1216 = vst.msk [vmem:[#allocation2 + $0xf0] sm:$0xff] %vm1200, %v1135
        %1217 = vst.msk [vmem:[#allocation2 + $0x100] sm:$0xff] %vm1200, %v1137
        %1218 = vst.msk [vmem:[#allocation2 + $0x110] sm:$0xff] %vm1200, %v1139
        %1219 = vst.msk [vmem:[#allocation2 + $0x120] sm:$0xff] %vm1200, %v1141
        %1220 = vst.msk [vmem:[#allocation2 + $0x130] sm:$0xff] %vm1200, %v1143
        %1221 = vst.msk [vmem:[#allocation2 + $0x140] sm:$0xff] %vm1200, %v1145
        %1222 = vst.msk [vmem:[#allocation2 + $0x150] sm:$0xff] %vm1200, %v1147
        %1223 = vst.msk [vmem:[#allocation2 + $0x160] sm:$0xff] %vm1200, %v1149
        %1224 = vst.msk [vmem:[#allocation2 + $0x170] sm:$0xff] %vm1200, %v1151
        %1225 = vst.msk [vmem:[#allocation2 + $0x180] sm:$0xff] %vm1200, %v1153
        %1226 = vst.msk [vmem:[#allocation2 + $0x190] sm:$0xff] %vm1200, %v1155
        %1227 = vst.msk [vmem:[#allocation2 + $0x1a0] sm:$0xff] %vm1200, %v1157
        %1228 = vst.msk [vmem:[#allocation2 + $0x1b0] sm:$0xff] %vm1200, %v1159
        %1229 = vst.msk [vmem:[#allocation2 + $0x1c0] sm:$0xff] %vm1200, %v1161
        %1230 = vst.msk [vmem:[#allocation2 + $0x1d0] sm:$0xff] %vm1200, %v1163
        %1231 = vst.msk [vmem:[#allocation2 + $0x1e0] sm:$0xff] %vm1200, %v1165
        %1232 = vst.msk [vmem:[#allocation2 + $0x1f0] sm:$0xff] %vm1200, %v1167
        %v1233 = vld [vmem:[%s197 + $0x6] sm:$0xff]
        %v1234 = vld [vmem:[%s197 + $0xe] sm:$0xff]
        %v1235 = vld [vmem:[%s197 + $0x1e] sm:$0xff]
        %v1236 = vld [vmem:[%s197 + $0x26] sm:$0xff]
        %v1237 = vld [vmem:[%s197 + $0x36] sm:$0xff]
        %v1238 = vld [vmem:[%s197 + $0x3e] sm:$0xff]
        %v1239 = vld [vmem:[%s197 + $0x4e] sm:$0xff]
        %v1240 = vld [vmem:[%s197 + $0x56] sm:$0xff]
        %v1241 = vld [vmem:[%s197 + $0x66] sm:$0xff]
        %v1242 = vld [vmem:[%s197 + $0x6e] sm:$0xff]
        %v1243 = vld [vmem:[%s197 + $0x7e] sm:$0xff]
        %v1244 = vld [vmem:[%s197 + $0x86] sm:$0xff]
        %v1245 = vld [vmem:[%s197 + $0x96] sm:$0xff]
        %v1246 = vld [vmem:[%s197 + $0x9e] sm:$0xff]
        %v1247 = vld [vmem:[%s197 + $0xae] sm:$0xff]
        %v1248 = vld [vmem:[%s197 + $0xb6] sm:$0xff]
        %v1249 = vld [vmem:[%s197 + $0xc6] sm:$0xff]
        %v1250 = vld [vmem:[%s197 + $0xce] sm:$0xff]
        %v1251 = vld [vmem:[%s197 + $0xde] sm:$0xff]
        %v1252 = vld [vmem:[%s197 + $0xe6] sm:$0xff]
        %v1253 = vld [vmem:[%s197 + $0xf6] sm:$0xff]
        %v1254 = vld [vmem:[%s197 + $0xfe] sm:$0xff]
        %v1255 = vld [vmem:[%s197 + $0x10e] sm:$0xff]
        %v1256 = vld [vmem:[%s197 + $0x116] sm:$0xff]
        %v1257 = vld [vmem:[%s197 + $0x126] sm:$0xff]
        %v1258 = vld [vmem:[%s197 + $0x12e] sm:$0xff]
        %v1259 = vld [vmem:[%s197 + $0x13e] sm:$0xff]
        %v1260 = vld [vmem:[%s197 + $0x146] sm:$0xff]
        %v1261 = vld [vmem:[%s197 + $0x156] sm:$0xff]
        %v1262 = vld [vmem:[%s197 + $0x15e] sm:$0xff]
        %v1263 = vld [vmem:[%s197 + $0x16e] sm:$0xff]
        %v1264 = vld [vmem:[%s197 + $0x176] sm:$0xff]
        %1297 = vrot.lane.b32.xlu0 %v1233, 24
        %v1298 = vpop.permute.xlu0 %1297
        %1299 = vrot.lane.b32.xlu0 %v1234, 24
        %v1300 = vpop.permute.xlu0 %1299
        %1301 = vrot.lane.b32.xlu0 %v1235, 24
        %v1302 = vpop.permute.xlu0 %1301
        %1303 = vrot.lane.b32.xlu0 %v1236, 24
        %v1304 = vpop.permute.xlu0 %1303
        %1305 = vrot.lane.b32.xlu0 %v1237, 24
        %v1306 = vpop.permute.xlu0 %1305
        %1307 = vrot.lane.b32.xlu0 %v1238, 24
        %v1308 = vpop.permute.xlu0 %1307
        %1309 = vrot.lane.b32.xlu0 %v1239, 24
        %v1310 = vpop.permute.xlu0 %1309
        %1311 = vrot.lane.b32.xlu0 %v1240, 24
        %v1312 = vpop.permute.xlu0 %1311
        %1313 = vrot.lane.b32.xlu0 %v1241, 24
        %v1314 = vpop.permute.xlu0 %1313
        %1315 = vrot.lane.b32.xlu0 %v1242, 24
        %v1316 = vpop.permute.xlu0 %1315
        %1317 = vrot.lane.b32.xlu0 %v1243, 24
        %v1318 = vpop.permute.xlu0 %1317
        %1319 = vrot.lane.b32.xlu0 %v1244, 24
        %v1320 = vpop.permute.xlu0 %1319
        %1321 = vrot.lane.b32.xlu0 %v1245, 24
        %v1322 = vpop.permute.xlu0 %1321
        %1323 = vrot.lane.b32.xlu0 %v1246, 24
        %v1324 = vpop.permute.xlu0 %1323
        %1325 = vrot.lane.b32.xlu0 %v1247, 24
        %v1326 = vpop.permute.xlu0 %1325
        %1327 = vrot.lane.b32.xlu0 %v1248, 24
        %v1328 = vpop.permute.xlu0 %1327
        %1329 = vrot.lane.b32.xlu0 %v1249, 24
        %v1330 = vpop.permute.xlu0 %1329
        %1331 = vrot.lane.b32.xlu0 %v1250, 24
        %v1332 = vpop.permute.xlu0 %1331
        %1333 = vrot.lane.b32.xlu0 %v1251, 24
        %v1334 = vpop.permute.xlu0 %1333
        %1335 = vrot.lane.b32.xlu0 %v1252, 24
        %v1336 = vpop.permute.xlu0 %1335
        %1337 = vrot.lane.b32.xlu0 %v1253, 24
        %v1338 = vpop.permute.xlu0 %1337
        %1339 = vrot.lane.b32.xlu0 %v1254, 24
        %v1340 = vpop.permute.xlu0 %1339
        %1341 = vrot.lane.b32.xlu0 %v1255, 24
        %v1342 = vpop.permute.xlu0 %1341
        %1343 = vrot.lane.b32.xlu0 %v1256, 24
        %v1344 = vpop.permute.xlu0 %1343
        %1345 = vrot.lane.b32.xlu0 %v1257, 24
        %v1346 = vpop.permute.xlu0 %1345
        %1347 = vrot.lane.b32.xlu0 %v1258, 24
        %v1348 = vpop.permute.xlu0 %1347
        %1349 = vrot.lane.b32.xlu0 %v1259, 24
        %v1350 = vpop.permute.xlu0 %1349
        %1351 = vrot.lane.b32.xlu0 %v1260, 24
        %v1352 = vpop.permute.xlu0 %1351
        %1353 = vrot.lane.b32.xlu0 %v1261, 24
        %v1354 = vpop.permute.xlu0 %1353
        %1355 = vrot.lane.b32.xlu0 %v1262, 24
        %v1356 = vpop.permute.xlu0 %1355
        %1357 = vrot.lane.b32.xlu0 %v1263, 24
        %v1358 = vpop.permute.xlu0 %1357
        %1359 = vrot.lane.b32.xlu0 %v1264, 24
        %v1360 = vpop.permute.xlu0 %1359
        %vm1393 = vcmask 228544
        %1394 = vst.msk [vmem:[#allocation2] sm:$0xff] %vm1393, %v1298
        %1395 = vst.msk [vmem:[#allocation2 + $0x10] sm:$0xff] %vm1393, %v1300
        %1396 = vst.msk [vmem:[#allocation2 + $0x20] sm:$0xff] %vm1393, %v1302
        %1397 = vst.msk [vmem:[#allocation2 + $0x30] sm:$0xff] %vm1393, %v1304
        %1398 = vst.msk [vmem:[#allocation2 + $0x40] sm:$0xff] %vm1393, %v1306
        %1399 = vst.msk [vmem:[#allocation2 + $0x50] sm:$0xff] %vm1393, %v1308
        %1400 = vst.msk [vmem:[#allocation2 + $0x60] sm:$0xff] %vm1393, %v1310
        %1401 = vst.msk [vmem:[#allocation2 + $0x70] sm:$0xff] %vm1393, %v1312
        %1402 = vst.msk [vmem:[#allocation2 + $0x80] sm:$0xff] %vm1393, %v1314
        %1403 = vst.msk [vmem:[#allocation2 + $0x90] sm:$0xff] %vm1393, %v1316
        %1404 = vst.msk [vmem:[#allocation2 + $0xa0] sm:$0xff] %vm1393, %v1318
        %1405 = vst.msk [vmem:[#allocation2 + $0xb0] sm:$0xff] %vm1393, %v1320
        %1406 = vst.msk [vmem:[#allocation2 + $0xc0] sm:$0xff] %vm1393, %v1322
        %1407 = vst.msk [vmem:[#allocation2 + $0xd0] sm:$0xff] %vm1393, %v1324
        %1408 = vst.msk [vmem:[#allocation2 + $0xe0] sm:$0xff] %vm1393, %v1326
        %1409 = vst.msk [vmem:[#allocation2 + $0xf0] sm:$0xff] %vm1393, %v1328
        %1410 = vst.msk [vmem:[#allocation2 + $0x100] sm:$0xff] %vm1393, %v1330
        %1411 = vst.msk [vmem:[#allocation2 + $0x110] sm:$0xff] %vm1393, %v1332
        %1412 = vst.msk [vmem:[#allocation2 + $0x120] sm:$0xff] %vm1393, %v1334
        %1413 = vst.msk [vmem:[#allocation2 + $0x130] sm:$0xff] %vm1393, %v1336
        %1414 = vst.msk [vmem:[#allocation2 + $0x140] sm:$0xff] %vm1393, %v1338
        %1415 = vst.msk [vmem:[#allocation2 + $0x150] sm:$0xff] %vm1393, %v1340
        %1416 = vst.msk [vmem:[#allocation2 + $0x160] sm:$0xff] %vm1393, %v1342
        %1417 = vst.msk [vmem:[#allocation2 + $0x170] sm:$0xff] %vm1393, %v1344
        %1418 = vst.msk [vmem:[#allocation2 + $0x180] sm:$0xff] %vm1393, %v1346
        %1419 = vst.msk [vmem:[#allocation2 + $0x190] sm:$0xff] %vm1393, %v1348
        %1420 = vst.msk [vmem:[#allocation2 + $0x1a0] sm:$0xff] %vm1393, %v1350
        %1421 = vst.msk [vmem:[#allocation2 + $0x1b0] sm:$0xff] %vm1393, %v1352
        %1422 = vst.msk [vmem:[#allocation2 + $0x1c0] sm:$0xff] %vm1393, %v1354
        %1423 = vst.msk [vmem:[#allocation2 + $0x1d0] sm:$0xff] %vm1393, %v1356
        %1424 = vst.msk [vmem:[#allocation2 + $0x1e0] sm:$0xff] %vm1393, %v1358
        %1425 = vst.msk [vmem:[#allocation2 + $0x1f0] sm:$0xff] %vm1393, %v1360
        %s1426 = scalar_lea.vmem %s197, 24
        %v1427 = vld [vmem:[%s1426] sm:$0xff]
        %v1428 = vld [vmem:[%s1426 + $0x8] sm:$0xff]
        %v1429 = vld [vmem:[%s1426 + $0x18] sm:$0xff]
        %v1430 = vld [vmem:[%s1426 + $0x20] sm:$0xff]
        %v1431 = vld [vmem:[%s1426 + $0x30] sm:$0xff]
        %v1432 = vld [vmem:[%s1426 + $0x38] sm:$0xff]
        %v1433 = vld [vmem:[%s1426 + $0x48] sm:$0xff]
        %v1434 = vld [vmem:[%s1426 + $0x50] sm:$0xff]
        %v1435 = vld [vmem:[%s1426 + $0x60] sm:$0xff]
        %v1436 = vld [vmem:[%s1426 + $0x68] sm:$0xff]
        %v1437 = vld [vmem:[%s1426 + $0x78] sm:$0xff]
        %v1438 = vld [vmem:[%s1426 + $0x80] sm:$0xff]
        %v1439 = vld [vmem:[%s1426 + $0x90] sm:$0xff]
        %v1440 = vld [vmem:[%s1426 + $0x98] sm:$0xff]
        %v1441 = vld [vmem:[%s1426 + $0xa8] sm:$0xff]
        %v1442 = vld [vmem:[%s1426 + $0xb0] sm:$0xff]
        %v1443 = vld [vmem:[%s1426 + $0xc0] sm:$0xff]
        %v1444 = vld [vmem:[%s1426 + $0xc8] sm:$0xff]
        %v1445 = vld [vmem:[%s1426 + $0xd8] sm:$0xff]
        %v1446 = vld [vmem:[%s1426 + $0xe0] sm:$0xff]
        %v1447 = vld [vmem:[%s1426 + $0xf0] sm:$0xff]
        %v1448 = vld [vmem:[%s1426 + $0xf8] sm:$0xff]
        %v1449 = vld [vmem:[%s1426 + $0x108] sm:$0xff]
        %v1450 = vld [vmem:[%s1426 + $0x110] sm:$0xff]
        %v1451 = vld [vmem:[%s1426 + $0x120] sm:$0xff]
        %v1452 = vld [vmem:[%s1426 + $0x128] sm:$0xff]
        %v1453 = vld [vmem:[%s1426 + $0x138] sm:$0xff]
        %v1454 = vld [vmem:[%s1426 + $0x140] sm:$0xff]
        %v1455 = vld [vmem:[%s1426 + $0x150] sm:$0xff]
        %v1456 = vld [vmem:[%s1426 + $0x158] sm:$0xff]
        %v1457 = vld [vmem:[%s1426 + $0x168] sm:$0xff]
        %v1458 = vld [vmem:[%s1426 + $0x170] sm:$0xff]
        %1491 = vrot.lane.b32.xlu0 %v1427, 28
        %v1492 = vpop.permute.xlu0 %1491
        %1493 = vrot.lane.b32.xlu0 %v1428, 28
        %v1494 = vpop.permute.xlu0 %1493
        %1495 = vrot.lane.b32.xlu0 %v1429, 28
        %v1496 = vpop.permute.xlu0 %1495
        %1497 = vrot.lane.b32.xlu0 %v1430, 28
        %v1498 = vpop.permute.xlu0 %1497
        %1499 = vrot.lane.b32.xlu0 %v1431, 28
        %v1500 = vpop.permute.xlu0 %1499
        %1501 = vrot.lane.b32.xlu0 %v1432, 28
        %v1502 = vpop.permute.xlu0 %1501
        %1503 = vrot.lane.b32.xlu0 %v1433, 28
        %v1504 = vpop.permute.xlu0 %1503
        %1505 = vrot.lane.b32.xlu0 %v1434, 28
        %v1506 = vpop.permute.xlu0 %1505
        %1507 = vrot.lane.b32.xlu0 %v1435, 28
        %v1508 = vpop.permute.xlu0 %1507
        %1509 = vrot.lane.b32.xlu0 %v1436, 28
        %v1510 = vpop.permute.xlu0 %1509
        %1511 = vrot.lane.b32.xlu0 %v1437, 28
        %v1512 = vpop.permute.xlu0 %1511
        %1513 = vrot.lane.b32.xlu0 %v1438, 28
        %v1514 = vpop.permute.xlu0 %1513
        %1515 = vrot.lane.b32.xlu0 %v1439, 28
        %v1516 = vpop.permute.xlu0 %1515
        %1517 = vrot.lane.b32.xlu0 %v1440, 28
        %v1518 = vpop.permute.xlu0 %1517
        %1519 = vrot.lane.b32.xlu0 %v1441, 28
        %v1520 = vpop.permute.xlu0 %1519
        %1521 = vrot.lane.b32.xlu0 %v1442, 28
        %v1522 = vpop.permute.xlu0 %1521
        %1523 = vrot.lane.b32.xlu0 %v1443, 28
        %v1524 = vpop.permute.xlu0 %1523
        %1525 = vrot.lane.b32.xlu0 %v1444, 28
        %v1526 = vpop.permute.xlu0 %1525
        %1527 = vrot.lane.b32.xlu0 %v1445, 28
        %v1528 = vpop.permute.xlu0 %1527
        %1529 = vrot.lane.b32.xlu0 %v1446, 28
        %v1530 = vpop.permute.xlu0 %1529
        %1531 = vrot.lane.b32.xlu0 %v1447, 28
        %v1532 = vpop.permute.xlu0 %1531
        %1533 = vrot.lane.b32.xlu0 %v1448, 28
        %v1534 = vpop.permute.xlu0 %1533
        %1535 = vrot.lane.b32.xlu0 %v1449, 28
        %v1536 = vpop.permute.xlu0 %1535
        %1537 = vrot.lane.b32.xlu0 %v1450, 28
        %v1538 = vpop.permute.xlu0 %1537
        %1539 = vrot.lane.b32.xlu0 %v1451, 28
        %v1540 = vpop.permute.xlu0 %1539
        %1541 = vrot.lane.b32.xlu0 %v1452, 28
        %v1542 = vpop.permute.xlu0 %1541
        %1543 = vrot.lane.b32.xlu0 %v1453, 28
        %v1544 = vpop.permute.xlu0 %1543
        %1545 = vrot.lane.b32.xlu0 %v1454, 28
        %v1546 = vpop.permute.xlu0 %1545
        %1547 = vrot.lane.b32.xlu0 %v1455, 28
        %v1548 = vpop.permute.xlu0 %1547
        %1549 = vrot.lane.b32.xlu0 %v1456, 28
        %v1550 = vpop.permute.xlu0 %1549
        %1551 = vrot.lane.b32.xlu0 %v1457, 28
        %v1552 = vpop.permute.xlu0 %1551
        %1553 = vrot.lane.b32.xlu0 %v1458, 28
        %v1554 = vpop.permute.xlu0 %1553
        %vm1587 = vcmask 261344
        %1588 = vst.msk [vmem:[#allocation2] sm:$0xff] %vm1587, %v1492
        %1589 = vst.msk [vmem:[#allocation2 + $0x10] sm:$0xff] %vm1587, %v1494
        %1590 = vst.msk [vmem:[#allocation2 + $0x20] sm:$0xff] %vm1587, %v1496
        %1591 = vst.msk [vmem:[#allocation2 + $0x30] sm:$0xff] %vm1587, %v1498
        %1592 = vst.msk [vmem:[#allocation2 + $0x40] sm:$0xff] %vm1587, %v1500
        %1593 = vst.msk [vmem:[#allocation2 + $0x50] sm:$0xff] %vm1587, %v1502
        %1594 = vst.msk [vmem:[#allocation2 + $0x60] sm:$0xff] %vm1587, %v1504
        %1595 = vst.msk [vmem:[#allocation2 + $0x70] sm:$0xff] %vm1587, %v1506
        %1596 = vst.msk [vmem:[#allocation2 + $0x80] sm:$0xff] %vm1587, %v1508
        %1597 = vst.msk [vmem:[#allocation2 + $0x90] sm:$0xff] %vm1587, %v1510
        %1598 = vst.msk [vmem:[#allocation2 + $0xa0] sm:$0xff] %vm1587, %v1512
        %1599 = vst.msk [vmem:[#allocation2 + $0xb0] sm:$0xff] %vm1587, %v1514
        %1600 = vst.msk [vmem:[#allocation2 + $0xc0] sm:$0xff] %vm1587, %v1516
        %1601 = vst.msk [vmem:[#allocation2 + $0xd0] sm:$0xff] %vm1587, %v1518
        %1602 = vst.msk [vmem:[#allocation2 + $0xe0] sm:$0xff] %vm1587, %v1520
        %1603 = vst.msk [vmem:[#allocation2 + $0xf0] sm:$0xff] %vm1587, %v1522
        %1604 = vst.msk [vmem:[#allocation2 + $0x100] sm:$0xff] %vm1587, %v1524
        %1605 = vst.msk [vmem:[#allocation2 + $0x110] sm:$0xff] %vm1587, %v1526
        %1606 = vst.msk [vmem:[#allocation2 + $0x120] sm:$0xff] %vm1587, %v1528
        %1607 = vst.msk [vmem:[#allocation2 + $0x130] sm:$0xff] %vm1587, %v1530
        %1608 = vst.msk [vmem:[#allocation2 + $0x140] sm:$0xff] %vm1587, %v1532
        %1609 = vst.msk [vmem:[#allocation2 + $0x150] sm:$0xff] %vm1587, %v1534
        %1610 = vst.msk [vmem:[#allocation2 + $0x160] sm:$0xff] %vm1587, %v1536
        %1611 = vst.msk [vmem:[#allocation2 + $0x170] sm:$0xff] %vm1587, %v1538
        %1612 = vst.msk [vmem:[#allocation2 + $0x180] sm:$0xff] %vm1587, %v1540
        %1613 = vst.msk [vmem:[#allocation2 + $0x190] sm:$0xff] %vm1587, %v1542
        %1614 = vst.msk [vmem:[#allocation2 + $0x1a0] sm:$0xff] %vm1587, %v1544
        %1615 = vst.msk [vmem:[#allocation2 + $0x1b0] sm:$0xff] %vm1587, %v1546
        %1616 = vst.msk [vmem:[#allocation2 + $0x1c0] sm:$0xff] %vm1587, %v1548
        %1617 = vst.msk [vmem:[#allocation2 + $0x1d0] sm:$0xff] %vm1587, %v1550
        %1618 = vst.msk [vmem:[#allocation2 + $0x1e0] sm:$0xff] %vm1587, %v1552
        %1619 = vst.msk [vmem:[#allocation2 + $0x1f0] sm:$0xff] %vm1587, %v1554
        %v1620 = vld [vmem:[%s1426 + $0x1] sm:$0xff]
        %v1621 = vld [vmem:[%s1426 + $0x9] sm:$0xff]
        %v1622 = vld [vmem:[%s1426 + $0x19] sm:$0xff]
        %v1623 = vld [vmem:[%s1426 + $0x21] sm:$0xff]
        %v1624 = vld [vmem:[%s1426 + $0x31] sm:$0xff]
        %v1625 = vld [vmem:[%s1426 + $0x39] sm:$0xff]
        %v1626 = vld [vmem:[%s1426 + $0x49] sm:$0xff]
        %v1627 = vld [vmem:[%s1426 + $0x51] sm:$0xff]
        %v1628 = vld [vmem:[%s1426 + $0x61] sm:$0xff]
        %v1629 = vld [vmem:[%s1426 + $0x69] sm:$0xff]
        %v1630 = vld [vmem:[%s1426 + $0x79] sm:$0xff]
        %v1631 = vld [vmem:[%s1426 + $0x81] sm:$0xff]
        %v1632 = vld [vmem:[%s1426 + $0x91] sm:$0xff]
        %v1633 = vld [vmem:[%s1426 + $0x99] sm:$0xff]
        %v1634 = vld [vmem:[%s1426 + $0xa9] sm:$0xff]
        %v1635 = vld [vmem:[%s1426 + $0xb1] sm:$0xff]
        %v1636 = vld [vmem:[%s1426 + $0xc1] sm:$0xff]
        %v1637 = vld [vmem:[%s1426 + $0xc9] sm:$0xff]
        %v1638 = vld [vmem:[%s1426 + $0xd9] sm:$0xff]
        %v1639 = vld [vmem:[%s1426 + $0xe1] sm:$0xff]
        %v1640 = vld [vmem:[%s1426 + $0xf1] sm:$0xff]
        %v1641 = vld [vmem:[%s1426 + $0xf9] sm:$0xff]
        %v1642 = vld [vmem:[%s1426 + $0x109] sm:$0xff]
        %v1643 = vld [vmem:[%s1426 + $0x111] sm:$0xff]
        %v1644 = vld [vmem:[%s1426 + $0x121] sm:$0xff]
        %v1645 = vld [vmem:[%s1426 + $0x129] sm:$0xff]
        %v1646 = vld [vmem:[%s1426 + $0x139] sm:$0xff]
        %v1647 = vld [vmem:[%s1426 + $0x141] sm:$0xff]
        %v1648 = vld [vmem:[%s1426 + $0x151] sm:$0xff]
        %v1649 = vld [vmem:[%s1426 + $0x159] sm:$0xff]
        %v1650 = vld [vmem:[%s1426 + $0x169] sm:$0xff]
        %v1651 = vld [vmem:[%s1426 + $0x171] sm:$0xff]
        %1684 = vrot.lane.b32.xlu0 %v1620, 32
        %v1685 = vpop.permute.xlu0 %1684
        %1686 = vrot.lane.b32.xlu0 %v1621, 32
        %v1687 = vpop.permute.xlu0 %1686
        %1688 = vrot.lane.b32.xlu0 %v1622, 32
        %v1689 = vpop.permute.xlu0 %1688
        %1690 = vrot.lane.b32.xlu0 %v1623, 32
        %v1691 = vpop.permute.xlu0 %1690
        %1692 = vrot.lane.b32.xlu0 %v1624, 32
        %v1693 = vpop.permute.xlu0 %1692
        %1694 = vrot.lane.b32.xlu0 %v1625, 32
        %v1695 = vpop.permute.xlu0 %1694
        %1696 = vrot.lane.b32.xlu0 %v1626, 32
        %v1697 = vpop.permute.xlu0 %1696
        %1698 = vrot.lane.b32.xlu0 %v1627, 32
        %v1699 = vpop.permute.xlu0 %1698
        %1700 = vrot.lane.b32.xlu0 %v1628, 32
        %v1701 = vpop.permute.xlu0 %1700
        %1702 = vrot.lane.b32.xlu0 %v1629, 32
        %v1703 = vpop.permute.xlu0 %1702
        %1704 = vrot.lane.b32.xlu0 %v1630, 32
        %v1705 = vpop.permute.xlu0 %1704
        %1706 = vrot.lane.b32.xlu0 %v1631, 32
        %v1707 = vpop.permute.xlu0 %1706
        %1708 = vrot.lane.b32.xlu0 %v1632, 32
        %v1709 = vpop.permute.xlu0 %1708
        %1710 = vrot.lane.b32.xlu0 %v1633, 32
        %v1711 = vpop.permute.xlu0 %1710
        %1712 = vrot.lane.b32.xlu0 %v1634, 32
        %v1713 = vpop.permute.xlu0 %1712
        %1714 = vrot.lane.b32.xlu0 %v1635, 32
        %v1715 = vpop.permute.xlu0 %1714
        %1716 = vrot.lane.b32.xlu0 %v1636, 32
        %v1717 = vpop.permute.xlu0 %1716
        %1718 = vrot.lane.b32.xlu0 %v1637, 32
        %v1719 = vpop.permute.xlu0 %1718
        %1720 = vrot.lane.b32.xlu0 %v1638, 32
        %v1721 = vpop.permute.xlu0 %1720
        %1722 = vrot.lane.b32.xlu0 %v1639, 32
        %v1723 = vpop.permute.xlu0 %1722
        %1724 = vrot.lane.b32.xlu0 %v1640, 32
        %v1725 = vpop.permute.xlu0 %1724
        %1726 = vrot.lane.b32.xlu0 %v1641, 32
        %v1727 = vpop.permute.xlu0 %1726
        %1728 = vrot.lane.b32.xlu0 %v1642, 32
        %v1729 = vpop.permute.xlu0 %1728
        %1730 = vrot.lane.b32.xlu0 %v1643, 32
        %v1731 = vpop.permute.xlu0 %1730
        %1732 = vrot.lane.b32.xlu0 %v1644, 32
        %v1733 = vpop.permute.xlu0 %1732
        %1734 = vrot.lane.b32.xlu0 %v1645, 32
        %v1735 = vpop.permute.xlu0 %1734
        %1736 = vrot.lane.b32.xlu0 %v1646, 32
        %v1737 = vpop.permute.xlu0 %1736
        %1738 = vrot.lane.b32.xlu0 %v1647, 32
        %v1739 = vpop.permute.xlu0 %1738
        %1740 = vrot.lane.b32.xlu0 %v1648, 32
        %v1741 = vpop.permute.xlu0 %1740
        %1742 = vrot.lane.b32.xlu0 %v1649, 32
        %v1743 = vpop.permute.xlu0 %1742
        %1744 = vrot.lane.b32.xlu0 %v1650, 32
        %v1745 = vpop.permute.xlu0 %1744
        %1746 = vrot.lane.b32.xlu0 %v1651, 32
        %v1747 = vpop.permute.xlu0 %1746
        %vm1780 = vcmask 294144
        %1781 = vst.msk [vmem:[#allocation2] sm:$0xff] %vm1780, %v1685
        %1782 = vst.msk [vmem:[#allocation2 + $0x10] sm:$0xff] %vm1780, %v1687
        %1783 = vst.msk [vmem:[#allocation2 + $0x20] sm:$0xff] %vm1780, %v1689
        %1784 = vst.msk [vmem:[#allocation2 + $0x30] sm:$0xff] %vm1780, %v1691
        %1785 = vst.msk [vmem:[#allocation2 + $0x40] sm:$0xff] %vm1780, %v1693
        %1786 = vst.msk [vmem:[#allocation2 + $0x50] sm:$0xff] %vm1780, %v1695
        %1787 = vst.msk [vmem:[#allocation2 + $0x60] sm:$0xff] %vm1780, %v1697
        %1788 = vst.msk [vmem:[#allocation2 + $0x70] sm:$0xff] %vm1780, %v1699
        %1789 = vst.msk [vmem:[#allocation2 + $0x80] sm:$0xff] %vm1780, %v1701
        %1790 = vst.msk [vmem:[#allocation2 + $0x90] sm:$0xff] %vm1780, %v1703
        %1791 = vst.msk [vmem:[#allocation2 + $0xa0] sm:$0xff] %vm1780, %v1705
        %1792 = vst.msk [vmem:[#allocation2 + $0xb0] sm:$0xff] %vm1780, %v1707
        %1793 = vst.msk [vmem:[#allocation2 + $0xc0] sm:$0xff] %vm1780, %v1709
        %1794 = vst.msk [vmem:[#allocation2 + $0xd0] sm:$0xff] %vm1780, %v1711
        %1795 = vst.msk [vmem:[#allocation2 + $0xe0] sm:$0xff] %vm1780, %v1713
        %1796 = vst.msk [vmem:[#allocation2 + $0xf0] sm:$0xff] %vm1780, %v1715
        %1797 = vst.msk [vmem:[#allocation2 + $0x100] sm:$0xff] %vm1780, %v1717
        %1798 = vst.msk [vmem:[#allocation2 + $0x110] sm:$0xff] %vm1780, %v1719
        %1799 = vst.msk [vmem:[#allocation2 + $0x120] sm:$0xff] %vm1780, %v1721
        %1800 = vst.msk [vmem:[#allocation2 + $0x130] sm:$0xff] %vm1780, %v1723
        %1801 = vst.msk [vmem:[#allocation2 + $0x140] sm:$0xff] %vm1780, %v1725
        %1802 = vst.msk [vmem:[#allocation2 + $0x150] sm:$0xff] %vm1780, %v1727
        %1803 = vst.msk [vmem:[#allocation2 + $0x160] sm:$0xff] %vm1780, %v1729
        %1804 = vst.msk [vmem:[#allocation2 + $0x170] sm:$0xff] %vm1780, %v1731
        %1805 = vst.msk [vmem:[#allocation2 + $0x180] sm:$0xff] %vm1780, %v1733
        %1806 = vst.msk [vmem:[#allocation2 + $0x190] sm:$0xff] %vm1780, %v1735
        %1807 = vst.msk [vmem:[#allocation2 + $0x1a0] sm:$0xff] %vm1780, %v1737
        %1808 = vst.msk [vmem:[#allocation2 + $0x1b0] sm:$0xff] %vm1780, %v1739
        %1809 = vst.msk [vmem:[#allocation2 + $0x1c0] sm:$0xff] %vm1780, %v1741
        %1810 = vst.msk [vmem:[#allocation2 + $0x1d0] sm:$0xff] %vm1780, %v1743
        %1811 = vst.msk [vmem:[#allocation2 + $0x1e0] sm:$0xff] %vm1780, %v1745
        %1812 = vst.msk [vmem:[#allocation2 + $0x1f0] sm:$0xff] %vm1780, %v1747
        %v1813 = vld [vmem:[%s1426 + $0x2] sm:$0xff]
        %v1814 = vld [vmem:[%s1426 + $0xa] sm:$0xff]
        %v1815 = vld [vmem:[%s1426 + $0x1a] sm:$0xff]
        %v1816 = vld [vmem:[%s1426 + $0x22] sm:$0xff]
        %v1817 = vld [vmem:[%s1426 + $0x32] sm:$0xff]
        %v1818 = vld [vmem:[%s1426 + $0x3a] sm:$0xff]
        %v1819 = vld [vmem:[%s1426 + $0x4a] sm:$0xff]
        %v1820 = vld [vmem:[%s1426 + $0x52] sm:$0xff]
        %v1821 = vld [vmem:[%s1426 + $0x62] sm:$0xff]
        %v1822 = vld [vmem:[%s1426 + $0x6a] sm:$0xff]
        %v1823 = vld [vmem:[%s1426 + $0x7a] sm:$0xff]
        %v1824 = vld [vmem:[%s1426 + $0x82] sm:$0xff]
        %v1825 = vld [vmem:[%s1426 + $0x92] sm:$0xff]
        %v1826 = vld [vmem:[%s1426 + $0x9a] sm:$0xff]
        %v1827 = vld [vmem:[%s1426 + $0xaa] sm:$0xff]
        %v1828 = vld [vmem:[%s1426 + $0xb2] sm:$0xff]
        %v1829 = vld [vmem:[%s1426 + $0xc2] sm:$0xff]
        %v1830 = vld [vmem:[%s1426 + $0xca] sm:$0xff]
        %v1831 = vld [vmem:[%s1426 + $0xda] sm:$0xff]
        %v1832 = vld [vmem:[%s1426 + $0xe2] sm:$0xff]
        %v1833 = vld [vmem:[%s1426 + $0xf2] sm:$0xff]
        %v1834 = vld [vmem:[%s1426 + $0xfa] sm:$0xff]
        %v1835 = vld [vmem:[%s1426 + $0x10a] sm:$0xff]
        %v1836 = vld [vmem:[%s1426 + $0x112] sm:$0xff]
        %v1837 = vld [vmem:[%s1426 + $0x122] sm:$0xff]
        %v1838 = vld [vmem:[%s1426 + $0x12a] sm:$0xff]
        %v1839 = vld [vmem:[%s1426 + $0x13a] sm:$0xff]
        %v1840 = vld [vmem:[%s1426 + $0x142] sm:$0xff]
        %v1841 = vld [vmem:[%s1426 + $0x152] sm:$0xff]
        %v1842 = vld [vmem:[%s1426 + $0x15a] sm:$0xff]
        %v1843 = vld [vmem:[%s1426 + $0x16a] sm:$0xff]
        %v1844 = vld [vmem:[%s1426 + $0x172] sm:$0xff]
        %1877 = vrot.lane.b32.xlu0 %v1813, 36
        %v1878 = vpop.permute.xlu0 %1877
        %1879 = vrot.lane.b32.xlu0 %v1814, 36
        %v1880 = vpop.permute.xlu0 %1879
        %1881 = vrot.lane.b32.xlu0 %v1815, 36
        %v1882 = vpop.permute.xlu0 %1881
        %1883 = vrot.lane.b32.xlu0 %v1816, 36
        %v1884 = vpop.permute.xlu0 %1883
        %1885 = vrot.lane.b32.xlu0 %v1817, 36
        %v1886 = vpop.permute.xlu0 %1885
        %1887 = vrot.lane.b32.xlu0 %v1818, 36
        %v1888 = vpop.permute.xlu0 %1887
        %1889 = vrot.lane.b32.xlu0 %v1819, 36
        %v1890 = vpop.permute.xlu0 %1889
        %1891 = vrot.lane.b32.xlu0 %v1820, 36
        %v1892 = vpop.permute.xlu0 %1891
        %1893 = vrot.lane.b32.xlu0 %v1821, 36
        %v1894 = vpop.permute.xlu0 %1893
        %1895 = vrot.lane.b32.xlu0 %v1822, 36
        %v1896 = vpop.permute.xlu0 %1895
        %1897 = vrot.lane.b32.xlu0 %v1823, 36
        %v1898 = vpop.permute.xlu0 %1897
        %1899 = vrot.lane.b32.xlu0 %v1824, 36
        %v1900 = vpop.permute.xlu0 %1899
        %1901 = vrot.lane.b32.xlu0 %v1825, 36
        %v1902 = vpop.permute.xlu0 %1901
        %1903 = vrot.lane.b32.xlu0 %v1826, 36
        %v1904 = vpop.permute.xlu0 %1903
        %1905 = vrot.lane.b32.xlu0 %v1827, 36
        %v1906 = vpop.permute.xlu0 %1905
        %1907 = vrot.lane.b32.xlu0 %v1828, 36
        %v1908 = vpop.permute.xlu0 %1907
        %1909 = vrot.lane.b32.xlu0 %v1829, 36
        %v1910 = vpop.permute.xlu0 %1909
        %1911 = vrot.lane.b32.xlu0 %v1830, 36
        %v1912 = vpop.permute.xlu0 %1911
        %1913 = vrot.lane.b32.xlu0 %v1831, 36
        %v1914 = vpop.permute.xlu0 %1913
        %1915 = vrot.lane.b32.xlu0 %v1832, 36
        %v1916 = vpop.permute.xlu0 %1915
        %1917 = vrot.lane.b32.xlu0 %v1833, 36
        %v1918 = vpop.permute.xlu0 %1917
        %1919 = vrot.lane.b32.xlu0 %v1834, 36
        %v1920 = vpop.permute.xlu0 %1919
        %1921 = vrot.lane.b32.xlu0 %v1835, 36
        %v1922 = vpop.permute.xlu0 %1921
        %1923 = vrot.lane.b32.xlu0 %v1836, 36
        %v1924 = vpop.permute.xlu0 %1923
        %1925 = vrot.lane.b32.xlu0 %v1837, 36
        %v1926 = vpop.permute.xlu0 %1925
        %1927 = vrot.lane.b32.xlu0 %v1838, 36
        %v1928 = vpop.permute.xlu0 %1927
        %1929 = vrot.lane.b32.xlu0 %v1839, 36
        %v1930 = vpop.permute.xlu0 %1929
        %1931 = vrot.lane.b32.xlu0 %v1840, 36
        %v1932 = vpop.permute.xlu0 %1931
        %1933 = vrot.lane.b32.xlu0 %v1841, 36
        %v1934 = vpop.permute.xlu0 %1933
        %1935 = vrot.lane.b32.xlu0 %v1842, 36
        %v1936 = vpop.permute.xlu0 %1935
        %1937 = vrot.lane.b32.xlu0 %v1843, 36
        %v1938 = vpop.permute.xlu0 %1937
        %1939 = vrot.lane.b32.xlu0 %v1844, 36
        %v1940 = vpop.permute.xlu0 %1939
        %vm1973 = vcmask 326944
        %1974 = vst.msk [vmem:[#allocation2] sm:$0xff] %vm1973, %v1878
        %1975 = vst.msk [vmem:[#allocation2 + $0x10] sm:$0xff] %vm1973, %v1880
        %1976 = vst.msk [vmem:[#allocation2 + $0x20] sm:$0xff] %vm1973, %v1882
        %1977 = vst.msk [vmem:[#allocation2 + $0x30] sm:$0xff] %vm1973, %v1884
        %1978 = vst.msk [vmem:[#allocation2 + $0x40] sm:$0xff] %vm1973, %v1886
        %1979 = vst.msk [vmem:[#allocation2 + $0x50] sm:$0xff] %vm1973, %v1888
        %1980 = vst.msk [vmem:[#allocation2 + $0x60] sm:$0xff] %vm1973, %v1890
        %1981 = vst.msk [vmem:[#allocation2 + $0x70] sm:$0xff] %vm1973, %v1892
        %1982 = vst.msk [vmem:[#allocation2 + $0x80] sm:$0xff] %vm1973, %v1894
        %1983 = vst.msk [vmem:[#allocation2 + $0x90] sm:$0xff] %vm1973, %v1896
        %1984 = vst.msk [vmem:[#allocation2 + $0xa0] sm:$0xff] %vm1973, %v1898
        %1985 = vst.msk [vmem:[#allocation2 + $0xb0] sm:$0xff] %vm1973, %v1900
        %1986 = vst.msk [vmem:[#allocation2 + $0xc0] sm:$0xff] %vm1973, %v1902
        %1987 = vst.msk [vmem:[#allocation2 + $0xd0] sm:$0xff] %vm1973, %v1904
        %1988 = vst.msk [vmem:[#allocation2 + $0xe0] sm:$0xff] %vm1973, %v1906
        %1989 = vst.msk [vmem:[#allocation2 + $0xf0] sm:$0xff] %vm1973, %v1908
        %1990 = vst.msk [vmem:[#allocation2 + $0x100] sm:$0xff] %vm1973, %v1910
        %1991 = vst.msk [vmem:[#allocation2 + $0x110] sm:$0xff] %vm1973, %v1912
        %1992 = vst.msk [vmem:[#allocation2 + $0x120] sm:$0xff] %vm1973, %v1914
        %1993 = vst.msk [vmem:[#allocation2 + $0x130] sm:$0xff] %vm1973, %v1916
        %1994 = vst.msk [vmem:[#allocation2 + $0x140] sm:$0xff] %vm1973, %v1918
        %1995 = vst.msk [vmem:[#allocation2 + $0x150] sm:$0xff] %vm1973, %v1920
        %1996 = vst.msk [vmem:[#allocation2 + $0x160] sm:$0xff] %vm1973, %v1922
        %1997 = vst.msk [vmem:[#allocation2 + $0x170] sm:$0xff] %vm1973, %v1924
        %1998 = vst.msk [vmem:[#allocation2 + $0x180] sm:$0xff] %vm1973, %v1926
        %1999 = vst.msk [vmem:[#allocation2 + $0x190] sm:$0xff] %vm1973, %v1928
        %2000 = vst.msk [vmem:[#allocation2 + $0x1a0] sm:$0xff] %vm1973, %v1930
        %2001 = vst.msk [vmem:[#allocation2 + $0x1b0] sm:$0xff] %vm1973, %v1932
        %2002 = vst.msk [vmem:[#allocation2 + $0x1c0] sm:$0xff] %vm1973, %v1934
        %2003 = vst.msk [vmem:[#allocation2 + $0x1d0] sm:$0xff] %vm1973, %v1936
        %2004 = vst.msk [vmem:[#allocation2 + $0x1e0] sm:$0xff] %vm1973, %v1938
        %2005 = vst.msk [vmem:[#allocation2 + $0x1f0] sm:$0xff] %vm1973, %v1940
        %v2006 = vld [vmem:[%s1426 + $0x3] sm:$0xff]
        %v2007 = vld [vmem:[%s1426 + $0xb] sm:$0xff]
        %v2008 = vld [vmem:[%s1426 + $0x1b] sm:$0xff]
        %v2009 = vld [vmem:[%s1426 + $0x23] sm:$0xff]
        %v2010 = vld [vmem:[%s1426 + $0x33] sm:$0xff]
        %v2011 = vld [vmem:[%s1426 + $0x3b] sm:$0xff]
        %v2012 = vld [vmem:[%s1426 + $0x4b] sm:$0xff]
        %v2013 = vld [vmem:[%s1426 + $0x53] sm:$0xff]
        %v2014 = vld [vmem:[%s1426 + $0x63] sm:$0xff]
        %v2015 = vld [vmem:[%s1426 + $0x6b] sm:$0xff]
        %v2016 = vld [vmem:[%s1426 + $0x7b] sm:$0xff]
        %v2017 = vld [vmem:[%s1426 + $0x83] sm:$0xff]
        %v2018 = vld [vmem:[%s1426 + $0x93] sm:$0xff]
        %v2019 = vld [vmem:[%s1426 + $0x9b] sm:$0xff]
        %v2020 = vld [vmem:[%s1426 + $0xab] sm:$0xff]
        %v2021 = vld [vmem:[%s1426 + $0xb3] sm:$0xff]
        %v2022 = vld [vmem:[%s1426 + $0xc3] sm:$0xff]
        %v2023 = vld [vmem:[%s1426 + $0xcb] sm:$0xff]
        %v2024 = vld [vmem:[%s1426 + $0xdb] sm:$0xff]
        %v2025 = vld [vmem:[%s1426 + $0xe3] sm:$0xff]
        %v2026 = vld [vmem:[%s1426 + $0xf3] sm:$0xff]
        %v2027 = vld [vmem:[%s1426 + $0xfb] sm:$0xff]
        %v2028 = vld [vmem:[%s1426 + $0x10b] sm:$0xff]
        %v2029 = vld [vmem:[%s1426 + $0x113] sm:$0xff]
        %v2030 = vld [vmem:[%s1426 + $0x123] sm:$0xff]
        %v2031 = vld [vmem:[%s1426 + $0x12b] sm:$0xff]
        %v2032 = vld [vmem:[%s1426 + $0x13b] sm:$0xff]
        %v2033 = vld [vmem:[%s1426 + $0x143] sm:$0xff]
        %v2034 = vld [vmem:[%s1426 + $0x153] sm:$0xff]
        %v2035 = vld [vmem:[%s1426 + $0x15b] sm:$0xff]
        %v2036 = vld [vmem:[%s1426 + $0x16b] sm:$0xff]
        %v2037 = vld [vmem:[%s1426 + $0x173] sm:$0xff]
        %2070 = vrot.lane.b32.xlu0 %v2006, 40
        %v2071 = vpop.permute.xlu0 %2070
        %2072 = vrot.lane.b32.xlu0 %v2007, 40
        %v2073 = vpop.permute.xlu0 %2072
        %2074 = vrot.lane.b32.xlu0 %v2008, 40
        %v2075 = vpop.permute.xlu0 %2074
        %2076 = vrot.lane.b32.xlu0 %v2009, 40
        %v2077 = vpop.permute.xlu0 %2076
        %2078 = vrot.lane.b32.xlu0 %v2010, 40
        %v2079 = vpop.permute.xlu0 %2078
        %2080 = vrot.lane.b32.xlu0 %v2011, 40
        %v2081 = vpop.permute.xlu0 %2080
        %2082 = vrot.lane.b32.xlu0 %v2012, 40
        %v2083 = vpop.permute.xlu0 %2082
        %2084 = vrot.lane.b32.xlu0 %v2013, 40
        %v2085 = vpop.permute.xlu0 %2084
        %2086 = vrot.lane.b32.xlu0 %v2014, 40
        %v2087 = vpop.permute.xlu0 %2086
        %2088 = vrot.lane.b32.xlu0 %v2015, 40
        %v2089 = vpop.permute.xlu0 %2088
        %2090 = vrot.lane.b32.xlu0 %v2016, 40
        %v2091 = vpop.permute.xlu0 %2090
        %2092 = vrot.lane.b32.xlu0 %v2017, 40
        %v2093 = vpop.permute.xlu0 %2092
        %2094 = vrot.lane.b32.xlu0 %v2018, 40
        %v2095 = vpop.permute.xlu0 %2094
        %2096 = vrot.lane.b32.xlu0 %v2019, 40
        %v2097 = vpop.permute.xlu0 %2096
        %2098 = vrot.lane.b32.xlu0 %v2020, 40
        %v2099 = vpop.permute.xlu0 %2098
        %2100 = vrot.lane.b32.xlu0 %v2021, 40
        %v2101 = vpop.permute.xlu0 %2100
        %2102 = vrot.lane.b32.xlu0 %v2022, 40
        %v2103 = vpop.permute.xlu0 %2102
        %2104 = vrot.lane.b32.xlu0 %v2023, 40
        %v2105 = vpop.permute.xlu0 %2104
        %2106 = vrot.lane.b32.xlu0 %v2024, 40
        %v2107 = vpop.permute.xlu0 %2106
        %2108 = vrot.lane.b32.xlu0 %v2025, 40
        %v2109 = vpop.permute.xlu0 %2108
        %2110 = vrot.lane.b32.xlu0 %v2026, 40
        %v2111 = vpop.permute.xlu0 %2110
        %2112 = vrot.lane.b32.xlu0 %v2027, 40
        %v2113 = vpop.permute.xlu0 %2112
        %2114 = vrot.lane.b32.xlu0 %v2028, 40
        %v2115 = vpop.permute.xlu0 %2114
        %2116 = vrot.lane.b32.xlu0 %v2029, 40
        %v2117 = vpop.permute.xlu0 %2116
        %2118 = vrot.lane.b32.xlu0 %v2030, 40
        %v2119 = vpop.permute.xlu0 %2118
        %2120 = vrot.lane.b32.xlu0 %v2031, 40
        %v2121 = vpop.permute.xlu0 %2120
        %2122 = vrot.lane.b32.xlu0 %v2032, 40
        %v2123 = vpop.permute.xlu0 %2122
        %2124 = vrot.lane.b32.xlu0 %v2033, 40
        %v2125 = vpop.permute.xlu0 %2124
        %2126 = vrot.lane.b32.xlu0 %v2034, 40
        %v2127 = vpop.permute.xlu0 %2126
        %2128 = vrot.lane.b32.xlu0 %v2035, 40
        %v2129 = vpop.permute.xlu0 %2128
        %2130 = vrot.lane.b32.xlu0 %v2036, 40
        %v2131 = vpop.permute.xlu0 %2130
        %2132 = vrot.lane.b32.xlu0 %v2037, 40
        %v2133 = vpop.permute.xlu0 %2132
        %vm2166 = vcmask 359744
        %2167 = vst.msk [vmem:[#allocation2] sm:$0xff] %vm2166, %v2071
        %2168 = vst.msk [vmem:[#allocation2 + $0x10] sm:$0xff] %vm2166, %v2073
        %2169 = vst.msk [vmem:[#allocation2 + $0x20] sm:$0xff] %vm2166, %v2075
        %2170 = vst.msk [vmem:[#allocation2 + $0x30] sm:$0xff] %vm2166, %v2077
        %2171 = vst.msk [vmem:[#allocation2 + $0x40] sm:$0xff] %vm2166, %v2079
        %2172 = vst.msk [vmem:[#allocation2 + $0x50] sm:$0xff] %vm2166, %v2081
        %2173 = vst.msk [vmem:[#allocation2 + $0x60] sm:$0xff] %vm2166, %v2083
        %2174 = vst.msk [vmem:[#allocation2 + $0x70] sm:$0xff] %vm2166, %v2085
        %2175 = vst.msk [vmem:[#allocation2 + $0x80] sm:$0xff] %vm2166, %v2087
        %2176 = vst.msk [vmem:[#allocation2 + $0x90] sm:$0xff] %vm2166, %v2089
        %2177 = vst.msk [vmem:[#allocation2 + $0xa0] sm:$0xff] %vm2166, %v2091
        %2178 = vst.msk [vmem:[#allocation2 + $0xb0] sm:$0xff] %vm2166, %v2093
        %2179 = vst.msk [vmem:[#allocation2 + $0xc0] sm:$0xff] %vm2166, %v2095
        %2180 = vst.msk [vmem:[#allocation2 + $0xd0] sm:$0xff] %vm2166, %v2097
        %2181 = vst.msk [vmem:[#allocation2 + $0xe0] sm:$0xff] %vm2166, %v2099
        %2182 = vst.msk [vmem:[#allocation2 + $0xf0] sm:$0xff] %vm2166, %v2101
        %2183 = vst.msk [vmem:[#allocation2 + $0x100] sm:$0xff] %vm2166, %v2103
        %2184 = vst.msk [vmem:[#allocation2 + $0x110] sm:$0xff] %vm2166, %v2105
        %2185 = vst.msk [vmem:[#allocation2 + $0x120] sm:$0xff] %vm2166, %v2107
        %2186 = vst.msk [vmem:[#allocation2 + $0x130] sm:$0xff] %vm2166, %v2109
        %2187 = vst.msk [vmem:[#allocation2 + $0x140] sm:$0xff] %vm2166, %v2111
        %2188 = vst.msk [vmem:[#allocation2 + $0x150] sm:$0xff] %vm2166, %v2113
        %2189 = vst.msk [vmem:[#allocation2 + $0x160] sm:$0xff] %vm2166, %v2115
        %2190 = vst.msk [vmem:[#allocation2 + $0x170] sm:$0xff] %vm2166, %v2117
        %2191 = vst.msk [vmem:[#allocation2 + $0x180] sm:$0xff] %vm2166, %v2119
        %2192 = vst.msk [vmem:[#allocation2 + $0x190] sm:$0xff] %vm2166, %v2121
        %2193 = vst.msk [vmem:[#allocation2 + $0x1a0] sm:$0xff] %vm2166, %v2123
        %2194 = vst.msk [vmem:[#allocation2 + $0x1b0] sm:$0xff] %vm2166, %v2125
        %2195 = vst.msk [vmem:[#allocation2 + $0x1c0] sm:$0xff] %vm2166, %v2127
        %2196 = vst.msk [vmem:[#allocation2 + $0x1d0] sm:$0xff] %vm2166, %v2129
        %2197 = vst.msk [vmem:[#allocation2 + $0x1e0] sm:$0xff] %vm2166, %v2131
        %2198 = vst.msk [vmem:[#allocation2 + $0x1f0] sm:$0xff] %vm2166, %v2133
        %v2199 = vld [vmem:[%s1426 + $0x4] sm:$0xff]
        %v2200 = vld [vmem:[%s1426 + $0xc] sm:$0xff]
        %v2201 = vld [vmem:[%s1426 + $0x1c] sm:$0xff]
        %v2202 = vld [vmem:[%s1426 + $0x24] sm:$0xff]
        %v2203 = vld [vmem:[%s1426 + $0x34] sm:$0xff]
        %v2204 = vld [vmem:[%s1426 + $0x3c] sm:$0xff]
        %v2205 = vld [vmem:[%s1426 + $0x4c] sm:$0xff]
        %v2206 = vld [vmem:[%s1426 + $0x54] sm:$0xff]
        %v2207 = vld [vmem:[%s1426 + $0x64] sm:$0xff]
        %v2208 = vld [vmem:[%s1426 + $0x6c] sm:$0xff]
        %v2209 = vld [vmem:[%s1426 + $0x7c] sm:$0xff]
        %v2210 = vld [vmem:[%s1426 + $0x84] sm:$0xff]
        %v2211 = vld [vmem:[%s1426 + $0x94] sm:$0xff]
        %v2212 = vld [vmem:[%s1426 + $0x9c] sm:$0xff]
        %v2213 = vld [vmem:[%s1426 + $0xac] sm:$0xff]
        %v2214 = vld [vmem:[%s1426 + $0xb4] sm:$0xff]
        %v2215 = vld [vmem:[%s1426 + $0xc4] sm:$0xff]
        %v2216 = vld [vmem:[%s1426 + $0xcc] sm:$0xff]
        %v2217 = vld [vmem:[%s1426 + $0xdc] sm:$0xff]
        %v2218 = vld [vmem:[%s1426 + $0xe4] sm:$0xff]
        %v2219 = vld [vmem:[%s1426 + $0xf4] sm:$0xff]
        %v2220 = vld [vmem:[%s1426 + $0xfc] sm:$0xff]
        %v2221 = vld [vmem:[%s1426 + $0x10c] sm:$0xff]
        %v2222 = vld [vmem:[%s1426 + $0x114] sm:$0xff]
        %v2223 = vld [vmem:[%s1426 + $0x124] sm:$0xff]
        %v2224 = vld [vmem:[%s1426 + $0x12c] sm:$0xff]
        %v2225 = vld [vmem:[%s1426 + $0x13c] sm:$0xff]
        %v2226 = vld [vmem:[%s1426 + $0x144] sm:$0xff]
        %v2227 = vld [vmem:[%s1426 + $0x154] sm:$0xff]
        %v2228 = vld [vmem:[%s1426 + $0x15c] sm:$0xff]
        %v2229 = vld [vmem:[%s1426 + $0x16c] sm:$0xff]
        %v2230 = vld [vmem:[%s1426 + $0x174] sm:$0xff]
        %2263 = vrot.lane.b32.xlu0 %v2199, 44
        %v2264 = vpop.permute.xlu0 %2263
        %2265 = vrot.lane.b32.xlu0 %v2200, 44
        %v2266 = vpop.permute.xlu0 %2265
        %2267 = vrot.lane.b32.xlu0 %v2201, 44
        %v2268 = vpop.permute.xlu0 %2267
        %2269 = vrot.lane.b32.xlu0 %v2202, 44
        %v2270 = vpop.permute.xlu0 %2269
        %2271 = vrot.lane.b32.xlu0 %v2203, 44
        %v2272 = vpop.permute.xlu0 %2271
        %2273 = vrot.lane.b32.xlu0 %v2204, 44
        %v2274 = vpop.permute.xlu0 %2273
        %2275 = vrot.lane.b32.xlu0 %v2205, 44
        %v2276 = vpop.permute.xlu0 %2275
        %2277 = vrot.lane.b32.xlu0 %v2206, 44
        %v2278 = vpop.permute.xlu0 %2277
        %2279 = vrot.lane.b32.xlu0 %v2207, 44
        %v2280 = vpop.permute.xlu0 %2279
        %2281 = vrot.lane.b32.xlu0 %v2208, 44
        %v2282 = vpop.permute.xlu0 %2281
        %2283 = vrot.lane.b32.xlu0 %v2209, 44
        %v2284 = vpop.permute.xlu0 %2283
        %2285 = vrot.lane.b32.xlu0 %v2210, 44
        %v2286 = vpop.permute.xlu0 %2285
        %2287 = vrot.lane.b32.xlu0 %v2211, 44
        %v2288 = vpop.permute.xlu0 %2287
        %2289 = vrot.lane.b32.xlu0 %v2212, 44
        %v2290 = vpop.permute.xlu0 %2289
        %2291 = vrot.lane.b32.xlu0 %v2213, 44
        %v2292 = vpop.permute.xlu0 %2291
        %2293 = vrot.lane.b32.xlu0 %v2214, 44
        %v2294 = vpop.permute.xlu0 %2293
        %2295 = vrot.lane.b32.xlu0 %v2215, 44
        %v2296 = vpop.permute.xlu0 %2295
        %2297 = vrot.lane.b32.xlu0 %v2216, 44
        %v2298 = vpop.permute.xlu0 %2297
        %2299 = vrot.lane.b32.xlu0 %v2217, 44
        %v2300 = vpop.permute.xlu0 %2299
        %2301 = vrot.lane.b32.xlu0 %v2218, 44
        %v2302 = vpop.permute.xlu0 %2301
        %2303 = vrot.lane.b32.xlu0 %v2219, 44
        %v2304 = vpop.permute.xlu0 %2303
        %2305 = vrot.lane.b32.xlu0 %v2220, 44
        %v2306 = vpop.permute.xlu0 %2305
        %2307 = vrot.lane.b32.xlu0 %v2221, 44
        %v2308 = vpop.permute.xlu0 %2307
        %2309 = vrot.lane.b32.xlu0 %v2222, 44
        %v2310 = vpop.permute.xlu0 %2309
        %2311 = vrot.lane.b32.xlu0 %v2223, 44
        %v2312 = vpop.permute.xlu0 %2311
        %2313 = vrot.lane.b32.xlu0 %v2224, 44
        %v2314 = vpop.permute.xlu0 %2313
        %2315 = vrot.lane.b32.xlu0 %v2225, 44
        %v2316 = vpop.permute.xlu0 %2315
        %2317 = vrot.lane.b32.xlu0 %v2226, 44
        %v2318 = vpop.permute.xlu0 %2317
        %2319 = vrot.lane.b32.xlu0 %v2227, 44
        %v2320 = vpop.permute.xlu0 %2319
        %2321 = vrot.lane.b32.xlu0 %v2228, 44
        %v2322 = vpop.permute.xlu0 %2321
        %2323 = vrot.lane.b32.xlu0 %v2229, 44
        %v2324 = vpop.permute.xlu0 %2323
        %2325 = vrot.lane.b32.xlu0 %v2230, 44
        %v2326 = vpop.permute.xlu0 %2325
        %vm2359 = vcmask 392544
        %2360 = vst.msk [vmem:[#allocation2] sm:$0xff] %vm2359, %v2264
        %2361 = vst.msk [vmem:[#allocation2 + $0x10] sm:$0xff] %vm2359, %v2266
        %2362 = vst.msk [vmem:[#allocation2 + $0x20] sm:$0xff] %vm2359, %v2268
        %2363 = vst.msk [vmem:[#allocation2 + $0x30] sm:$0xff] %vm2359, %v2270
        %2364 = vst.msk [vmem:[#allocation2 + $0x40] sm:$0xff] %vm2359, %v2272
        %2365 = vst.msk [vmem:[#allocation2 + $0x50] sm:$0xff] %vm2359, %v2274
        %2366 = vst.msk [vmem:[#allocation2 + $0x60] sm:$0xff] %vm2359, %v2276
        %2367 = vst.msk [vmem:[#allocation2 + $0x70] sm:$0xff] %vm2359, %v2278
        %2368 = vst.msk [vmem:[#allocation2 + $0x80] sm:$0xff] %vm2359, %v2280
        %2369 = vst.msk [vmem:[#allocation2 + $0x90] sm:$0xff] %vm2359, %v2282
        %2370 = vst.msk [vmem:[#allocation2 + $0xa0] sm:$0xff] %vm2359, %v2284
        %2371 = vst.msk [vmem:[#allocation2 + $0xb0] sm:$0xff] %vm2359, %v2286
        %2372 = vst.msk [vmem:[#allocation2 + $0xc0] sm:$0xff] %vm2359, %v2288
        %2373 = vst.msk [vmem:[#allocation2 + $0xd0] sm:$0xff] %vm2359, %v2290
        %2374 = vst.msk [vmem:[#allocation2 + $0xe0] sm:$0xff] %vm2359, %v2292
        %2375 = vst.msk [vmem:[#allocation2 + $0xf0] sm:$0xff] %vm2359, %v2294
        %2376 = vst.msk [vmem:[#allocation2 + $0x100] sm:$0xff] %vm2359, %v2296
        %2377 = vst.msk [vmem:[#allocation2 + $0x110] sm:$0xff] %vm2359, %v2298
        %2378 = vst.msk [vmem:[#allocation2 + $0x120] sm:$0xff] %vm2359, %v2300
        %2379 = vst.msk [vmem:[#allocation2 + $0x130] sm:$0xff] %vm2359, %v2302
        %2380 = vst.msk [vmem:[#allocation2 + $0x140] sm:$0xff] %vm2359, %v2304
        %2381 = vst.msk [vmem:[#allocation2 + $0x150] sm:$0xff] %vm2359, %v2306
        %2382 = vst.msk [vmem:[#allocation2 + $0x160] sm:$0xff] %vm2359, %v2308
        %2383 = vst.msk [vmem:[#allocation2 + $0x170] sm:$0xff] %vm2359, %v2310
        %2384 = vst.msk [vmem:[#allocation2 + $0x180] sm:$0xff] %vm2359, %v2312
        %2385 = vst.msk [vmem:[#allocation2 + $0x190] sm:$0xff] %vm2359, %v2314
        %2386 = vst.msk [vmem:[#allocation2 + $0x1a0] sm:$0xff] %vm2359, %v2316
        %2387 = vst.msk [vmem:[#allocation2 + $0x1b0] sm:$0xff] %vm2359, %v2318
        %2388 = vst.msk [vmem:[#allocation2 + $0x1c0] sm:$0xff] %vm2359, %v2320
        %2389 = vst.msk [vmem:[#allocation2 + $0x1d0] sm:$0xff] %vm2359, %v2322
        %2390 = vst.msk [vmem:[#allocation2 + $0x1e0] sm:$0xff] %vm2359, %v2324
        %2391 = vst.msk [vmem:[#allocation2 + $0x1f0] sm:$0xff] %vm2359, %v2326
        %v2392 = vld [vmem:[%s1426 + $0x5] sm:$0xff]
        %v2393 = vld [vmem:[%s1426 + $0xd] sm:$0xff]
        %v2394 = vld [vmem:[%s1426 + $0x1d] sm:$0xff]
        %v2395 = vld [vmem:[%s1426 + $0x25] sm:$0xff]
        %v2396 = vld [vmem:[%s1426 + $0x35] sm:$0xff]
        %v2397 = vld [vmem:[%s1426 + $0x3d] sm:$0xff]
        %v2398 = vld [vmem:[%s1426 + $0x4d] sm:$0xff]
        %v2399 = vld [vmem:[%s1426 + $0x55] sm:$0xff]
        %v2400 = vld [vmem:[%s1426 + $0x65] sm:$0xff]
        %v2401 = vld [vmem:[%s1426 + $0x6d] sm:$0xff]
        %v2402 = vld [vmem:[%s1426 + $0x7d] sm:$0xff]
        %v2403 = vld [vmem:[%s1426 + $0x85] sm:$0xff]
        %v2404 = vld [vmem:[%s1426 + $0x95] sm:$0xff]
        %v2405 = vld [vmem:[%s1426 + $0x9d] sm:$0xff]
        %v2406 = vld [vmem:[%s1426 + $0xad] sm:$0xff]
        %v2407 = vld [vmem:[%s1426 + $0xb5] sm:$0xff]
        %v2408 = vld [vmem:[%s1426 + $0xc5] sm:$0xff]
        %v2409 = vld [vmem:[%s1426 + $0xcd] sm:$0xff]
        %v2410 = vld [vmem:[%s1426 + $0xdd] sm:$0xff]
        %v2411 = vld [vmem:[%s1426 + $0xe5] sm:$0xff]
        %v2412 = vld [vmem:[%s1426 + $0xf5] sm:$0xff]
        %v2413 = vld [vmem:[%s1426 + $0xfd] sm:$0xff]
        %v2414 = vld [vmem:[%s1426 + $0x10d] sm:$0xff]
        %v2415 = vld [vmem:[%s1426 + $0x115] sm:$0xff]
        %v2416 = vld [vmem:[%s1426 + $0x125] sm:$0xff]
        %v2417 = vld [vmem:[%s1426 + $0x12d] sm:$0xff]
        %v2418 = vld [vmem:[%s1426 + $0x13d] sm:$0xff]
        %v2419 = vld [vmem:[%s1426 + $0x145] sm:$0xff]
        %v2420 = vld [vmem:[%s1426 + $0x155] sm:$0xff]
        %v2421 = vld [vmem:[%s1426 + $0x15d] sm:$0xff]
        %v2422 = vld [vmem:[%s1426 + $0x16d] sm:$0xff]
        %v2423 = vld [vmem:[%s1426 + $0x175] sm:$0xff]
        %2456 = vrot.lane.b32.xlu0 %v2392, 48
        %v2457 = vpop.permute.xlu0 %2456
        %2458 = vrot.lane.b32.xlu0 %v2393, 48
        %v2459 = vpop.permute.xlu0 %2458
        %2460 = vrot.lane.b32.xlu0 %v2394, 48
        %v2461 = vpop.permute.xlu0 %2460
        %2462 = vrot.lane.b32.xlu0 %v2395, 48
        %v2463 = vpop.permute.xlu0 %2462
        %2464 = vrot.lane.b32.xlu0 %v2396, 48
        %v2465 = vpop.permute.xlu0 %2464
        %2466 = vrot.lane.b32.xlu0 %v2397, 48
        %v2467 = vpop.permute.xlu0 %2466
        %2468 = vrot.lane.b32.xlu0 %v2398, 48
        %v2469 = vpop.permute.xlu0 %2468
        %2470 = vrot.lane.b32.xlu0 %v2399, 48
        %v2471 = vpop.permute.xlu0 %2470
        %2472 = vrot.lane.b32.xlu0 %v2400, 48
        %v2473 = vpop.permute.xlu0 %2472
        %2474 = vrot.lane.b32.xlu0 %v2401, 48
        %v2475 = vpop.permute.xlu0 %2474
        %2476 = vrot.lane.b32.xlu0 %v2402, 48
        %v2477 = vpop.permute.xlu0 %2476
        %2478 = vrot.lane.b32.xlu0 %v2403, 48
        %v2479 = vpop.permute.xlu0 %2478
        %2480 = vrot.lane.b32.xlu0 %v2404, 48
        %v2481 = vpop.permute.xlu0 %2480
        %2482 = vrot.lane.b32.xlu0 %v2405, 48
        %v2483 = vpop.permute.xlu0 %2482
        %2484 = vrot.lane.b32.xlu0 %v2406, 48
        %v2485 = vpop.permute.xlu0 %2484
        %2486 = vrot.lane.b32.xlu0 %v2407, 48
        %v2487 = vpop.permute.xlu0 %2486
        %2488 = vrot.lane.b32.xlu0 %v2408, 48
        %v2489 = vpop.permute.xlu0 %2488
        %2490 = vrot.lane.b32.xlu0 %v2409, 48
        %v2491 = vpop.permute.xlu0 %2490
        %2492 = vrot.lane.b32.xlu0 %v2410, 48
        %v2493 = vpop.permute.xlu0 %2492
        %2494 = vrot.lane.b32.xlu0 %v2411, 48
        %v2495 = vpop.permute.xlu0 %2494
        %2496 = vrot.lane.b32.xlu0 %v2412, 48
        %v2497 = vpop.permute.xlu0 %2496
        %2498 = vrot.lane.b32.xlu0 %v2413, 48
        %v2499 = vpop.permute.xlu0 %2498
        %2500 = vrot.lane.b32.xlu0 %v2414, 48
        %v2501 = vpop.permute.xlu0 %2500
        %2502 = vrot.lane.b32.xlu0 %v2415, 48
        %v2503 = vpop.permute.xlu0 %2502
        %2504 = vrot.lane.b32.xlu0 %v2416, 48
        %v2505 = vpop.permute.xlu0 %2504
        %2506 = vrot.lane.b32.xlu0 %v2417, 48
        %v2507 = vpop.permute.xlu0 %2506
        %2508 = vrot.lane.b32.xlu0 %v2418, 48
        %v2509 = vpop.permute.xlu0 %2508
        %2510 = vrot.lane.b32.xlu0 %v2419, 48
        %v2511 = vpop.permute.xlu0 %2510
        %2512 = vrot.lane.b32.xlu0 %v2420, 48
        %v2513 = vpop.permute.xlu0 %2512
        %2514 = vrot.lane.b32.xlu0 %v2421, 48
        %v2515 = vpop.permute.xlu0 %2514
        %2516 = vrot.lane.b32.xlu0 %v2422, 48
        %v2517 = vpop.permute.xlu0 %2516
        %2518 = vrot.lane.b32.xlu0 %v2423, 48
        %v2519 = vpop.permute.xlu0 %2518
        %vm2552 = vcmask 425344
        %2553 = vst.msk [vmem:[#allocation2] sm:$0xff] %vm2552, %v2457
        %2554 = vst.msk [vmem:[#allocation2 + $0x10] sm:$0xff] %vm2552, %v2459
        %2555 = vst.msk [vmem:[#allocation2 + $0x20] sm:$0xff] %vm2552, %v2461
        %2556 = vst.msk [vmem:[#allocation2 + $0x30] sm:$0xff] %vm2552, %v2463
        %2557 = vst.msk [vmem:[#allocation2 + $0x40] sm:$0xff] %vm2552, %v2465
        %2558 = vst.msk [vmem:[#allocation2 + $0x50] sm:$0xff] %vm2552, %v2467
        %2559 = vst.msk [vmem:[#allocation2 + $0x60] sm:$0xff] %vm2552, %v2469
        %2560 = vst.msk [vmem:[#allocation2 + $0x70] sm:$0xff] %vm2552, %v2471
        %2561 = vst.msk [vmem:[#allocation2 + $0x80] sm:$0xff] %vm2552, %v2473
        %2562 = vst.msk [vmem:[#allocation2 + $0x90] sm:$0xff] %vm2552, %v2475
        %2563 = vst.msk [vmem:[#allocation2 + $0xa0] sm:$0xff] %vm2552, %v2477
        %2564 = vst.msk [vmem:[#allocation2 + $0xb0] sm:$0xff] %vm2552, %v2479
        %2565 = vst.msk [vmem:[#allocation2 + $0xc0] sm:$0xff] %vm2552, %v2481
        %2566 = vst.msk [vmem:[#allocation2 + $0xd0] sm:$0xff] %vm2552, %v2483
        %2567 = vst.msk [vmem:[#allocation2 + $0xe0] sm:$0xff] %vm2552, %v2485
        %2568 = vst.msk [vmem:[#allocation2 + $0xf0] sm:$0xff] %vm2552, %v2487
        %2569 = vst.msk [vmem:[#allocation2 + $0x100] sm:$0xff] %vm2552, %v2489
        %2570 = vst.msk [vmem:[#allocation2 + $0x110] sm:$0xff] %vm2552, %v2491
        %2571 = vst.msk [vmem:[#allocation2 + $0x120] sm:$0xff] %vm2552, %v2493
        %2572 = vst.msk [vmem:[#allocation2 + $0x130] sm:$0xff] %vm2552, %v2495
        %2573 = vst.msk [vmem:[#allocation2 + $0x140] sm:$0xff] %vm2552, %v2497
        %2574 = vst.msk [vmem:[#allocation2 + $0x150] sm:$0xff] %vm2552, %v2499
        %2575 = vst.msk [vmem:[#allocation2 + $0x160] sm:$0xff] %vm2552, %v2501
        %2576 = vst.msk [vmem:[#allocation2 + $0x170] sm:$0xff] %vm2552, %v2503
        %2577 = vst.msk [vmem:[#allocation2 + $0x180] sm:$0xff] %vm2552, %v2505
        %2578 = vst.msk [vmem:[#allocation2 + $0x190] sm:$0xff] %vm2552, %v2507
        %2579 = vst.msk [vmem:[#allocation2 + $0x1a0] sm:$0xff] %vm2552, %v2509
        %2580 = vst.msk [vmem:[#allocation2 + $0x1b0] sm:$0xff] %vm2552, %v2511
        %2581 = vst.msk [vmem:[#allocation2 + $0x1c0] sm:$0xff] %vm2552, %v2513
        %2582 = vst.msk [vmem:[#allocation2 + $0x1d0] sm:$0xff] %vm2552, %v2515
        %2583 = vst.msk [vmem:[#allocation2 + $0x1e0] sm:$0xff] %vm2552, %v2517
        %2584 = vst.msk [vmem:[#allocation2 + $0x1f0] sm:$0xff] %vm2552, %v2519
        %v2585 = vld [vmem:[%s1426 + $0x6] sm:$0xff]
        %v2586 = vld [vmem:[%s1426 + $0xe] sm:$0xff]
        %v2587 = vld [vmem:[%s1426 + $0x1e] sm:$0xff]
        %v2588 = vld [vmem:[%s1426 + $0x26] sm:$0xff]
        %v2589 = vld [vmem:[%s1426 + $0x36] sm:$0xff]
        %v2590 = vld [vmem:[%s1426 + $0x3e] sm:$0xff]
        %v2591 = vld [vmem:[%s1426 + $0x4e] sm:$0xff]
        %v2592 = vld [vmem:[%s1426 + $0x56] sm:$0xff]
        %v2593 = vld [vmem:[%s1426 + $0x66] sm:$0xff]
        %v2594 = vld [vmem:[%s1426 + $0x6e] sm:$0xff]
        %v2595 = vld [vmem:[%s1426 + $0x7e] sm:$0xff]
        %v2596 = vld [vmem:[%s1426 + $0x86] sm:$0xff]
        %v2597 = vld [vmem:[%s1426 + $0x96] sm:$0xff]
        %v2598 = vld [vmem:[%s1426 + $0x9e] sm:$0xff]
        %v2599 = vld [vmem:[%s1426 + $0xae] sm:$0xff]
        %v2600 = vld [vmem:[%s1426 + $0xb6] sm:$0xff]
        %v2601 = vld [vmem:[%s1426 + $0xc6] sm:$0xff]
        %v2602 = vld [vmem:[%s1426 + $0xce] sm:$0xff]
        %v2603 = vld [vmem:[%s1426 + $0xde] sm:$0xff]
        %v2604 = vld [vmem:[%s1426 + $0xe6] sm:$0xff]
        %v2605 = vld [vmem:[%s1426 + $0xf6] sm:$0xff]
        %v2606 = vld [vmem:[%s1426 + $0xfe] sm:$0xff]
        %v2607 = vld [vmem:[%s1426 + $0x10e] sm:$0xff]
        %v2608 = vld [vmem:[%s1426 + $0x116] sm:$0xff]
        %v2609 = vld [vmem:[%s1426 + $0x126] sm:$0xff]
        %v2610 = vld [vmem:[%s1426 + $0x12e] sm:$0xff]
        %v2611 = vld [vmem:[%s1426 + $0x13e] sm:$0xff]
        %v2612 = vld [vmem:[%s1426 + $0x146] sm:$0xff]
        %v2613 = vld [vmem:[%s1426 + $0x156] sm:$0xff]
        %v2614 = vld [vmem:[%s1426 + $0x15e] sm:$0xff]
        %v2615 = vld [vmem:[%s1426 + $0x16e] sm:$0xff]
        %v2616 = vld [vmem:[%s1426 + $0x176] sm:$0xff]
        %2649 = vrot.lane.b32.xlu0 %v2585, 52
        %v2650 = vpop.permute.xlu0 %2649
        %2651 = vrot.lane.b32.xlu0 %v2586, 52
        %v2652 = vpop.permute.xlu0 %2651
        %2653 = vrot.lane.b32.xlu0 %v2587, 52
        %v2654 = vpop.permute.xlu0 %2653
        %2655 = vrot.lane.b32.xlu0 %v2588, 52
        %v2656 = vpop.permute.xlu0 %2655
        %2657 = vrot.lane.b32.xlu0 %v2589, 52
        %v2658 = vpop.permute.xlu0 %2657
        %2659 = vrot.lane.b32.xlu0 %v2590, 52
        %v2660 = vpop.permute.xlu0 %2659
        %2661 = vrot.lane.b32.xlu0 %v2591, 52
        %v2662 = vpop.permute.xlu0 %2661
        %2663 = vrot.lane.b32.xlu0 %v2592, 52
        %v2664 = vpop.permute.xlu0 %2663
        %2665 = vrot.lane.b32.xlu0 %v2593, 52
        %v2666 = vpop.permute.xlu0 %2665
        %2667 = vrot.lane.b32.xlu0 %v2594, 52
        %v2668 = vpop.permute.xlu0 %2667
        %2669 = vrot.lane.b32.xlu0 %v2595, 52
        %v2670 = vpop.permute.xlu0 %2669
        %2671 = vrot.lane.b32.xlu0 %v2596, 52
        %v2672 = vpop.permute.xlu0 %2671
        %2673 = vrot.lane.b32.xlu0 %v2597, 52
        %v2674 = vpop.permute.xlu0 %2673
        %2675 = vrot.lane.b32.xlu0 %v2598, 52
        %v2676 = vpop.permute.xlu0 %2675
        %2677 = vrot.lane.b32.xlu0 %v2599, 52
        %v2678 = vpop.permute.xlu0 %2677
        %2679 = vrot.lane.b32.xlu0 %v2600, 52
        %v2680 = vpop.permute.xlu0 %2679
        %2681 = vrot.lane.b32.xlu0 %v2601, 52
        %v2682 = vpop.permute.xlu0 %2681
        %2683 = vrot.lane.b32.xlu0 %v2602, 52
        %v2684 = vpop.permute.xlu0 %2683
        %2685 = vrot.lane.b32.xlu0 %v2603, 52
        %v2686 = vpop.permute.xlu0 %2685
        %2687 = vrot.lane.b32.xlu0 %v2604, 52
        %v2688 = vpop.permute.xlu0 %2687
        %2689 = vrot.lane.b32.xlu0 %v2605, 52
        %v2690 = vpop.permute.xlu0 %2689
        %2691 = vrot.lane.b32.xlu0 %v2606, 52
        %v2692 = vpop.permute.xlu0 %2691
        %2693 = vrot.lane.b32.xlu0 %v2607, 52
        %v2694 = vpop.permute.xlu0 %2693
        %2695 = vrot.lane.b32.xlu0 %v2608, 52
        %v2696 = vpop.permute.xlu0 %2695
        %2697 = vrot.lane.b32.xlu0 %v2609, 52
        %v2698 = vpop.permute.xlu0 %2697
        %2699 = vrot.lane.b32.xlu0 %v2610, 52
        %v2700 = vpop.permute.xlu0 %2699
        %2701 = vrot.lane.b32.xlu0 %v2611, 52
        %v2702 = vpop.permute.xlu0 %2701
        %2703 = vrot.lane.b32.xlu0 %v2612, 52
        %v2704 = vpop.permute.xlu0 %2703
        %2705 = vrot.lane.b32.xlu0 %v2613, 52
        %v2706 = vpop.permute.xlu0 %2705
        %2707 = vrot.lane.b32.xlu0 %v2614, 52
        %v2708 = vpop.permute.xlu0 %2707
        %2709 = vrot.lane.b32.xlu0 %v2615, 52
        %v2710 = vpop.permute.xlu0 %2709
        %2711 = vrot.lane.b32.xlu0 %v2616, 52
        %v2712 = vpop.permute.xlu0 %2711
        %vm2745 = vcmask 458144
        %2746 = vst.msk [vmem:[#allocation2] sm:$0xff] %vm2745, %v2650
        %2747 = vst.msk [vmem:[#allocation2 + $0x10] sm:$0xff] %vm2745, %v2652
        %2748 = vst.msk [vmem:[#allocation2 + $0x20] sm:$0xff] %vm2745, %v2654
        %2749 = vst.msk [vmem:[#allocation2 + $0x30] sm:$0xff] %vm2745, %v2656
        %2750 = vst.msk [vmem:[#allocation2 + $0x40] sm:$0xff] %vm2745, %v2658
        %2751 = vst.msk [vmem:[#allocation2 + $0x50] sm:$0xff] %vm2745, %v2660
        %2752 = vst.msk [vmem:[#allocation2 + $0x60] sm:$0xff] %vm2745, %v2662
        %2753 = vst.msk [vmem:[#allocation2 + $0x70] sm:$0xff] %vm2745, %v2664
        %2754 = vst.msk [vmem:[#allocation2 + $0x80] sm:$0xff] %vm2745, %v2666
        %2755 = vst.msk [vmem:[#allocation2 + $0x90] sm:$0xff] %vm2745, %v2668
        %2756 = vst.msk [vmem:[#allocation2 + $0xa0] sm:$0xff] %vm2745, %v2670
        %2757 = vst.msk [vmem:[#allocation2 + $0xb0] sm:$0xff] %vm2745, %v2672
        %2758 = vst.msk [vmem:[#allocation2 + $0xc0] sm:$0xff] %vm2745, %v2674
        %2759 = vst.msk [vmem:[#allocation2 + $0xd0] sm:$0xff] %vm2745, %v2676
        %2760 = vst.msk [vmem:[#allocation2 + $0xe0] sm:$0xff] %vm2745, %v2678
        %2761 = vst.msk [vmem:[#allocation2 + $0xf0] sm:$0xff] %vm2745, %v2680
        %2762 = vst.msk [vmem:[#allocation2 + $0x100] sm:$0xff] %vm2745, %v2682
        %2763 = vst.msk [vmem:[#allocation2 + $0x110] sm:$0xff] %vm2745, %v2684
        %2764 = vst.msk [vmem:[#allocation2 + $0x120] sm:$0xff] %vm2745, %v2686
        %2765 = vst.msk [vmem:[#allocation2 + $0x130] sm:$0xff] %vm2745, %v2688
        %2766 = vst.msk [vmem:[#allocation2 + $0x140] sm:$0xff] %vm2745, %v2690
        %2767 = vst.msk [vmem:[#allocation2 + $0x150] sm:$0xff] %vm2745, %v2692
        %2768 = vst.msk [vmem:[#allocation2 + $0x160] sm:$0xff] %vm2745, %v2694
        %2769 = vst.msk [vmem:[#allocation2 + $0x170] sm:$0xff] %vm2745, %v2696
        %2770 = vst.msk [vmem:[#allocation2 + $0x180] sm:$0xff] %vm2745, %v2698
        %2771 = vst.msk [vmem:[#allocation2 + $0x190] sm:$0xff] %vm2745, %v2700
        %2772 = vst.msk [vmem:[#allocation2 + $0x1a0] sm:$0xff] %vm2745, %v2702
        %2773 = vst.msk [vmem:[#allocation2 + $0x1b0] sm:$0xff] %vm2745, %v2704
        %2774 = vst.msk [vmem:[#allocation2 + $0x1c0] sm:$0xff] %vm2745, %v2706
        %2775 = vst.msk [vmem:[#allocation2 + $0x1d0] sm:$0xff] %vm2745, %v2708
        %2776 = vst.msk [vmem:[#allocation2 + $0x1e0] sm:$0xff] %vm2745, %v2710
        %2777 = vst.msk [vmem:[#allocation2 + $0x1f0] sm:$0xff] %vm2745, %v2712
        %s2778 = scalar_lea.vmem %s197, 48
        %v2779 = vld [vmem:[%s2778] sm:$0xff]
        %v2780 = vld [vmem:[%s2778 + $0x8] sm:$0xff]
        %v2781 = vld [vmem:[%s2778 + $0x18] sm:$0xff]
        %v2782 = vld [vmem:[%s2778 + $0x20] sm:$0xff]
        %v2783 = vld [vmem:[%s2778 + $0x30] sm:$0xff]
        %v2784 = vld [vmem:[%s2778 + $0x38] sm:$0xff]
        %v2785 = vld [vmem:[%s2778 + $0x48] sm:$0xff]
        %v2786 = vld [vmem:[%s2778 + $0x50] sm:$0xff]
        %v2787 = vld [vmem:[%s2778 + $0x60] sm:$0xff]
        %v2788 = vld [vmem:[%s2778 + $0x68] sm:$0xff]
        %v2789 = vld [vmem:[%s2778 + $0x78] sm:$0xff]
        %v2790 = vld [vmem:[%s2778 + $0x80] sm:$0xff]
        %v2791 = vld [vmem:[%s2778 + $0x90] sm:$0xff]
        %v2792 = vld [vmem:[%s2778 + $0x98] sm:$0xff]
        %v2793 = vld [vmem:[%s2778 + $0xa8] sm:$0xff]
        %v2794 = vld [vmem:[%s2778 + $0xb0] sm:$0xff]
        %v2795 = vld [vmem:[%s2778 + $0xc0] sm:$0xff]
        %v2796 = vld [vmem:[%s2778 + $0xc8] sm:$0xff]
        %v2797 = vld [vmem:[%s2778 + $0xd8] sm:$0xff]
        %v2798 = vld [vmem:[%s2778 + $0xe0] sm:$0xff]
        %v2799 = vld [vmem:[%s2778 + $0xf0] sm:$0xff]
        %v2800 = vld [vmem:[%s2778 + $0xf8] sm:$0xff]
        %v2801 = vld [vmem:[%s2778 + $0x108] sm:$0xff]
        %v2802 = vld [vmem:[%s2778 + $0x110] sm:$0xff]
        %v2803 = vld [vmem:[%s2778 + $0x120] sm:$0xff]
        %v2804 = vld [vmem:[%s2778 + $0x128] sm:$0xff]
        %v2805 = vld [vmem:[%s2778 + $0x138] sm:$0xff]
        %v2806 = vld [vmem:[%s2778 + $0x140] sm:$0xff]
        %v2807 = vld [vmem:[%s2778 + $0x150] sm:$0xff]
        %v2808 = vld [vmem:[%s2778 + $0x158] sm:$0xff]
        %v2809 = vld [vmem:[%s2778 + $0x168] sm:$0xff]
        %v2810 = vld [vmem:[%s2778 + $0x170] sm:$0xff]
        %2843 = vrot.lane.b32.xlu0 %v2779, 56
        %v2844 = vpop.permute.xlu0 %2843
        %2845 = vrot.lane.b32.xlu0 %v2780, 56
        %v2846 = vpop.permute.xlu0 %2845
        %2847 = vrot.lane.b32.xlu0 %v2781, 56
        %v2848 = vpop.permute.xlu0 %2847
        %2849 = vrot.lane.b32.xlu0 %v2782, 56
        %v2850 = vpop.permute.xlu0 %2849
        %2851 = vrot.lane.b32.xlu0 %v2783, 56
        %v2852 = vpop.permute.xlu0 %2851
        %2853 = vrot.lane.b32.xlu0 %v2784, 56
        %v2854 = vpop.permute.xlu0 %2853
        %2855 = vrot.lane.b32.xlu0 %v2785, 56
        %v2856 = vpop.permute.xlu0 %2855
        %2857 = vrot.lane.b32.xlu0 %v2786, 56
        %v2858 = vpop.permute.xlu0 %2857
        %2859 = vrot.lane.b32.xlu0 %v2787, 56
        %v2860 = vpop.permute.xlu0 %2859
        %2861 = vrot.lane.b32.xlu0 %v2788, 56
        %v2862 = vpop.permute.xlu0 %2861
        %2863 = vrot.lane.b32.xlu0 %v2789, 56
        %v2864 = vpop.permute.xlu0 %2863
        %2865 = vrot.lane.b32.xlu0 %v2790, 56
        %v2866 = vpop.permute.xlu0 %2865
        %2867 = vrot.lane.b32.xlu0 %v2791, 56
        %v2868 = vpop.permute.xlu0 %2867
        %2869 = vrot.lane.b32.xlu0 %v2792, 56
        %v2870 = vpop.permute.xlu0 %2869
        %2871 = vrot.lane.b32.xlu0 %v2793, 56
        %v2872 = vpop.permute.xlu0 %2871
        %2873 = vrot.lane.b32.xlu0 %v2794, 56
        %v2874 = vpop.permute.xlu0 %2873
        %2875 = vrot.lane.b32.xlu0 %v2795, 56
        %v2876 = vpop.permute.xlu0 %2875
        %2877 = vrot.lane.b32.xlu0 %v2796, 56
        %v2878 = vpop.permute.xlu0 %2877
        %2879 = vrot.lane.b32.xlu0 %v2797, 56
        %v2880 = vpop.permute.xlu0 %2879
        %2881 = vrot.lane.b32.xlu0 %v2798, 56
        %v2882 = vpop.permute.xlu0 %2881
        %2883 = vrot.lane.b32.xlu0 %v2799, 56
        %v2884 = vpop.permute.xlu0 %2883
        %2885 = vrot.lane.b32.xlu0 %v2800, 56
        %v2886 = vpop.permute.xlu0 %2885
        %2887 = vrot.lane.b32.xlu0 %v2801, 56
        %v2888 = vpop.permute.xlu0 %2887
        %2889 = vrot.lane.b32.xlu0 %v2802, 56
        %v2890 = vpop.permute.xlu0 %2889
        %2891 = vrot.lane.b32.xlu0 %v2803, 56
        %v2892 = vpop.permute.xlu0 %2891
        %2893 = vrot.lane.b32.xlu0 %v2804, 56
        %v2894 = vpop.permute.xlu0 %2893
        %2895 = vrot.lane.b32.xlu0 %v2805, 56
        %v2896 = vpop.permute.xlu0 %2895
        %2897 = vrot.lane.b32.xlu0 %v2806, 56
        %v2898 = vpop.permute.xlu0 %2897
        %2899 = vrot.lane.b32.xlu0 %v2807, 56
        %v2900 = vpop.permute.xlu0 %2899
        %2901 = vrot.lane.b32.xlu0 %v2808, 56
        %v2902 = vpop.permute.xlu0 %2901
        %2903 = vrot.lane.b32.xlu0 %v2809, 56
        %v2904 = vpop.permute.xlu0 %2903
        %2905 = vrot.lane.b32.xlu0 %v2810, 56
        %v2906 = vpop.permute.xlu0 %2905
        %vm2939 = vcmask 490944
        %2940 = vst.msk [vmem:[#allocation2] sm:$0xff] %vm2939, %v2844
        %2941 = vst.msk [vmem:[#allocation2 + $0x10] sm:$0xff] %vm2939, %v2846
        %2942 = vst.msk [vmem:[#allocation2 + $0x20] sm:$0xff] %vm2939, %v2848
        %2943 = vst.msk [vmem:[#allocation2 + $0x30] sm:$0xff] %vm2939, %v2850
        %2944 = vst.msk [vmem:[#allocation2 + $0x40] sm:$0xff] %vm2939, %v2852
        %2945 = vst.msk [vmem:[#allocation2 + $0x50] sm:$0xff] %vm2939, %v2854
        %2946 = vst.msk [vmem:[#allocation2 + $0x60] sm:$0xff] %vm2939, %v2856
        %2947 = vst.msk [vmem:[#allocation2 + $0x70] sm:$0xff] %vm2939, %v2858
        %2948 = vst.msk [vmem:[#allocation2 + $0x80] sm:$0xff] %vm2939, %v2860
        %2949 = vst.msk [vmem:[#allocation2 + $0x90] sm:$0xff] %vm2939, %v2862
        %2950 = vst.msk [vmem:[#allocation2 + $0xa0] sm:$0xff] %vm2939, %v2864
        %2951 = vst.msk [vmem:[#allocation2 + $0xb0] sm:$0xff] %vm2939, %v2866
        %2952 = vst.msk [vmem:[#allocation2 + $0xc0] sm:$0xff] %vm2939, %v2868
        %2953 = vst.msk [vmem:[#allocation2 + $0xd0] sm:$0xff] %vm2939, %v2870
        %2954 = vst.msk [vmem:[#allocation2 + $0xe0] sm:$0xff] %vm2939, %v2872
        %2955 = vst.msk [vmem:[#allocation2 + $0xf0] sm:$0xff] %vm2939, %v2874
        %2956 = vst.msk [vmem:[#allocation2 + $0x100] sm:$0xff] %vm2939, %v2876
        %2957 = vst.msk [vmem:[#allocation2 + $0x110] sm:$0xff] %vm2939, %v2878
        %2958 = vst.msk [vmem:[#allocation2 + $0x120] sm:$0xff] %vm2939, %v2880
        %2959 = vst.msk [vmem:[#allocation2 + $0x130] sm:$0xff] %vm2939, %v2882
        %2960 = vst.msk [vmem:[#allocation2 + $0x140] sm:$0xff] %vm2939, %v2884
        %2961 = vst.msk [vmem:[#allocation2 + $0x150] sm:$0xff] %vm2939, %v2886
        %2962 = vst.msk [vmem:[#allocation2 + $0x160] sm:$0xff] %vm2939, %v2888
        %2963 = vst.msk [vmem:[#allocation2 + $0x170] sm:$0xff] %vm2939, %v2890
        %2964 = vst.msk [vmem:[#allocation2 + $0x180] sm:$0xff] %vm2939, %v2892
        %2965 = vst.msk [vmem:[#allocation2 + $0x190] sm:$0xff] %vm2939, %v2894
        %2966 = vst.msk [vmem:[#allocation2 + $0x1a0] sm:$0xff] %vm2939, %v2896
        %2967 = vst.msk [vmem:[#allocation2 + $0x1b0] sm:$0xff] %vm2939, %v2898
        %2968 = vst.msk [vmem:[#allocation2 + $0x1c0] sm:$0xff] %vm2939, %v2900
        %2969 = vst.msk [vmem:[#allocation2 + $0x1d0] sm:$0xff] %vm2939, %v2902
        %2970 = vst.msk [vmem:[#allocation2 + $0x1e0] sm:$0xff] %vm2939, %v2904
        %2971 = vst.msk [vmem:[#allocation2 + $0x1f0] sm:$0xff] %vm2939, %v2906
        %v2972 = vld [vmem:[%s2778 + $0x1] sm:$0xff]
        %v2973 = vld [vmem:[%s2778 + $0x9] sm:$0xff]
        %v2974 = vld [vmem:[%s2778 + $0x19] sm:$0xff]
        %v2975 = vld [vmem:[%s2778 + $0x21] sm:$0xff]
        %v2976 = vld [vmem:[%s2778 + $0x31] sm:$0xff]
        %v2977 = vld [vmem:[%s2778 + $0x39] sm:$0xff]
        %v2978 = vld [vmem:[%s2778 + $0x49] sm:$0xff]
        %v2979 = vld [vmem:[%s2778 + $0x51] sm:$0xff]
        %v2980 = vld [vmem:[%s2778 + $0x61] sm:$0xff]
        %v2981 = vld [vmem:[%s2778 + $0x69] sm:$0xff]
        %v2982 = vld [vmem:[%s2778 + $0x79] sm:$0xff]
        %v2983 = vld [vmem:[%s2778 + $0x81] sm:$0xff]
        %v2984 = vld [vmem:[%s2778 + $0x91] sm:$0xff]
        %v2985 = vld [vmem:[%s2778 + $0x99] sm:$0xff]
        %v2986 = vld [vmem:[%s2778 + $0xa9] sm:$0xff]
        %v2987 = vld [vmem:[%s2778 + $0xb1] sm:$0xff]
        %v2988 = vld [vmem:[%s2778 + $0xc1] sm:$0xff]
        %v2989 = vld [vmem:[%s2778 + $0xc9] sm:$0xff]
        %v2990 = vld [vmem:[%s2778 + $0xd9] sm:$0xff]
        %v2991 = vld [vmem:[%s2778 + $0xe1] sm:$0xff]
        %v2992 = vld [vmem:[%s2778 + $0xf1] sm:$0xff]
        %v2993 = vld [vmem:[%s2778 + $0xf9] sm:$0xff]
        %v2994 = vld [vmem:[%s2778 + $0x109] sm:$0xff]
        %v2995 = vld [vmem:[%s2778 + $0x111] sm:$0xff]
        %v2996 = vld [vmem:[%s2778 + $0x121] sm:$0xff]
        %v2997 = vld [vmem:[%s2778 + $0x129] sm:$0xff]
        %v2998 = vld [vmem:[%s2778 + $0x139] sm:$0xff]
        %v2999 = vld [vmem:[%s2778 + $0x141] sm:$0xff]
        %v3000 = vld [vmem:[%s2778 + $0x151] sm:$0xff]
        %v3001 = vld [vmem:[%s2778 + $0x159] sm:$0xff]
        %v3002 = vld [vmem:[%s2778 + $0x169] sm:$0xff]
        %v3003 = vld [vmem:[%s2778 + $0x171] sm:$0xff]
        %3036 = vrot.lane.b32.xlu0 %v2972, 60
        %v3037 = vpop.permute.xlu0 %3036
        %3038 = vrot.lane.b32.xlu0 %v2973, 60
        %v3039 = vpop.permute.xlu0 %3038
        %3040 = vrot.lane.b32.xlu0 %v2974, 60
        %v3041 = vpop.permute.xlu0 %3040
        %3042 = vrot.lane.b32.xlu0 %v2975, 60
        %v3043 = vpop.permute.xlu0 %3042
        %3044 = vrot.lane.b32.xlu0 %v2976, 60
        %v3045 = vpop.permute.xlu0 %3044
        %3046 = vrot.lane.b32.xlu0 %v2977, 60
        %v3047 = vpop.permute.xlu0 %3046
        %3048 = vrot.lane.b32.xlu0 %v2978, 60
        %v3049 = vpop.permute.xlu0 %3048
        %3050 = vrot.lane.b32.xlu0 %v2979, 60
        %v3051 = vpop.permute.xlu0 %3050
        %3052 = vrot.lane.b32.xlu0 %v2980, 60
        %v3053 = vpop.permute.xlu0 %3052
        %3054 = vrot.lane.b32.xlu0 %v2981, 60
        %v3055 = vpop.permute.xlu0 %3054
        %3056 = vrot.lane.b32.xlu0 %v2982, 60
        %v3057 = vpop.permute.xlu0 %3056
        %3058 = vrot.lane.b32.xlu0 %v2983, 60
        %v3059 = vpop.permute.xlu0 %3058
        %3060 = vrot.lane.b32.xlu0 %v2984, 60
        %v3061 = vpop.permute.xlu0 %3060
        %3062 = vrot.lane.b32.xlu0 %v2985, 60
        %v3063 = vpop.permute.xlu0 %3062
        %3064 = vrot.lane.b32.xlu0 %v2986, 60
        %v3065 = vpop.permute.xlu0 %3064
        %3066 = vrot.lane.b32.xlu0 %v2987, 60
        %v3067 = vpop.permute.xlu0 %3066
        %3068 = vrot.lane.b32.xlu0 %v2988, 60
        %v3069 = vpop.permute.xlu0 %3068
        %3070 = vrot.lane.b32.xlu0 %v2989, 60
        %v3071 = vpop.permute.xlu0 %3070
        %3072 = vrot.lane.b32.xlu0 %v2990, 60
        %v3073 = vpop.permute.xlu0 %3072
        %3074 = vrot.lane.b32.xlu0 %v2991, 60
        %v3075 = vpop.permute.xlu0 %3074
        %3076 = vrot.lane.b32.xlu0 %v2992, 60
        %v3077 = vpop.permute.xlu0 %3076
        %3078 = vrot.lane.b32.xlu0 %v2993, 60
        %v3079 = vpop.permute.xlu0 %3078
        %3080 = vrot.lane.b32.xlu0 %v2994, 60
        %v3081 = vpop.permute.xlu0 %3080
        %3082 = vrot.lane.b32.xlu0 %v2995, 60
        %v3083 = vpop.permute.xlu0 %3082
        %3084 = vrot.lane.b32.xlu0 %v2996, 60
        %v3085 = vpop.permute.xlu0 %3084
        %3086 = vrot.lane.b32.xlu0 %v2997, 60
        %v3087 = vpop.permute.xlu0 %3086
        %3088 = vrot.lane.b32.xlu0 %v2998, 60
        %v3089 = vpop.permute.xlu0 %3088
        %3090 = vrot.lane.b32.xlu0 %v2999, 60
        %v3091 = vpop.permute.xlu0 %3090
        %3092 = vrot.lane.b32.xlu0 %v3000, 60
        %v3093 = vpop.permute.xlu0 %3092
        %3094 = vrot.lane.b32.xlu0 %v3001, 60
        %v3095 = vpop.permute.xlu0 %3094
        %3096 = vrot.lane.b32.xlu0 %v3002, 60
        %v3097 = vpop.permute.xlu0 %3096
        %3098 = vrot.lane.b32.xlu0 %v3003, 60
        %v3099 = vpop.permute.xlu0 %3098
        %vm3132 = vcmask 523744
        %3133 = vst.msk [vmem:[#allocation2] sm:$0xff] %vm3132, %v3037
        %3134 = vst.msk [vmem:[#allocation2 + $0x10] sm:$0xff] %vm3132, %v3039
        %3135 = vst.msk [vmem:[#allocation2 + $0x20] sm:$0xff] %vm3132, %v3041
        %3136 = vst.msk [vmem:[#allocation2 + $0x30] sm:$0xff] %vm3132, %v3043
        %3137 = vst.msk [vmem:[#allocation2 + $0x40] sm:$0xff] %vm3132, %v3045
        %3138 = vst.msk [vmem:[#allocation2 + $0x50] sm:$0xff] %vm3132, %v3047
        %3139 = vst.msk [vmem:[#allocation2 + $0x60] sm:$0xff] %vm3132, %v3049
        %3140 = vst.msk [vmem:[#allocation2 + $0x70] sm:$0xff] %vm3132, %v3051
        %3141 = vst.msk [vmem:[#allocation2 + $0x80] sm:$0xff] %vm3132, %v3053
        %3142 = vst.msk [vmem:[#allocation2 + $0x90] sm:$0xff] %vm3132, %v3055
        %3143 = vst.msk [vmem:[#allocation2 + $0xa0] sm:$0xff] %vm3132, %v3057
        %3144 = vst.msk [vmem:[#allocation2 + $0xb0] sm:$0xff] %vm3132, %v3059
        %3145 = vst.msk [vmem:[#allocation2 + $0xc0] sm:$0xff] %vm3132, %v3061
        %3146 = vst.msk [vmem:[#allocation2 + $0xd0] sm:$0xff] %vm3132, %v3063
        %3147 = vst.msk [vmem:[#allocation2 + $0xe0] sm:$0xff] %vm3132, %v3065
        %3148 = vst.msk [vmem:[#allocation2 + $0xf0] sm:$0xff] %vm3132, %v3067
        %3149 = vst.msk [vmem:[#allocation2 + $0x100] sm:$0xff] %vm3132, %v3069
        %3150 = vst.msk [vmem:[#allocation2 + $0x110] sm:$0xff] %vm3132, %v3071
        %3151 = vst.msk [vmem:[#allocation2 + $0x120] sm:$0xff] %vm3132, %v3073
        %3152 = vst.msk [vmem:[#allocation2 + $0x130] sm:$0xff] %vm3132, %v3075
        %3153 = vst.msk [vmem:[#allocation2 + $0x140] sm:$0xff] %vm3132, %v3077
        %3154 = vst.msk [vmem:[#allocation2 + $0x150] sm:$0xff] %vm3132, %v3079
        %3155 = vst.msk [vmem:[#allocation2 + $0x160] sm:$0xff] %vm3132, %v3081
        %3156 = vst.msk [vmem:[#allocation2 + $0x170] sm:$0xff] %vm3132, %v3083
        %3157 = vst.msk [vmem:[#allocation2 + $0x180] sm:$0xff] %vm3132, %v3085
        %3158 = vst.msk [vmem:[#allocation2 + $0x190] sm:$0xff] %vm3132, %v3087
        %3159 = vst.msk [vmem:[#allocation2 + $0x1a0] sm:$0xff] %vm3132, %v3089
        %3160 = vst.msk [vmem:[#allocation2 + $0x1b0] sm:$0xff] %vm3132, %v3091
        %3161 = vst.msk [vmem:[#allocation2 + $0x1c0] sm:$0xff] %vm3132, %v3093
        %3162 = vst.msk [vmem:[#allocation2 + $0x1d0] sm:$0xff] %vm3132, %v3095
        %3163 = vst.msk [vmem:[#allocation2 + $0x1e0] sm:$0xff] %vm3132, %v3097
        %3164 = vst.msk [vmem:[#allocation2 + $0x1f0] sm:$0xff] %vm3132, %v3099
        %v3165 = vld [vmem:[%s2778 + $0x2] sm:$0xff]
        %v3166 = vld [vmem:[%s2778 + $0xa] sm:$0xff]
        %v3167 = vld [vmem:[%s2778 + $0x1a] sm:$0xff]
        %v3168 = vld [vmem:[%s2778 + $0x22] sm:$0xff]
        %v3169 = vld [vmem:[%s2778 + $0x32] sm:$0xff]
        %v3170 = vld [vmem:[%s2778 + $0x3a] sm:$0xff]
        %v3171 = vld [vmem:[%s2778 + $0x4a] sm:$0xff]
        %v3172 = vld [vmem:[%s2778 + $0x52] sm:$0xff]
        %v3173 = vld [vmem:[%s2778 + $0x62] sm:$0xff]
        %v3174 = vld [vmem:[%s2778 + $0x6a] sm:$0xff]
        %v3175 = vld [vmem:[%s2778 + $0x7a] sm:$0xff]
        %v3176 = vld [vmem:[%s2778 + $0x82] sm:$0xff]
        %v3177 = vld [vmem:[%s2778 + $0x92] sm:$0xff]
        %v3178 = vld [vmem:[%s2778 + $0x9a] sm:$0xff]
        %v3179 = vld [vmem:[%s2778 + $0xaa] sm:$0xff]
        %v3180 = vld [vmem:[%s2778 + $0xb2] sm:$0xff]
        %v3181 = vld [vmem:[%s2778 + $0xc2] sm:$0xff]
        %v3182 = vld [vmem:[%s2778 + $0xca] sm:$0xff]
        %v3183 = vld [vmem:[%s2778 + $0xda] sm:$0xff]
        %v3184 = vld [vmem:[%s2778 + $0xe2] sm:$0xff]
        %v3185 = vld [vmem:[%s2778 + $0xf2] sm:$0xff]
        %v3186 = vld [vmem:[%s2778 + $0xfa] sm:$0xff]
        %v3187 = vld [vmem:[%s2778 + $0x10a] sm:$0xff]
        %v3188 = vld [vmem:[%s2778 + $0x112] sm:$0xff]
        %v3189 = vld [vmem:[%s2778 + $0x122] sm:$0xff]
        %v3190 = vld [vmem:[%s2778 + $0x12a] sm:$0xff]
        %v3191 = vld [vmem:[%s2778 + $0x13a] sm:$0xff]
        %v3192 = vld [vmem:[%s2778 + $0x142] sm:$0xff]
        %v3193 = vld [vmem:[%s2778 + $0x152] sm:$0xff]
        %v3194 = vld [vmem:[%s2778 + $0x15a] sm:$0xff]
        %v3195 = vld [vmem:[%s2778 + $0x16a] sm:$0xff]
        %v3196 = vld [vmem:[%s2778 + $0x172] sm:$0xff]
        %3229 = vrot.lane.b32.xlu0 %v3165, 64
        %v3230 = vpop.permute.xlu0 %3229
        %3231 = vrot.lane.b32.xlu0 %v3166, 64
        %v3232 = vpop.permute.xlu0 %3231
        %3233 = vrot.lane.b32.xlu0 %v3167, 64
        %v3234 = vpop.permute.xlu0 %3233
        %3235 = vrot.lane.b32.xlu0 %v3168, 64
        %v3236 = vpop.permute.xlu0 %3235
        %3237 = vrot.lane.b32.xlu0 %v3169, 64
        %v3238 = vpop.permute.xlu0 %3237
        %3239 = vrot.lane.b32.xlu0 %v3170, 64
        %v3240 = vpop.permute.xlu0 %3239
        %3241 = vrot.lane.b32.xlu0 %v3171, 64
        %v3242 = vpop.permute.xlu0 %3241
        %3243 = vrot.lane.b32.xlu0 %v3172, 64
        %v3244 = vpop.permute.xlu0 %3243
        %3245 = vrot.lane.b32.xlu0 %v3173, 64
        %v3246 = vpop.permute.xlu0 %3245
        %3247 = vrot.lane.b32.xlu0 %v3174, 64
        %v3248 = vpop.permute.xlu0 %3247
        %3249 = vrot.lane.b32.xlu0 %v3175, 64
        %v3250 = vpop.permute.xlu0 %3249
        %3251 = vrot.lane.b32.xlu0 %v3176, 64
        %v3252 = vpop.permute.xlu0 %3251
        %3253 = vrot.lane.b32.xlu0 %v3177, 64
        %v3254 = vpop.permute.xlu0 %3253
        %3255 = vrot.lane.b32.xlu0 %v3178, 64
        %v3256 = vpop.permute.xlu0 %3255
        %3257 = vrot.lane.b32.xlu0 %v3179, 64
        %v3258 = vpop.permute.xlu0 %3257
        %3259 = vrot.lane.b32.xlu0 %v3180, 64
        %v3260 = vpop.permute.xlu0 %3259
        %3261 = vrot.lane.b32.xlu0 %v3181, 64
        %v3262 = vpop.permute.xlu0 %3261
        %3263 = vrot.lane.b32.xlu0 %v3182, 64
        %v3264 = vpop.permute.xlu0 %3263
        %3265 = vrot.lane.b32.xlu0 %v3183, 64
        %v3266 = vpop.permute.xlu0 %3265
        %3267 = vrot.lane.b32.xlu0 %v3184, 64
        %v3268 = vpop.permute.xlu0 %3267
        %3269 = vrot.lane.b32.xlu0 %v3185, 64
        %v3270 = vpop.permute.xlu0 %3269
        %3271 = vrot.lane.b32.xlu0 %v3186, 64
        %v3272 = vpop.permute.xlu0 %3271
        %3273 = vrot.lane.b32.xlu0 %v3187, 64
        %v3274 = vpop.permute.xlu0 %3273
        %3275 = vrot.lane.b32.xlu0 %v3188, 64
        %v3276 = vpop.permute.xlu0 %3275
        %3277 = vrot.lane.b32.xlu0 %v3189, 64
        %v3278 = vpop.permute.xlu0 %3277
        %3279 = vrot.lane.b32.xlu0 %v3190, 64
        %v3280 = vpop.permute.xlu0 %3279
        %3281 = vrot.lane.b32.xlu0 %v3191, 64
        %v3282 = vpop.permute.xlu0 %3281
        %3283 = vrot.lane.b32.xlu0 %v3192, 64
        %v3284 = vpop.permute.xlu0 %3283
        %3285 = vrot.lane.b32.xlu0 %v3193, 64
        %v3286 = vpop.permute.xlu0 %3285
        %3287 = vrot.lane.b32.xlu0 %v3194, 64
        %v3288 = vpop.permute.xlu0 %3287
        %3289 = vrot.lane.b32.xlu0 %v3195, 64
        %v3290 = vpop.permute.xlu0 %3289
        %3291 = vrot.lane.b32.xlu0 %v3196, 64
        %v3292 = vpop.permute.xlu0 %3291
        %vm3325 = vcmask 556544
        %3326 = vst.msk [vmem:[#allocation2] sm:$0xff] %vm3325, %v3230
        %3327 = vst.msk [vmem:[#allocation2 + $0x10] sm:$0xff] %vm3325, %v3232
        %3328 = vst.msk [vmem:[#allocation2 + $0x20] sm:$0xff] %vm3325, %v3234
        %3329 = vst.msk [vmem:[#allocation2 + $0x30] sm:$0xff] %vm3325, %v3236
        %3330 = vst.msk [vmem:[#allocation2 + $0x40] sm:$0xff] %vm3325, %v3238
        %3331 = vst.msk [vmem:[#allocation2 + $0x50] sm:$0xff] %vm3325, %v3240
        %3332 = vst.msk [vmem:[#allocation2 + $0x60] sm:$0xff] %vm3325, %v3242
        %3333 = vst.msk [vmem:[#allocation2 + $0x70] sm:$0xff] %vm3325, %v3244
        %3334 = vst.msk [vmem:[#allocation2 + $0x80] sm:$0xff] %vm3325, %v3246
        %3335 = vst.msk [vmem:[#allocation2 + $0x90] sm:$0xff] %vm3325, %v3248
        %3336 = vst.msk [vmem:[#allocation2 + $0xa0] sm:$0xff] %vm3325, %v3250
        %3337 = vst.msk [vmem:[#allocation2 + $0xb0] sm:$0xff] %vm3325, %v3252
        %3338 = vst.msk [vmem:[#allocation2 + $0xc0] sm:$0xff] %vm3325, %v3254
        %3339 = vst.msk [vmem:[#allocation2 + $0xd0] sm:$0xff] %vm3325, %v3256
        %3340 = vst.msk [vmem:[#allocation2 + $0xe0] sm:$0xff] %vm3325, %v3258
        %3341 = vst.msk [vmem:[#allocation2 + $0xf0] sm:$0xff] %vm3325, %v3260
        %3342 = vst.msk [vmem:[#allocation2 + $0x100] sm:$0xff] %vm3325, %v3262
        %3343 = vst.msk [vmem:[#allocation2 + $0x110] sm:$0xff] %vm3325, %v3264
        %3344 = vst.msk [vmem:[#allocation2 + $0x120] sm:$0xff] %vm3325, %v3266
        %3345 = vst.msk [vmem:[#allocation2 + $0x130] sm:$0xff] %vm3325, %v3268
        %3346 = vst.msk [vmem:[#allocation2 + $0x140] sm:$0xff] %vm3325, %v3270
        %3347 = vst.msk [vmem:[#allocation2 + $0x150] sm:$0xff] %vm3325, %v3272
        %3348 = vst.msk [vmem:[#allocation2 + $0x160] sm:$0xff] %vm3325, %v3274
        %3349 = vst.msk [vmem:[#allocation2 + $0x170] sm:$0xff] %vm3325, %v3276
        %3350 = vst.msk [vmem:[#allocation2 + $0x180] sm:$0xff] %vm3325, %v3278
        %3351 = vst.msk [vmem:[#allocation2 + $0x190] sm:$0xff] %vm3325, %v3280
        %3352 = vst.msk [vmem:[#allocation2 + $0x1a0] sm:$0xff] %vm3325, %v3282
        %3353 = vst.msk [vmem:[#allocation2 + $0x1b0] sm:$0xff] %vm3325, %v3284
        %3354 = vst.msk [vmem:[#allocation2 + $0x1c0] sm:$0xff] %vm3325, %v3286
        %3355 = vst.msk [vmem:[#allocation2 + $0x1d0] sm:$0xff] %vm3325, %v3288
        %3356 = vst.msk [vmem:[#allocation2 + $0x1e0] sm:$0xff] %vm3325, %v3290
        %3357 = vst.msk [vmem:[#allocation2 + $0x1f0] sm:$0xff] %vm3325, %v3292
        %v3358 = vld [vmem:[%s2778 + $0x3] sm:$0xff]
        %v3359 = vld [vmem:[%s2778 + $0xb] sm:$0xff]
        %v3360 = vld [vmem:[%s2778 + $0x1b] sm:$0xff]
        %v3361 = vld [vmem:[%s2778 + $0x23] sm:$0xff]
        %v3362 = vld [vmem:[%s2778 + $0x33] sm:$0xff]
        %v3363 = vld [vmem:[%s2778 + $0x3b] sm:$0xff]
        %v3364 = vld [vmem:[%s2778 + $0x4b] sm:$0xff]
        %v3365 = vld [vmem:[%s2778 + $0x53] sm:$0xff]
        %v3366 = vld [vmem:[%s2778 + $0x63] sm:$0xff]
        %v3367 = vld [vmem:[%s2778 + $0x6b] sm:$0xff]
        %v3368 = vld [vmem:[%s2778 + $0x7b] sm:$0xff]
        %v3369 = vld [vmem:[%s2778 + $0x83] sm:$0xff]
        %v3370 = vld [vmem:[%s2778 + $0x93] sm:$0xff]
        %v3371 = vld [vmem:[%s2778 + $0x9b] sm:$0xff]
        %v3372 = vld [vmem:[%s2778 + $0xab] sm:$0xff]
        %v3373 = vld [vmem:[%s2778 + $0xb3] sm:$0xff]
        %v3374 = vld [vmem:[%s2778 + $0xc3] sm:$0xff]
        %v3375 = vld [vmem:[%s2778 + $0xcb] sm:$0xff]
        %v3376 = vld [vmem:[%s2778 + $0xdb] sm:$0xff]
        %v3377 = vld [vmem:[%s2778 + $0xe3] sm:$0xff]
        %v3378 = vld [vmem:[%s2778 + $0xf3] sm:$0xff]
        %v3379 = vld [vmem:[%s2778 + $0xfb] sm:$0xff]
        %v3380 = vld [vmem:[%s2778 + $0x10b] sm:$0xff]
        %v3381 = vld [vmem:[%s2778 + $0x113] sm:$0xff]
        %v3382 = vld [vmem:[%s2778 + $0x123] sm:$0xff]
        %v3383 = vld [vmem:[%s2778 + $0x12b] sm:$0xff]
        %v3384 = vld [vmem:[%s2778 + $0x13b] sm:$0xff]
        %v3385 = vld [vmem:[%s2778 + $0x143] sm:$0xff]
        %v3386 = vld [vmem:[%s2778 + $0x153] sm:$0xff]
        %v3387 = vld [vmem:[%s2778 + $0x15b] sm:$0xff]
        %v3388 = vld [vmem:[%s2778 + $0x16b] sm:$0xff]
        %v3389 = vld [vmem:[%s2778 + $0x173] sm:$0xff]
        %3422 = vrot.lane.b32.xlu0 %v3358, 68
        %v3423 = vpop.permute.xlu0 %3422
        %3424 = vrot.lane.b32.xlu0 %v3359, 68
        %v3425 = vpop.permute.xlu0 %3424
        %3426 = vrot.lane.b32.xlu0 %v3360, 68
        %v3427 = vpop.permute.xlu0 %3426
        %3428 = vrot.lane.b32.xlu0 %v3361, 68
        %v3429 = vpop.permute.xlu0 %3428
        %3430 = vrot.lane.b32.xlu0 %v3362, 68
        %v3431 = vpop.permute.xlu0 %3430
        %3432 = vrot.lane.b32.xlu0 %v3363, 68
        %v3433 = vpop.permute.xlu0 %3432
        %3434 = vrot.lane.b32.xlu0 %v3364, 68
        %v3435 = vpop.permute.xlu0 %3434
        %3436 = vrot.lane.b32.xlu0 %v3365, 68
        %v3437 = vpop.permute.xlu0 %3436
        %3438 = vrot.lane.b32.xlu0 %v3366, 68
        %v3439 = vpop.permute.xlu0 %3438
        %3440 = vrot.lane.b32.xlu0 %v3367, 68
        %v3441 = vpop.permute.xlu0 %3440
        %3442 = vrot.lane.b32.xlu0 %v3368, 68
        %v3443 = vpop.permute.xlu0 %3442
        %3444 = vrot.lane.b32.xlu0 %v3369, 68
        %v3445 = vpop.permute.xlu0 %3444
        %3446 = vrot.lane.b32.xlu0 %v3370, 68
        %v3447 = vpop.permute.xlu0 %3446
        %3448 = vrot.lane.b32.xlu0 %v3371, 68
        %v3449 = vpop.permute.xlu0 %3448
        %3450 = vrot.lane.b32.xlu0 %v3372, 68
        %v3451 = vpop.permute.xlu0 %3450
        %3452 = vrot.lane.b32.xlu0 %v3373, 68
        %v3453 = vpop.permute.xlu0 %3452
        %3454 = vrot.lane.b32.xlu0 %v3374, 68
        %v3455 = vpop.permute.xlu0 %3454
        %3456 = vrot.lane.b32.xlu0 %v3375, 68
        %v3457 = vpop.permute.xlu0 %3456
        %3458 = vrot.lane.b32.xlu0 %v3376, 68
        %v3459 = vpop.permute.xlu0 %3458
        %3460 = vrot.lane.b32.xlu0 %v3377, 68
        %v3461 = vpop.permute.xlu0 %3460
        %3462 = vrot.lane.b32.xlu0 %v3378, 68
        %v3463 = vpop.permute.xlu0 %3462
        %3464 = vrot.lane.b32.xlu0 %v3379, 68
        %v3465 = vpop.permute.xlu0 %3464
        %3466 = vrot.lane.b32.xlu0 %v3380, 68
        %v3467 = vpop.permute.xlu0 %3466
        %3468 = vrot.lane.b32.xlu0 %v3381, 68
        %v3469 = vpop.permute.xlu0 %3468
        %3470 = vrot.lane.b32.xlu0 %v3382, 68
        %v3471 = vpop.permute.xlu0 %3470
        %3472 = vrot.lane.b32.xlu0 %v3383, 68
        %v3473 = vpop.permute.xlu0 %3472
        %3474 = vrot.lane.b32.xlu0 %v3384, 68
        %v3475 = vpop.permute.xlu0 %3474
        %3476 = vrot.lane.b32.xlu0 %v3385, 68
        %v3477 = vpop.permute.xlu0 %3476
        %3478 = vrot.lane.b32.xlu0 %v3386, 68
        %v3479 = vpop.permute.xlu0 %3478
        %3480 = vrot.lane.b32.xlu0 %v3387, 68
        %v3481 = vpop.permute.xlu0 %3480
        %3482 = vrot.lane.b32.xlu0 %v3388, 68
        %v3483 = vpop.permute.xlu0 %3482
        %3484 = vrot.lane.b32.xlu0 %v3389, 68
        %v3485 = vpop.permute.xlu0 %3484
        %vm3518 = vcmask 589344
        %3519 = vst.msk [vmem:[#allocation2] sm:$0xff] %vm3518, %v3423
        %3520 = vst.msk [vmem:[#allocation2 + $0x10] sm:$0xff] %vm3518, %v3425
        %3521 = vst.msk [vmem:[#allocation2 + $0x20] sm:$0xff] %vm3518, %v3427
        %3522 = vst.msk [vmem:[#allocation2 + $0x30] sm:$0xff] %vm3518, %v3429
        %3523 = vst.msk [vmem:[#allocation2 + $0x40] sm:$0xff] %vm3518, %v3431
        %3524 = vst.msk [vmem:[#allocation2 + $0x50] sm:$0xff] %vm3518, %v3433
        %3525 = vst.msk [vmem:[#allocation2 + $0x60] sm:$0xff] %vm3518, %v3435
        %3526 = vst.msk [vmem:[#allocation2 + $0x70] sm:$0xff] %vm3518, %v3437
        %3527 = vst.msk [vmem:[#allocation2 + $0x80] sm:$0xff] %vm3518, %v3439
        %3528 = vst.msk [vmem:[#allocation2 + $0x90] sm:$0xff] %vm3518, %v3441
        %3529 = vst.msk [vmem:[#allocation2 + $0xa0] sm:$0xff] %vm3518, %v3443
        %3530 = vst.msk [vmem:[#allocation2 + $0xb0] sm:$0xff] %vm3518, %v3445
        %3531 = vst.msk [vmem:[#allocation2 + $0xc0] sm:$0xff] %vm3518, %v3447
        %3532 = vst.msk [vmem:[#allocation2 + $0xd0] sm:$0xff] %vm3518, %v3449
        %3533 = vst.msk [vmem:[#allocation2 + $0xe0] sm:$0xff] %vm3518, %v3451
        %3534 = vst.msk [vmem:[#allocation2 + $0xf0] sm:$0xff] %vm3518, %v3453
        %3535 = vst.msk [vmem:[#allocation2 + $0x100] sm:$0xff] %vm3518, %v3455
        %3536 = vst.msk [vmem:[#allocation2 + $0x110] sm:$0xff] %vm3518, %v3457
        %3537 = vst.msk [vmem:[#allocation2 + $0x120] sm:$0xff] %vm3518, %v3459
        %3538 = vst.msk [vmem:[#allocation2 + $0x130] sm:$0xff] %vm3518, %v3461
        %3539 = vst.msk [vmem:[#allocation2 + $0x140] sm:$0xff] %vm3518, %v3463
        %3540 = vst.msk [vmem:[#allocation2 + $0x150] sm:$0xff] %vm3518, %v3465
        %3541 = vst.msk [vmem:[#allocation2 + $0x160] sm:$0xff] %vm3518, %v3467
        %3542 = vst.msk [vmem:[#allocation2 + $0x170] sm:$0xff] %vm3518, %v3469
        %3543 = vst.msk [vmem:[#allocation2 + $0x180] sm:$0xff] %vm3518, %v3471
        %3544 = vst.msk [vmem:[#allocation2 + $0x190] sm:$0xff] %vm3518, %v3473
        %3545 = vst.msk [vmem:[#allocation2 + $0x1a0] sm:$0xff] %vm3518, %v3475
        %3546 = vst.msk [vmem:[#allocation2 + $0x1b0] sm:$0xff] %vm3518, %v3477
        %3547 = vst.msk [vmem:[#allocation2 + $0x1c0] sm:$0xff] %vm3518, %v3479
        %3548 = vst.msk [vmem:[#allocation2 + $0x1d0] sm:$0xff] %vm3518, %v3481
        %3549 = vst.msk [vmem:[#allocation2 + $0x1e0] sm:$0xff] %vm3518, %v3483
        %3550 = vst.msk [vmem:[#allocation2 + $0x1f0] sm:$0xff] %vm3518, %v3485
        %v3551 = vld [vmem:[%s2778 + $0x4] sm:$0xff]
        %v3552 = vld [vmem:[%s2778 + $0xc] sm:$0xff]
        %v3553 = vld [vmem:[%s2778 + $0x1c] sm:$0xff]
        %v3554 = vld [vmem:[%s2778 + $0x24] sm:$0xff]
        %v3555 = vld [vmem:[%s2778 + $0x34] sm:$0xff]
        %v3556 = vld [vmem:[%s2778 + $0x3c] sm:$0xff]
        %v3557 = vld [vmem:[%s2778 + $0x4c] sm:$0xff]
        %v3558 = vld [vmem:[%s2778 + $0x54] sm:$0xff]
        %v3559 = vld [vmem:[%s2778 + $0x64] sm:$0xff]
        %v3560 = vld [vmem:[%s2778 + $0x6c] sm:$0xff]
        %v3561 = vld [vmem:[%s2778 + $0x7c] sm:$0xff]
        %v3562 = vld [vmem:[%s2778 + $0x84] sm:$0xff]
        %v3563 = vld [vmem:[%s2778 + $0x94] sm:$0xff]
        %v3564 = vld [vmem:[%s2778 + $0x9c] sm:$0xff]
        %v3565 = vld [vmem:[%s2778 + $0xac] sm:$0xff]
        %v3566 = vld [vmem:[%s2778 + $0xb4] sm:$0xff]
        %v3567 = vld [vmem:[%s2778 + $0xc4] sm:$0xff]
        %v3568 = vld [vmem:[%s2778 + $0xcc] sm:$0xff]
        %v3569 = vld [vmem:[%s2778 + $0xdc] sm:$0xff]
        %v3570 = vld [vmem:[%s2778 + $0xe4] sm:$0xff]
        %v3571 = vld [vmem:[%s2778 + $0xf4] sm:$0xff]
        %v3572 = vld [vmem:[%s2778 + $0xfc] sm:$0xff]
        %v3573 = vld [vmem:[%s2778 + $0x10c] sm:$0xff]
        %v3574 = vld [vmem:[%s2778 + $0x114] sm:$0xff]
        %v3575 = vld [vmem:[%s2778 + $0x124] sm:$0xff]
        %v3576 = vld [vmem:[%s2778 + $0x12c] sm:$0xff]
        %v3577 = vld [vmem:[%s2778 + $0x13c] sm:$0xff]
        %v3578 = vld [vmem:[%s2778 + $0x144] sm:$0xff]
        %v3579 = vld [vmem:[%s2778 + $0x154] sm:$0xff]
        %v3580 = vld [vmem:[%s2778 + $0x15c] sm:$0xff]
        %v3581 = vld [vmem:[%s2778 + $0x16c] sm:$0xff]
        %v3582 = vld [vmem:[%s2778 + $0x174] sm:$0xff]
        %3615 = vrot.lane.b32.xlu0 %v3551, 72
        %v3616 = vpop.permute.xlu0 %3615
        %3617 = vrot.lane.b32.xlu0 %v3552, 72
        %v3618 = vpop.permute.xlu0 %3617
        %3619 = vrot.lane.b32.xlu0 %v3553, 72
        %v3620 = vpop.permute.xlu0 %3619
        %3621 = vrot.lane.b32.xlu0 %v3554, 72
        %v3622 = vpop.permute.xlu0 %3621
        %3623 = vrot.lane.b32.xlu0 %v3555, 72
        %v3624 = vpop.permute.xlu0 %3623
        %3625 = vrot.lane.b32.xlu0 %v3556, 72
        %v3626 = vpop.permute.xlu0 %3625
        %3627 = vrot.lane.b32.xlu0 %v3557, 72
        %v3628 = vpop.permute.xlu0 %3627
        %3629 = vrot.lane.b32.xlu0 %v3558, 72
        %v3630 = vpop.permute.xlu0 %3629
        %3631 = vrot.lane.b32.xlu0 %v3559, 72
        %v3632 = vpop.permute.xlu0 %3631
        %3633 = vrot.lane.b32.xlu0 %v3560, 72
        %v3634 = vpop.permute.xlu0 %3633
        %3635 = vrot.lane.b32.xlu0 %v3561, 72
        %v3636 = vpop.permute.xlu0 %3635
        %3637 = vrot.lane.b32.xlu0 %v3562, 72
        %v3638 = vpop.permute.xlu0 %3637
        %3639 = vrot.lane.b32.xlu0 %v3563, 72
        %v3640 = vpop.permute.xlu0 %3639
        %3641 = vrot.lane.b32.xlu0 %v3564, 72
        %v3642 = vpop.permute.xlu0 %3641
        %3643 = vrot.lane.b32.xlu0 %v3565, 72
        %v3644 = vpop.permute.xlu0 %3643
        %3645 = vrot.lane.b32.xlu0 %v3566, 72
        %v3646 = vpop.permute.xlu0 %3645
        %3647 = vrot.lane.b32.xlu0 %v3567, 72
        %v3648 = vpop.permute.xlu0 %3647
        %3649 = vrot.lane.b32.xlu0 %v3568, 72
        %v3650 = vpop.permute.xlu0 %3649
        %3651 = vrot.lane.b32.xlu0 %v3569, 72
        %v3652 = vpop.permute.xlu0 %3651
        %3653 = vrot.lane.b32.xlu0 %v3570, 72
        %v3654 = vpop.permute.xlu0 %3653
        %3655 = vrot.lane.b32.xlu0 %v3571, 72
        %v3656 = vpop.permute.xlu0 %3655
        %3657 = vrot.lane.b32.xlu0 %v3572, 72
        %v3658 = vpop.permute.xlu0 %3657
        %3659 = vrot.lane.b32.xlu0 %v3573, 72
        %v3660 = vpop.permute.xlu0 %3659
        %3661 = vrot.lane.b32.xlu0 %v3574, 72
        %v3662 = vpop.permute.xlu0 %3661
        %3663 = vrot.lane.b32.xlu0 %v3575, 72
        %v3664 = vpop.permute.xlu0 %3663
        %3665 = vrot.lane.b32.xlu0 %v3576, 72
        %v3666 = vpop.permute.xlu0 %3665
        %3667 = vrot.lane.b32.xlu0 %v3577, 72
        %v3668 = vpop.permute.xlu0 %3667
        %3669 = vrot.lane.b32.xlu0 %v3578, 72
        %v3670 = vpop.permute.xlu0 %3669
        %3671 = vrot.lane.b32.xlu0 %v3579, 72
        %v3672 = vpop.permute.xlu0 %3671
        %3673 = vrot.lane.b32.xlu0 %v3580, 72
        %v3674 = vpop.permute.xlu0 %3673
        %3675 = vrot.lane.b32.xlu0 %v3581, 72
        %v3676 = vpop.permute.xlu0 %3675
        %3677 = vrot.lane.b32.xlu0 %v3582, 72
        %v3678 = vpop.permute.xlu0 %3677
        %vm3711 = vcmask 622144
        %3712 = vst.msk [vmem:[#allocation2] sm:$0xff] %vm3711, %v3616
        %3713 = vst.msk [vmem:[#allocation2 + $0x10] sm:$0xff] %vm3711, %v3618
        %3714 = vst.msk [vmem:[#allocation2 + $0x20] sm:$0xff] %vm3711, %v3620
        %3715 = vst.msk [vmem:[#allocation2 + $0x30] sm:$0xff] %vm3711, %v3622
        %3716 = vst.msk [vmem:[#allocation2 + $0x40] sm:$0xff] %vm3711, %v3624
        %3717 = vst.msk [vmem:[#allocation2 + $0x50] sm:$0xff] %vm3711, %v3626
        %3718 = vst.msk [vmem:[#allocation2 + $0x60] sm:$0xff] %vm3711, %v3628
        %3719 = vst.msk [vmem:[#allocation2 + $0x70] sm:$0xff] %vm3711, %v3630
        %3720 = vst.msk [vmem:[#allocation2 + $0x80] sm:$0xff] %vm3711, %v3632
        %3721 = vst.msk [vmem:[#allocation2 + $0x90] sm:$0xff] %vm3711, %v3634
        %3722 = vst.msk [vmem:[#allocation2 + $0xa0] sm:$0xff] %vm3711, %v3636
        %3723 = vst.msk [vmem:[#allocation2 + $0xb0] sm:$0xff] %vm3711, %v3638
        %3724 = vst.msk [vmem:[#allocation2 + $0xc0] sm:$0xff] %vm3711, %v3640
        %3725 = vst.msk [vmem:[#allocation2 + $0xd0] sm:$0xff] %vm3711, %v3642
        %3726 = vst.msk [vmem:[#allocation2 + $0xe0] sm:$0xff] %vm3711, %v3644
        %3727 = vst.msk [vmem:[#allocation2 + $0xf0] sm:$0xff] %vm3711, %v3646
        %3728 = vst.msk [vmem:[#allocation2 + $0x100] sm:$0xff] %vm3711, %v3648
        %3729 = vst.msk [vmem:[#allocation2 + $0x110] sm:$0xff] %vm3711, %v3650
        %3730 = vst.msk [vmem:[#allocation2 + $0x120] sm:$0xff] %vm3711, %v3652
        %3731 = vst.msk [vmem:[#allocation2 + $0x130] sm:$0xff] %vm3711, %v3654
        %3732 = vst.msk [vmem:[#allocation2 + $0x140] sm:$0xff] %vm3711, %v3656
        %3733 = vst.msk [vmem:[#allocation2 + $0x150] sm:$0xff] %vm3711, %v3658
        %3734 = vst.msk [vmem:[#allocation2 + $0x160] sm:$0xff] %vm3711, %v3660
        %3735 = vst.msk [vmem:[#allocation2 + $0x170] sm:$0xff] %vm3711, %v3662
        %3736 = vst.msk [vmem:[#allocation2 + $0x180] sm:$0xff] %vm3711, %v3664
        %3737 = vst.msk [vmem:[#allocation2 + $0x190] sm:$0xff] %vm3711, %v3666
        %3738 = vst.msk [vmem:[#allocation2 + $0x1a0] sm:$0xff] %vm3711, %v3668
        %3739 = vst.msk [vmem:[#allocation2 + $0x1b0] sm:$0xff] %vm3711, %v3670
        %3740 = vst.msk [vmem:[#allocation2 + $0x1c0] sm:$0xff] %vm3711, %v3672
        %3741 = vst.msk [vmem:[#allocation2 + $0x1d0] sm:$0xff] %vm3711, %v3674
        %3742 = vst.msk [vmem:[#allocation2 + $0x1e0] sm:$0xff] %vm3711, %v3676
        %3743 = vst.msk [vmem:[#allocation2 + $0x1f0] sm:$0xff] %vm3711, %v3678
        %v3744 = vld [vmem:[%s2778 + $0x5] sm:$0xff]
        %v3745 = vld [vmem:[%s2778 + $0xd] sm:$0xff]
        %v3746 = vld [vmem:[%s2778 + $0x1d] sm:$0xff]
        %v3747 = vld [vmem:[%s2778 + $0x25] sm:$0xff]
        %v3748 = vld [vmem:[%s2778 + $0x35] sm:$0xff]
        %v3749 = vld [vmem:[%s2778 + $0x3d] sm:$0xff]
        %v3750 = vld [vmem:[%s2778 + $0x4d] sm:$0xff]
        %v3751 = vld [vmem:[%s2778 + $0x55] sm:$0xff]
        %v3752 = vld [vmem:[%s2778 + $0x65] sm:$0xff]
        %v3753 = vld [vmem:[%s2778 + $0x6d] sm:$0xff]
        %v3754 = vld [vmem:[%s2778 + $0x7d] sm:$0xff]
        %v3755 = vld [vmem:[%s2778 + $0x85] sm:$0xff]
        %v3756 = vld [vmem:[%s2778 + $0x95] sm:$0xff]
        %v3757 = vld [vmem:[%s2778 + $0x9d] sm:$0xff]
        %v3758 = vld [vmem:[%s2778 + $0xad] sm:$0xff]
        %v3759 = vld [vmem:[%s2778 + $0xb5] sm:$0xff]
        %v3760 = vld [vmem:[%s2778 + $0xc5] sm:$0xff]
        %v3761 = vld [vmem:[%s2778 + $0xcd] sm:$0xff]
        %v3762 = vld [vmem:[%s2778 + $0xdd] sm:$0xff]
        %v3763 = vld [vmem:[%s2778 + $0xe5] sm:$0xff]
        %v3764 = vld [vmem:[%s2778 + $0xf5] sm:$0xff]
        %v3765 = vld [vmem:[%s2778 + $0xfd] sm:$0xff]
        %v3766 = vld [vmem:[%s2778 + $0x10d] sm:$0xff]
        %v3767 = vld [vmem:[%s2778 + $0x115] sm:$0xff]
        %v3768 = vld [vmem:[%s2778 + $0x125] sm:$0xff]
        %v3769 = vld [vmem:[%s2778 + $0x12d] sm:$0xff]
        %v3770 = vld [vmem:[%s2778 + $0x13d] sm:$0xff]
        %v3771 = vld [vmem:[%s2778 + $0x145] sm:$0xff]
        %v3772 = vld [vmem:[%s2778 + $0x155] sm:$0xff]
        %v3773 = vld [vmem:[%s2778 + $0x15d] sm:$0xff]
        %v3774 = vld [vmem:[%s2778 + $0x16d] sm:$0xff]
        %v3775 = vld [vmem:[%s2778 + $0x175] sm:$0xff]
        %3808 = vrot.lane.b32.xlu0 %v3744, 76
        %v3809 = vpop.permute.xlu0 %3808
        %3810 = vrot.lane.b32.xlu0 %v3745, 76
        %v3811 = vpop.permute.xlu0 %3810
        %3812 = vrot.lane.b32.xlu0 %v3746, 76
        %v3813 = vpop.permute.xlu0 %3812
        %3814 = vrot.lane.b32.xlu0 %v3747, 76
        %v3815 = vpop.permute.xlu0 %3814
        %3816 = vrot.lane.b32.xlu0 %v3748, 76
        %v3817 = vpop.permute.xlu0 %3816
        %3818 = vrot.lane.b32.xlu0 %v3749, 76
        %v3819 = vpop.permute.xlu0 %3818
        %3820 = vrot.lane.b32.xlu0 %v3750, 76
        %v3821 = vpop.permute.xlu0 %3820
        %3822 = vrot.lane.b32.xlu0 %v3751, 76
        %v3823 = vpop.permute.xlu0 %3822
        %3824 = vrot.lane.b32.xlu0 %v3752, 76
        %v3825 = vpop.permute.xlu0 %3824
        %3826 = vrot.lane.b32.xlu0 %v3753, 76
        %v3827 = vpop.permute.xlu0 %3826
        %3828 = vrot.lane.b32.xlu0 %v3754, 76
        %v3829 = vpop.permute.xlu0 %3828
        %3830 = vrot.lane.b32.xlu0 %v3755, 76
        %v3831 = vpop.permute.xlu0 %3830
        %3832 = vrot.lane.b32.xlu0 %v3756, 76
        %v3833 = vpop.permute.xlu0 %3832
        %3834 = vrot.lane.b32.xlu0 %v3757, 76
        %v3835 = vpop.permute.xlu0 %3834
        %3836 = vrot.lane.b32.xlu0 %v3758, 76
        %v3837 = vpop.permute.xlu0 %3836
        %3838 = vrot.lane.b32.xlu0 %v3759, 76
        %v3839 = vpop.permute.xlu0 %3838
        %3840 = vrot.lane.b32.xlu0 %v3760, 76
        %v3841 = vpop.permute.xlu0 %3840
        %3842 = vrot.lane.b32.xlu0 %v3761, 76
        %v3843 = vpop.permute.xlu0 %3842
        %3844 = vrot.lane.b32.xlu0 %v3762, 76
        %v3845 = vpop.permute.xlu0 %3844
        %3846 = vrot.lane.b32.xlu0 %v3763, 76
        %v3847 = vpop.permute.xlu0 %3846
        %3848 = vrot.lane.b32.xlu0 %v3764, 76
        %v3849 = vpop.permute.xlu0 %3848
        %3850 = vrot.lane.b32.xlu0 %v3765, 76
        %v3851 = vpop.permute.xlu0 %3850
        %3852 = vrot.lane.b32.xlu0 %v3766, 76
        %v3853 = vpop.permute.xlu0 %3852
        %3854 = vrot.lane.b32.xlu0 %v3767, 76
        %v3855 = vpop.permute.xlu0 %3854
        %3856 = vrot.lane.b32.xlu0 %v3768, 76
        %v3857 = vpop.permute.xlu0 %3856
        %3858 = vrot.lane.b32.xlu0 %v3769, 76
        %v3859 = vpop.permute.xlu0 %3858
        %3860 = vrot.lane.b32.xlu0 %v3770, 76
        %v3861 = vpop.permute.xlu0 %3860
        %3862 = vrot.lane.b32.xlu0 %v3771, 76
        %v3863 = vpop.permute.xlu0 %3862
        %3864 = vrot.lane.b32.xlu0 %v3772, 76
        %v3865 = vpop.permute.xlu0 %3864
        %3866 = vrot.lane.b32.xlu0 %v3773, 76
        %v3867 = vpop.permute.xlu0 %3866
        %3868 = vrot.lane.b32.xlu0 %v3774, 76
        %v3869 = vpop.permute.xlu0 %3868
        %3870 = vrot.lane.b32.xlu0 %v3775, 76
        %v3871 = vpop.permute.xlu0 %3870
        %vm3904 = vcmask 654944
        %3905 = vst.msk [vmem:[#allocation2] sm:$0xff] %vm3904, %v3809
        %3906 = vst.msk [vmem:[#allocation2 + $0x10] sm:$0xff] %vm3904, %v3811
        %3907 = vst.msk [vmem:[#allocation2 + $0x20] sm:$0xff] %vm3904, %v3813
        %3908 = vst.msk [vmem:[#allocation2 + $0x30] sm:$0xff] %vm3904, %v3815
        %3909 = vst.msk [vmem:[#allocation2 + $0x40] sm:$0xff] %vm3904, %v3817
        %3910 = vst.msk [vmem:[#allocation2 + $0x50] sm:$0xff] %vm3904, %v3819
        %3911 = vst.msk [vmem:[#allocation2 + $0x60] sm:$0xff] %vm3904, %v3821
        %3912 = vst.msk [vmem:[#allocation2 + $0x70] sm:$0xff] %vm3904, %v3823
        %3913 = vst.msk [vmem:[#allocation2 + $0x80] sm:$0xff] %vm3904, %v3825
        %3914 = vst.msk [vmem:[#allocation2 + $0x90] sm:$0xff] %vm3904, %v3827
        %3915 = vst.msk [vmem:[#allocation2 + $0xa0] sm:$0xff] %vm3904, %v3829
        %3916 = vst.msk [vmem:[#allocation2 + $0xb0] sm:$0xff] %vm3904, %v3831
        %3917 = vst.msk [vmem:[#allocation2 + $0xc0] sm:$0xff] %vm3904, %v3833
        %3918 = vst.msk [vmem:[#allocation2 + $0xd0] sm:$0xff] %vm3904, %v3835
        %3919 = vst.msk [vmem:[#allocation2 + $0xe0] sm:$0xff] %vm3904, %v3837
        %3920 = vst.msk [vmem:[#allocation2 + $0xf0] sm:$0xff] %vm3904, %v3839
        %3921 = vst.msk [vmem:[#allocation2 + $0x100] sm:$0xff] %vm3904, %v3841
        %3922 = vst.msk [vmem:[#allocation2 + $0x110] sm:$0xff] %vm3904, %v3843
        %3923 = vst.msk [vmem:[#allocation2 + $0x120] sm:$0xff] %vm3904, %v3845
        %3924 = vst.msk [vmem:[#allocation2 + $0x130] sm:$0xff] %vm3904, %v3847
        %3925 = vst.msk [vmem:[#allocation2 + $0x140] sm:$0xff] %vm3904, %v3849
        %3926 = vst.msk [vmem:[#allocation2 + $0x150] sm:$0xff] %vm3904, %v3851
        %3927 = vst.msk [vmem:[#allocation2 + $0x160] sm:$0xff] %vm3904, %v3853
        %3928 = vst.msk [vmem:[#allocation2 + $0x170] sm:$0xff] %vm3904, %v3855
        %3929 = vst.msk [vmem:[#allocation2 + $0x180] sm:$0xff] %vm3904, %v3857
        %3930 = vst.msk [vmem:[#allocation2 + $0x190] sm:$0xff] %vm3904, %v3859
        %3931 = vst.msk [vmem:[#allocation2 + $0x1a0] sm:$0xff] %vm3904, %v3861
        %3932 = vst.msk [vmem:[#allocation2 + $0x1b0] sm:$0xff] %vm3904, %v3863
        %3933 = vst.msk [vmem:[#allocation2 + $0x1c0] sm:$0xff] %vm3904, %v3865
        %3934 = vst.msk [vmem:[#allocation2 + $0x1d0] sm:$0xff] %vm3904, %v3867
        %3935 = vst.msk [vmem:[#allocation2 + $0x1e0] sm:$0xff] %vm3904, %v3869
        %3936 = vst.msk [vmem:[#allocation2 + $0x1f0] sm:$0xff] %vm3904, %v3871
        %v3937 = vld [vmem:[%s2778 + $0x6] sm:$0xff]
        %v3938 = vld [vmem:[%s2778 + $0xe] sm:$0xff]
        %v3939 = vld [vmem:[%s2778 + $0x1e] sm:$0xff]
        %v3940 = vld [vmem:[%s2778 + $0x26] sm:$0xff]
        %v3941 = vld [vmem:[%s2778 + $0x36] sm:$0xff]
        %v3942 = vld [vmem:[%s2778 + $0x3e] sm:$0xff]
        %v3943 = vld [vmem:[%s2778 + $0x4e] sm:$0xff]
        %v3944 = vld [vmem:[%s2778 + $0x56] sm:$0xff]
        %v3945 = vld [vmem:[%s2778 + $0x66] sm:$0xff]
        %v3946 = vld [vmem:[%s2778 + $0x6e] sm:$0xff]
        %v3947 = vld [vmem:[%s2778 + $0x7e] sm:$0xff]
        %v3948 = vld [vmem:[%s2778 + $0x86] sm:$0xff]
        %v3949 = vld [vmem:[%s2778 + $0x96] sm:$0xff]
        %v3950 = vld [vmem:[%s2778 + $0x9e] sm:$0xff]
        %v3951 = vld [vmem:[%s2778 + $0xae] sm:$0xff]
        %v3952 = vld [vmem:[%s2778 + $0xb6] sm:$0xff]
        %v3953 = vld [vmem:[%s2778 + $0xc6] sm:$0xff]
        %v3954 = vld [vmem:[%s2778 + $0xce] sm:$0xff]
        %v3955 = vld [vmem:[%s2778 + $0xde] sm:$0xff]
        %v3956 = vld [vmem:[%s2778 + $0xe6] sm:$0xff]
        %v3957 = vld [vmem:[%s2778 + $0xf6] sm:$0xff]
        %v3958 = vld [vmem:[%s2778 + $0xfe] sm:$0xff]
        %v3959 = vld [vmem:[%s2778 + $0x10e] sm:$0xff]
        %v3960 = vld [vmem:[%s2778 + $0x116] sm:$0xff]
        %v3961 = vld [vmem:[%s2778 + $0x126] sm:$0xff]
        %v3962 = vld [vmem:[%s2778 + $0x12e] sm:$0xff]
        %v3963 = vld [vmem:[%s2778 + $0x13e] sm:$0xff]
        %v3964 = vld [vmem:[%s2778 + $0x146] sm:$0xff]
        %v3965 = vld [vmem:[%s2778 + $0x156] sm:$0xff]
        %v3966 = vld [vmem:[%s2778 + $0x15e] sm:$0xff]
        %v3967 = vld [vmem:[%s2778 + $0x16e] sm:$0xff]
        %v3968 = vld [vmem:[%s2778 + $0x176] sm:$0xff]
        %4001 = vrot.lane.b32.xlu0 %v3937, 80
        %v4002 = vpop.permute.xlu0 %4001
        %4003 = vrot.lane.b32.xlu0 %v3938, 80
        %v4004 = vpop.permute.xlu0 %4003
        %4005 = vrot.lane.b32.xlu0 %v3939, 80
        %v4006 = vpop.permute.xlu0 %4005
        %4007 = vrot.lane.b32.xlu0 %v3940, 80
        %v4008 = vpop.permute.xlu0 %4007
        %4009 = vrot.lane.b32.xlu0 %v3941, 80
        %v4010 = vpop.permute.xlu0 %4009
        %4011 = vrot.lane.b32.xlu0 %v3942, 80
        %v4012 = vpop.permute.xlu0 %4011
        %4013 = vrot.lane.b32.xlu0 %v3943, 80
        %v4014 = vpop.permute.xlu0 %4013
        %4015 = vrot.lane.b32.xlu0 %v3944, 80
        %v4016 = vpop.permute.xlu0 %4015
        %4017 = vrot.lane.b32.xlu0 %v3945, 80
        %v4018 = vpop.permute.xlu0 %4017
        %4019 = vrot.lane.b32.xlu0 %v3946, 80
        %v4020 = vpop.permute.xlu0 %4019
        %4021 = vrot.lane.b32.xlu0 %v3947, 80
        %v4022 = vpop.permute.xlu0 %4021
        %4023 = vrot.lane.b32.xlu0 %v3948, 80
        %v4024 = vpop.permute.xlu0 %4023
        %4025 = vrot.lane.b32.xlu0 %v3949, 80
        %v4026 = vpop.permute.xlu0 %4025
        %4027 = vrot.lane.b32.xlu0 %v3950, 80
        %v4028 = vpop.permute.xlu0 %4027
        %4029 = vrot.lane.b32.xlu0 %v3951, 80
        %v4030 = vpop.permute.xlu0 %4029
        %4031 = vrot.lane.b32.xlu0 %v3952, 80
        %v4032 = vpop.permute.xlu0 %4031
        %4033 = vrot.lane.b32.xlu0 %v3953, 80
        %v4034 = vpop.permute.xlu0 %4033
        %4035 = vrot.lane.b32.xlu0 %v3954, 80
        %v4036 = vpop.permute.xlu0 %4035
        %4037 = vrot.lane.b32.xlu0 %v3955, 80
        %v4038 = vpop.permute.xlu0 %4037
        %4039 = vrot.lane.b32.xlu0 %v3956, 80
        %v4040 = vpop.permute.xlu0 %4039
        %4041 = vrot.lane.b32.xlu0 %v3957, 80
        %v4042 = vpop.permute.xlu0 %4041
        %4043 = vrot.lane.b32.xlu0 %v3958, 80
        %v4044 = vpop.permute.xlu0 %4043
        %4045 = vrot.lane.b32.xlu0 %v3959, 80
        %v4046 = vpop.permute.xlu0 %4045
        %4047 = vrot.lane.b32.xlu0 %v3960, 80
        %v4048 = vpop.permute.xlu0 %4047
        %4049 = vrot.lane.b32.xlu0 %v3961, 80
        %v4050 = vpop.permute.xlu0 %4049
        %4051 = vrot.lane.b32.xlu0 %v3962, 80
        %v4052 = vpop.permute.xlu0 %4051
        %4053 = vrot.lane.b32.xlu0 %v3963, 80
        %v4054 = vpop.permute.xlu0 %4053
        %4055 = vrot.lane.b32.xlu0 %v3964, 80
        %v4056 = vpop.permute.xlu0 %4055
        %4057 = vrot.lane.b32.xlu0 %v3965, 80
        %v4058 = vpop.permute.xlu0 %4057
        %4059 = vrot.lane.b32.xlu0 %v3966, 80
        %v4060 = vpop.permute.xlu0 %4059
        %4061 = vrot.lane.b32.xlu0 %v3967, 80
        %v4062 = vpop.permute.xlu0 %4061
        %4063 = vrot.lane.b32.xlu0 %v3968, 80
        %v4064 = vpop.permute.xlu0 %4063
        %vm4097 = vcmask 687744
        %4098 = vst.msk [vmem:[#allocation2] sm:$0xff] %vm4097, %v4002
        %4099 = vst.msk [vmem:[#allocation2 + $0x10] sm:$0xff] %vm4097, %v4004
        %4100 = vst.msk [vmem:[#allocation2 + $0x20] sm:$0xff] %vm4097, %v4006
        %4101 = vst.msk [vmem:[#allocation2 + $0x30] sm:$0xff] %vm4097, %v4008
        %4102 = vst.msk [vmem:[#allocation2 + $0x40] sm:$0xff] %vm4097, %v4010
        %4103 = vst.msk [vmem:[#allocation2 + $0x50] sm:$0xff] %vm4097, %v4012
        %4104 = vst.msk [vmem:[#allocation2 + $0x60] sm:$0xff] %vm4097, %v4014
        %4105 = vst.msk [vmem:[#allocation2 + $0x70] sm:$0xff] %vm4097, %v4016
        %4106 = vst.msk [vmem:[#allocation2 + $0x80] sm:$0xff] %vm4097, %v4018
        %4107 = vst.msk [vmem:[#allocation2 + $0x90] sm:$0xff] %vm4097, %v4020
        %4108 = vst.msk [vmem:[#allocation2 + $0xa0] sm:$0xff] %vm4097, %v4022
        %4109 = vst.msk [vmem:[#allocation2 + $0xb0] sm:$0xff] %vm4097, %v4024
        %4110 = vst.msk [vmem:[#allocation2 + $0xc0] sm:$0xff] %vm4097, %v4026
        %4111 = vst.msk [vmem:[#allocation2 + $0xd0] sm:$0xff] %vm4097, %v4028
        %4112 = vst.msk [vmem:[#allocation2 + $0xe0] sm:$0xff] %vm4097, %v4030
        %4113 = vst.msk [vmem:[#allocation2 + $0xf0] sm:$0xff] %vm4097, %v4032
        %4114 = vst.msk [vmem:[#allocation2 + $0x100] sm:$0xff] %vm4097, %v4034
        %4115 = vst.msk [vmem:[#allocation2 + $0x110] sm:$0xff] %vm4097, %v4036
        %4116 = vst.msk [vmem:[#allocation2 + $0x120] sm:$0xff] %vm4097, %v4038
        %4117 = vst.msk [vmem:[#allocation2 + $0x130] sm:$0xff] %vm4097, %v4040
        %4118 = vst.msk [vmem:[#allocation2 + $0x140] sm:$0xff] %vm4097, %v4042
        %4119 = vst.msk [vmem:[#allocation2 + $0x150] sm:$0xff] %vm4097, %v4044
        %4120 = vst.msk [vmem:[#allocation2 + $0x160] sm:$0xff] %vm4097, %v4046
        %4121 = vst.msk [vmem:[#allocation2 + $0x170] sm:$0xff] %vm4097, %v4048
        %4122 = vst.msk [vmem:[#allocation2 + $0x180] sm:$0xff] %vm4097, %v4050
        %4123 = vst.msk [vmem:[#allocation2 + $0x190] sm:$0xff] %vm4097, %v4052
        %4124 = vst.msk [vmem:[#allocation2 + $0x1a0] sm:$0xff] %vm4097, %v4054
        %4125 = vst.msk [vmem:[#allocation2 + $0x1b0] sm:$0xff] %vm4097, %v4056
        %4126 = vst.msk [vmem:[#allocation2 + $0x1c0] sm:$0xff] %vm4097, %v4058
        %4127 = vst.msk [vmem:[#allocation2 + $0x1d0] sm:$0xff] %vm4097, %v4060
        %4128 = vst.msk [vmem:[#allocation2 + $0x1e0] sm:$0xff] %vm4097, %v4062
        %4129 = vst.msk [vmem:[#allocation2 + $0x1f0] sm:$0xff] %vm4097, %v4064
        %s4130 = scalar_lea.vmem %s197, 72
        %v4131 = vld [vmem:[%s4130] sm:$0xff]
        %v4132 = vld [vmem:[%s4130 + $0x8] sm:$0xff]
        %v4133 = vld [vmem:[%s4130 + $0x18] sm:$0xff]
        %v4134 = vld [vmem:[%s4130 + $0x20] sm:$0xff]
        %v4135 = vld [vmem:[%s4130 + $0x30] sm:$0xff]
        %v4136 = vld [vmem:[%s4130 + $0x38] sm:$0xff]
        %v4137 = vld [vmem:[%s4130 + $0x48] sm:$0xff]
        %v4138 = vld [vmem:[%s4130 + $0x50] sm:$0xff]
        %v4139 = vld [vmem:[%s4130 + $0x60] sm:$0xff]
        %v4140 = vld [vmem:[%s4130 + $0x68] sm:$0xff]
        %v4141 = vld [vmem:[%s4130 + $0x78] sm:$0xff]
        %v4142 = vld [vmem:[%s4130 + $0x80] sm:$0xff]
        %v4143 = vld [vmem:[%s4130 + $0x90] sm:$0xff]
        %v4144 = vld [vmem:[%s4130 + $0x98] sm:$0xff]
        %v4145 = vld [vmem:[%s4130 + $0xa8] sm:$0xff]
        %v4146 = vld [vmem:[%s4130 + $0xb0] sm:$0xff]
        %v4147 = vld [vmem:[%s4130 + $0xc0] sm:$0xff]
        %v4148 = vld [vmem:[%s4130 + $0xc8] sm:$0xff]
        %v4149 = vld [vmem:[%s4130 + $0xd8] sm:$0xff]
        %v4150 = vld [vmem:[%s4130 + $0xe0] sm:$0xff]
        %v4151 = vld [vmem:[%s4130 + $0xf0] sm:$0xff]
        %v4152 = vld [vmem:[%s4130 + $0xf8] sm:$0xff]
        %v4153 = vld [vmem:[%s4130 + $0x108] sm:$0xff]
        %v4154 = vld [vmem:[%s4130 + $0x110] sm:$0xff]
        %v4155 = vld [vmem:[%s4130 + $0x120] sm:$0xff]
        %v4156 = vld [vmem:[%s4130 + $0x128] sm:$0xff]
        %v4157 = vld [vmem:[%s4130 + $0x138] sm:$0xff]
        %v4158 = vld [vmem:[%s4130 + $0x140] sm:$0xff]
        %v4159 = vld [vmem:[%s4130 + $0x150] sm:$0xff]
        %v4160 = vld [vmem:[%s4130 + $0x158] sm:$0xff]
        %v4161 = vld [vmem:[%s4130 + $0x168] sm:$0xff]
        %v4162 = vld [vmem:[%s4130 + $0x170] sm:$0xff]
        %4195 = vrot.lane.b32.xlu0 %v4131, 84
        %v4196 = vpop.permute.xlu0 %4195
        %4197 = vrot.lane.b32.xlu0 %v4132, 84
        %v4198 = vpop.permute.xlu0 %4197
        %4199 = vrot.lane.b32.xlu0 %v4133, 84
        %v4200 = vpop.permute.xlu0 %4199
        %4201 = vrot.lane.b32.xlu0 %v4134, 84
        %v4202 = vpop.permute.xlu0 %4201
        %4203 = vrot.lane.b32.xlu0 %v4135, 84
        %v4204 = vpop.permute.xlu0 %4203
        %4205 = vrot.lane.b32.xlu0 %v4136, 84
        %v4206 = vpop.permute.xlu0 %4205
        %4207 = vrot.lane.b32.xlu0 %v4137, 84
        %v4208 = vpop.permute.xlu0 %4207
        %4209 = vrot.lane.b32.xlu0 %v4138, 84
        %v4210 = vpop.permute.xlu0 %4209
        %4211 = vrot.lane.b32.xlu0 %v4139, 84
        %v4212 = vpop.permute.xlu0 %4211
        %4213 = vrot.lane.b32.xlu0 %v4140, 84
        %v4214 = vpop.permute.xlu0 %4213
        %4215 = vrot.lane.b32.xlu0 %v4141, 84
        %v4216 = vpop.permute.xlu0 %4215
        %4217 = vrot.lane.b32.xlu0 %v4142, 84
        %v4218 = vpop.permute.xlu0 %4217
        %4219 = vrot.lane.b32.xlu0 %v4143, 84
        %v4220 = vpop.permute.xlu0 %4219
        %4221 = vrot.lane.b32.xlu0 %v4144, 84
        %v4222 = vpop.permute.xlu0 %4221
        %4223 = vrot.lane.b32.xlu0 %v4145, 84
        %v4224 = vpop.permute.xlu0 %4223
        %4225 = vrot.lane.b32.xlu0 %v4146, 84
        %v4226 = vpop.permute.xlu0 %4225
        %4227 = vrot.lane.b32.xlu0 %v4147, 84
        %v4228 = vpop.permute.xlu0 %4227
        %4229 = vrot.lane.b32.xlu0 %v4148, 84
        %v4230 = vpop.permute.xlu0 %4229
        %4231 = vrot.lane.b32.xlu0 %v4149, 84
        %v4232 = vpop.permute.xlu0 %4231
        %4233 = vrot.lane.b32.xlu0 %v4150, 84
        %v4234 = vpop.permute.xlu0 %4233
        %4235 = vrot.lane.b32.xlu0 %v4151, 84
        %v4236 = vpop.permute.xlu0 %4235
        %4237 = vrot.lane.b32.xlu0 %v4152, 84
        %v4238 = vpop.permute.xlu0 %4237
        %4239 = vrot.lane.b32.xlu0 %v4153, 84
        %v4240 = vpop.permute.xlu0 %4239
        %4241 = vrot.lane.b32.xlu0 %v4154, 84
        %v4242 = vpop.permute.xlu0 %4241
        %4243 = vrot.lane.b32.xlu0 %v4155, 84
        %v4244 = vpop.permute.xlu0 %4243
        %4245 = vrot.lane.b32.xlu0 %v4156, 84
        %v4246 = vpop.permute.xlu0 %4245
        %4247 = vrot.lane.b32.xlu0 %v4157, 84
        %v4248 = vpop.permute.xlu0 %4247
        %4249 = vrot.lane.b32.xlu0 %v4158, 84
        %v4250 = vpop.permute.xlu0 %4249
        %4251 = vrot.lane.b32.xlu0 %v4159, 84
        %v4252 = vpop.permute.xlu0 %4251
        %4253 = vrot.lane.b32.xlu0 %v4160, 84
        %v4254 = vpop.permute.xlu0 %4253
        %4255 = vrot.lane.b32.xlu0 %v4161, 84
        %v4256 = vpop.permute.xlu0 %4255
        %4257 = vrot.lane.b32.xlu0 %v4162, 84
        %v4258 = vpop.permute.xlu0 %4257
        %vm4291 = vcmask 720544
        %4292 = vst.msk [vmem:[#allocation2] sm:$0xff] %vm4291, %v4196
        %4293 = vst.msk [vmem:[#allocation2 + $0x10] sm:$0xff] %vm4291, %v4198
        %4294 = vst.msk [vmem:[#allocation2 + $0x20] sm:$0xff] %vm4291, %v4200
        %4295 = vst.msk [vmem:[#allocation2 + $0x30] sm:$0xff] %vm4291, %v4202
        %4296 = vst.msk [vmem:[#allocation2 + $0x40] sm:$0xff] %vm4291, %v4204
        %4297 = vst.msk [vmem:[#allocation2 + $0x50] sm:$0xff] %vm4291, %v4206
        %4298 = vst.msk [vmem:[#allocation2 + $0x60] sm:$0xff] %vm4291, %v4208
        %4299 = vst.msk [vmem:[#allocation2 + $0x70] sm:$0xff] %vm4291, %v4210
        %4300 = vst.msk [vmem:[#allocation2 + $0x80] sm:$0xff] %vm4291, %v4212
        %4301 = vst.msk [vmem:[#allocation2 + $0x90] sm:$0xff] %vm4291, %v4214
        %4302 = vst.msk [vmem:[#allocation2 + $0xa0] sm:$0xff] %vm4291, %v4216
        %4303 = vst.msk [vmem:[#allocation2 + $0xb0] sm:$0xff] %vm4291, %v4218
        %4304 = vst.msk [vmem:[#allocation2 + $0xc0] sm:$0xff] %vm4291, %v4220
        %4305 = vst.msk [vmem:[#allocation2 + $0xd0] sm:$0xff] %vm4291, %v4222
        %4306 = vst.msk [vmem:[#allocation2 + $0xe0] sm:$0xff] %vm4291, %v4224
        %4307 = vst.msk [vmem:[#allocation2 + $0xf0] sm:$0xff] %vm4291, %v4226
        %4308 = vst.msk [vmem:[#allocation2 + $0x100] sm:$0xff] %vm4291, %v4228
        %4309 = vst.msk [vmem:[#allocation2 + $0x110] sm:$0xff] %vm4291, %v4230
        %4310 = vst.msk [vmem:[#allocation2 + $0x120] sm:$0xff] %vm4291, %v4232
        %4311 = vst.msk [vmem:[#allocation2 + $0x130] sm:$0xff] %vm4291, %v4234
        %4312 = vst.msk [vmem:[#allocation2 + $0x140] sm:$0xff] %vm4291, %v4236
        %4313 = vst.msk [vmem:[#allocation2 + $0x150] sm:$0xff] %vm4291, %v4238
        %4314 = vst.msk [vmem:[#allocation2 + $0x160] sm:$0xff] %vm4291, %v4240
        %4315 = vst.msk [vmem:[#allocation2 + $0x170] sm:$0xff] %vm4291, %v4242
        %4316 = vst.msk [vmem:[#allocation2 + $0x180] sm:$0xff] %vm4291, %v4244
        %4317 = vst.msk [vmem:[#allocation2 + $0x190] sm:$0xff] %vm4291, %v4246
        %4318 = vst.msk [vmem:[#allocation2 + $0x1a0] sm:$0xff] %vm4291, %v4248
        %4319 = vst.msk [vmem:[#allocation2 + $0x1b0] sm:$0xff] %vm4291, %v4250
        %4320 = vst.msk [vmem:[#allocation2 + $0x1c0] sm:$0xff] %vm4291, %v4252
        %4321 = vst.msk [vmem:[#allocation2 + $0x1d0] sm:$0xff] %vm4291, %v4254
        %4322 = vst.msk [vmem:[#allocation2 + $0x1e0] sm:$0xff] %vm4291, %v4256
        %4323 = vst.msk [vmem:[#allocation2 + $0x1f0] sm:$0xff] %vm4291, %v4258
        %v4324 = vld [vmem:[%s4130 + $0x1] sm:$0xff]
        %v4325 = vld [vmem:[%s4130 + $0x9] sm:$0xff]
        %v4326 = vld [vmem:[%s4130 + $0x19] sm:$0xff]
        %v4327 = vld [vmem:[%s4130 + $0x21] sm:$0xff]
        %v4328 = vld [vmem:[%s4130 + $0x31] sm:$0xff]
        %v4329 = vld [vmem:[%s4130 + $0x39] sm:$0xff]
        %v4330 = vld [vmem:[%s4130 + $0x49] sm:$0xff]
        %v4331 = vld [vmem:[%s4130 + $0x51] sm:$0xff]
        %v4332 = vld [vmem:[%s4130 + $0x61] sm:$0xff]
        %v4333 = vld [vmem:[%s4130 + $0x69] sm:$0xff]
        %v4334 = vld [vmem:[%s4130 + $0x79] sm:$0xff]
        %v4335 = vld [vmem:[%s4130 + $0x81] sm:$0xff]
        %v4336 = vld [vmem:[%s4130 + $0x91] sm:$0xff]
        %v4337 = vld [vmem:[%s4130 + $0x99] sm:$0xff]
        %v4338 = vld [vmem:[%s4130 + $0xa9] sm:$0xff]
        %v4339 = vld [vmem:[%s4130 + $0xb1] sm:$0xff]
        %v4340 = vld [vmem:[%s4130 + $0xc1] sm:$0xff]
        %v4341 = vld [vmem:[%s4130 + $0xc9] sm:$0xff]
        %v4342 = vld [vmem:[%s4130 + $0xd9] sm:$0xff]
        %v4343 = vld [vmem:[%s4130 + $0xe1] sm:$0xff]
        %v4344 = vld [vmem:[%s4130 + $0xf1] sm:$0xff]
        %v4345 = vld [vmem:[%s4130 + $0xf9] sm:$0xff]
        %v4346 = vld [vmem:[%s4130 + $0x109] sm:$0xff]
        %v4347 = vld [vmem:[%s4130 + $0x111] sm:$0xff]
        %v4348 = vld [vmem:[%s4130 + $0x121] sm:$0xff]
        %v4349 = vld [vmem:[%s4130 + $0x129] sm:$0xff]
        %v4350 = vld [vmem:[%s4130 + $0x139] sm:$0xff]
        %v4351 = vld [vmem:[%s4130 + $0x141] sm:$0xff]
        %v4352 = vld [vmem:[%s4130 + $0x151] sm:$0xff]
        %v4353 = vld [vmem:[%s4130 + $0x159] sm:$0xff]
        %v4354 = vld [vmem:[%s4130 + $0x169] sm:$0xff]
        %v4355 = vld [vmem:[%s4130 + $0x171] sm:$0xff]
        %4388 = vrot.lane.b32.xlu0 %v4324, 88
        %v4389 = vpop.permute.xlu0 %4388
        %4390 = vrot.lane.b32.xlu0 %v4325, 88
        %v4391 = vpop.permute.xlu0 %4390
        %4392 = vrot.lane.b32.xlu0 %v4326, 88
        %v4393 = vpop.permute.xlu0 %4392
        %4394 = vrot.lane.b32.xlu0 %v4327, 88
        %v4395 = vpop.permute.xlu0 %4394
        %4396 = vrot.lane.b32.xlu0 %v4328, 88
        %v4397 = vpop.permute.xlu0 %4396
        %4398 = vrot.lane.b32.xlu0 %v4329, 88
        %v4399 = vpop.permute.xlu0 %4398
        %4400 = vrot.lane.b32.xlu0 %v4330, 88
        %v4401 = vpop.permute.xlu0 %4400
        %4402 = vrot.lane.b32.xlu0 %v4331, 88
        %v4403 = vpop.permute.xlu0 %4402
        %4404 = vrot.lane.b32.xlu0 %v4332, 88
        %v4405 = vpop.permute.xlu0 %4404
        %4406 = vrot.lane.b32.xlu0 %v4333, 88
        %v4407 = vpop.permute.xlu0 %4406
        %4408 = vrot.lane.b32.xlu0 %v4334, 88
        %v4409 = vpop.permute.xlu0 %4408
        %4410 = vrot.lane.b32.xlu0 %v4335, 88
        %v4411 = vpop.permute.xlu0 %4410
        %4412 = vrot.lane.b32.xlu0 %v4336, 88
        %v4413 = vpop.permute.xlu0 %4412
        %4414 = vrot.lane.b32.xlu0 %v4337, 88
        %v4415 = vpop.permute.xlu0 %4414
        %4416 = vrot.lane.b32.xlu0 %v4338, 88
        %v4417 = vpop.permute.xlu0 %4416
        %4418 = vrot.lane.b32.xlu0 %v4339, 88
        %v4419 = vpop.permute.xlu0 %4418
        %4420 = vrot.lane.b32.xlu0 %v4340, 88
        %v4421 = vpop.permute.xlu0 %4420
        %4422 = vrot.lane.b32.xlu0 %v4341, 88
        %v4423 = vpop.permute.xlu0 %4422
        %4424 = vrot.lane.b32.xlu0 %v4342, 88
        %v4425 = vpop.permute.xlu0 %4424
        %4426 = vrot.lane.b32.xlu0 %v4343, 88
        %v4427 = vpop.permute.xlu0 %4426
        %4428 = vrot.lane.b32.xlu0 %v4344, 88
        %v4429 = vpop.permute.xlu0 %4428
        %4430 = vrot.lane.b32.xlu0 %v4345, 88
        %v4431 = vpop.permute.xlu0 %4430
        %4432 = vrot.lane.b32.xlu0 %v4346, 88
        %v4433 = vpop.permute.xlu0 %4432
        %4434 = vrot.lane.b32.xlu0 %v4347, 88
        %v4435 = vpop.permute.xlu0 %4434
        %4436 = vrot.lane.b32.xlu0 %v4348, 88
        %v4437 = vpop.permute.xlu0 %4436
        %4438 = vrot.lane.b32.xlu0 %v4349, 88
        %v4439 = vpop.permute.xlu0 %4438
        %4440 = vrot.lane.b32.xlu0 %v4350, 88
        %v4441 = vpop.permute.xlu0 %4440
        %4442 = vrot.lane.b32.xlu0 %v4351, 88
        %v4443 = vpop.permute.xlu0 %4442
        %4444 = vrot.lane.b32.xlu0 %v4352, 88
        %v4445 = vpop.permute.xlu0 %4444
        %4446 = vrot.lane.b32.xlu0 %v4353, 88
        %v4447 = vpop.permute.xlu0 %4446
        %4448 = vrot.lane.b32.xlu0 %v4354, 88
        %v4449 = vpop.permute.xlu0 %4448
        %4450 = vrot.lane.b32.xlu0 %v4355, 88
        %v4451 = vpop.permute.xlu0 %4450
        %vm4484 = vcmask 753344
        %4485 = vst.msk [vmem:[#allocation2] sm:$0xff] %vm4484, %v4389
        %4486 = vst.msk [vmem:[#allocation2 + $0x10] sm:$0xff] %vm4484, %v4391
        %4487 = vst.msk [vmem:[#allocation2 + $0x20] sm:$0xff] %vm4484, %v4393
        %4488 = vst.msk [vmem:[#allocation2 + $0x30] sm:$0xff] %vm4484, %v4395
        %4489 = vst.msk [vmem:[#allocation2 + $0x40] sm:$0xff] %vm4484, %v4397
        %4490 = vst.msk [vmem:[#allocation2 + $0x50] sm:$0xff] %vm4484, %v4399
        %4491 = vst.msk [vmem:[#allocation2 + $0x60] sm:$0xff] %vm4484, %v4401
        %4492 = vst.msk [vmem:[#allocation2 + $0x70] sm:$0xff] %vm4484, %v4403
        %4493 = vst.msk [vmem:[#allocation2 + $0x80] sm:$0xff] %vm4484, %v4405
        %4494 = vst.msk [vmem:[#allocation2 + $0x90] sm:$0xff] %vm4484, %v4407
        %4495 = vst.msk [vmem:[#allocation2 + $0xa0] sm:$0xff] %vm4484, %v4409
        %4496 = vst.msk [vmem:[#allocation2 + $0xb0] sm:$0xff] %vm4484, %v4411
        %4497 = vst.msk [vmem:[#allocation2 + $0xc0] sm:$0xff] %vm4484, %v4413
        %4498 = vst.msk [vmem:[#allocation2 + $0xd0] sm:$0xff] %vm4484, %v4415
        %4499 = vst.msk [vmem:[#allocation2 + $0xe0] sm:$0xff] %vm4484, %v4417
        %4500 = vst.msk [vmem:[#allocation2 + $0xf0] sm:$0xff] %vm4484, %v4419
        %4501 = vst.msk [vmem:[#allocation2 + $0x100] sm:$0xff] %vm4484, %v4421
        %4502 = vst.msk [vmem:[#allocation2 + $0x110] sm:$0xff] %vm4484, %v4423
        %4503 = vst.msk [vmem:[#allocation2 + $0x120] sm:$0xff] %vm4484, %v4425
        %4504 = vst.msk [vmem:[#allocation2 + $0x130] sm:$0xff] %vm4484, %v4427
        %4505 = vst.msk [vmem:[#allocation2 + $0x140] sm:$0xff] %vm4484, %v4429
        %4506 = vst.msk [vmem:[#allocation2 + $0x150] sm:$0xff] %vm4484, %v4431
        %4507 = vst.msk [vmem:[#allocation2 + $0x160] sm:$0xff] %vm4484, %v4433
        %4508 = vst.msk [vmem:[#allocation2 + $0x170] sm:$0xff] %vm4484, %v4435
        %4509 = vst.msk [vmem:[#allocation2 + $0x180] sm:$0xff] %vm4484, %v4437
        %4510 = vst.msk [vmem:[#allocation2 + $0x190] sm:$0xff] %vm4484, %v4439
        %4511 = vst.msk [vmem:[#allocation2 + $0x1a0] sm:$0xff] %vm4484, %v4441
        %4512 = vst.msk [vmem:[#allocation2 + $0x1b0] sm:$0xff] %vm4484, %v4443
        %4513 = vst.msk [vmem:[#allocation2 + $0x1c0] sm:$0xff] %vm4484, %v4445
        %4514 = vst.msk [vmem:[#allocation2 + $0x1d0] sm:$0xff] %vm4484, %v4447
        %4515 = vst.msk [vmem:[#allocation2 + $0x1e0] sm:$0xff] %vm4484, %v4449
        %4516 = vst.msk [vmem:[#allocation2 + $0x1f0] sm:$0xff] %vm4484, %v4451
        %v4517 = vld [vmem:[%s4130 + $0x2] sm:$0xff]
        %v4518 = vld [vmem:[%s4130 + $0xa] sm:$0xff]
        %v4519 = vld [vmem:[%s4130 + $0x1a] sm:$0xff]
        %v4520 = vld [vmem:[%s4130 + $0x22] sm:$0xff]
        %v4521 = vld [vmem:[%s4130 + $0x32] sm:$0xff]
        %v4522 = vld [vmem:[%s4130 + $0x3a] sm:$0xff]
        %v4523 = vld [vmem:[%s4130 + $0x4a] sm:$0xff]
        %v4524 = vld [vmem:[%s4130 + $0x52] sm:$0xff]
        %v4525 = vld [vmem:[%s4130 + $0x62] sm:$0xff]
        %v4526 = vld [vmem:[%s4130 + $0x6a] sm:$0xff]
        %v4527 = vld [vmem:[%s4130 + $0x7a] sm:$0xff]
        %v4528 = vld [vmem:[%s4130 + $0x82] sm:$0xff]
        %v4529 = vld [vmem:[%s4130 + $0x92] sm:$0xff]
        %v4530 = vld [vmem:[%s4130 + $0x9a] sm:$0xff]
        %v4531 = vld [vmem:[%s4130 + $0xaa] sm:$0xff]
        %v4532 = vld [vmem:[%s4130 + $0xb2] sm:$0xff]
        %v4533 = vld [vmem:[%s4130 + $0xc2] sm:$0xff]
        %v4534 = vld [vmem:[%s4130 + $0xca] sm:$0xff]
        %v4535 = vld [vmem:[%s4130 + $0xda] sm:$0xff]
        %v4536 = vld [vmem:[%s4130 + $0xe2] sm:$0xff]
        %v4537 = vld [vmem:[%s4130 + $0xf2] sm:$0xff]
        %v4538 = vld [vmem:[%s4130 + $0xfa] sm:$0xff]
        %v4539 = vld [vmem:[%s4130 + $0x10a] sm:$0xff]
        %v4540 = vld [vmem:[%s4130 + $0x112] sm:$0xff]
        %v4541 = vld [vmem:[%s4130 + $0x122] sm:$0xff]
        %v4542 = vld [vmem:[%s4130 + $0x12a] sm:$0xff]
        %v4543 = vld [vmem:[%s4130 + $0x13a] sm:$0xff]
        %v4544 = vld [vmem:[%s4130 + $0x142] sm:$0xff]
        %v4545 = vld [vmem:[%s4130 + $0x152] sm:$0xff]
        %v4546 = vld [vmem:[%s4130 + $0x15a] sm:$0xff]
        %v4547 = vld [vmem:[%s4130 + $0x16a] sm:$0xff]
        %v4548 = vld [vmem:[%s4130 + $0x172] sm:$0xff]
        %4581 = vrot.lane.b32.xlu0 %v4517, 92
        %v4582 = vpop.permute.xlu0 %4581
        %4583 = vrot.lane.b32.xlu0 %v4518, 92
        %v4584 = vpop.permute.xlu0 %4583
        %4585 = vrot.lane.b32.xlu0 %v4519, 92
        %v4586 = vpop.permute.xlu0 %4585
        %4587 = vrot.lane.b32.xlu0 %v4520, 92
        %v4588 = vpop.permute.xlu0 %4587
        %4589 = vrot.lane.b32.xlu0 %v4521, 92
        %v4590 = vpop.permute.xlu0 %4589
        %4591 = vrot.lane.b32.xlu0 %v4522, 92
        %v4592 = vpop.permute.xlu0 %4591
        %4593 = vrot.lane.b32.xlu0 %v4523, 92
        %v4594 = vpop.permute.xlu0 %4593
        %4595 = vrot.lane.b32.xlu0 %v4524, 92
        %v4596 = vpop.permute.xlu0 %4595
        %4597 = vrot.lane.b32.xlu0 %v4525, 92
        %v4598 = vpop.permute.xlu0 %4597
        %4599 = vrot.lane.b32.xlu0 %v4526, 92
        %v4600 = vpop.permute.xlu0 %4599
        %4601 = vrot.lane.b32.xlu0 %v4527, 92
        %v4602 = vpop.permute.xlu0 %4601
        %4603 = vrot.lane.b32.xlu0 %v4528, 92
        %v4604 = vpop.permute.xlu0 %4603
        %4605 = vrot.lane.b32.xlu0 %v4529, 92
        %v4606 = vpop.permute.xlu0 %4605
        %4607 = vrot.lane.b32.xlu0 %v4530, 92
        %v4608 = vpop.permute.xlu0 %4607
        %4609 = vrot.lane.b32.xlu0 %v4531, 92
        %v4610 = vpop.permute.xlu0 %4609
        %4611 = vrot.lane.b32.xlu0 %v4532, 92
        %v4612 = vpop.permute.xlu0 %4611
        %4613 = vrot.lane.b32.xlu0 %v4533, 92
        %v4614 = vpop.permute.xlu0 %4613
        %4615 = vrot.lane.b32.xlu0 %v4534, 92
        %v4616 = vpop.permute.xlu0 %4615
        %4617 = vrot.lane.b32.xlu0 %v4535, 92
        %v4618 = vpop.permute.xlu0 %4617
        %4619 = vrot.lane.b32.xlu0 %v4536, 92
        %v4620 = vpop.permute.xlu0 %4619
        %4621 = vrot.lane.b32.xlu0 %v4537, 92
        %v4622 = vpop.permute.xlu0 %4621
        %4623 = vrot.lane.b32.xlu0 %v4538, 92
        %v4624 = vpop.permute.xlu0 %4623
        %4625 = vrot.lane.b32.xlu0 %v4539, 92
        %v4626 = vpop.permute.xlu0 %4625
        %4627 = vrot.lane.b32.xlu0 %v4540, 92
        %v4628 = vpop.permute.xlu0 %4627
        %4629 = vrot.lane.b32.xlu0 %v4541, 92
        %v4630 = vpop.permute.xlu0 %4629
        %4631 = vrot.lane.b32.xlu0 %v4542, 92
        %v4632 = vpop.permute.xlu0 %4631
        %4633 = vrot.lane.b32.xlu0 %v4543, 92
        %v4634 = vpop.permute.xlu0 %4633
        %4635 = vrot.lane.b32.xlu0 %v4544, 92
        %v4636 = vpop.permute.xlu0 %4635
        %4637 = vrot.lane.b32.xlu0 %v4545, 92
        %v4638 = vpop.permute.xlu0 %4637
        %4639 = vrot.lane.b32.xlu0 %v4546, 92
        %v4640 = vpop.permute.xlu0 %4639
        %4641 = vrot.lane.b32.xlu0 %v4547, 92
        %v4642 = vpop.permute.xlu0 %4641
        %4643 = vrot.lane.b32.xlu0 %v4548, 92
        %v4644 = vpop.permute.xlu0 %4643
        %vm4677 = vcmask 786144
        %4678 = vst.msk [vmem:[#allocation2] sm:$0xff] %vm4677, %v4582
        %4679 = vst.msk [vmem:[#allocation2 + $0x10] sm:$0xff] %vm4677, %v4584
        %4680 = vst.msk [vmem:[#allocation2 + $0x20] sm:$0xff] %vm4677, %v4586
        %4681 = vst.msk [vmem:[#allocation2 + $0x30] sm:$0xff] %vm4677, %v4588
        %4682 = vst.msk [vmem:[#allocation2 + $0x40] sm:$0xff] %vm4677, %v4590
        %4683 = vst.msk [vmem:[#allocation2 + $0x50] sm:$0xff] %vm4677, %v4592
        %4684 = vst.msk [vmem:[#allocation2 + $0x60] sm:$0xff] %vm4677, %v4594
        %4685 = vst.msk [vmem:[#allocation2 + $0x70] sm:$0xff] %vm4677, %v4596
        %4686 = vst.msk [vmem:[#allocation2 + $0x80] sm:$0xff] %vm4677, %v4598
        %4687 = vst.msk [vmem:[#allocation2 + $0x90] sm:$0xff] %vm4677, %v4600
        %4688 = vst.msk [vmem:[#allocation2 + $0xa0] sm:$0xff] %vm4677, %v4602
        %4689 = vst.msk [vmem:[#allocation2 + $0xb0] sm:$0xff] %vm4677, %v4604
        %4690 = vst.msk [vmem:[#allocation2 + $0xc0] sm:$0xff] %vm4677, %v4606
        %4691 = vst.msk [vmem:[#allocation2 + $0xd0] sm:$0xff] %vm4677, %v4608
        %4692 = vst.msk [vmem:[#allocation2 + $0xe0] sm:$0xff] %vm4677, %v4610
        %4693 = vst.msk [vmem:[#allocation2 + $0xf0] sm:$0xff] %vm4677, %v4612
        %4694 = vst.msk [vmem:[#allocation2 + $0x100] sm:$0xff] %vm4677, %v4614
        %4695 = vst.msk [vmem:[#allocation2 + $0x110] sm:$0xff] %vm4677, %v4616
        %4696 = vst.msk [vmem:[#allocation2 + $0x120] sm:$0xff] %vm4677, %v4618
        %4697 = vst.msk [vmem:[#allocation2 + $0x130] sm:$0xff] %vm4677, %v4620
        %4698 = vst.msk [vmem:[#allocation2 + $0x140] sm:$0xff] %vm4677, %v4622
        %4699 = vst.msk [vmem:[#allocation2 + $0x150] sm:$0xff] %vm4677, %v4624
        %4700 = vst.msk [vmem:[#allocation2 + $0x160] sm:$0xff] %vm4677, %v4626
        %4701 = vst.msk [vmem:[#allocation2 + $0x170] sm:$0xff] %vm4677, %v4628
        %4702 = vst.msk [vmem:[#allocation2 + $0x180] sm:$0xff] %vm4677, %v4630
        %4703 = vst.msk [vmem:[#allocation2 + $0x190] sm:$0xff] %vm4677, %v4632
        %4704 = vst.msk [vmem:[#allocation2 + $0x1a0] sm:$0xff] %vm4677, %v4634
        %4705 = vst.msk [vmem:[#allocation2 + $0x1b0] sm:$0xff] %vm4677, %v4636
        %4706 = vst.msk [vmem:[#allocation2 + $0x1c0] sm:$0xff] %vm4677, %v4638
        %4707 = vst.msk [vmem:[#allocation2 + $0x1d0] sm:$0xff] %vm4677, %v4640
        %4708 = vst.msk [vmem:[#allocation2 + $0x1e0] sm:$0xff] %vm4677, %v4642
        %4709 = vst.msk [vmem:[#allocation2 + $0x1f0] sm:$0xff] %vm4677, %v4644
        %v4710 = vld [vmem:[%s4130 + $0x3] sm:$0xff]
        %v4711 = vld [vmem:[%s4130 + $0xb] sm:$0xff]
        %v4712 = vld [vmem:[%s4130 + $0x1b] sm:$0xff]
        %v4713 = vld [vmem:[%s4130 + $0x23] sm:$0xff]
        %v4714 = vld [vmem:[%s4130 + $0x33] sm:$0xff]
        %v4715 = vld [vmem:[%s4130 + $0x3b] sm:$0xff]
        %v4716 = vld [vmem:[%s4130 + $0x4b] sm:$0xff]
        %v4717 = vld [vmem:[%s4130 + $0x53] sm:$0xff]
        %v4718 = vld [vmem:[%s4130 + $0x63] sm:$0xff]
        %v4719 = vld [vmem:[%s4130 + $0x6b] sm:$0xff]
        %v4720 = vld [vmem:[%s4130 + $0x7b] sm:$0xff]
        %v4721 = vld [vmem:[%s4130 + $0x83] sm:$0xff]
        %v4722 = vld [vmem:[%s4130 + $0x93] sm:$0xff]
        %v4723 = vld [vmem:[%s4130 + $0x9b] sm:$0xff]
        %v4724 = vld [vmem:[%s4130 + $0xab] sm:$0xff]
        %v4725 = vld [vmem:[%s4130 + $0xb3] sm:$0xff]
        %v4726 = vld [vmem:[%s4130 + $0xc3] sm:$0xff]
        %v4727 = vld [vmem:[%s4130 + $0xcb] sm:$0xff]
        %v4728 = vld [vmem:[%s4130 + $0xdb] sm:$0xff]
        %v4729 = vld [vmem:[%s4130 + $0xe3] sm:$0xff]
        %v4730 = vld [vmem:[%s4130 + $0xf3] sm:$0xff]
        %v4731 = vld [vmem:[%s4130 + $0xfb] sm:$0xff]
        %v4732 = vld [vmem:[%s4130 + $0x10b] sm:$0xff]
        %v4733 = vld [vmem:[%s4130 + $0x113] sm:$0xff]
        %v4734 = vld [vmem:[%s4130 + $0x123] sm:$0xff]
        %v4735 = vld [vmem:[%s4130 + $0x12b] sm:$0xff]
        %v4736 = vld [vmem:[%s4130 + $0x13b] sm:$0xff]
        %v4737 = vld [vmem:[%s4130 + $0x143] sm:$0xff]
        %v4738 = vld [vmem:[%s4130 + $0x153] sm:$0xff]
        %v4739 = vld [vmem:[%s4130 + $0x15b] sm:$0xff]
        %v4740 = vld [vmem:[%s4130 + $0x16b] sm:$0xff]
        %v4741 = vld [vmem:[%s4130 + $0x173] sm:$0xff]
        %4774 = vrot.lane.b32.xlu0 %v4710, 96
        %v4775 = vpop.permute.xlu0 %4774
        %4776 = vrot.lane.b32.xlu0 %v4711, 96
        %v4777 = vpop.permute.xlu0 %4776
        %4778 = vrot.lane.b32.xlu0 %v4712, 96
        %v4779 = vpop.permute.xlu0 %4778
        %4780 = vrot.lane.b32.xlu0 %v4713, 96
        %v4781 = vpop.permute.xlu0 %4780
        %4782 = vrot.lane.b32.xlu0 %v4714, 96
        %v4783 = vpop.permute.xlu0 %4782
        %4784 = vrot.lane.b32.xlu0 %v4715, 96
        %v4785 = vpop.permute.xlu0 %4784
        %4786 = vrot.lane.b32.xlu0 %v4716, 96
        %v4787 = vpop.permute.xlu0 %4786
        %4788 = vrot.lane.b32.xlu0 %v4717, 96
        %v4789 = vpop.permute.xlu0 %4788
        %4790 = vrot.lane.b32.xlu0 %v4718, 96
        %v4791 = vpop.permute.xlu0 %4790
        %4792 = vrot.lane.b32.xlu0 %v4719, 96
        %v4793 = vpop.permute.xlu0 %4792
        %4794 = vrot.lane.b32.xlu0 %v4720, 96
        %v4795 = vpop.permute.xlu0 %4794
        %4796 = vrot.lane.b32.xlu0 %v4721, 96
        %v4797 = vpop.permute.xlu0 %4796
        %4798 = vrot.lane.b32.xlu0 %v4722, 96
        %v4799 = vpop.permute.xlu0 %4798
        %4800 = vrot.lane.b32.xlu0 %v4723, 96
        %v4801 = vpop.permute.xlu0 %4800
        %4802 = vrot.lane.b32.xlu0 %v4724, 96
        %v4803 = vpop.permute.xlu0 %4802
        %4804 = vrot.lane.b32.xlu0 %v4725, 96
        %v4805 = vpop.permute.xlu0 %4804
        %4806 = vrot.lane.b32.xlu0 %v4726, 96
        %v4807 = vpop.permute.xlu0 %4806
        %4808 = vrot.lane.b32.xlu0 %v4727, 96
        %v4809 = vpop.permute.xlu0 %4808
        %4810 = vrot.lane.b32.xlu0 %v4728, 96
        %v4811 = vpop.permute.xlu0 %4810
        %4812 = vrot.lane.b32.xlu0 %v4729, 96
        %v4813 = vpop.permute.xlu0 %4812
        %4814 = vrot.lane.b32.xlu0 %v4730, 96
        %v4815 = vpop.permute.xlu0 %4814
        %4816 = vrot.lane.b32.xlu0 %v4731, 96
        %v4817 = vpop.permute.xlu0 %4816
        %4818 = vrot.lane.b32.xlu0 %v4732, 96
        %v4819 = vpop.permute.xlu0 %4818
        %4820 = vrot.lane.b32.xlu0 %v4733, 96
        %v4821 = vpop.permute.xlu0 %4820
        %4822 = vrot.lane.b32.xlu0 %v4734, 96
        %v4823 = vpop.permute.xlu0 %4822
        %4824 = vrot.lane.b32.xlu0 %v4735, 96
        %v4825 = vpop.permute.xlu0 %4824
        %4826 = vrot.lane.b32.xlu0 %v4736, 96
        %v4827 = vpop.permute.xlu0 %4826
        %4828 = vrot.lane.b32.xlu0 %v4737, 96
        %v4829 = vpop.permute.xlu0 %4828
        %4830 = vrot.lane.b32.xlu0 %v4738, 96
        %v4831 = vpop.permute.xlu0 %4830
        %4832 = vrot.lane.b32.xlu0 %v4739, 96
        %v4833 = vpop.permute.xlu0 %4832
        %4834 = vrot.lane.b32.xlu0 %v4740, 96
        %v4835 = vpop.permute.xlu0 %4834
        %4836 = vrot.lane.b32.xlu0 %v4741, 96
        %v4837 = vpop.permute.xlu0 %4836
        %vm4870 = vcmask 818944
        %4871 = vst.msk [vmem:[#allocation2] sm:$0xff] %vm4870, %v4775
        %4872 = vst.msk [vmem:[#allocation2 + $0x10] sm:$0xff] %vm4870, %v4777
        %4873 = vst.msk [vmem:[#allocation2 + $0x20] sm:$0xff] %vm4870, %v4779
        %4874 = vst.msk [vmem:[#allocation2 + $0x30] sm:$0xff] %vm4870, %v4781
        %4875 = vst.msk [vmem:[#allocation2 + $0x40] sm:$0xff] %vm4870, %v4783
        %4876 = vst.msk [vmem:[#allocation2 + $0x50] sm:$0xff] %vm4870, %v4785
        %4877 = vst.msk [vmem:[#allocation2 + $0x60] sm:$0xff] %vm4870, %v4787
        %4878 = vst.msk [vmem:[#allocation2 + $0x70] sm:$0xff] %vm4870, %v4789
        %4879 = vst.msk [vmem:[#allocation2 + $0x80] sm:$0xff] %vm4870, %v4791
        %4880 = vst.msk [vmem:[#allocation2 + $0x90] sm:$0xff] %vm4870, %v4793
        %4881 = vst.msk [vmem:[#allocation2 + $0xa0] sm:$0xff] %vm4870, %v4795
        %4882 = vst.msk [vmem:[#allocation2 + $0xb0] sm:$0xff] %vm4870, %v4797
        %4883 = vst.msk [vmem:[#allocation2 + $0xc0] sm:$0xff] %vm4870, %v4799
        %4884 = vst.msk [vmem:[#allocation2 + $0xd0] sm:$0xff] %vm4870, %v4801
        %4885 = vst.msk [vmem:[#allocation2 + $0xe0] sm:$0xff] %vm4870, %v4803
        %4886 = vst.msk [vmem:[#allocation2 + $0xf0] sm:$0xff] %vm4870, %v4805
        %4887 = vst.msk [vmem:[#allocation2 + $0x100] sm:$0xff] %vm4870, %v4807
        %4888 = vst.msk [vmem:[#allocation2 + $0x110] sm:$0xff] %vm4870, %v4809
        %4889 = vst.msk [vmem:[#allocation2 + $0x120] sm:$0xff] %vm4870, %v4811
        %4890 = vst.msk [vmem:[#allocation2 + $0x130] sm:$0xff] %vm4870, %v4813
        %4891 = vst.msk [vmem:[#allocation2 + $0x140] sm:$0xff] %vm4870, %v4815
        %4892 = vst.msk [vmem:[#allocation2 + $0x150] sm:$0xff] %vm4870, %v4817
        %4893 = vst.msk [vmem:[#allocation2 + $0x160] sm:$0xff] %vm4870, %v4819
        %4894 = vst.msk [vmem:[#allocation2 + $0x170] sm:$0xff] %vm4870, %v4821
        %4895 = vst.msk [vmem:[#allocation2 + $0x180] sm:$0xff] %vm4870, %v4823
        %4896 = vst.msk [vmem:[#allocation2 + $0x190] sm:$0xff] %vm4870, %v4825
        %4897 = vst.msk [vmem:[#allocation2 + $0x1a0] sm:$0xff] %vm4870, %v4827
        %4898 = vst.msk [vmem:[#allocation2 + $0x1b0] sm:$0xff] %vm4870, %v4829
        %4899 = vst.msk [vmem:[#allocation2 + $0x1c0] sm:$0xff] %vm4870, %v4831
        %4900 = vst.msk [vmem:[#allocation2 + $0x1d0] sm:$0xff] %vm4870, %v4833
        %4901 = vst.msk [vmem:[#allocation2 + $0x1e0] sm:$0xff] %vm4870, %v4835
        %4902 = vst.msk [vmem:[#allocation2 + $0x1f0] sm:$0xff] %vm4870, %v4837
        %v4903 = vld [vmem:[%s4130 + $0x4] sm:$0xff]
        %v4904 = vld [vmem:[%s4130 + $0xc] sm:$0xff]
        %v4905 = vld [vmem:[%s4130 + $0x1c] sm:$0xff]
        %v4906 = vld [vmem:[%s4130 + $0x24] sm:$0xff]
        %v4907 = vld [vmem:[%s4130 + $0x34] sm:$0xff]
        %v4908 = vld [vmem:[%s4130 + $0x3c] sm:$0xff]
        %v4909 = vld [vmem:[%s4130 + $0x4c] sm:$0xff]
        %v4910 = vld [vmem:[%s4130 + $0x54] sm:$0xff]
        %v4911 = vld [vmem:[%s4130 + $0x64] sm:$0xff]
        %v4912 = vld [vmem:[%s4130 + $0x6c] sm:$0xff]
        %v4913 = vld [vmem:[%s4130 + $0x7c] sm:$0xff]
        %v4914 = vld [vmem:[%s4130 + $0x84] sm:$0xff]
        %v4915 = vld [vmem:[%s4130 + $0x94] sm:$0xff]
        %v4916 = vld [vmem:[%s4130 + $0x9c] sm:$0xff]
        %v4917 = vld [vmem:[%s4130 + $0xac] sm:$0xff]
        %v4918 = vld [vmem:[%s4130 + $0xb4] sm:$0xff]
        %v4919 = vld [vmem:[%s4130 + $0xc4] sm:$0xff]
        %v4920 = vld [vmem:[%s4130 + $0xcc] sm:$0xff]
        %v4921 = vld [vmem:[%s4130 + $0xdc] sm:$0xff]
        %v4922 = vld [vmem:[%s4130 + $0xe4] sm:$0xff]
        %v4923 = vld [vmem:[%s4130 + $0xf4] sm:$0xff]
        %v4924 = vld [vmem:[%s4130 + $0xfc] sm:$0xff]
        %v4925 = vld [vmem:[%s4130 + $0x10c] sm:$0xff]
        %v4926 = vld [vmem:[%s4130 + $0x114] sm:$0xff]
        %v4927 = vld [vmem:[%s4130 + $0x124] sm:$0xff]
        %v4928 = vld [vmem:[%s4130 + $0x12c] sm:$0xff]
        %v4929 = vld [vmem:[%s4130 + $0x13c] sm:$0xff]
        %v4930 = vld [vmem:[%s4130 + $0x144] sm:$0xff]
        %v4931 = vld [vmem:[%s4130 + $0x154] sm:$0xff]
        %v4932 = vld [vmem:[%s4130 + $0x15c] sm:$0xff]
        %v4933 = vld [vmem:[%s4130 + $0x16c] sm:$0xff]
        %v4934 = vld [vmem:[%s4130 + $0x174] sm:$0xff]
        %4967 = vrot.lane.b32.xlu0 %v4903, 100
        %v4968 = vpop.permute.xlu0 %4967
        %4969 = vrot.lane.b32.xlu0 %v4904, 100
        %v4970 = vpop.permute.xlu0 %4969
        %4971 = vrot.lane.b32.xlu0 %v4905, 100
        %v4972 = vpop.permute.xlu0 %4971
        %4973 = vrot.lane.b32.xlu0 %v4906, 100
        %v4974 = vpop.permute.xlu0 %4973
        %4975 = vrot.lane.b32.xlu0 %v4907, 100
        %v4976 = vpop.permute.xlu0 %4975
        %4977 = vrot.lane.b32.xlu0 %v4908, 100
        %v4978 = vpop.permute.xlu0 %4977
        %4979 = vrot.lane.b32.xlu0 %v4909, 100
        %v4980 = vpop.permute.xlu0 %4979
        %4981 = vrot.lane.b32.xlu0 %v4910, 100
        %v4982 = vpop.permute.xlu0 %4981
        %4983 = vrot.lane.b32.xlu0 %v4911, 100
        %v4984 = vpop.permute.xlu0 %4983
        %4985 = vrot.lane.b32.xlu0 %v4912, 100
        %v4986 = vpop.permute.xlu0 %4985
        %4987 = vrot.lane.b32.xlu0 %v4913, 100
        %v4988 = vpop.permute.xlu0 %4987
        %4989 = vrot.lane.b32.xlu0 %v4914, 100
        %v4990 = vpop.permute.xlu0 %4989
        %4991 = vrot.lane.b32.xlu0 %v4915, 100
        %v4992 = vpop.permute.xlu0 %4991
        %4993 = vrot.lane.b32.xlu0 %v4916, 100
        %v4994 = vpop.permute.xlu0 %4993
        %4995 = vrot.lane.b32.xlu0 %v4917, 100
        %v4996 = vpop.permute.xlu0 %4995
        %4997 = vrot.lane.b32.xlu0 %v4918, 100
        %v4998 = vpop.permute.xlu0 %4997
        %4999 = vrot.lane.b32.xlu0 %v4919, 100
        %v5000 = vpop.permute.xlu0 %4999
        %5001 = vrot.lane.b32.xlu0 %v4920, 100
        %v5002 = vpop.permute.xlu0 %5001
        %5003 = vrot.lane.b32.xlu0 %v4921, 100
        %v5004 = vpop.permute.xlu0 %5003
        %5005 = vrot.lane.b32.xlu0 %v4922, 100
        %v5006 = vpop.permute.xlu0 %5005
        %5007 = vrot.lane.b32.xlu0 %v4923, 100
        %v5008 = vpop.permute.xlu0 %5007
        %5009 = vrot.lane.b32.xlu0 %v4924, 100
        %v5010 = vpop.permute.xlu0 %5009
        %5011 = vrot.lane.b32.xlu0 %v4925, 100
        %v5012 = vpop.permute.xlu0 %5011
        %5013 = vrot.lane.b32.xlu0 %v4926, 100
        %v5014 = vpop.permute.xlu0 %5013
        %5015 = vrot.lane.b32.xlu0 %v4927, 100
        %v5016 = vpop.permute.xlu0 %5015
        %5017 = vrot.lane.b32.xlu0 %v4928, 100
        %v5018 = vpop.permute.xlu0 %5017
        %5019 = vrot.lane.b32.xlu0 %v4929, 100
        %v5020 = vpop.permute.xlu0 %5019
        %5021 = vrot.lane.b32.xlu0 %v4930, 100
        %v5022 = vpop.permute.xlu0 %5021
        %5023 = vrot.lane.b32.xlu0 %v4931, 100
        %v5024 = vpop.permute.xlu0 %5023
        %5025 = vrot.lane.b32.xlu0 %v4932, 100
        %v5026 = vpop.permute.xlu0 %5025
        %5027 = vrot.lane.b32.xlu0 %v4933, 100
        %v5028 = vpop.permute.xlu0 %5027
        %5029 = vrot.lane.b32.xlu0 %v4934, 100
        %v5030 = vpop.permute.xlu0 %5029
        %vm5063 = vcmask 851744
        %5064 = vst.msk [vmem:[#allocation2] sm:$0xff] %vm5063, %v4968
        %5065 = vst.msk [vmem:[#allocation2 + $0x10] sm:$0xff] %vm5063, %v4970
        %5066 = vst.msk [vmem:[#allocation2 + $0x20] sm:$0xff] %vm5063, %v4972
        %5067 = vst.msk [vmem:[#allocation2 + $0x30] sm:$0xff] %vm5063, %v4974
        %5068 = vst.msk [vmem:[#allocation2 + $0x40] sm:$0xff] %vm5063, %v4976
        %5069 = vst.msk [vmem:[#allocation2 + $0x50] sm:$0xff] %vm5063, %v4978
        %5070 = vst.msk [vmem:[#allocation2 + $0x60] sm:$0xff] %vm5063, %v4980
        %5071 = vst.msk [vmem:[#allocation2 + $0x70] sm:$0xff] %vm5063, %v4982
        %5072 = vst.msk [vmem:[#allocation2 + $0x80] sm:$0xff] %vm5063, %v4984
        %5073 = vst.msk [vmem:[#allocation2 + $0x90] sm:$0xff] %vm5063, %v4986
        %5074 = vst.msk [vmem:[#allocation2 + $0xa0] sm:$0xff] %vm5063, %v4988
        %5075 = vst.msk [vmem:[#allocation2 + $0xb0] sm:$0xff] %vm5063, %v4990
        %5076 = vst.msk [vmem:[#allocation2 + $0xc0] sm:$0xff] %vm5063, %v4992
        %5077 = vst.msk [vmem:[#allocation2 + $0xd0] sm:$0xff] %vm5063, %v4994
        %5078 = vst.msk [vmem:[#allocation2 + $0xe0] sm:$0xff] %vm5063, %v4996
        %5079 = vst.msk [vmem:[#allocation2 + $0xf0] sm:$0xff] %vm5063, %v4998
        %5080 = vst.msk [vmem:[#allocation2 + $0x100] sm:$0xff] %vm5063, %v5000
        %5081 = vst.msk [vmem:[#allocation2 + $0x110] sm:$0xff] %vm5063, %v5002
        %5082 = vst.msk [vmem:[#allocation2 + $0x120] sm:$0xff] %vm5063, %v5004
        %5083 = vst.msk [vmem:[#allocation2 + $0x130] sm:$0xff] %vm5063, %v5006
        %5084 = vst.msk [vmem:[#allocation2 + $0x140] sm:$0xff] %vm5063, %v5008
        %5085 = vst.msk [vmem:[#allocation2 + $0x150] sm:$0xff] %vm5063, %v5010
        %5086 = vst.msk [vmem:[#allocation2 + $0x160] sm:$0xff] %vm5063, %v5012
        %5087 = vst.msk [vmem:[#allocation2 + $0x170] sm:$0xff] %vm5063, %v5014
        %5088 = vst.msk [vmem:[#allocation2 + $0x180] sm:$0xff] %vm5063, %v5016
        %5089 = vst.msk [vmem:[#allocation2 + $0x190] sm:$0xff] %vm5063, %v5018
        %5090 = vst.msk [vmem:[#allocation2 + $0x1a0] sm:$0xff] %vm5063, %v5020
        %5091 = vst.msk [vmem:[#allocation2 + $0x1b0] sm:$0xff] %vm5063, %v5022
        %5092 = vst.msk [vmem:[#allocation2 + $0x1c0] sm:$0xff] %vm5063, %v5024
        %5093 = vst.msk [vmem:[#allocation2 + $0x1d0] sm:$0xff] %vm5063, %v5026
        %5094 = vst.msk [vmem:[#allocation2 + $0x1e0] sm:$0xff] %vm5063, %v5028
        %5095 = vst.msk [vmem:[#allocation2 + $0x1f0] sm:$0xff] %vm5063, %v5030
        %v5096 = vld [vmem:[%s4130 + $0x5] sm:$0xff]
        %v5097 = vld [vmem:[%s4130 + $0xd] sm:$0xff]
        %v5098 = vld [vmem:[%s4130 + $0x1d] sm:$0xff]
        %v5099 = vld [vmem:[%s4130 + $0x25] sm:$0xff]
        %v5100 = vld [vmem:[%s4130 + $0x35] sm:$0xff]
        %v5101 = vld [vmem:[%s4130 + $0x3d] sm:$0xff]
        %v5102 = vld [vmem:[%s4130 + $0x4d] sm:$0xff]
        %v5103 = vld [vmem:[%s4130 + $0x55] sm:$0xff]
        %v5104 = vld [vmem:[%s4130 + $0x65] sm:$0xff]
        %v5105 = vld [vmem:[%s4130 + $0x6d] sm:$0xff]
        %v5106 = vld [vmem:[%s4130 + $0x7d] sm:$0xff]
        %v5107 = vld [vmem:[%s4130 + $0x85] sm:$0xff]
        %v5108 = vld [vmem:[%s4130 + $0x95] sm:$0xff]
        %v5109 = vld [vmem:[%s4130 + $0x9d] sm:$0xff]
        %v5110 = vld [vmem:[%s4130 + $0xad] sm:$0xff]
        %v5111 = vld [vmem:[%s4130 + $0xb5] sm:$0xff]
        %v5112 = vld [vmem:[%s4130 + $0xc5] sm:$0xff]
        %v5113 = vld [vmem:[%s4130 + $0xcd] sm:$0xff]
        %v5114 = vld [vmem:[%s4130 + $0xdd] sm:$0xff]
        %v5115 = vld [vmem:[%s4130 + $0xe5] sm:$0xff]
        %v5116 = vld [vmem:[%s4130 + $0xf5] sm:$0xff]
        %v5117 = vld [vmem:[%s4130 + $0xfd] sm:$0xff]
        %v5118 = vld [vmem:[%s4130 + $0x10d] sm:$0xff]
        %v5119 = vld [vmem:[%s4130 + $0x115] sm:$0xff]
        %v5120 = vld [vmem:[%s4130 + $0x125] sm:$0xff]
        %v5121 = vld [vmem:[%s4130 + $0x12d] sm:$0xff]
        %v5122 = vld [vmem:[%s4130 + $0x13d] sm:$0xff]
        %v5123 = vld [vmem:[%s4130 + $0x145] sm:$0xff]
        %v5124 = vld [vmem:[%s4130 + $0x155] sm:$0xff]
        %v5125 = vld [vmem:[%s4130 + $0x15d] sm:$0xff]
        %v5126 = vld [vmem:[%s4130 + $0x16d] sm:$0xff]
        %v5127 = vld [vmem:[%s4130 + $0x175] sm:$0xff]
        %5160 = vrot.lane.b32.xlu0 %v5096, 104
        %v5161 = vpop.permute.xlu0 %5160
        %5162 = vrot.lane.b32.xlu0 %v5097, 104
        %v5163 = vpop.permute.xlu0 %5162
        %5164 = vrot.lane.b32.xlu0 %v5098, 104
        %v5165 = vpop.permute.xlu0 %5164
        %5166 = vrot.lane.b32.xlu0 %v5099, 104
        %v5167 = vpop.permute.xlu0 %5166
        %5168 = vrot.lane.b32.xlu0 %v5100, 104
        %v5169 = vpop.permute.xlu0 %5168
        %5170 = vrot.lane.b32.xlu0 %v5101, 104
        %v5171 = vpop.permute.xlu0 %5170
        %5172 = vrot.lane.b32.xlu0 %v5102, 104
        %v5173 = vpop.permute.xlu0 %5172
        %5174 = vrot.lane.b32.xlu0 %v5103, 104
        %v5175 = vpop.permute.xlu0 %5174
        %5176 = vrot.lane.b32.xlu0 %v5104, 104
        %v5177 = vpop.permute.xlu0 %5176
        %5178 = vrot.lane.b32.xlu0 %v5105, 104
        %v5179 = vpop.permute.xlu0 %5178
        %5180 = vrot.lane.b32.xlu0 %v5106, 104
        %v5181 = vpop.permute.xlu0 %5180
        %5182 = vrot.lane.b32.xlu0 %v5107, 104
        %v5183 = vpop.permute.xlu0 %5182
        %5184 = vrot.lane.b32.xlu0 %v5108, 104
        %v5185 = vpop.permute.xlu0 %5184
        %5186 = vrot.lane.b32.xlu0 %v5109, 104
        %v5187 = vpop.permute.xlu0 %5186
        %5188 = vrot.lane.b32.xlu0 %v5110, 104
        %v5189 = vpop.permute.xlu0 %5188
        %5190 = vrot.lane.b32.xlu0 %v5111, 104
        %v5191 = vpop.permute.xlu0 %5190
        %5192 = vrot.lane.b32.xlu0 %v5112, 104
        %v5193 = vpop.permute.xlu0 %5192
        %5194 = vrot.lane.b32.xlu0 %v5113, 104
        %v5195 = vpop.permute.xlu0 %5194
        %5196 = vrot.lane.b32.xlu0 %v5114, 104
        %v5197 = vpop.permute.xlu0 %5196
        %5198 = vrot.lane.b32.xlu0 %v5115, 104
        %v5199 = vpop.permute.xlu0 %5198
        %5200 = vrot.lane.b32.xlu0 %v5116, 104
        %v5201 = vpop.permute.xlu0 %5200
        %5202 = vrot.lane.b32.xlu0 %v5117, 104
        %v5203 = vpop.permute.xlu0 %5202
        %5204 = vrot.lane.b32.xlu0 %v5118, 104
        %v5205 = vpop.permute.xlu0 %5204
        %5206 = vrot.lane.b32.xlu0 %v5119, 104
        %v5207 = vpop.permute.xlu0 %5206
        %5208 = vrot.lane.b32.xlu0 %v5120, 104
        %v5209 = vpop.permute.xlu0 %5208
        %5210 = vrot.lane.b32.xlu0 %v5121, 104
        %v5211 = vpop.permute.xlu0 %5210
        %5212 = vrot.lane.b32.xlu0 %v5122, 104
        %v5213 = vpop.permute.xlu0 %5212
        %5214 = vrot.lane.b32.xlu0 %v5123, 104
        %v5215 = vpop.permute.xlu0 %5214
        %5216 = vrot.lane.b32.xlu0 %v5124, 104
        %v5217 = vpop.permute.xlu0 %5216
        %5218 = vrot.lane.b32.xlu0 %v5125, 104
        %v5219 = vpop.permute.xlu0 %5218
        %5220 = vrot.lane.b32.xlu0 %v5126, 104
        %v5221 = vpop.permute.xlu0 %5220
        %5222 = vrot.lane.b32.xlu0 %v5127, 104
        %v5223 = vpop.permute.xlu0 %5222
        %vm5256 = vcmask 884544
        %5257 = vst.msk [vmem:[#allocation2] sm:$0xff] %vm5256, %v5161
        %5258 = vst.msk [vmem:[#allocation2 + $0x10] sm:$0xff] %vm5256, %v5163
        %5259 = vst.msk [vmem:[#allocation2 + $0x20] sm:$0xff] %vm5256, %v5165
        %5260 = vst.msk [vmem:[#allocation2 + $0x30] sm:$0xff] %vm5256, %v5167
        %5261 = vst.msk [vmem:[#allocation2 + $0x40] sm:$0xff] %vm5256, %v5169
        %5262 = vst.msk [vmem:[#allocation2 + $0x50] sm:$0xff] %vm5256, %v5171
        %5263 = vst.msk [vmem:[#allocation2 + $0x60] sm:$0xff] %vm5256, %v5173
        %5264 = vst.msk [vmem:[#allocation2 + $0x70] sm:$0xff] %vm5256, %v5175
        %5265 = vst.msk [vmem:[#allocation2 + $0x80] sm:$0xff] %vm5256, %v5177
        %5266 = vst.msk [vmem:[#allocation2 + $0x90] sm:$0xff] %vm5256, %v5179
        %5267 = vst.msk [vmem:[#allocation2 + $0xa0] sm:$0xff] %vm5256, %v5181
        %5268 = vst.msk [vmem:[#allocation2 + $0xb0] sm:$0xff] %vm5256, %v5183
        %5269 = vst.msk [vmem:[#allocation2 + $0xc0] sm:$0xff] %vm5256, %v5185
        %5270 = vst.msk [vmem:[#allocation2 + $0xd0] sm:$0xff] %vm5256, %v5187
        %5271 = vst.msk [vmem:[#allocation2 + $0xe0] sm:$0xff] %vm5256, %v5189
        %5272 = vst.msk [vmem:[#allocation2 + $0xf0] sm:$0xff] %vm5256, %v5191
        %5273 = vst.msk [vmem:[#allocation2 + $0x100] sm:$0xff] %vm5256, %v5193
        %5274 = vst.msk [vmem:[#allocation2 + $0x110] sm:$0xff] %vm5256, %v5195
        %5275 = vst.msk [vmem:[#allocation2 + $0x120] sm:$0xff] %vm5256, %v5197
        %5276 = vst.msk [vmem:[#allocation2 + $0x130] sm:$0xff] %vm5256, %v5199
        %5277 = vst.msk [vmem:[#allocation2 + $0x140] sm:$0xff] %vm5256, %v5201
        %5278 = vst.msk [vmem:[#allocation2 + $0x150] sm:$0xff] %vm5256, %v5203
        %5279 = vst.msk [vmem:[#allocation2 + $0x160] sm:$0xff] %vm5256, %v5205
        %5280 = vst.msk [vmem:[#allocation2 + $0x170] sm:$0xff] %vm5256, %v5207
        %5281 = vst.msk [vmem:[#allocation2 + $0x180] sm:$0xff] %vm5256, %v5209
        %5282 = vst.msk [vmem:[#allocation2 + $0x190] sm:$0xff] %vm5256, %v5211
        %5283 = vst.msk [vmem:[#allocation2 + $0x1a0] sm:$0xff] %vm5256, %v5213
        %5284 = vst.msk [vmem:[#allocation2 + $0x1b0] sm:$0xff] %vm5256, %v5215
        %5285 = vst.msk [vmem:[#allocation2 + $0x1c0] sm:$0xff] %vm5256, %v5217
        %5286 = vst.msk [vmem:[#allocation2 + $0x1d0] sm:$0xff] %vm5256, %v5219
        %5287 = vst.msk [vmem:[#allocation2 + $0x1e0] sm:$0xff] %vm5256, %v5221
        %5288 = vst.msk [vmem:[#allocation2 + $0x1f0] sm:$0xff] %vm5256, %v5223
        %v5289 = vld [vmem:[%s4130 + $0x6] sm:$0xff]
        %v5290 = vld [vmem:[%s4130 + $0xe] sm:$0xff]
        %v5291 = vld [vmem:[%s4130 + $0x1e] sm:$0xff]
        %v5292 = vld [vmem:[%s4130 + $0x26] sm:$0xff]
        %v5293 = vld [vmem:[%s4130 + $0x36] sm:$0xff]
        %v5294 = vld [vmem:[%s4130 + $0x3e] sm:$0xff]
        %v5295 = vld [vmem:[%s4130 + $0x4e] sm:$0xff]
        %v5296 = vld [vmem:[%s4130 + $0x56] sm:$0xff]
        %v5297 = vld [vmem:[%s4130 + $0x66] sm:$0xff]
        %v5298 = vld [vmem:[%s4130 + $0x6e] sm:$0xff]
        %v5299 = vld [vmem:[%s4130 + $0x7e] sm:$0xff]
        %v5300 = vld [vmem:[%s4130 + $0x86] sm:$0xff]
        %v5301 = vld [vmem:[%s4130 + $0x96] sm:$0xff]
        %v5302 = vld [vmem:[%s4130 + $0x9e] sm:$0xff]
        %v5303 = vld [vmem:[%s4130 + $0xae] sm:$0xff]
        %v5304 = vld [vmem:[%s4130 + $0xb6] sm:$0xff]
        %v5305 = vld [vmem:[%s4130 + $0xc6] sm:$0xff]
        %v5306 = vld [vmem:[%s4130 + $0xce] sm:$0xff]
        %v5307 = vld [vmem:[%s4130 + $0xde] sm:$0xff]
        %v5308 = vld [vmem:[%s4130 + $0xe6] sm:$0xff]
        %v5309 = vld [vmem:[%s4130 + $0xf6] sm:$0xff]
        %v5310 = vld [vmem:[%s4130 + $0xfe] sm:$0xff]
        %v5311 = vld [vmem:[%s4130 + $0x10e] sm:$0xff]
        %v5312 = vld [vmem:[%s4130 + $0x116] sm:$0xff]
        %v5313 = vld [vmem:[%s4130 + $0x126] sm:$0xff]
        %v5314 = vld [vmem:[%s4130 + $0x12e] sm:$0xff]
        %v5315 = vld [vmem:[%s4130 + $0x13e] sm:$0xff]
        %v5316 = vld [vmem:[%s4130 + $0x146] sm:$0xff]
        %v5317 = vld [vmem:[%s4130 + $0x156] sm:$0xff]
        %v5318 = vld [vmem:[%s4130 + $0x15e] sm:$0xff]
        %v5319 = vld [vmem:[%s4130 + $0x16e] sm:$0xff]
        %v5320 = vld [vmem:[%s4130 + $0x176] sm:$0xff]
        %5353 = vrot.lane.b32.xlu0 %v5289, 108
        %v5354 = vpop.permute.xlu0 %5353
        %5355 = vrot.lane.b32.xlu0 %v5290, 108
        %v5356 = vpop.permute.xlu0 %5355
        %5357 = vrot.lane.b32.xlu0 %v5291, 108
        %v5358 = vpop.permute.xlu0 %5357
        %5359 = vrot.lane.b32.xlu0 %v5292, 108
        %v5360 = vpop.permute.xlu0 %5359
        %5361 = vrot.lane.b32.xlu0 %v5293, 108
        %v5362 = vpop.permute.xlu0 %5361
        %5363 = vrot.lane.b32.xlu0 %v5294, 108
        %v5364 = vpop.permute.xlu0 %5363
        %5365 = vrot.lane.b32.xlu0 %v5295, 108
        %v5366 = vpop.permute.xlu0 %5365
        %5367 = vrot.lane.b32.xlu0 %v5296, 108
        %v5368 = vpop.permute.xlu0 %5367
        %5369 = vrot.lane.b32.xlu0 %v5297, 108
        %v5370 = vpop.permute.xlu0 %5369
        %5371 = vrot.lane.b32.xlu0 %v5298, 108
        %v5372 = vpop.permute.xlu0 %5371
        %5373 = vrot.lane.b32.xlu0 %v5299, 108
        %v5374 = vpop.permute.xlu0 %5373
        %5375 = vrot.lane.b32.xlu0 %v5300, 108
        %v5376 = vpop.permute.xlu0 %5375
        %5377 = vrot.lane.b32.xlu0 %v5301, 108
        %v5378 = vpop.permute.xlu0 %5377
        %5379 = vrot.lane.b32.xlu0 %v5302, 108
        %v5380 = vpop.permute.xlu0 %5379
        %5381 = vrot.lane.b32.xlu0 %v5303, 108
        %v5382 = vpop.permute.xlu0 %5381
        %5383 = vrot.lane.b32.xlu0 %v5304, 108
        %v5384 = vpop.permute.xlu0 %5383
        %5385 = vrot.lane.b32.xlu0 %v5305, 108
        %v5386 = vpop.permute.xlu0 %5385
        %5387 = vrot.lane.b32.xlu0 %v5306, 108
        %v5388 = vpop.permute.xlu0 %5387
        %5389 = vrot.lane.b32.xlu0 %v5307, 108
        %v5390 = vpop.permute.xlu0 %5389
        %5391 = vrot.lane.b32.xlu0 %v5308, 108
        %v5392 = vpop.permute.xlu0 %5391
        %5393 = vrot.lane.b32.xlu0 %v5309, 108
        %v5394 = vpop.permute.xlu0 %5393
        %5395 = vrot.lane.b32.xlu0 %v5310, 108
        %v5396 = vpop.permute.xlu0 %5395
        %5397 = vrot.lane.b32.xlu0 %v5311, 108
        %v5398 = vpop.permute.xlu0 %5397
        %5399 = vrot.lane.b32.xlu0 %v5312, 108
        %v5400 = vpop.permute.xlu0 %5399
        %5401 = vrot.lane.b32.xlu0 %v5313, 108
        %v5402 = vpop.permute.xlu0 %5401
        %5403 = vrot.lane.b32.xlu0 %v5314, 108
        %v5404 = vpop.permute.xlu0 %5403
        %5405 = vrot.lane.b32.xlu0 %v5315, 108
        %v5406 = vpop.permute.xlu0 %5405
        %5407 = vrot.lane.b32.xlu0 %v5316, 108
        %v5408 = vpop.permute.xlu0 %5407
        %5409 = vrot.lane.b32.xlu0 %v5317, 108
        %v5410 = vpop.permute.xlu0 %5409
        %5411 = vrot.lane.b32.xlu0 %v5318, 108
        %v5412 = vpop.permute.xlu0 %5411
        %5413 = vrot.lane.b32.xlu0 %v5319, 108
        %v5414 = vpop.permute.xlu0 %5413
        %5415 = vrot.lane.b32.xlu0 %v5320, 108
        %v5416 = vpop.permute.xlu0 %5415
        %vm5449 = vcmask 917344
        %5450 = vst.msk [vmem:[#allocation2] sm:$0xff] %vm5449, %v5354
        %5451 = vst.msk [vmem:[#allocation2 + $0x10] sm:$0xff] %vm5449, %v5356
        %5452 = vst.msk [vmem:[#allocation2 + $0x20] sm:$0xff] %vm5449, %v5358
        %5453 = vst.msk [vmem:[#allocation2 + $0x30] sm:$0xff] %vm5449, %v5360
        %5454 = vst.msk [vmem:[#allocation2 + $0x40] sm:$0xff] %vm5449, %v5362
        %5455 = vst.msk [vmem:[#allocation2 + $0x50] sm:$0xff] %vm5449, %v5364
        %5456 = vst.msk [vmem:[#allocation2 + $0x60] sm:$0xff] %vm5449, %v5366
        %5457 = vst.msk [vmem:[#allocation2 + $0x70] sm:$0xff] %vm5449, %v5368
        %5458 = vst.msk [vmem:[#allocation2 + $0x80] sm:$0xff] %vm5449, %v5370
        %5459 = vst.msk [vmem:[#allocation2 + $0x90] sm:$0xff] %vm5449, %v5372
        %5460 = vst.msk [vmem:[#allocation2 + $0xa0] sm:$0xff] %vm5449, %v5374
        %5461 = vst.msk [vmem:[#allocation2 + $0xb0] sm:$0xff] %vm5449, %v5376
        %5462 = vst.msk [vmem:[#allocation2 + $0xc0] sm:$0xff] %vm5449, %v5378
        %5463 = vst.msk [vmem:[#allocation2 + $0xd0] sm:$0xff] %vm5449, %v5380
        %5464 = vst.msk [vmem:[#allocation2 + $0xe0] sm:$0xff] %vm5449, %v5382
        %5465 = vst.msk [vmem:[#allocation2 + $0xf0] sm:$0xff] %vm5449, %v5384
        %5466 = vst.msk [vmem:[#allocation2 + $0x100] sm:$0xff] %vm5449, %v5386
        %5467 = vst.msk [vmem:[#allocation2 + $0x110] sm:$0xff] %vm5449, %v5388
        %5468 = vst.msk [vmem:[#allocation2 + $0x120] sm:$0xff] %vm5449, %v5390
        %5469 = vst.msk [vmem:[#allocation2 + $0x130] sm:$0xff] %vm5449, %v5392
        %5470 = vst.msk [vmem:[#allocation2 + $0x140] sm:$0xff] %vm5449, %v5394
        %5471 = vst.msk [vmem:[#allocation2 + $0x150] sm:$0xff] %vm5449, %v5396
        %5472 = vst.msk [vmem:[#allocation2 + $0x160] sm:$0xff] %vm5449, %v5398
        %5473 = vst.msk [vmem:[#allocation2 + $0x170] sm:$0xff] %vm5449, %v5400
        %5474 = vst.msk [vmem:[#allocation2 + $0x180] sm:$0xff] %vm5449, %v5402
        %5475 = vst.msk [vmem:[#allocation2 + $0x190] sm:$0xff] %vm5449, %v5404
        %5476 = vst.msk [vmem:[#allocation2 + $0x1a0] sm:$0xff] %vm5449, %v5406
        %5477 = vst.msk [vmem:[#allocation2 + $0x1b0] sm:$0xff] %vm5449, %v5408
        %5478 = vst.msk [vmem:[#allocation2 + $0x1c0] sm:$0xff] %vm5449, %v5410
        %5479 = vst.msk [vmem:[#allocation2 + $0x1d0] sm:$0xff] %vm5449, %v5412
        %5480 = vst.msk [vmem:[#allocation2 + $0x1e0] sm:$0xff] %vm5449, %v5414
        %5481 = vst.msk [vmem:[#allocation2 + $0x1f0] sm:$0xff] %vm5449, %v5416
        %s5482 = scalar_lea.vmem %s197, 96
        %v5483 = vld [vmem:[%s5482] sm:$0xff]
        %v5484 = vld [vmem:[%s5482 + $0x8] sm:$0xff]
        %v5485 = vld [vmem:[%s5482 + $0x18] sm:$0xff]
        %v5486 = vld [vmem:[%s5482 + $0x20] sm:$0xff]
        %v5487 = vld [vmem:[%s5482 + $0x30] sm:$0xff]
        %v5488 = vld [vmem:[%s5482 + $0x38] sm:$0xff]
        %v5489 = vld [vmem:[%s5482 + $0x48] sm:$0xff]
        %v5490 = vld [vmem:[%s5482 + $0x50] sm:$0xff]
        %v5491 = vld [vmem:[%s5482 + $0x60] sm:$0xff]
        %v5492 = vld [vmem:[%s5482 + $0x68] sm:$0xff]
        %v5493 = vld [vmem:[%s5482 + $0x78] sm:$0xff]
        %v5494 = vld [vmem:[%s5482 + $0x80] sm:$0xff]
        %v5495 = vld [vmem:[%s5482 + $0x90] sm:$0xff]
        %v5496 = vld [vmem:[%s5482 + $0x98] sm:$0xff]
        %v5497 = vld [vmem:[%s5482 + $0xa8] sm:$0xff]
        %v5498 = vld [vmem:[%s5482 + $0xb0] sm:$0xff]
        %v5499 = vld [vmem:[%s5482 + $0xc0] sm:$0xff]
        %v5500 = vld [vmem:[%s5482 + $0xc8] sm:$0xff]
        %v5501 = vld [vmem:[%s5482 + $0xd8] sm:$0xff]
        %v5502 = vld [vmem:[%s5482 + $0xe0] sm:$0xff]
        %v5503 = vld [vmem:[%s5482 + $0xf0] sm:$0xff]
        %v5504 = vld [vmem:[%s5482 + $0xf8] sm:$0xff]
        %v5505 = vld [vmem:[%s5482 + $0x108] sm:$0xff]
        %v5506 = vld [vmem:[%s5482 + $0x110] sm:$0xff]
        %v5507 = vld [vmem:[%s5482 + $0x120] sm:$0xff]
        %v5508 = vld [vmem:[%s5482 + $0x128] sm:$0xff]
        %v5509 = vld [vmem:[%s5482 + $0x138] sm:$0xff]
        %v5510 = vld [vmem:[%s5482 + $0x140] sm:$0xff]
        %v5511 = vld [vmem:[%s5482 + $0x150] sm:$0xff]
        %v5512 = vld [vmem:[%s5482 + $0x158] sm:$0xff]
        %v5513 = vld [vmem:[%s5482 + $0x168] sm:$0xff]
        %v5514 = vld [vmem:[%s5482 + $0x170] sm:$0xff]
        %5547 = vrot.lane.b32.xlu0 %v5483, 112
        %v5548 = vpop.permute.xlu0 %5547
        %5549 = vrot.lane.b32.xlu0 %v5484, 112
        %v5550 = vpop.permute.xlu0 %5549
        %5551 = vrot.lane.b32.xlu0 %v5485, 112
        %v5552 = vpop.permute.xlu0 %5551
        %5553 = vrot.lane.b32.xlu0 %v5486, 112
        %v5554 = vpop.permute.xlu0 %5553
        %5555 = vrot.lane.b32.xlu0 %v5487, 112
        %v5556 = vpop.permute.xlu0 %5555
        %5557 = vrot.lane.b32.xlu0 %v5488, 112
        %v5558 = vpop.permute.xlu0 %5557
        %5559 = vrot.lane.b32.xlu0 %v5489, 112
        %v5560 = vpop.permute.xlu0 %5559
        %5561 = vrot.lane.b32.xlu0 %v5490, 112
        %v5562 = vpop.permute.xlu0 %5561
        %5563 = vrot.lane.b32.xlu0 %v5491, 112
        %v5564 = vpop.permute.xlu0 %5563
        %5565 = vrot.lane.b32.xlu0 %v5492, 112
        %v5566 = vpop.permute.xlu0 %5565
        %5567 = vrot.lane.b32.xlu0 %v5493, 112
        %v5568 = vpop.permute.xlu0 %5567
        %5569 = vrot.lane.b32.xlu0 %v5494, 112
        %v5570 = vpop.permute.xlu0 %5569
        %5571 = vrot.lane.b32.xlu0 %v5495, 112
        %v5572 = vpop.permute.xlu0 %5571
        %5573 = vrot.lane.b32.xlu0 %v5496, 112
        %v5574 = vpop.permute.xlu0 %5573
        %5575 = vrot.lane.b32.xlu0 %v5497, 112
        %v5576 = vpop.permute.xlu0 %5575
        %5577 = vrot.lane.b32.xlu0 %v5498, 112
        %v5578 = vpop.permute.xlu0 %5577
        %5579 = vrot.lane.b32.xlu0 %v5499, 112
        %v5580 = vpop.permute.xlu0 %5579
        %5581 = vrot.lane.b32.xlu0 %v5500, 112
        %v5582 = vpop.permute.xlu0 %5581
        %5583 = vrot.lane.b32.xlu0 %v5501, 112
        %v5584 = vpop.permute.xlu0 %5583
        %5585 = vrot.lane.b32.xlu0 %v5502, 112
        %v5586 = vpop.permute.xlu0 %5585
        %5587 = vrot.lane.b32.xlu0 %v5503, 112
        %v5588 = vpop.permute.xlu0 %5587
        %5589 = vrot.lane.b32.xlu0 %v5504, 112
        %v5590 = vpop.permute.xlu0 %5589
        %5591 = vrot.lane.b32.xlu0 %v5505, 112
        %v5592 = vpop.permute.xlu0 %5591
        %5593 = vrot.lane.b32.xlu0 %v5506, 112
        %v5594 = vpop.permute.xlu0 %5593
        %5595 = vrot.lane.b32.xlu0 %v5507, 112
        %v5596 = vpop.permute.xlu0 %5595
        %5597 = vrot.lane.b32.xlu0 %v5508, 112
        %v5598 = vpop.permute.xlu0 %5597
        %5599 = vrot.lane.b32.xlu0 %v5509, 112
        %v5600 = vpop.permute.xlu0 %5599
        %5601 = vrot.lane.b32.xlu0 %v5510, 112
        %v5602 = vpop.permute.xlu0 %5601
        %5603 = vrot.lane.b32.xlu0 %v5511, 112
        %v5604 = vpop.permute.xlu0 %5603
        %5605 = vrot.lane.b32.xlu0 %v5512, 112
        %v5606 = vpop.permute.xlu0 %5605
        %5607 = vrot.lane.b32.xlu0 %v5513, 112
        %v5608 = vpop.permute.xlu0 %5607
        %5609 = vrot.lane.b32.xlu0 %v5514, 112
        %v5610 = vpop.permute.xlu0 %5609
        %vm5643 = vcmask 950144
        %5644 = vst.msk [vmem:[#allocation2] sm:$0xff] %vm5643, %v5548
        %5645 = vst.msk [vmem:[#allocation2 + $0x10] sm:$0xff] %vm5643, %v5550
        %5646 = vst.msk [vmem:[#allocation2 + $0x20] sm:$0xff] %vm5643, %v5552
        %5647 = vst.msk [vmem:[#allocation2 + $0x30] sm:$0xff] %vm5643, %v5554
        %5648 = vst.msk [vmem:[#allocation2 + $0x40] sm:$0xff] %vm5643, %v5556
        %5649 = vst.msk [vmem:[#allocation2 + $0x50] sm:$0xff] %vm5643, %v5558
        %5650 = vst.msk [vmem:[#allocation2 + $0x60] sm:$0xff] %vm5643, %v5560
        %5651 = vst.msk [vmem:[#allocation2 + $0x70] sm:$0xff] %vm5643, %v5562
        %5652 = vst.msk [vmem:[#allocation2 + $0x80] sm:$0xff] %vm5643, %v5564
        %5653 = vst.msk [vmem:[#allocation2 + $0x90] sm:$0xff] %vm5643, %v5566
        %5654 = vst.msk [vmem:[#allocation2 + $0xa0] sm:$0xff] %vm5643, %v5568
        %5655 = vst.msk [vmem:[#allocation2 + $0xb0] sm:$0xff] %vm5643, %v5570
        %5656 = vst.msk [vmem:[#allocation2 + $0xc0] sm:$0xff] %vm5643, %v5572
        %5657 = vst.msk [vmem:[#allocation2 + $0xd0] sm:$0xff] %vm5643, %v5574
        %5658 = vst.msk [vmem:[#allocation2 + $0xe0] sm:$0xff] %vm5643, %v5576
        %5659 = vst.msk [vmem:[#allocation2 + $0xf0] sm:$0xff] %vm5643, %v5578
        %5660 = vst.msk [vmem:[#allocation2 + $0x100] sm:$0xff] %vm5643, %v5580
        %5661 = vst.msk [vmem:[#allocation2 + $0x110] sm:$0xff] %vm5643, %v5582
        %5662 = vst.msk [vmem:[#allocation2 + $0x120] sm:$0xff] %vm5643, %v5584
        %5663 = vst.msk [vmem:[#allocation2 + $0x130] sm:$0xff] %vm5643, %v5586
        %5664 = vst.msk [vmem:[#allocation2 + $0x140] sm:$0xff] %vm5643, %v5588
        %5665 = vst.msk [vmem:[#allocation2 + $0x150] sm:$0xff] %vm5643, %v5590
        %5666 = vst.msk [vmem:[#allocation2 + $0x160] sm:$0xff] %vm5643, %v5592
        %5667 = vst.msk [vmem:[#allocation2 + $0x170] sm:$0xff] %vm5643, %v5594
        %5668 = vst.msk [vmem:[#allocation2 + $0x180] sm:$0xff] %vm5643, %v5596
        %5669 = vst.msk [vmem:[#allocation2 + $0x190] sm:$0xff] %vm5643, %v5598
        %5670 = vst.msk [vmem:[#allocation2 + $0x1a0] sm:$0xff] %vm5643, %v5600
        %5671 = vst.msk [vmem:[#allocation2 + $0x1b0] sm:$0xff] %vm5643, %v5602
        %5672 = vst.msk [vmem:[#allocation2 + $0x1c0] sm:$0xff] %vm5643, %v5604
        %5673 = vst.msk [vmem:[#allocation2 + $0x1d0] sm:$0xff] %vm5643, %v5606
        %5674 = vst.msk [vmem:[#allocation2 + $0x1e0] sm:$0xff] %vm5643, %v5608
        %5675 = vst.msk [vmem:[#allocation2 + $0x1f0] sm:$0xff] %vm5643, %v5610
        %v5676 = vld [vmem:[%s5482 + $0x1] sm:$0xff]
        %v5677 = vld [vmem:[%s5482 + $0x9] sm:$0xff]
        %v5678 = vld [vmem:[%s5482 + $0x19] sm:$0xff]
        %v5679 = vld [vmem:[%s5482 + $0x21] sm:$0xff]
        %v5680 = vld [vmem:[%s5482 + $0x31] sm:$0xff]
        %v5681 = vld [vmem:[%s5482 + $0x39] sm:$0xff]
        %v5682 = vld [vmem:[%s5482 + $0x49] sm:$0xff]
        %v5683 = vld [vmem:[%s5482 + $0x51] sm:$0xff]
        %v5684 = vld [vmem:[%s5482 + $0x61] sm:$0xff]
        %v5685 = vld [vmem:[%s5482 + $0x69] sm:$0xff]
        %v5686 = vld [vmem:[%s5482 + $0x79] sm:$0xff]
        %v5687 = vld [vmem:[%s5482 + $0x81] sm:$0xff]
        %v5688 = vld [vmem:[%s5482 + $0x91] sm:$0xff]
        %v5689 = vld [vmem:[%s5482 + $0x99] sm:$0xff]
        %v5690 = vld [vmem:[%s5482 + $0xa9] sm:$0xff]
        %v5691 = vld [vmem:[%s5482 + $0xb1] sm:$0xff]
        %v5692 = vld [vmem:[%s5482 + $0xc1] sm:$0xff]
        %v5693 = vld [vmem:[%s5482 + $0xc9] sm:$0xff]
        %v5694 = vld [vmem:[%s5482 + $0xd9] sm:$0xff]
        %v5695 = vld [vmem:[%s5482 + $0xe1] sm:$0xff]
        %v5696 = vld [vmem:[%s5482 + $0xf1] sm:$0xff]
        %v5697 = vld [vmem:[%s5482 + $0xf9] sm:$0xff]
        %v5698 = vld [vmem:[%s5482 + $0x109] sm:$0xff]
        %v5699 = vld [vmem:[%s5482 + $0x111] sm:$0xff]
        %v5700 = vld [vmem:[%s5482 + $0x121] sm:$0xff]
        %v5701 = vld [vmem:[%s5482 + $0x129] sm:$0xff]
        %v5702 = vld [vmem:[%s5482 + $0x139] sm:$0xff]
        %v5703 = vld [vmem:[%s5482 + $0x141] sm:$0xff]
        %v5704 = vld [vmem:[%s5482 + $0x151] sm:$0xff]
        %v5705 = vld [vmem:[%s5482 + $0x159] sm:$0xff]
        %v5706 = vld [vmem:[%s5482 + $0x169] sm:$0xff]
        %v5707 = vld [vmem:[%s5482 + $0x171] sm:$0xff]
        %5740 = vrot.lane.b32.xlu0 %v5676, 116
        %v5741 = vpop.permute.xlu0 %5740
        %5742 = vrot.lane.b32.xlu0 %v5677, 116
        %v5743 = vpop.permute.xlu0 %5742
        %5744 = vrot.lane.b32.xlu0 %v5678, 116
        %v5745 = vpop.permute.xlu0 %5744
        %5746 = vrot.lane.b32.xlu0 %v5679, 116
        %v5747 = vpop.permute.xlu0 %5746
        %5748 = vrot.lane.b32.xlu0 %v5680, 116
        %v5749 = vpop.permute.xlu0 %5748
        %5750 = vrot.lane.b32.xlu0 %v5681, 116
        %v5751 = vpop.permute.xlu0 %5750
        %5752 = vrot.lane.b32.xlu0 %v5682, 116
        %v5753 = vpop.permute.xlu0 %5752
        %5754 = vrot.lane.b32.xlu0 %v5683, 116
        %v5755 = vpop.permute.xlu0 %5754
        %5756 = vrot.lane.b32.xlu0 %v5684, 116
        %v5757 = vpop.permute.xlu0 %5756
        %5758 = vrot.lane.b32.xlu0 %v5685, 116
        %v5759 = vpop.permute.xlu0 %5758
        %5760 = vrot.lane.b32.xlu0 %v5686, 116
        %v5761 = vpop.permute.xlu0 %5760
        %5762 = vrot.lane.b32.xlu0 %v5687, 116
        %v5763 = vpop.permute.xlu0 %5762
        %5764 = vrot.lane.b32.xlu0 %v5688, 116
        %v5765 = vpop.permute.xlu0 %5764
        %5766 = vrot.lane.b32.xlu0 %v5689, 116
        %v5767 = vpop.permute.xlu0 %5766
        %5768 = vrot.lane.b32.xlu0 %v5690, 116
        %v5769 = vpop.permute.xlu0 %5768
        %5770 = vrot.lane.b32.xlu0 %v5691, 116
        %v5771 = vpop.permute.xlu0 %5770
        %5772 = vrot.lane.b32.xlu0 %v5692, 116
        %v5773 = vpop.permute.xlu0 %5772
        %5774 = vrot.lane.b32.xlu0 %v5693, 116
        %v5775 = vpop.permute.xlu0 %5774
        %5776 = vrot.lane.b32.xlu0 %v5694, 116
        %v5777 = vpop.permute.xlu0 %5776
        %5778 = vrot.lane.b32.xlu0 %v5695, 116
        %v5779 = vpop.permute.xlu0 %5778
        %5780 = vrot.lane.b32.xlu0 %v5696, 116
        %v5781 = vpop.permute.xlu0 %5780
        %5782 = vrot.lane.b32.xlu0 %v5697, 116
        %v5783 = vpop.permute.xlu0 %5782
        %5784 = vrot.lane.b32.xlu0 %v5698, 116
        %v5785 = vpop.permute.xlu0 %5784
        %5786 = vrot.lane.b32.xlu0 %v5699, 116
        %v5787 = vpop.permute.xlu0 %5786
        %5788 = vrot.lane.b32.xlu0 %v5700, 116
        %v5789 = vpop.permute.xlu0 %5788
        %5790 = vrot.lane.b32.xlu0 %v5701, 116
        %v5791 = vpop.permute.xlu0 %5790
        %5792 = vrot.lane.b32.xlu0 %v5702, 116
        %v5793 = vpop.permute.xlu0 %5792
        %5794 = vrot.lane.b32.xlu0 %v5703, 116
        %v5795 = vpop.permute.xlu0 %5794
        %5796 = vrot.lane.b32.xlu0 %v5704, 116
        %v5797 = vpop.permute.xlu0 %5796
        %5798 = vrot.lane.b32.xlu0 %v5705, 116
        %v5799 = vpop.permute.xlu0 %5798
        %5800 = vrot.lane.b32.xlu0 %v5706, 116
        %v5801 = vpop.permute.xlu0 %5800
        %5802 = vrot.lane.b32.xlu0 %v5707, 116
        %v5803 = vpop.permute.xlu0 %5802
        %vm5836 = vcmask 982944
        %5837 = vst.msk [vmem:[#allocation2] sm:$0xff] %vm5836, %v5741
        %5838 = vst.msk [vmem:[#allocation2 + $0x10] sm:$0xff] %vm5836, %v5743
        %5839 = vst.msk [vmem:[#allocation2 + $0x20] sm:$0xff] %vm5836, %v5745
        %5840 = vst.msk [vmem:[#allocation2 + $0x30] sm:$0xff] %vm5836, %v5747
        %5841 = vst.msk [vmem:[#allocation2 + $0x40] sm:$0xff] %vm5836, %v5749
        %5842 = vst.msk [vmem:[#allocation2 + $0x50] sm:$0xff] %vm5836, %v5751
        %5843 = vst.msk [vmem:[#allocation2 + $0x60] sm:$0xff] %vm5836, %v5753
        %5844 = vst.msk [vmem:[#allocation2 + $0x70] sm:$0xff] %vm5836, %v5755
        %5845 = vst.msk [vmem:[#allocation2 + $0x80] sm:$0xff] %vm5836, %v5757
        %5846 = vst.msk [vmem:[#allocation2 + $0x90] sm:$0xff] %vm5836, %v5759
        %5847 = vst.msk [vmem:[#allocation2 + $0xa0] sm:$0xff] %vm5836, %v5761
        %5848 = vst.msk [vmem:[#allocation2 + $0xb0] sm:$0xff] %vm5836, %v5763
        %5849 = vst.msk [vmem:[#allocation2 + $0xc0] sm:$0xff] %vm5836, %v5765
        %5850 = vst.msk [vmem:[#allocation2 + $0xd0] sm:$0xff] %vm5836, %v5767
        %5851 = vst.msk [vmem:[#allocation2 + $0xe0] sm:$0xff] %vm5836, %v5769
        %5852 = vst.msk [vmem:[#allocation2 + $0xf0] sm:$0xff] %vm5836, %v5771
        %5853 = vst.msk [vmem:[#allocation2 + $0x100] sm:$0xff] %vm5836, %v5773
        %5854 = vst.msk [vmem:[#allocation2 + $0x110] sm:$0xff] %vm5836, %v5775
        %5855 = vst.msk [vmem:[#allocation2 + $0x120] sm:$0xff] %vm5836, %v5777
        %5856 = vst.msk [vmem:[#allocation2 + $0x130] sm:$0xff] %vm5836, %v5779
        %5857 = vst.msk [vmem:[#allocation2 + $0x140] sm:$0xff] %vm5836, %v5781
        %5858 = vst.msk [vmem:[#allocation2 + $0x150] sm:$0xff] %vm5836, %v5783
        %5859 = vst.msk [vmem:[#allocation2 + $0x160] sm:$0xff] %vm5836, %v5785
        %5860 = vst.msk [vmem:[#allocation2 + $0x170] sm:$0xff] %vm5836, %v5787
        %5861 = vst.msk [vmem:[#allocation2 + $0x180] sm:$0xff] %vm5836, %v5789
        %5862 = vst.msk [vmem:[#allocation2 + $0x190] sm:$0xff] %vm5836, %v5791
        %5863 = vst.msk [vmem:[#allocation2 + $0x1a0] sm:$0xff] %vm5836, %v5793
        %5864 = vst.msk [vmem:[#allocation2 + $0x1b0] sm:$0xff] %vm5836, %v5795
        %5865 = vst.msk [vmem:[#allocation2 + $0x1c0] sm:$0xff] %vm5836, %v5797
        %5866 = vst.msk [vmem:[#allocation2 + $0x1d0] sm:$0xff] %vm5836, %v5799
        %5867 = vst.msk [vmem:[#allocation2 + $0x1e0] sm:$0xff] %vm5836, %v5801
        %5868 = vst.msk [vmem:[#allocation2 + $0x1f0] sm:$0xff] %vm5836, %v5803
        %v5869 = vld [vmem:[%s5482 + $0x2] sm:$0xff]
        %v5870 = vld [vmem:[%s5482 + $0xa] sm:$0xff]
        %v5871 = vld [vmem:[%s5482 + $0x1a] sm:$0xff]
        %v5872 = vld [vmem:[%s5482 + $0x22] sm:$0xff]
        %v5873 = vld [vmem:[%s5482 + $0x32] sm:$0xff]
        %v5874 = vld [vmem:[%s5482 + $0x3a] sm:$0xff]
        %v5875 = vld [vmem:[%s5482 + $0x4a] sm:$0xff]
        %v5876 = vld [vmem:[%s5482 + $0x52] sm:$0xff]
        %v5877 = vld [vmem:[%s5482 + $0x62] sm:$0xff]
        %v5878 = vld [vmem:[%s5482 + $0x6a] sm:$0xff]
        %v5879 = vld [vmem:[%s5482 + $0x7a] sm:$0xff]
        %v5880 = vld [vmem:[%s5482 + $0x82] sm:$0xff]
        %v5881 = vld [vmem:[%s5482 + $0x92] sm:$0xff]
        %v5882 = vld [vmem:[%s5482 + $0x9a] sm:$0xff]
        %v5883 = vld [vmem:[%s5482 + $0xaa] sm:$0xff]
        %v5884 = vld [vmem:[%s5482 + $0xb2] sm:$0xff]
        %v5885 = vld [vmem:[%s5482 + $0xc2] sm:$0xff]
        %v5886 = vld [vmem:[%s5482 + $0xca] sm:$0xff]
        %v5887 = vld [vmem:[%s5482 + $0xda] sm:$0xff]
        %v5888 = vld [vmem:[%s5482 + $0xe2] sm:$0xff]
        %v5889 = vld [vmem:[%s5482 + $0xf2] sm:$0xff]
        %v5890 = vld [vmem:[%s5482 + $0xfa] sm:$0xff]
        %v5891 = vld [vmem:[%s5482 + $0x10a] sm:$0xff]
        %v5892 = vld [vmem:[%s5482 + $0x112] sm:$0xff]
        %v5893 = vld [vmem:[%s5482 + $0x122] sm:$0xff]
        %v5894 = vld [vmem:[%s5482 + $0x12a] sm:$0xff]
        %v5895 = vld [vmem:[%s5482 + $0x13a] sm:$0xff]
        %v5896 = vld [vmem:[%s5482 + $0x142] sm:$0xff]
        %v5897 = vld [vmem:[%s5482 + $0x152] sm:$0xff]
        %v5898 = vld [vmem:[%s5482 + $0x15a] sm:$0xff]
        %v5899 = vld [vmem:[%s5482 + $0x16a] sm:$0xff]
        %v5900 = vld [vmem:[%s5482 + $0x172] sm:$0xff]
        %5933 = vrot.lane.b32.xlu0 %v5869, 120
        %v5934 = vpop.permute.xlu0 %5933
        %5935 = vrot.lane.b32.xlu0 %v5870, 120
        %v5936 = vpop.permute.xlu0 %5935
        %5937 = vrot.lane.b32.xlu0 %v5871, 120
        %v5938 = vpop.permute.xlu0 %5937
        %5939 = vrot.lane.b32.xlu0 %v5872, 120
        %v5940 = vpop.permute.xlu0 %5939
        %5941 = vrot.lane.b32.xlu0 %v5873, 120
        %v5942 = vpop.permute.xlu0 %5941
        %5943 = vrot.lane.b32.xlu0 %v5874, 120
        %v5944 = vpop.permute.xlu0 %5943
        %5945 = vrot.lane.b32.xlu0 %v5875, 120
        %v5946 = vpop.permute.xlu0 %5945
        %5947 = vrot.lane.b32.xlu0 %v5876, 120
        %v5948 = vpop.permute.xlu0 %5947
        %5949 = vrot.lane.b32.xlu0 %v5877, 120
        %v5950 = vpop.permute.xlu0 %5949
        %5951 = vrot.lane.b32.xlu0 %v5878, 120
        %v5952 = vpop.permute.xlu0 %5951
        %5953 = vrot.lane.b32.xlu0 %v5879, 120
        %v5954 = vpop.permute.xlu0 %5953
        %5955 = vrot.lane.b32.xlu0 %v5880, 120
        %v5956 = vpop.permute.xlu0 %5955
        %5957 = vrot.lane.b32.xlu0 %v5881, 120
        %v5958 = vpop.permute.xlu0 %5957
        %5959 = vrot.lane.b32.xlu0 %v5882, 120
        %v5960 = vpop.permute.xlu0 %5959
        %5961 = vrot.lane.b32.xlu0 %v5883, 120
        %v5962 = vpop.permute.xlu0 %5961
        %5963 = vrot.lane.b32.xlu0 %v5884, 120
        %v5964 = vpop.permute.xlu0 %5963
        %5965 = vrot.lane.b32.xlu0 %v5885, 120
        %v5966 = vpop.permute.xlu0 %5965
        %5967 = vrot.lane.b32.xlu0 %v5886, 120
        %v5968 = vpop.permute.xlu0 %5967
        %5969 = vrot.lane.b32.xlu0 %v5887, 120
        %v5970 = vpop.permute.xlu0 %5969
        %5971 = vrot.lane.b32.xlu0 %v5888, 120
        %v5972 = vpop.permute.xlu0 %5971
        %5973 = vrot.lane.b32.xlu0 %v5889, 120
        %v5974 = vpop.permute.xlu0 %5973
        %5975 = vrot.lane.b32.xlu0 %v5890, 120
        %v5976 = vpop.permute.xlu0 %5975
        %5977 = vrot.lane.b32.xlu0 %v5891, 120
        %v5978 = vpop.permute.xlu0 %5977
        %5979 = vrot.lane.b32.xlu0 %v5892, 120
        %v5980 = vpop.permute.xlu0 %5979
        %5981 = vrot.lane.b32.xlu0 %v5893, 120
        %v5982 = vpop.permute.xlu0 %5981
        %5983 = vrot.lane.b32.xlu0 %v5894, 120
        %v5984 = vpop.permute.xlu0 %5983
        %5985 = vrot.lane.b32.xlu0 %v5895, 120
        %v5986 = vpop.permute.xlu0 %5985
        %5987 = vrot.lane.b32.xlu0 %v5896, 120
        %v5988 = vpop.permute.xlu0 %5987
        %5989 = vrot.lane.b32.xlu0 %v5897, 120
        %v5990 = vpop.permute.xlu0 %5989
        %5991 = vrot.lane.b32.xlu0 %v5898, 120
        %v5992 = vpop.permute.xlu0 %5991
        %5993 = vrot.lane.b32.xlu0 %v5899, 120
        %v5994 = vpop.permute.xlu0 %5993
        %5995 = vrot.lane.b32.xlu0 %v5900, 120
        %v5996 = vpop.permute.xlu0 %5995
        %vm6029 = vcmask 1015744
        %6030 = vst.msk [vmem:[#allocation2] sm:$0xff] %vm6029, %v5934
        %6031 = vst.msk [vmem:[#allocation2 + $0x10] sm:$0xff] %vm6029, %v5936
        %6032 = vst.msk [vmem:[#allocation2 + $0x20] sm:$0xff] %vm6029, %v5938
        %6033 = vst.msk [vmem:[#allocation2 + $0x30] sm:$0xff] %vm6029, %v5940
        %6034 = vst.msk [vmem:[#allocation2 + $0x40] sm:$0xff] %vm6029, %v5942
        %6035 = vst.msk [vmem:[#allocation2 + $0x50] sm:$0xff] %vm6029, %v5944
        %6036 = vst.msk [vmem:[#allocation2 + $0x60] sm:$0xff] %vm6029, %v5946
        %6037 = vst.msk [vmem:[#allocation2 + $0x70] sm:$0xff] %vm6029, %v5948
        %6038 = vst.msk [vmem:[#allocation2 + $0x80] sm:$0xff] %vm6029, %v5950
        %6039 = vst.msk [vmem:[#allocation2 + $0x90] sm:$0xff] %vm6029, %v5952
        %6040 = vst.msk [vmem:[#allocation2 + $0xa0] sm:$0xff] %vm6029, %v5954
        %6041 = vst.msk [vmem:[#allocation2 + $0xb0] sm:$0xff] %vm6029, %v5956
        %6042 = vst.msk [vmem:[#allocation2 + $0xc0] sm:$0xff] %vm6029, %v5958
        %6043 = vst.msk [vmem:[#allocation2 + $0xd0] sm:$0xff] %vm6029, %v5960
        %6044 = vst.msk [vmem:[#allocation2 + $0xe0] sm:$0xff] %vm6029, %v5962
        %6045 = vst.msk [vmem:[#allocation2 + $0xf0] sm:$0xff] %vm6029, %v5964
        %6046 = vst.msk [vmem:[#allocation2 + $0x100] sm:$0xff] %vm6029, %v5966
        %6047 = vst.msk [vmem:[#allocation2 + $0x110] sm:$0xff] %vm6029, %v5968
        %6048 = vst.msk [vmem:[#allocation2 + $0x120] sm:$0xff] %vm6029, %v5970
        %6049 = vst.msk [vmem:[#allocation2 + $0x130] sm:$0xff] %vm6029, %v5972
        %6050 = vst.msk [vmem:[#allocation2 + $0x140] sm:$0xff] %vm6029, %v5974
        %6051 = vst.msk [vmem:[#allocation2 + $0x150] sm:$0xff] %vm6029, %v5976
        %6052 = vst.msk [vmem:[#allocation2 + $0x160] sm:$0xff] %vm6029, %v5978
        %6053 = vst.msk [vmem:[#allocation2 + $0x170] sm:$0xff] %vm6029, %v5980
        %6054 = vst.msk [vmem:[#allocation2 + $0x180] sm:$0xff] %vm6029, %v5982
        %6055 = vst.msk [vmem:[#allocation2 + $0x190] sm:$0xff] %vm6029, %v5984
        %6056 = vst.msk [vmem:[#allocation2 + $0x1a0] sm:$0xff] %vm6029, %v5986
        %6057 = vst.msk [vmem:[#allocation2 + $0x1b0] sm:$0xff] %vm6029, %v5988
        %6058 = vst.msk [vmem:[#allocation2 + $0x1c0] sm:$0xff] %vm6029, %v5990
        %6059 = vst.msk [vmem:[#allocation2 + $0x1d0] sm:$0xff] %vm6029, %v5992
        %6060 = vst.msk [vmem:[#allocation2 + $0x1e0] sm:$0xff] %vm6029, %v5994
        %6061 = vst.msk [vmem:[#allocation2 + $0x1f0] sm:$0xff] %vm6029, %v5996
        %v6062 = vld [vmem:[%s5482 + $0x3] sm:$0xff]
        %v6063 = vld [vmem:[%s5482 + $0xb] sm:$0xff]
        %v6064 = vld [vmem:[%s5482 + $0x1b] sm:$0xff]
        %v6065 = vld [vmem:[%s5482 + $0x23] sm:$0xff]
        %v6066 = vld [vmem:[%s5482 + $0x33] sm:$0xff]
        %v6067 = vld [vmem:[%s5482 + $0x3b] sm:$0xff]
        %v6068 = vld [vmem:[%s5482 + $0x4b] sm:$0xff]
        %v6069 = vld [vmem:[%s5482 + $0x53] sm:$0xff]
        %v6070 = vld [vmem:[%s5482 + $0x63] sm:$0xff]
        %v6071 = vld [vmem:[%s5482 + $0x6b] sm:$0xff]
        %v6072 = vld [vmem:[%s5482 + $0x7b] sm:$0xff]
        %v6073 = vld [vmem:[%s5482 + $0x83] sm:$0xff]
        %v6074 = vld [vmem:[%s5482 + $0x93] sm:$0xff]
        %v6075 = vld [vmem:[%s5482 + $0x9b] sm:$0xff]
        %v6076 = vld [vmem:[%s5482 + $0xab] sm:$0xff]
        %v6077 = vld [vmem:[%s5482 + $0xb3] sm:$0xff]
        %v6078 = vld [vmem:[%s5482 + $0xc3] sm:$0xff]
        %v6079 = vld [vmem:[%s5482 + $0xcb] sm:$0xff]
        %v6080 = vld [vmem:[%s5482 + $0xdb] sm:$0xff]
        %v6081 = vld [vmem:[%s5482 + $0xe3] sm:$0xff]
        %v6082 = vld [vmem:[%s5482 + $0xf3] sm:$0xff]
        %v6083 = vld [vmem:[%s5482 + $0xfb] sm:$0xff]
        %v6084 = vld [vmem:[%s5482 + $0x10b] sm:$0xff]
        %v6085 = vld [vmem:[%s5482 + $0x113] sm:$0xff]
        %v6086 = vld [vmem:[%s5482 + $0x123] sm:$0xff]
        %v6087 = vld [vmem:[%s5482 + $0x12b] sm:$0xff]
        %v6088 = vld [vmem:[%s5482 + $0x13b] sm:$0xff]
        %v6089 = vld [vmem:[%s5482 + $0x143] sm:$0xff]
        %v6090 = vld [vmem:[%s5482 + $0x153] sm:$0xff]
        %v6091 = vld [vmem:[%s5482 + $0x15b] sm:$0xff]
        %v6092 = vld [vmem:[%s5482 + $0x16b] sm:$0xff]
        %v6093 = vld [vmem:[%s5482 + $0x173] sm:$0xff]
        %6126 = vrot.lane.b32.xlu0 %v6062, 124
        %v6127 = vpop.permute.xlu0 %6126
        %6128 = vrot.lane.b32.xlu0 %v6063, 124
        %v6129 = vpop.permute.xlu0 %6128
        %6130 = vrot.lane.b32.xlu0 %v6064, 124
        %v6131 = vpop.permute.xlu0 %6130
        %6132 = vrot.lane.b32.xlu0 %v6065, 124
        %v6133 = vpop.permute.xlu0 %6132
        %6134 = vrot.lane.b32.xlu0 %v6066, 124
        %v6135 = vpop.permute.xlu0 %6134
        %6136 = vrot.lane.b32.xlu0 %v6067, 124
        %v6137 = vpop.permute.xlu0 %6136
        %6138 = vrot.lane.b32.xlu0 %v6068, 124
        %v6139 = vpop.permute.xlu0 %6138
        %6140 = vrot.lane.b32.xlu0 %v6069, 124
        %v6141 = vpop.permute.xlu0 %6140
        %6142 = vrot.lane.b32.xlu0 %v6070, 124
        %v6143 = vpop.permute.xlu0 %6142
        %6144 = vrot.lane.b32.xlu0 %v6071, 124
        %v6145 = vpop.permute.xlu0 %6144
        %6146 = vrot.lane.b32.xlu0 %v6072, 124
        %v6147 = vpop.permute.xlu0 %6146
        %6148 = vrot.lane.b32.xlu0 %v6073, 124
        %v6149 = vpop.permute.xlu0 %6148
        %6150 = vrot.lane.b32.xlu0 %v6074, 124
        %v6151 = vpop.permute.xlu0 %6150
        %6152 = vrot.lane.b32.xlu0 %v6075, 124
        %v6153 = vpop.permute.xlu0 %6152
        %6154 = vrot.lane.b32.xlu0 %v6076, 124
        %v6155 = vpop.permute.xlu0 %6154
        %6156 = vrot.lane.b32.xlu0 %v6077, 124
        %v6157 = vpop.permute.xlu0 %6156
        %6158 = vrot.lane.b32.xlu0 %v6078, 124
        %v6159 = vpop.permute.xlu0 %6158
        %6160 = vrot.lane.b32.xlu0 %v6079, 124
        %v6161 = vpop.permute.xlu0 %6160
        %6162 = vrot.lane.b32.xlu0 %v6080, 124
        %v6163 = vpop.permute.xlu0 %6162
        %6164 = vrot.lane.b32.xlu0 %v6081, 124
        %v6165 = vpop.permute.xlu0 %6164
        %6166 = vrot.lane.b32.xlu0 %v6082, 124
        %v6167 = vpop.permute.xlu0 %6166
        %6168 = vrot.lane.b32.xlu0 %v6083, 124
        %v6169 = vpop.permute.xlu0 %6168
        %6170 = vrot.lane.b32.xlu0 %v6084, 124
        %v6171 = vpop.permute.xlu0 %6170
        %6172 = vrot.lane.b32.xlu0 %v6085, 124
        %v6173 = vpop.permute.xlu0 %6172
        %6174 = vrot.lane.b32.xlu0 %v6086, 124
        %v6175 = vpop.permute.xlu0 %6174
        %6176 = vrot.lane.b32.xlu0 %v6087, 124
        %v6177 = vpop.permute.xlu0 %6176
        %6178 = vrot.lane.b32.xlu0 %v6088, 124
        %v6179 = vpop.permute.xlu0 %6178
        %6180 = vrot.lane.b32.xlu0 %v6089, 124
        %v6181 = vpop.permute.xlu0 %6180
        %6182 = vrot.lane.b32.xlu0 %v6090, 124
        %v6183 = vpop.permute.xlu0 %6182
        %6184 = vrot.lane.b32.xlu0 %v6091, 124
        %v6185 = vpop.permute.xlu0 %6184
        %6186 = vrot.lane.b32.xlu0 %v6092, 124
        %v6187 = vpop.permute.xlu0 %6186
        %6188 = vrot.lane.b32.xlu0 %v6093, 124
        %v6189 = vpop.permute.xlu0 %6188
        %vm6222 = vcmask 1048544
        %6223 = vst.msk [vmem:[#allocation2] sm:$0xff] %vm6222, %v6127
        %6224 = vst.msk [vmem:[#allocation2 + $0x10] sm:$0xff] %vm6222, %v6129
        %6225 = vst.msk [vmem:[#allocation2 + $0x20] sm:$0xff] %vm6222, %v6131
        %6226 = vst.msk [vmem:[#allocation2 + $0x30] sm:$0xff] %vm6222, %v6133
        %6227 = vst.msk [vmem:[#allocation2 + $0x40] sm:$0xff] %vm6222, %v6135
        %6228 = vst.msk [vmem:[#allocation2 + $0x50] sm:$0xff] %vm6222, %v6137
        %6229 = vst.msk [vmem:[#allocation2 + $0x60] sm:$0xff] %vm6222, %v6139
        %6230 = vst.msk [vmem:[#allocation2 + $0x70] sm:$0xff] %vm6222, %v6141
        %6231 = vst.msk [vmem:[#allocation2 + $0x80] sm:$0xff] %vm6222, %v6143
        %6232 = vst.msk [vmem:[#allocation2 + $0x90] sm:$0xff] %vm6222, %v6145
        %6233 = vst.msk [vmem:[#allocation2 + $0xa0] sm:$0xff] %vm6222, %v6147
        %6234 = vst.msk [vmem:[#allocation2 + $0xb0] sm:$0xff] %vm6222, %v6149
        %6235 = vst.msk [vmem:[#allocation2 + $0xc0] sm:$0xff] %vm6222, %v6151
        %6236 = vst.msk [vmem:[#allocation2 + $0xd0] sm:$0xff] %vm6222, %v6153
        %6237 = vst.msk [vmem:[#allocation2 + $0xe0] sm:$0xff] %vm6222, %v6155
        %6238 = vst.msk [vmem:[#allocation2 + $0xf0] sm:$0xff] %vm6222, %v6157
        %6239 = vst.msk [vmem:[#allocation2 + $0x100] sm:$0xff] %vm6222, %v6159
        %6240 = vst.msk [vmem:[#allocation2 + $0x110] sm:$0xff] %vm6222, %v6161
        %6241 = vst.msk [vmem:[#allocation2 + $0x120] sm:$0xff] %vm6222, %v6163
        %6242 = vst.msk [vmem:[#allocation2 + $0x130] sm:$0xff] %vm6222, %v6165
        %6243 = vst.msk [vmem:[#allocation2 + $0x140] sm:$0xff] %vm6222, %v6167
        %6244 = vst.msk [vmem:[#allocation2 + $0x150] sm:$0xff] %vm6222, %v6169
        %6245 = vst.msk [vmem:[#allocation2 + $0x160] sm:$0xff] %vm6222, %v6171
        %6246 = vst.msk [vmem:[#allocation2 + $0x170] sm:$0xff] %vm6222, %v6173
        %6247 = vst.msk [vmem:[#allocation2 + $0x180] sm:$0xff] %vm6222, %v6175
        %6248 = vst.msk [vmem:[#allocation2 + $0x190] sm:$0xff] %vm6222, %v6177
        %6249 = vst.msk [vmem:[#allocation2 + $0x1a0] sm:$0xff] %vm6222, %v6179
        %6250 = vst.msk [vmem:[#allocation2 + $0x1b0] sm:$0xff] %vm6222, %v6181
        %6251 = vst.msk [vmem:[#allocation2 + $0x1c0] sm:$0xff] %vm6222, %v6183
        %6252 = vst.msk [vmem:[#allocation2 + $0x1d0] sm:$0xff] %vm6222, %v6185
        %6253 = vst.msk [vmem:[#allocation2 + $0x1e0] sm:$0xff] %vm6222, %v6187
        %6254 = vst.msk [vmem:[#allocation2 + $0x1f0] sm:$0xff] %vm6222, %v6189
        %v6255 = vld [vmem:[%s5482 + $0x4] sm:$0xff]
        %v6256 = vld [vmem:[%s5482 + $0xc] sm:$0xff]
        %v6257 = vld [vmem:[%s5482 + $0x1c] sm:$0xff]
        %v6258 = vld [vmem:[%s5482 + $0x24] sm:$0xff]
        %v6259 = vld [vmem:[%s5482 + $0x34] sm:$0xff]
        %v6260 = vld [vmem:[%s5482 + $0x3c] sm:$0xff]
        %v6261 = vld [vmem:[%s5482 + $0x4c] sm:$0xff]
        %v6262 = vld [vmem:[%s5482 + $0x54] sm:$0xff]
        %v6263 = vld [vmem:[%s5482 + $0x64] sm:$0xff]
        %v6264 = vld [vmem:[%s5482 + $0x6c] sm:$0xff]
        %v6265 = vld [vmem:[%s5482 + $0x7c] sm:$0xff]
        %v6266 = vld [vmem:[%s5482 + $0x84] sm:$0xff]
        %v6267 = vld [vmem:[%s5482 + $0x94] sm:$0xff]
        %v6268 = vld [vmem:[%s5482 + $0x9c] sm:$0xff]
        %v6269 = vld [vmem:[%s5482 + $0xac] sm:$0xff]
        %v6270 = vld [vmem:[%s5482 + $0xb4] sm:$0xff]
        %v6271 = vld [vmem:[%s5482 + $0xc4] sm:$0xff]
        %v6272 = vld [vmem:[%s5482 + $0xcc] sm:$0xff]
        %v6273 = vld [vmem:[%s5482 + $0xdc] sm:$0xff]
        %v6274 = vld [vmem:[%s5482 + $0xe4] sm:$0xff]
        %v6275 = vld [vmem:[%s5482 + $0xf4] sm:$0xff]
        %v6276 = vld [vmem:[%s5482 + $0xfc] sm:$0xff]
        %v6277 = vld [vmem:[%s5482 + $0x10c] sm:$0xff]
        %v6278 = vld [vmem:[%s5482 + $0x114] sm:$0xff]
        %v6279 = vld [vmem:[%s5482 + $0x124] sm:$0xff]
        %v6280 = vld [vmem:[%s5482 + $0x12c] sm:$0xff]
        %v6281 = vld [vmem:[%s5482 + $0x13c] sm:$0xff]
        %v6282 = vld [vmem:[%s5482 + $0x144] sm:$0xff]
        %v6283 = vld [vmem:[%s5482 + $0x154] sm:$0xff]
        %v6284 = vld [vmem:[%s5482 + $0x15c] sm:$0xff]
        %v6285 = vld [vmem:[%s5482 + $0x16c] sm:$0xff]
        %v6286 = vld [vmem:[%s5482 + $0x174] sm:$0xff]
        %6287 = vst.msk [vmem:[#allocation2 + $0x8] sm:$0xff] %vm235, %v6255
        %6288 = vst.msk [vmem:[#allocation2 + $0x18] sm:$0xff] %vm235, %v6256
        %6289 = vst.msk [vmem:[#allocation2 + $0x28] sm:$0xff] %vm235, %v6257
        %6290 = vst.msk [vmem:[#allocation2 + $0x38] sm:$0xff] %vm235, %v6258
        %6291 = vst.msk [vmem:[#allocation2 + $0x48] sm:$0xff] %vm235, %v6259
        %6292 = vst.msk [vmem:[#allocation2 + $0x58] sm:$0xff] %vm235, %v6260
        %6293 = vst.msk [vmem:[#allocation2 + $0x68] sm:$0xff] %vm235, %v6261
        %6294 = vst.msk [vmem:[#allocation2 + $0x78] sm:$0xff] %vm235, %v6262
        %6295 = vst.msk [vmem:[#allocation2 + $0x88] sm:$0xff] %vm235, %v6263
        %6296 = vst.msk [vmem:[#allocation2 + $0x98] sm:$0xff] %vm235, %v6264
        %6297 = vst.msk [vmem:[#allocation2 + $0xa8] sm:$0xff] %vm235, %v6265
        %6298 = vst.msk [vmem:[#allocation2 + $0xb8] sm:$0xff] %vm235, %v6266
        %6299 = vst.msk [vmem:[#allocation2 + $0xc8] sm:$0xff] %vm235, %v6267
        %6300 = vst.msk [vmem:[#allocation2 + $0xd8] sm:$0xff] %vm235, %v6268
        %6301 = vst.msk [vmem:[#allocation2 + $0xe8] sm:$0xff] %vm235, %v6269
        %6302 = vst.msk [vmem:[#allocation2 + $0xf8] sm:$0xff] %vm235, %v6270
        %6303 = vst.msk [vmem:[#allocation2 + $0x108] sm:$0xff] %vm235, %v6271
        %6304 = vst.msk [vmem:[#allocation2 + $0x118] sm:$0xff] %vm235, %v6272
        %6305 = vst.msk [vmem:[#allocation2 + $0x128] sm:$0xff] %vm235, %v6273
        %6306 = vst.msk [vmem:[#allocation2 + $0x138] sm:$0xff] %vm235, %v6274
        %6307 = vst.msk [vmem:[#allocation2 + $0x148] sm:$0xff] %vm235, %v6275
        %6308 = vst.msk [vmem:[#allocation2 + $0x158] sm:$0xff] %vm235, %v6276
        %6309 = vst.msk [vmem:[#allocation2 + $0x168] sm:$0xff] %vm235, %v6277
        %6310 = vst.msk [vmem:[#allocation2 + $0x178] sm:$0xff] %vm235, %v6278
        %6311 = vst.msk [vmem:[#allocation2 + $0x188] sm:$0xff] %vm235, %v6279
        %6312 = vst.msk [vmem:[#allocation2 + $0x198] sm:$0xff] %vm235, %v6280
        %6313 = vst.msk [vmem:[#allocation2 + $0x1a8] sm:$0xff] %vm235, %v6281
        %6314 = vst.msk [vmem:[#allocation2 + $0x1b8] sm:$0xff] %vm235, %v6282
        %6315 = vst.msk [vmem:[#allocation2 + $0x1c8] sm:$0xff] %vm235, %v6283
        %6316 = vst.msk [vmem:[#allocation2 + $0x1d8] sm:$0xff] %vm235, %v6284
        %6317 = vst.msk [vmem:[#allocation2 + $0x1e8] sm:$0xff] %vm235, %v6285
        %6318 = vst.msk [vmem:[#allocation2 + $0x1f8] sm:$0xff] %vm235, %v6286
        %v6319 = vld [vmem:[%s5482 + $0x5] sm:$0xff]
        %v6320 = vld [vmem:[%s5482 + $0xd] sm:$0xff]
        %v6321 = vld [vmem:[%s5482 + $0x1d] sm:$0xff]
        %v6322 = vld [vmem:[%s5482 + $0x25] sm:$0xff]
        %v6323 = vld [vmem:[%s5482 + $0x35] sm:$0xff]
        %v6324 = vld [vmem:[%s5482 + $0x3d] sm:$0xff]
        %v6325 = vld [vmem:[%s5482 + $0x4d] sm:$0xff]
        %v6326 = vld [vmem:[%s5482 + $0x55] sm:$0xff]
        %v6327 = vld [vmem:[%s5482 + $0x65] sm:$0xff]
        %v6328 = vld [vmem:[%s5482 + $0x6d] sm:$0xff]
        %v6329 = vld [vmem:[%s5482 + $0x7d] sm:$0xff]
        %v6330 = vld [vmem:[%s5482 + $0x85] sm:$0xff]
        %v6331 = vld [vmem:[%s5482 + $0x95] sm:$0xff]
        %v6332 = vld [vmem:[%s5482 + $0x9d] sm:$0xff]
        %v6333 = vld [vmem:[%s5482 + $0xad] sm:$0xff]
        %v6334 = vld [vmem:[%s5482 + $0xb5] sm:$0xff]
        %v6335 = vld [vmem:[%s5482 + $0xc5] sm:$0xff]
        %v6336 = vld [vmem:[%s5482 + $0xcd] sm:$0xff]
        %v6337 = vld [vmem:[%s5482 + $0xdd] sm:$0xff]
        %v6338 = vld [vmem:[%s5482 + $0xe5] sm:$0xff]
        %v6339 = vld [vmem:[%s5482 + $0xf5] sm:$0xff]
        %v6340 = vld [vmem:[%s5482 + $0xfd] sm:$0xff]
        %v6341 = vld [vmem:[%s5482 + $0x10d] sm:$0xff]
        %v6342 = vld [vmem:[%s5482 + $0x115] sm:$0xff]
        %v6343 = vld [vmem:[%s5482 + $0x125] sm:$0xff]
        %v6344 = vld [vmem:[%s5482 + $0x12d] sm:$0xff]
        %v6345 = vld [vmem:[%s5482 + $0x13d] sm:$0xff]
        %v6346 = vld [vmem:[%s5482 + $0x145] sm:$0xff]
        %v6347 = vld [vmem:[%s5482 + $0x155] sm:$0xff]
        %v6348 = vld [vmem:[%s5482 + $0x15d] sm:$0xff]
        %v6349 = vld [vmem:[%s5482 + $0x16d] sm:$0xff]
        %v6350 = vld [vmem:[%s5482 + $0x175] sm:$0xff]
        %6383 = vrot.lane.b32.xlu0 %v6319, 4
        %v6384 = vpop.permute.xlu0 %6383
        %6385 = vrot.lane.b32.xlu0 %v6320, 4
        %v6386 = vpop.permute.xlu0 %6385
        %6387 = vrot.lane.b32.xlu0 %v6321, 4
        %v6388 = vpop.permute.xlu0 %6387
        %6389 = vrot.lane.b32.xlu0 %v6322, 4
        %v6390 = vpop.permute.xlu0 %6389
        %6391 = vrot.lane.b32.xlu0 %v6323, 4
        %v6392 = vpop.permute.xlu0 %6391
        %6393 = vrot.lane.b32.xlu0 %v6324, 4
        %v6394 = vpop.permute.xlu0 %6393
        %6395 = vrot.lane.b32.xlu0 %v6325, 4
        %v6396 = vpop.permute.xlu0 %6395
        %6397 = vrot.lane.b32.xlu0 %v6326, 4
        %v6398 = vpop.permute.xlu0 %6397
        %6399 = vrot.lane.b32.xlu0 %v6327, 4
        %v6400 = vpop.permute.xlu0 %6399
        %6401 = vrot.lane.b32.xlu0 %v6328, 4
        %v6402 = vpop.permute.xlu0 %6401
        %6403 = vrot.lane.b32.xlu0 %v6329, 4
        %v6404 = vpop.permute.xlu0 %6403
        %6405 = vrot.lane.b32.xlu0 %v6330, 4
        %v6406 = vpop.permute.xlu0 %6405
        %6407 = vrot.lane.b32.xlu0 %v6331, 4
        %v6408 = vpop.permute.xlu0 %6407
        %6409 = vrot.lane.b32.xlu0 %v6332, 4
        %v6410 = vpop.permute.xlu0 %6409
        %6411 = vrot.lane.b32.xlu0 %v6333, 4
        %v6412 = vpop.permute.xlu0 %6411
        %6413 = vrot.lane.b32.xlu0 %v6334, 4
        %v6414 = vpop.permute.xlu0 %6413
        %6415 = vrot.lane.b32.xlu0 %v6335, 4
        %v6416 = vpop.permute.xlu0 %6415
        %6417 = vrot.lane.b32.xlu0 %v6336, 4
        %v6418 = vpop.permute.xlu0 %6417
        %6419 = vrot.lane.b32.xlu0 %v6337, 4
        %v6420 = vpop.permute.xlu0 %6419
        %6421 = vrot.lane.b32.xlu0 %v6338, 4
        %v6422 = vpop.permute.xlu0 %6421
        %6423 = vrot.lane.b32.xlu0 %v6339, 4
        %v6424 = vpop.permute.xlu0 %6423
        %6425 = vrot.lane.b32.xlu0 %v6340, 4
        %v6426 = vpop.permute.xlu0 %6425
        %6427 = vrot.lane.b32.xlu0 %v6341, 4
        %v6428 = vpop.permute.xlu0 %6427
        %6429 = vrot.lane.b32.xlu0 %v6342, 4
        %v6430 = vpop.permute.xlu0 %6429
        %6431 = vrot.lane.b32.xlu0 %v6343, 4
        %v6432 = vpop.permute.xlu0 %6431
        %6433 = vrot.lane.b32.xlu0 %v6344, 4
        %v6434 = vpop.permute.xlu0 %6433
        %6435 = vrot.lane.b32.xlu0 %v6345, 4
        %v6436 = vpop.permute.xlu0 %6435
        %6437 = vrot.lane.b32.xlu0 %v6346, 4
        %v6438 = vpop.permute.xlu0 %6437
        %6439 = vrot.lane.b32.xlu0 %v6347, 4
        %v6440 = vpop.permute.xlu0 %6439
        %6441 = vrot.lane.b32.xlu0 %v6348, 4
        %v6442 = vpop.permute.xlu0 %6441
        %6443 = vrot.lane.b32.xlu0 %v6349, 4
        %v6444 = vpop.permute.xlu0 %6443
        %6445 = vrot.lane.b32.xlu0 %v6350, 4
        %v6446 = vpop.permute.xlu0 %6445
        %6479 = vst.msk [vmem:[#allocation2 + $0x8] sm:$0xff] %vm428, %v6384
        %6480 = vst.msk [vmem:[#allocation2 + $0x18] sm:$0xff] %vm428, %v6386
        %6481 = vst.msk [vmem:[#allocation2 + $0x28] sm:$0xff] %vm428, %v6388
        %6482 = vst.msk [vmem:[#allocation2 + $0x38] sm:$0xff] %vm428, %v6390
        %6483 = vst.msk [vmem:[#allocation2 + $0x48] sm:$0xff] %vm428, %v6392
        %6484 = vst.msk [vmem:[#allocation2 + $0x58] sm:$0xff] %vm428, %v6394
        %6485 = vst.msk [vmem:[#allocation2 + $0x68] sm:$0xff] %vm428, %v6396
        %6486 = vst.msk [vmem:[#allocation2 + $0x78] sm:$0xff] %vm428, %v6398
        %6487 = vst.msk [vmem:[#allocation2 + $0x88] sm:$0xff] %vm428, %v6400
        %6488 = vst.msk [vmem:[#allocation2 + $0x98] sm:$0xff] %vm428, %v6402
        %6489 = vst.msk [vmem:[#allocation2 + $0xa8] sm:$0xff] %vm428, %v6404
        %6490 = vst.msk [vmem:[#allocation2 + $0xb8] sm:$0xff] %vm428, %v6406
        %6491 = vst.msk [vmem:[#allocation2 + $0xc8] sm:$0xff] %vm428, %v6408
        %6492 = vst.msk [vmem:[#allocation2 + $0xd8] sm:$0xff] %vm428, %v6410
        %6493 = vst.msk [vmem:[#allocation2 + $0xe8] sm:$0xff] %vm428, %v6412
        %6494 = vst.msk [vmem:[#allocation2 + $0xf8] sm:$0xff] %vm428, %v6414
        %6495 = vst.msk [vmem:[#allocation2 + $0x108] sm:$0xff] %vm428, %v6416
        %6496 = vst.msk [vmem:[#allocation2 + $0x118] sm:$0xff] %vm428, %v6418
        %6497 = vst.msk [vmem:[#allocation2 + $0x128] sm:$0xff] %vm428, %v6420
        %6498 = vst.msk [vmem:[#allocation2 + $0x138] sm:$0xff] %vm428, %v6422
        %6499 = vst.msk [vmem:[#allocation2 + $0x148] sm:$0xff] %vm428, %v6424
        %6500 = vst.msk [vmem:[#allocation2 + $0x158] sm:$0xff] %vm428, %v6426
        %6501 = vst.msk [vmem:[#allocation2 + $0x168] sm:$0xff] %vm428, %v6428
        %6502 = vst.msk [vmem:[#allocation2 + $0x178] sm:$0xff] %vm428, %v6430
        %6503 = vst.msk [vmem:[#allocation2 + $0x188] sm:$0xff] %vm428, %v6432
        %6504 = vst.msk [vmem:[#allocation2 + $0x198] sm:$0xff] %vm428, %v6434
        %6505 = vst.msk [vmem:[#allocation2 + $0x1a8] sm:$0xff] %vm428, %v6436
        %6506 = vst.msk [vmem:[#allocation2 + $0x1b8] sm:$0xff] %vm428, %v6438
        %6507 = vst.msk [vmem:[#allocation2 + $0x1c8] sm:$0xff] %vm428, %v6440
        %6508 = vst.msk [vmem:[#allocation2 + $0x1d8] sm:$0xff] %vm428, %v6442
        %6509 = vst.msk [vmem:[#allocation2 + $0x1e8] sm:$0xff] %vm428, %v6444
        %6510 = vst.msk [vmem:[#allocation2 + $0x1f8] sm:$0xff] %vm428, %v6446
        %v6511 = vld [vmem:[%s5482 + $0x6] sm:$0xff]
        %v6512 = vld [vmem:[%s5482 + $0xe] sm:$0xff]
        %v6513 = vld [vmem:[%s5482 + $0x1e] sm:$0xff]
        %v6514 = vld [vmem:[%s5482 + $0x26] sm:$0xff]
        %v6515 = vld [vmem:[%s5482 + $0x36] sm:$0xff]
        %v6516 = vld [vmem:[%s5482 + $0x3e] sm:$0xff]
        %v6517 = vld [vmem:[%s5482 + $0x4e] sm:$0xff]
        %v6518 = vld [vmem:[%s5482 + $0x56] sm:$0xff]
        %v6519 = vld [vmem:[%s5482 + $0x66] sm:$0xff]
        %v6520 = vld [vmem:[%s5482 + $0x6e] sm:$0xff]
        %v6521 = vld [vmem:[%s5482 + $0x7e] sm:$0xff]
        %v6522 = vld [vmem:[%s5482 + $0x86] sm:$0xff]
        %v6523 = vld [vmem:[%s5482 + $0x96] sm:$0xff]
        %v6524 = vld [vmem:[%s5482 + $0x9e] sm:$0xff]
        %v6525 = vld [vmem:[%s5482 + $0xae] sm:$0xff]
        %v6526 = vld [vmem:[%s5482 + $0xb6] sm:$0xff]
        %v6527 = vld [vmem:[%s5482 + $0xc6] sm:$0xff]
        %v6528 = vld [vmem:[%s5482 + $0xce] sm:$0xff]
        %v6529 = vld [vmem:[%s5482 + $0xde] sm:$0xff]
        %v6530 = vld [vmem:[%s5482 + $0xe6] sm:$0xff]
        %v6531 = vld [vmem:[%s5482 + $0xf6] sm:$0xff]
        %v6532 = vld [vmem:[%s5482 + $0xfe] sm:$0xff]
        %v6533 = vld [vmem:[%s5482 + $0x10e] sm:$0xff]
        %v6534 = vld [vmem:[%s5482 + $0x116] sm:$0xff]
        %v6535 = vld [vmem:[%s5482 + $0x126] sm:$0xff]
        %v6536 = vld [vmem:[%s5482 + $0x12e] sm:$0xff]
        %v6537 = vld [vmem:[%s5482 + $0x13e] sm:$0xff]
        %v6538 = vld [vmem:[%s5482 + $0x146] sm:$0xff]
        %v6539 = vld [vmem:[%s5482 + $0x156] sm:$0xff]
        %v6540 = vld [vmem:[%s5482 + $0x15e] sm:$0xff]
        %v6541 = vld [vmem:[%s5482 + $0x16e] sm:$0xff]
        %v6542 = vld [vmem:[%s5482 + $0x176] sm:$0xff]
        %6575 = vrot.lane.b32.xlu0 %v6511, 8
        %v6576 = vpop.permute.xlu0 %6575
        %6577 = vrot.lane.b32.xlu0 %v6512, 8
        %v6578 = vpop.permute.xlu0 %6577
        %6579 = vrot.lane.b32.xlu0 %v6513, 8
        %v6580 = vpop.permute.xlu0 %6579
        %6581 = vrot.lane.b32.xlu0 %v6514, 8
        %v6582 = vpop.permute.xlu0 %6581
        %6583 = vrot.lane.b32.xlu0 %v6515, 8
        %v6584 = vpop.permute.xlu0 %6583
        %6585 = vrot.lane.b32.xlu0 %v6516, 8
        %v6586 = vpop.permute.xlu0 %6585
        %6587 = vrot.lane.b32.xlu0 %v6517, 8
        %v6588 = vpop.permute.xlu0 %6587
        %6589 = vrot.lane.b32.xlu0 %v6518, 8
        %v6590 = vpop.permute.xlu0 %6589
        %6591 = vrot.lane.b32.xlu0 %v6519, 8
        %v6592 = vpop.permute.xlu0 %6591
        %6593 = vrot.lane.b32.xlu0 %v6520, 8
        %v6594 = vpop.permute.xlu0 %6593
        %6595 = vrot.lane.b32.xlu0 %v6521, 8
        %v6596 = vpop.permute.xlu0 %6595
        %6597 = vrot.lane.b32.xlu0 %v6522, 8
        %v6598 = vpop.permute.xlu0 %6597
        %6599 = vrot.lane.b32.xlu0 %v6523, 8
        %v6600 = vpop.permute.xlu0 %6599
        %6601 = vrot.lane.b32.xlu0 %v6524, 8
        %v6602 = vpop.permute.xlu0 %6601
        %6603 = vrot.lane.b32.xlu0 %v6525, 8
        %v6604 = vpop.permute.xlu0 %6603
        %6605 = vrot.lane.b32.xlu0 %v6526, 8
        %v6606 = vpop.permute.xlu0 %6605
        %6607 = vrot.lane.b32.xlu0 %v6527, 8
        %v6608 = vpop.permute.xlu0 %6607
        %6609 = vrot.lane.b32.xlu0 %v6528, 8
        %v6610 = vpop.permute.xlu0 %6609
        %6611 = vrot.lane.b32.xlu0 %v6529, 8
        %v6612 = vpop.permute.xlu0 %6611
        %6613 = vrot.lane.b32.xlu0 %v6530, 8
        %v6614 = vpop.permute.xlu0 %6613
        %6615 = vrot.lane.b32.xlu0 %v6531, 8
        %v6616 = vpop.permute.xlu0 %6615
        %6617 = vrot.lane.b32.xlu0 %v6532, 8
        %v6618 = vpop.permute.xlu0 %6617
        %6619 = vrot.lane.b32.xlu0 %v6533, 8
        %v6620 = vpop.permute.xlu0 %6619
        %6621 = vrot.lane.b32.xlu0 %v6534, 8
        %v6622 = vpop.permute.xlu0 %6621
        %6623 = vrot.lane.b32.xlu0 %v6535, 8
        %v6624 = vpop.permute.xlu0 %6623
        %6625 = vrot.lane.b32.xlu0 %v6536, 8
        %v6626 = vpop.permute.xlu0 %6625
        %6627 = vrot.lane.b32.xlu0 %v6537, 8
        %v6628 = vpop.permute.xlu0 %6627
        %6629 = vrot.lane.b32.xlu0 %v6538, 8
        %v6630 = vpop.permute.xlu0 %6629
        %6631 = vrot.lane.b32.xlu0 %v6539, 8
        %v6632 = vpop.permute.xlu0 %6631
        %6633 = vrot.lane.b32.xlu0 %v6540, 8
        %v6634 = vpop.permute.xlu0 %6633
        %6635 = vrot.lane.b32.xlu0 %v6541, 8
        %v6636 = vpop.permute.xlu0 %6635
        %6637 = vrot.lane.b32.xlu0 %v6542, 8
        %v6638 = vpop.permute.xlu0 %6637
        %6671 = vst.msk [vmem:[#allocation2 + $0x8] sm:$0xff] %vm621, %v6576
        %6672 = vst.msk [vmem:[#allocation2 + $0x18] sm:$0xff] %vm621, %v6578
        %6673 = vst.msk [vmem:[#allocation2 + $0x28] sm:$0xff] %vm621, %v6580
        %6674 = vst.msk [vmem:[#allocation2 + $0x38] sm:$0xff] %vm621, %v6582
        %6675 = vst.msk [vmem:[#allocation2 + $0x48] sm:$0xff] %vm621, %v6584
        %6676 = vst.msk [vmem:[#allocation2 + $0x58] sm:$0xff] %vm621, %v6586
        %6677 = vst.msk [vmem:[#allocation2 + $0x68] sm:$0xff] %vm621, %v6588
        %6678 = vst.msk [vmem:[#allocation2 + $0x78] sm:$0xff] %vm621, %v6590
        %6679 = vst.msk [vmem:[#allocation2 + $0x88] sm:$0xff] %vm621, %v6592
        %6680 = vst.msk [vmem:[#allocation2 + $0x98] sm:$0xff] %vm621, %v6594
        %6681 = vst.msk [vmem:[#allocation2 + $0xa8] sm:$0xff] %vm621, %v6596
        %6682 = vst.msk [vmem:[#allocation2 + $0xb8] sm:$0xff] %vm621, %v6598
        %6683 = vst.msk [vmem:[#allocation2 + $0xc8] sm:$0xff] %vm621, %v6600
        %6684 = vst.msk [vmem:[#allocation2 + $0xd8] sm:$0xff] %vm621, %v6602
        %6685 = vst.msk [vmem:[#allocation2 + $0xe8] sm:$0xff] %vm621, %v6604
        %6686 = vst.msk [vmem:[#allocation2 + $0xf8] sm:$0xff] %vm621, %v6606
        %6687 = vst.msk [vmem:[#allocation2 + $0x108] sm:$0xff] %vm621, %v6608
        %6688 = vst.msk [vmem:[#allocation2 + $0x118] sm:$0xff] %vm621, %v6610
        %6689 = vst.msk [vmem:[#allocation2 + $0x128] sm:$0xff] %vm621, %v6612
        %6690 = vst.msk [vmem:[#allocation2 + $0x138] sm:$0xff] %vm621, %v6614
        %6691 = vst.msk [vmem:[#allocation2 + $0x148] sm:$0xff] %vm621, %v6616
        %6692 = vst.msk [vmem:[#allocation2 + $0x158] sm:$0xff] %vm621, %v6618
        %6693 = vst.msk [vmem:[#allocation2 + $0x168] sm:$0xff] %vm621, %v6620
        %6694 = vst.msk [vmem:[#allocation2 + $0x178] sm:$0xff] %vm621, %v6622
        %6695 = vst.msk [vmem:[#allocation2 + $0x188] sm:$0xff] %vm621, %v6624
        %6696 = vst.msk [vmem:[#allocation2 + $0x198] sm:$0xff] %vm621, %v6626
        %6697 = vst.msk [vmem:[#allocation2 + $0x1a8] sm:$0xff] %vm621, %v6628
        %6698 = vst.msk [vmem:[#allocation2 + $0x1b8] sm:$0xff] %vm621, %v6630
        %6699 = vst.msk [vmem:[#allocation2 + $0x1c8] sm:$0xff] %vm621, %v6632
        %6700 = vst.msk [vmem:[#allocation2 + $0x1d8] sm:$0xff] %vm621, %v6634
        %6701 = vst.msk [vmem:[#allocation2 + $0x1e8] sm:$0xff] %vm621, %v6636
        %6702 = vst.msk [vmem:[#allocation2 + $0x1f8] sm:$0xff] %vm621, %v6638
        %s6703 = scalar_lea.vmem %s197, 120
        %v6704 = vld [vmem:[%s6703] sm:$0xff]
        %v6705 = vld [vmem:[%s6703 + $0x8] sm:$0xff]
        %v6706 = vld [vmem:[%s6703 + $0x18] sm:$0xff]
        %v6707 = vld [vmem:[%s6703 + $0x20] sm:$0xff]
        %v6708 = vld [vmem:[%s6703 + $0x30] sm:$0xff]
        %v6709 = vld [vmem:[%s6703 + $0x38] sm:$0xff]
        %v6710 = vld [vmem:[%s6703 + $0x48] sm:$0xff]
        %v6711 = vld [vmem:[%s6703 + $0x50] sm:$0xff]
        %v6712 = vld [vmem:[%s6703 + $0x60] sm:$0xff]
        %v6713 = vld [vmem:[%s6703 + $0x68] sm:$0xff]
        %v6714 = vld [vmem:[%s6703 + $0x78] sm:$0xff]
        %v6715 = vld [vmem:[%s6703 + $0x80] sm:$0xff]
        %v6716 = vld [vmem:[%s6703 + $0x90] sm:$0xff]
        %v6717 = vld [vmem:[%s6703 + $0x98] sm:$0xff]
        %v6718 = vld [vmem:[%s6703 + $0xa8] sm:$0xff]
        %v6719 = vld [vmem:[%s6703 + $0xb0] sm:$0xff]
        %v6720 = vld [vmem:[%s6703 + $0xc0] sm:$0xff]
        %v6721 = vld [vmem:[%s6703 + $0xc8] sm:$0xff]
        %v6722 = vld [vmem:[%s6703 + $0xd8] sm:$0xff]
        %v6723 = vld [vmem:[%s6703 + $0xe0] sm:$0xff]
        %v6724 = vld [vmem:[%s6703 + $0xf0] sm:$0xff]
        %v6725 = vld [vmem:[%s6703 + $0xf8] sm:$0xff]
        %v6726 = vld [vmem:[%s6703 + $0x108] sm:$0xff]
        %v6727 = vld [vmem:[%s6703 + $0x110] sm:$0xff]
        %v6728 = vld [vmem:[%s6703 + $0x120] sm:$0xff]
        %v6729 = vld [vmem:[%s6703 + $0x128] sm:$0xff]
        %v6730 = vld [vmem:[%s6703 + $0x138] sm:$0xff]
        %v6731 = vld [vmem:[%s6703 + $0x140] sm:$0xff]
        %v6732 = vld [vmem:[%s6703 + $0x150] sm:$0xff]
        %v6733 = vld [vmem:[%s6703 + $0x158] sm:$0xff]
        %v6734 = vld [vmem:[%s6703 + $0x168] sm:$0xff]
        %v6735 = vld [vmem:[%s6703 + $0x170] sm:$0xff]
        %6768 = vrot.lane.b32.xlu0 %v6704, 12
        %v6769 = vpop.permute.xlu0 %6768
        %6770 = vrot.lane.b32.xlu0 %v6705, 12
        %v6771 = vpop.permute.xlu0 %6770
        %6772 = vrot.lane.b32.xlu0 %v6706, 12
        %v6773 = vpop.permute.xlu0 %6772
        %6774 = vrot.lane.b32.xlu0 %v6707, 12
        %v6775 = vpop.permute.xlu0 %6774
        %6776 = vrot.lane.b32.xlu0 %v6708, 12
        %v6777 = vpop.permute.xlu0 %6776
        %6778 = vrot.lane.b32.xlu0 %v6709, 12
        %v6779 = vpop.permute.xlu0 %6778
        %6780 = vrot.lane.b32.xlu0 %v6710, 12
        %v6781 = vpop.permute.xlu0 %6780
        %6782 = vrot.lane.b32.xlu0 %v6711, 12
        %v6783 = vpop.permute.xlu0 %6782
        %6784 = vrot.lane.b32.xlu0 %v6712, 12
        %v6785 = vpop.permute.xlu0 %6784
        %6786 = vrot.lane.b32.xlu0 %v6713, 12
        %v6787 = vpop.permute.xlu0 %6786
        %6788 = vrot.lane.b32.xlu0 %v6714, 12
        %v6789 = vpop.permute.xlu0 %6788
        %6790 = vrot.lane.b32.xlu0 %v6715, 12
        %v6791 = vpop.permute.xlu0 %6790
        %6792 = vrot.lane.b32.xlu0 %v6716, 12
        %v6793 = vpop.permute.xlu0 %6792
        %6794 = vrot.lane.b32.xlu0 %v6717, 12
        %v6795 = vpop.permute.xlu0 %6794
        %6796 = vrot.lane.b32.xlu0 %v6718, 12
        %v6797 = vpop.permute.xlu0 %6796
        %6798 = vrot.lane.b32.xlu0 %v6719, 12
        %v6799 = vpop.permute.xlu0 %6798
        %6800 = vrot.lane.b32.xlu0 %v6720, 12
        %v6801 = vpop.permute.xlu0 %6800
        %6802 = vrot.lane.b32.xlu0 %v6721, 12
        %v6803 = vpop.permute.xlu0 %6802
        %6804 = vrot.lane.b32.xlu0 %v6722, 12
        %v6805 = vpop.permute.xlu0 %6804
        %6806 = vrot.lane.b32.xlu0 %v6723, 12
        %v6807 = vpop.permute.xlu0 %6806
        %6808 = vrot.lane.b32.xlu0 %v6724, 12
        %v6809 = vpop.permute.xlu0 %6808
        %6810 = vrot.lane.b32.xlu0 %v6725, 12
        %v6811 = vpop.permute.xlu0 %6810
        %6812 = vrot.lane.b32.xlu0 %v6726, 12
        %v6813 = vpop.permute.xlu0 %6812
        %6814 = vrot.lane.b32.xlu0 %v6727, 12
        %v6815 = vpop.permute.xlu0 %6814
        %6816 = vrot.lane.b32.xlu0 %v6728, 12
        %v6817 = vpop.permute.xlu0 %6816
        %6818 = vrot.lane.b32.xlu0 %v6729, 12
        %v6819 = vpop.permute.xlu0 %6818
        %6820 = vrot.lane.b32.xlu0 %v6730, 12
        %v6821 = vpop.permute.xlu0 %6820
        %6822 = vrot.lane.b32.xlu0 %v6731, 12
        %v6823 = vpop.permute.xlu0 %6822
        %6824 = vrot.lane.b32.xlu0 %v6732, 12
        %v6825 = vpop.permute.xlu0 %6824
        %6826 = vrot.lane.b32.xlu0 %v6733, 12
        %v6827 = vpop.permute.xlu0 %6826
        %6828 = vrot.lane.b32.xlu0 %v6734, 12
        %v6829 = vpop.permute.xlu0 %6828
        %6830 = vrot.lane.b32.xlu0 %v6735, 12
        %v6831 = vpop.permute.xlu0 %6830
        %6864 = vst.msk [vmem:[#allocation2 + $0x8] sm:$0xff] %vm814, %v6769
        %6865 = vst.msk [vmem:[#allocation2 + $0x18] sm:$0xff] %vm814, %v6771
        %6866 = vst.msk [vmem:[#allocation2 + $0x28] sm:$0xff] %vm814, %v6773
        %6867 = vst.msk [vmem:[#allocation2 + $0x38] sm:$0xff] %vm814, %v6775
        %6868 = vst.msk [vmem:[#allocation2 + $0x48] sm:$0xff] %vm814, %v6777
        %6869 = vst.msk [vmem:[#allocation2 + $0x58] sm:$0xff] %vm814, %v6779
        %6870 = vst.msk [vmem:[#allocation2 + $0x68] sm:$0xff] %vm814, %v6781
        %6871 = vst.msk [vmem:[#allocation2 + $0x78] sm:$0xff] %vm814, %v6783
        %6872 = vst.msk [vmem:[#allocation2 + $0x88] sm:$0xff] %vm814, %v6785
        %6873 = vst.msk [vmem:[#allocation2 + $0x98] sm:$0xff] %vm814, %v6787
        %6874 = vst.msk [vmem:[#allocation2 + $0xa8] sm:$0xff] %vm814, %v6789
        %6875 = vst.msk [vmem:[#allocation2 + $0xb8] sm:$0xff] %vm814, %v6791
        %6876 = vst.msk [vmem:[#allocation2 + $0xc8] sm:$0xff] %vm814, %v6793
        %6877 = vst.msk [vmem:[#allocation2 + $0xd8] sm:$0xff] %vm814, %v6795
        %6878 = vst.msk [vmem:[#allocation2 + $0xe8] sm:$0xff] %vm814, %v6797
        %6879 = vst.msk [vmem:[#allocation2 + $0xf8] sm:$0xff] %vm814, %v6799
        %6880 = vst.msk [vmem:[#allocation2 + $0x108] sm:$0xff] %vm814, %v6801
        %6881 = vst.msk [vmem:[#allocation2 + $0x118] sm:$0xff] %vm814, %v6803
        %6882 = vst.msk [vmem:[#allocation2 + $0x128] sm:$0xff] %vm814, %v6805
        %6883 = vst.msk [vmem:[#allocation2 + $0x138] sm:$0xff] %vm814, %v6807
        %6884 = vst.msk [vmem:[#allocation2 + $0x148] sm:$0xff] %vm814, %v6809
        %6885 = vst.msk [vmem:[#allocation2 + $0x158] sm:$0xff] %vm814, %v6811
        %6886 = vst.msk [vmem:[#allocation2 + $0x168] sm:$0xff] %vm814, %v6813
        %6887 = vst.msk [vmem:[#allocation2 + $0x178] sm:$0xff] %vm814, %v6815
        %6888 = vst.msk [vmem:[#allocation2 + $0x188] sm:$0xff] %vm814, %v6817
        %6889 = vst.msk [vmem:[#allocation2 + $0x198] sm:$0xff] %vm814, %v6819
        %6890 = vst.msk [vmem:[#allocation2 + $0x1a8] sm:$0xff] %vm814, %v6821
        %6891 = vst.msk [vmem:[#allocation2 + $0x1b8] sm:$0xff] %vm814, %v6823
        %6892 = vst.msk [vmem:[#allocation2 + $0x1c8] sm:$0xff] %vm814, %v6825
        %6893 = vst.msk [vmem:[#allocation2 + $0x1d8] sm:$0xff] %vm814, %v6827
        %6894 = vst.msk [vmem:[#allocation2 + $0x1e8] sm:$0xff] %vm814, %v6829
        %6895 = vst.msk [vmem:[#allocation2 + $0x1f8] sm:$0xff] %vm814, %v6831
        %v6896 = vld [vmem:[%s6703 + $0x1] sm:$0xff]
        %v6897 = vld [vmem:[%s6703 + $0x9] sm:$0xff]
        %v6898 = vld [vmem:[%s6703 + $0x19] sm:$0xff]
        %v6899 = vld [vmem:[%s6703 + $0x21] sm:$0xff]
        %v6900 = vld [vmem:[%s6703 + $0x31] sm:$0xff]
        %v6901 = vld [vmem:[%s6703 + $0x39] sm:$0xff]
        %v6902 = vld [vmem:[%s6703 + $0x49] sm:$0xff]
        %v6903 = vld [vmem:[%s6703 + $0x51] sm:$0xff]
        %v6904 = vld [vmem:[%s6703 + $0x61] sm:$0xff]
        %v6905 = vld [vmem:[%s6703 + $0x69] sm:$0xff]
        %v6906 = vld [vmem:[%s6703 + $0x79] sm:$0xff]
        %v6907 = vld [vmem:[%s6703 + $0x81] sm:$0xff]
        %v6908 = vld [vmem:[%s6703 + $0x91] sm:$0xff]
        %v6909 = vld [vmem:[%s6703 + $0x99] sm:$0xff]
        %v6910 = vld [vmem:[%s6703 + $0xa9] sm:$0xff]
        %v6911 = vld [vmem:[%s6703 + $0xb1] sm:$0xff]
        %v6912 = vld [vmem:[%s6703 + $0xc1] sm:$0xff]
        %v6913 = vld [vmem:[%s6703 + $0xc9] sm:$0xff]
        %v6914 = vld [vmem:[%s6703 + $0xd9] sm:$0xff]
        %v6915 = vld [vmem:[%s6703 + $0xe1] sm:$0xff]
        %v6916 = vld [vmem:[%s6703 + $0xf1] sm:$0xff]
        %v6917 = vld [vmem:[%s6703 + $0xf9] sm:$0xff]
        %v6918 = vld [vmem:[%s6703 + $0x109] sm:$0xff]
        %v6919 = vld [vmem:[%s6703 + $0x111] sm:$0xff]
        %v6920 = vld [vmem:[%s6703 + $0x121] sm:$0xff]
        %v6921 = vld [vmem:[%s6703 + $0x129] sm:$0xff]
        %v6922 = vld [vmem:[%s6703 + $0x139] sm:$0xff]
        %v6923 = vld [vmem:[%s6703 + $0x141] sm:$0xff]
        %v6924 = vld [vmem:[%s6703 + $0x151] sm:$0xff]
        %v6925 = vld [vmem:[%s6703 + $0x159] sm:$0xff]
        %v6926 = vld [vmem:[%s6703 + $0x169] sm:$0xff]
        %v6927 = vld [vmem:[%s6703 + $0x171] sm:$0xff]
        %6960 = vrot.lane.b32.xlu0 %v6896, 16
        %v6961 = vpop.permute.xlu0 %6960
        %6962 = vrot.lane.b32.xlu0 %v6897, 16
        %v6963 = vpop.permute.xlu0 %6962
        %6964 = vrot.lane.b32.xlu0 %v6898, 16
        %v6965 = vpop.permute.xlu0 %6964
        %6966 = vrot.lane.b32.xlu0 %v6899, 16
        %v6967 = vpop.permute.xlu0 %6966
        %6968 = vrot.lane.b32.xlu0 %v6900, 16
        %v6969 = vpop.permute.xlu0 %6968
        %6970 = vrot.lane.b32.xlu0 %v6901, 16
        %v6971 = vpop.permute.xlu0 %6970
        %6972 = vrot.lane.b32.xlu0 %v6902, 16
        %v6973 = vpop.permute.xlu0 %6972
        %6974 = vrot.lane.b32.xlu0 %v6903, 16
        %v6975 = vpop.permute.xlu0 %6974
        %6976 = vrot.lane.b32.xlu0 %v6904, 16
        %v6977 = vpop.permute.xlu0 %6976
        %6978 = vrot.lane.b32.xlu0 %v6905, 16
        %v6979 = vpop.permute.xlu0 %6978
        %6980 = vrot.lane.b32.xlu0 %v6906, 16
        %v6981 = vpop.permute.xlu0 %6980
        %6982 = vrot.lane.b32.xlu0 %v6907, 16
        %v6983 = vpop.permute.xlu0 %6982
        %6984 = vrot.lane.b32.xlu0 %v6908, 16
        %v6985 = vpop.permute.xlu0 %6984
        %6986 = vrot.lane.b32.xlu0 %v6909, 16
        %v6987 = vpop.permute.xlu0 %6986
        %6988 = vrot.lane.b32.xlu0 %v6910, 16
        %v6989 = vpop.permute.xlu0 %6988
        %6990 = vrot.lane.b32.xlu0 %v6911, 16
        %v6991 = vpop.permute.xlu0 %6990
        %6992 = vrot.lane.b32.xlu0 %v6912, 16
        %v6993 = vpop.permute.xlu0 %6992
        %6994 = vrot.lane.b32.xlu0 %v6913, 16
        %v6995 = vpop.permute.xlu0 %6994
        %6996 = vrot.lane.b32.xlu0 %v6914, 16
        %v6997 = vpop.permute.xlu0 %6996
        %6998 = vrot.lane.b32.xlu0 %v6915, 16
        %v6999 = vpop.permute.xlu0 %6998
        %7000 = vrot.lane.b32.xlu0 %v6916, 16
        %v7001 = vpop.permute.xlu0 %7000
        %7002 = vrot.lane.b32.xlu0 %v6917, 16
        %v7003 = vpop.permute.xlu0 %7002
        %7004 = vrot.lane.b32.xlu0 %v6918, 16
        %v7005 = vpop.permute.xlu0 %7004
        %7006 = vrot.lane.b32.xlu0 %v6919, 16
        %v7007 = vpop.permute.xlu0 %7006
        %7008 = vrot.lane.b32.xlu0 %v6920, 16
        %v7009 = vpop.permute.xlu0 %7008
        %7010 = vrot.lane.b32.xlu0 %v6921, 16
        %v7011 = vpop.permute.xlu0 %7010
        %7012 = vrot.lane.b32.xlu0 %v6922, 16
        %v7013 = vpop.permute.xlu0 %7012
        %7014 = vrot.lane.b32.xlu0 %v6923, 16
        %v7015 = vpop.permute.xlu0 %7014
        %7016 = vrot.lane.b32.xlu0 %v6924, 16
        %v7017 = vpop.permute.xlu0 %7016
        %7018 = vrot.lane.b32.xlu0 %v6925, 16
        %v7019 = vpop.permute.xlu0 %7018
        %7020 = vrot.lane.b32.xlu0 %v6926, 16
        %v7021 = vpop.permute.xlu0 %7020
        %7022 = vrot.lane.b32.xlu0 %v6927, 16
        %v7023 = vpop.permute.xlu0 %7022
        %7056 = vst.msk [vmem:[#allocation2 + $0x8] sm:$0xff] %vm1007, %v6961
        %7057 = vst.msk [vmem:[#allocation2 + $0x18] sm:$0xff] %vm1007, %v6963
        %7058 = vst.msk [vmem:[#allocation2 + $0x28] sm:$0xff] %vm1007, %v6965
        %7059 = vst.msk [vmem:[#allocation2 + $0x38] sm:$0xff] %vm1007, %v6967
        %7060 = vst.msk [vmem:[#allocation2 + $0x48] sm:$0xff] %vm1007, %v6969
        %7061 = vst.msk [vmem:[#allocation2 + $0x58] sm:$0xff] %vm1007, %v6971
        %7062 = vst.msk [vmem:[#allocation2 + $0x68] sm:$0xff] %vm1007, %v6973
        %7063 = vst.msk [vmem:[#allocation2 + $0x78] sm:$0xff] %vm1007, %v6975
        %7064 = vst.msk [vmem:[#allocation2 + $0x88] sm:$0xff] %vm1007, %v6977
        %7065 = vst.msk [vmem:[#allocation2 + $0x98] sm:$0xff] %vm1007, %v6979
        %7066 = vst.msk [vmem:[#allocation2 + $0xa8] sm:$0xff] %vm1007, %v6981
        %7067 = vst.msk [vmem:[#allocation2 + $0xb8] sm:$0xff] %vm1007, %v6983
        %7068 = vst.msk [vmem:[#allocation2 + $0xc8] sm:$0xff] %vm1007, %v6985
        %7069 = vst.msk [vmem:[#allocation2 + $0xd8] sm:$0xff] %vm1007, %v6987
        %7070 = vst.msk [vmem:[#allocation2 + $0xe8] sm:$0xff] %vm1007, %v6989
        %7071 = vst.msk [vmem:[#allocation2 + $0xf8] sm:$0xff] %vm1007, %v6991
        %7072 = vst.msk [vmem:[#allocation2 + $0x108] sm:$0xff] %vm1007, %v6993
        %7073 = vst.msk [vmem:[#allocation2 + $0x118] sm:$0xff] %vm1007, %v6995
        %7074 = vst.msk [vmem:[#allocation2 + $0x128] sm:$0xff] %vm1007, %v6997
        %7075 = vst.msk [vmem:[#allocation2 + $0x138] sm:$0xff] %vm1007, %v6999
        %7076 = vst.msk [vmem:[#allocation2 + $0x148] sm:$0xff] %vm1007, %v7001
        %7077 = vst.msk [vmem:[#allocation2 + $0x158] sm:$0xff] %vm1007, %v7003
        %7078 = vst.msk [vmem:[#allocation2 + $0x168] sm:$0xff] %vm1007, %v7005
        %7079 = vst.msk [vmem:[#allocation2 + $0x178] sm:$0xff] %vm1007, %v7007
        %7080 = vst.msk [vmem:[#allocation2 + $0x188] sm:$0xff] %vm1007, %v7009
        %7081 = vst.msk [vmem:[#allocation2 + $0x198] sm:$0xff] %vm1007, %v7011
        %7082 = vst.msk [vmem:[#allocation2 + $0x1a8] sm:$0xff] %vm1007, %v7013
        %7083 = vst.msk [vmem:[#allocation2 + $0x1b8] sm:$0xff] %vm1007, %v7015
        %7084 = vst.msk [vmem:[#allocation2 + $0x1c8] sm:$0xff] %vm1007, %v7017
        %7085 = vst.msk [vmem:[#allocation2 + $0x1d8] sm:$0xff] %vm1007, %v7019
        %7086 = vst.msk [vmem:[#allocation2 + $0x1e8] sm:$0xff] %vm1007, %v7021
        %7087 = vst.msk [vmem:[#allocation2 + $0x1f8] sm:$0xff] %vm1007, %v7023
        %v7088 = vld [vmem:[%s6703 + $0x2] sm:$0xff]
        %v7089 = vld [vmem:[%s6703 + $0xa] sm:$0xff]
        %v7090 = vld [vmem:[%s6703 + $0x1a] sm:$0xff]
        %v7091 = vld [vmem:[%s6703 + $0x22] sm:$0xff]
        %v7092 = vld [vmem:[%s6703 + $0x32] sm:$0xff]
        %v7093 = vld [vmem:[%s6703 + $0x3a] sm:$0xff]
        %v7094 = vld [vmem:[%s6703 + $0x4a] sm:$0xff]
        %v7095 = vld [vmem:[%s6703 + $0x52] sm:$0xff]
        %v7096 = vld [vmem:[%s6703 + $0x62] sm:$0xff]
        %v7097 = vld [vmem:[%s6703 + $0x6a] sm:$0xff]
        %v7098 = vld [vmem:[%s6703 + $0x7a] sm:$0xff]
        %v7099 = vld [vmem:[%s6703 + $0x82] sm:$0xff]
        %v7100 = vld [vmem:[%s6703 + $0x92] sm:$0xff]
        %v7101 = vld [vmem:[%s6703 + $0x9a] sm:$0xff]
        %v7102 = vld [vmem:[%s6703 + $0xaa] sm:$0xff]
        %v7103 = vld [vmem:[%s6703 + $0xb2] sm:$0xff]
        %v7104 = vld [vmem:[%s6703 + $0xc2] sm:$0xff]
        %v7105 = vld [vmem:[%s6703 + $0xca] sm:$0xff]
        %v7106 = vld [vmem:[%s6703 + $0xda] sm:$0xff]
        %v7107 = vld [vmem:[%s6703 + $0xe2] sm:$0xff]
        %v7108 = vld [vmem:[%s6703 + $0xf2] sm:$0xff]
        %v7109 = vld [vmem:[%s6703 + $0xfa] sm:$0xff]
        %v7110 = vld [vmem:[%s6703 + $0x10a] sm:$0xff]
        %v7111 = vld [vmem:[%s6703 + $0x112] sm:$0xff]
        %v7112 = vld [vmem:[%s6703 + $0x122] sm:$0xff]
        %v7113 = vld [vmem:[%s6703 + $0x12a] sm:$0xff]
        %v7114 = vld [vmem:[%s6703 + $0x13a] sm:$0xff]
        %v7115 = vld [vmem:[%s6703 + $0x142] sm:$0xff]
        %v7116 = vld [vmem:[%s6703 + $0x152] sm:$0xff]
        %v7117 = vld [vmem:[%s6703 + $0x15a] sm:$0xff]
        %v7118 = vld [vmem:[%s6703 + $0x16a] sm:$0xff]
        %v7119 = vld [vmem:[%s6703 + $0x172] sm:$0xff]
        %7152 = vrot.lane.b32.xlu0 %v7088, 20
        %v7153 = vpop.permute.xlu0 %7152
        %7154 = vrot.lane.b32.xlu0 %v7089, 20
        %v7155 = vpop.permute.xlu0 %7154
        %7156 = vrot.lane.b32.xlu0 %v7090, 20
        %v7157 = vpop.permute.xlu0 %7156
        %7158 = vrot.lane.b32.xlu0 %v7091, 20
        %v7159 = vpop.permute.xlu0 %7158
        %7160 = vrot.lane.b32.xlu0 %v7092, 20
        %v7161 = vpop.permute.xlu0 %7160
        %7162 = vrot.lane.b32.xlu0 %v7093, 20
        %v7163 = vpop.permute.xlu0 %7162
        %7164 = vrot.lane.b32.xlu0 %v7094, 20
        %v7165 = vpop.permute.xlu0 %7164
        %7166 = vrot.lane.b32.xlu0 %v7095, 20
        %v7167 = vpop.permute.xlu0 %7166
        %7168 = vrot.lane.b32.xlu0 %v7096, 20
        %v7169 = vpop.permute.xlu0 %7168
        %7170 = vrot.lane.b32.xlu0 %v7097, 20
        %v7171 = vpop.permute.xlu0 %7170
        %7172 = vrot.lane.b32.xlu0 %v7098, 20
        %v7173 = vpop.permute.xlu0 %7172
        %7174 = vrot.lane.b32.xlu0 %v7099, 20
        %v7175 = vpop.permute.xlu0 %7174
        %7176 = vrot.lane.b32.xlu0 %v7100, 20
        %v7177 = vpop.permute.xlu0 %7176
        %7178 = vrot.lane.b32.xlu0 %v7101, 20
        %v7179 = vpop.permute.xlu0 %7178
        %7180 = vrot.lane.b32.xlu0 %v7102, 20
        %v7181 = vpop.permute.xlu0 %7180
        %7182 = vrot.lane.b32.xlu0 %v7103, 20
        %v7183 = vpop.permute.xlu0 %7182
        %7184 = vrot.lane.b32.xlu0 %v7104, 20
        %v7185 = vpop.permute.xlu0 %7184
        %7186 = vrot.lane.b32.xlu0 %v7105, 20
        %v7187 = vpop.permute.xlu0 %7186
        %7188 = vrot.lane.b32.xlu0 %v7106, 20
        %v7189 = vpop.permute.xlu0 %7188
        %7190 = vrot.lane.b32.xlu0 %v7107, 20
        %v7191 = vpop.permute.xlu0 %7190
        %7192 = vrot.lane.b32.xlu0 %v7108, 20
        %v7193 = vpop.permute.xlu0 %7192
        %7194 = vrot.lane.b32.xlu0 %v7109, 20
        %v7195 = vpop.permute.xlu0 %7194
        %7196 = vrot.lane.b32.xlu0 %v7110, 20
        %v7197 = vpop.permute.xlu0 %7196
        %7198 = vrot.lane.b32.xlu0 %v7111, 20
        %v7199 = vpop.permute.xlu0 %7198
        %7200 = vrot.lane.b32.xlu0 %v7112, 20
        %v7201 = vpop.permute.xlu0 %7200
        %7202 = vrot.lane.b32.xlu0 %v7113, 20
        %v7203 = vpop.permute.xlu0 %7202
        %7204 = vrot.lane.b32.xlu0 %v7114, 20
        %v7205 = vpop.permute.xlu0 %7204
        %7206 = vrot.lane.b32.xlu0 %v7115, 20
        %v7207 = vpop.permute.xlu0 %7206
        %7208 = vrot.lane.b32.xlu0 %v7116, 20
        %v7209 = vpop.permute.xlu0 %7208
        %7210 = vrot.lane.b32.xlu0 %v7117, 20
        %v7211 = vpop.permute.xlu0 %7210
        %7212 = vrot.lane.b32.xlu0 %v7118, 20
        %v7213 = vpop.permute.xlu0 %7212
        %7214 = vrot.lane.b32.xlu0 %v7119, 20
        %v7215 = vpop.permute.xlu0 %7214
        %7248 = vst.msk [vmem:[#allocation2 + $0x8] sm:$0xff] %vm1200, %v7153
        %7249 = vst.msk [vmem:[#allocation2 + $0x18] sm:$0xff] %vm1200, %v7155
        %7250 = vst.msk [vmem:[#allocation2 + $0x28] sm:$0xff] %vm1200, %v7157
        %7251 = vst.msk [vmem:[#allocation2 + $0x38] sm:$0xff] %vm1200, %v7159
        %7252 = vst.msk [vmem:[#allocation2 + $0x48] sm:$0xff] %vm1200, %v7161
        %7253 = vst.msk [vmem:[#allocation2 + $0x58] sm:$0xff] %vm1200, %v7163
        %7254 = vst.msk [vmem:[#allocation2 + $0x68] sm:$0xff] %vm1200, %v7165
        %7255 = vst.msk [vmem:[#allocation2 + $0x78] sm:$0xff] %vm1200, %v7167
        %7256 = vst.msk [vmem:[#allocation2 + $0x88] sm:$0xff] %vm1200, %v7169
        %7257 = vst.msk [vmem:[#allocation2 + $0x98] sm:$0xff] %vm1200, %v7171
        %7258 = vst.msk [vmem:[#allocation2 + $0xa8] sm:$0xff] %vm1200, %v7173
        %7259 = vst.msk [vmem:[#allocation2 + $0xb8] sm:$0xff] %vm1200, %v7175
        %7260 = vst.msk [vmem:[#allocation2 + $0xc8] sm:$0xff] %vm1200, %v7177
        %7261 = vst.msk [vmem:[#allocation2 + $0xd8] sm:$0xff] %vm1200, %v7179
        %7262 = vst.msk [vmem:[#allocation2 + $0xe8] sm:$0xff] %vm1200, %v7181
        %7263 = vst.msk [vmem:[#allocation2 + $0xf8] sm:$0xff] %vm1200, %v7183
        %7264 = vst.msk [vmem:[#allocation2 + $0x108] sm:$0xff] %vm1200, %v7185
        %7265 = vst.msk [vmem:[#allocation2 + $0x118] sm:$0xff] %vm1200, %v7187
        %7266 = vst.msk [vmem:[#allocation2 + $0x128] sm:$0xff] %vm1200, %v7189
        %7267 = vst.msk [vmem:[#allocation2 + $0x138] sm:$0xff] %vm1200, %v7191
        %7268 = vst.msk [vmem:[#allocation2 + $0x148] sm:$0xff] %vm1200, %v7193
        %7269 = vst.msk [vmem:[#allocation2 + $0x158] sm:$0xff] %vm1200, %v7195
        %7270 = vst.msk [vmem:[#allocation2 + $0x168] sm:$0xff] %vm1200, %v7197
        %7271 = vst.msk [vmem:[#allocation2 + $0x178] sm:$0xff] %vm1200, %v7199
        %7272 = vst.msk [vmem:[#allocation2 + $0x188] sm:$0xff] %vm1200, %v7201
        %7273 = vst.msk [vmem:[#allocation2 + $0x198] sm:$0xff] %vm1200, %v7203
        %7274 = vst.msk [vmem:[#allocation2 + $0x1a8] sm:$0xff] %vm1200, %v7205
        %7275 = vst.msk [vmem:[#allocation2 + $0x1b8] sm:$0xff] %vm1200, %v7207
        %7276 = vst.msk [vmem:[#allocation2 + $0x1c8] sm:$0xff] %vm1200, %v7209
        %7277 = vst.msk [vmem:[#allocation2 + $0x1d8] sm:$0xff] %vm1200, %v7211
        %7278 = vst.msk [vmem:[#allocation2 + $0x1e8] sm:$0xff] %vm1200, %v7213
        %7279 = vst.msk [vmem:[#allocation2 + $0x1f8] sm:$0xff] %vm1200, %v7215
        %v7280 = vld [vmem:[%s6703 + $0x3] sm:$0xff]
        %v7281 = vld [vmem:[%s6703 + $0xb] sm:$0xff]
        %v7282 = vld [vmem:[%s6703 + $0x1b] sm:$0xff]
        %v7283 = vld [vmem:[%s6703 + $0x23] sm:$0xff]
        %v7284 = vld [vmem:[%s6703 + $0x33] sm:$0xff]
        %v7285 = vld [vmem:[%s6703 + $0x3b] sm:$0xff]
        %v7286 = vld [vmem:[%s6703 + $0x4b] sm:$0xff]
        %v7287 = vld [vmem:[%s6703 + $0x53] sm:$0xff]
        %v7288 = vld [vmem:[%s6703 + $0x63] sm:$0xff]
        %v7289 = vld [vmem:[%s6703 + $0x6b] sm:$0xff]
        %v7290 = vld [vmem:[%s6703 + $0x7b] sm:$0xff]
        %v7291 = vld [vmem:[%s6703 + $0x83] sm:$0xff]
        %v7292 = vld [vmem:[%s6703 + $0x93] sm:$0xff]
        %v7293 = vld [vmem:[%s6703 + $0x9b] sm:$0xff]
        %v7294 = vld [vmem:[%s6703 + $0xab] sm:$0xff]
        %v7295 = vld [vmem:[%s6703 + $0xb3] sm:$0xff]
        %v7296 = vld [vmem:[%s6703 + $0xc3] sm:$0xff]
        %v7297 = vld [vmem:[%s6703 + $0xcb] sm:$0xff]
        %v7298 = vld [vmem:[%s6703 + $0xdb] sm:$0xff]
        %v7299 = vld [vmem:[%s6703 + $0xe3] sm:$0xff]
        %v7300 = vld [vmem:[%s6703 + $0xf3] sm:$0xff]
        %v7301 = vld [vmem:[%s6703 + $0xfb] sm:$0xff]
        %v7302 = vld [vmem:[%s6703 + $0x10b] sm:$0xff]
        %v7303 = vld [vmem:[%s6703 + $0x113] sm:$0xff]
        %v7304 = vld [vmem:[%s6703 + $0x123] sm:$0xff]
        %v7305 = vld [vmem:[%s6703 + $0x12b] sm:$0xff]
        %v7306 = vld [vmem:[%s6703 + $0x13b] sm:$0xff]
        %v7307 = vld [vmem:[%s6703 + $0x143] sm:$0xff]
        %v7308 = vld [vmem:[%s6703 + $0x153] sm:$0xff]
        %v7309 = vld [vmem:[%s6703 + $0x15b] sm:$0xff]
        %v7310 = vld [vmem:[%s6703 + $0x16b] sm:$0xff]
        %v7311 = vld [vmem:[%s6703 + $0x173] sm:$0xff]
        %7344 = vrot.lane.b32.xlu0 %v7280, 24
        %v7345 = vpop.permute.xlu0 %7344
        %7346 = vrot.lane.b32.xlu0 %v7281, 24
        %v7347 = vpop.permute.xlu0 %7346
        %7348 = vrot.lane.b32.xlu0 %v7282, 24
        %v7349 = vpop.permute.xlu0 %7348
        %7350 = vrot.lane.b32.xlu0 %v7283, 24
        %v7351 = vpop.permute.xlu0 %7350
        %7352 = vrot.lane.b32.xlu0 %v7284, 24
        %v7353 = vpop.permute.xlu0 %7352
        %7354 = vrot.lane.b32.xlu0 %v7285, 24
        %v7355 = vpop.permute.xlu0 %7354
        %7356 = vrot.lane.b32.xlu0 %v7286, 24
        %v7357 = vpop.permute.xlu0 %7356
        %7358 = vrot.lane.b32.xlu0 %v7287, 24
        %v7359 = vpop.permute.xlu0 %7358
        %7360 = vrot.lane.b32.xlu0 %v7288, 24
        %v7361 = vpop.permute.xlu0 %7360
        %7362 = vrot.lane.b32.xlu0 %v7289, 24
        %v7363 = vpop.permute.xlu0 %7362
        %7364 = vrot.lane.b32.xlu0 %v7290, 24
        %v7365 = vpop.permute.xlu0 %7364
        %7366 = vrot.lane.b32.xlu0 %v7291, 24
        %v7367 = vpop.permute.xlu0 %7366
        %7368 = vrot.lane.b32.xlu0 %v7292, 24
        %v7369 = vpop.permute.xlu0 %7368
        %7370 = vrot.lane.b32.xlu0 %v7293, 24
        %v7371 = vpop.permute.xlu0 %7370
        %7372 = vrot.lane.b32.xlu0 %v7294, 24
        %v7373 = vpop.permute.xlu0 %7372
        %7374 = vrot.lane.b32.xlu0 %v7295, 24
        %v7375 = vpop.permute.xlu0 %7374
        %7376 = vrot.lane.b32.xlu0 %v7296, 24
        %v7377 = vpop.permute.xlu0 %7376
        %7378 = vrot.lane.b32.xlu0 %v7297, 24
        %v7379 = vpop.permute.xlu0 %7378
        %7380 = vrot.lane.b32.xlu0 %v7298, 24
        %v7381 = vpop.permute.xlu0 %7380
        %7382 = vrot.lane.b32.xlu0 %v7299, 24
        %v7383 = vpop.permute.xlu0 %7382
        %7384 = vrot.lane.b32.xlu0 %v7300, 24
        %v7385 = vpop.permute.xlu0 %7384
        %7386 = vrot.lane.b32.xlu0 %v7301, 24
        %v7387 = vpop.permute.xlu0 %7386
        %7388 = vrot.lane.b32.xlu0 %v7302, 24
        %v7389 = vpop.permute.xlu0 %7388
        %7390 = vrot.lane.b32.xlu0 %v7303, 24
        %v7391 = vpop.permute.xlu0 %7390
        %7392 = vrot.lane.b32.xlu0 %v7304, 24
        %v7393 = vpop.permute.xlu0 %7392
        %7394 = vrot.lane.b32.xlu0 %v7305, 24
        %v7395 = vpop.permute.xlu0 %7394
        %7396 = vrot.lane.b32.xlu0 %v7306, 24
        %v7397 = vpop.permute.xlu0 %7396
        %7398 = vrot.lane.b32.xlu0 %v7307, 24
        %v7399 = vpop.permute.xlu0 %7398
        %7400 = vrot.lane.b32.xlu0 %v7308, 24
        %v7401 = vpop.permute.xlu0 %7400
        %7402 = vrot.lane.b32.xlu0 %v7309, 24
        %v7403 = vpop.permute.xlu0 %7402
        %7404 = vrot.lane.b32.xlu0 %v7310, 24
        %v7405 = vpop.permute.xlu0 %7404
        %7406 = vrot.lane.b32.xlu0 %v7311, 24
        %v7407 = vpop.permute.xlu0 %7406
        %7440 = vst.msk [vmem:[#allocation2 + $0x8] sm:$0xff] %vm1393, %v7345
        %7441 = vst.msk [vmem:[#allocation2 + $0x18] sm:$0xff] %vm1393, %v7347
        %7442 = vst.msk [vmem:[#allocation2 + $0x28] sm:$0xff] %vm1393, %v7349
        %7443 = vst.msk [vmem:[#allocation2 + $0x38] sm:$0xff] %vm1393, %v7351
        %7444 = vst.msk [vmem:[#allocation2 + $0x48] sm:$0xff] %vm1393, %v7353
        %7445 = vst.msk [vmem:[#allocation2 + $0x58] sm:$0xff] %vm1393, %v7355
        %7446 = vst.msk [vmem:[#allocation2 + $0x68] sm:$0xff] %vm1393, %v7357
        %7447 = vst.msk [vmem:[#allocation2 + $0x78] sm:$0xff] %vm1393, %v7359
        %7448 = vst.msk [vmem:[#allocation2 + $0x88] sm:$0xff] %vm1393, %v7361
        %7449 = vst.msk [vmem:[#allocation2 + $0x98] sm:$0xff] %vm1393, %v7363
        %7450 = vst.msk [vmem:[#allocation2 + $0xa8] sm:$0xff] %vm1393, %v7365
        %7451 = vst.msk [vmem:[#allocation2 + $0xb8] sm:$0xff] %vm1393, %v7367
        %7452 = vst.msk [vmem:[#allocation2 + $0xc8] sm:$0xff] %vm1393, %v7369
        %7453 = vst.msk [vmem:[#allocation2 + $0xd8] sm:$0xff] %vm1393, %v7371
        %7454 = vst.msk [vmem:[#allocation2 + $0xe8] sm:$0xff] %vm1393, %v7373
        %7455 = vst.msk [vmem:[#allocation2 + $0xf8] sm:$0xff] %vm1393, %v7375
        %7456 = vst.msk [vmem:[#allocation2 + $0x108] sm:$0xff] %vm1393, %v7377
        %7457 = vst.msk [vmem:[#allocation2 + $0x118] sm:$0xff] %vm1393, %v7379
        %7458 = vst.msk [vmem:[#allocation2 + $0x128] sm:$0xff] %vm1393, %v7381
        %7459 = vst.msk [vmem:[#allocation2 + $0x138] sm:$0xff] %vm1393, %v7383
        %7460 = vst.msk [vmem:[#allocation2 + $0x148] sm:$0xff] %vm1393, %v7385
        %7461 = vst.msk [vmem:[#allocation2 + $0x158] sm:$0xff] %vm1393, %v7387
        %7462 = vst.msk [vmem:[#allocation2 + $0x168] sm:$0xff] %vm1393, %v7389
        %7463 = vst.msk [vmem:[#allocation2 + $0x178] sm:$0xff] %vm1393, %v7391
        %7464 = vst.msk [vmem:[#allocation2 + $0x188] sm:$0xff] %vm1393, %v7393
        %7465 = vst.msk [vmem:[#allocation2 + $0x198] sm:$0xff] %vm1393, %v7395
        %7466 = vst.msk [vmem:[#allocation2 + $0x1a8] sm:$0xff] %vm1393, %v7397
        %7467 = vst.msk [vmem:[#allocation2 + $0x1b8] sm:$0xff] %vm1393, %v7399
        %7468 = vst.msk [vmem:[#allocation2 + $0x1c8] sm:$0xff] %vm1393, %v7401
        %7469 = vst.msk [vmem:[#allocation2 + $0x1d8] sm:$0xff] %vm1393, %v7403
        %7470 = vst.msk [vmem:[#allocation2 + $0x1e8] sm:$0xff] %vm1393, %v7405
        %7471 = vst.msk [vmem:[#allocation2 + $0x1f8] sm:$0xff] %vm1393, %v7407
        %v7472 = vld [vmem:[%s6703 + $0x4] sm:$0xff]
        %v7473 = vld [vmem:[%s6703 + $0xc] sm:$0xff]
        %v7474 = vld [vmem:[%s6703 + $0x1c] sm:$0xff]
        %v7475 = vld [vmem:[%s6703 + $0x24] sm:$0xff]
        %v7476 = vld [vmem:[%s6703 + $0x34] sm:$0xff]
        %v7477 = vld [vmem:[%s6703 + $0x3c] sm:$0xff]
        %v7478 = vld [vmem:[%s6703 + $0x4c] sm:$0xff]
        %v7479 = vld [vmem:[%s6703 + $0x54] sm:$0xff]
        %v7480 = vld [vmem:[%s6703 + $0x64] sm:$0xff]
        %v7481 = vld [vmem:[%s6703 + $0x6c] sm:$0xff]
        %v7482 = vld [vmem:[%s6703 + $0x7c] sm:$0xff]
        %v7483 = vld [vmem:[%s6703 + $0x84] sm:$0xff]
        %v7484 = vld [vmem:[%s6703 + $0x94] sm:$0xff]
        %v7485 = vld [vmem:[%s6703 + $0x9c] sm:$0xff]
        %v7486 = vld [vmem:[%s6703 + $0xac] sm:$0xff]
        %v7487 = vld [vmem:[%s6703 + $0xb4] sm:$0xff]
        %v7488 = vld [vmem:[%s6703 + $0xc4] sm:$0xff]
        %v7489 = vld [vmem:[%s6703 + $0xcc] sm:$0xff]
        %v7490 = vld [vmem:[%s6703 + $0xdc] sm:$0xff]
        %v7491 = vld [vmem:[%s6703 + $0xe4] sm:$0xff]
        %v7492 = vld [vmem:[%s6703 + $0xf4] sm:$0xff]
        %v7493 = vld [vmem:[%s6703 + $0xfc] sm:$0xff]
        %v7494 = vld [vmem:[%s6703 + $0x10c] sm:$0xff]
        %v7495 = vld [vmem:[%s6703 + $0x114] sm:$0xff]
        %v7496 = vld [vmem:[%s6703 + $0x124] sm:$0xff]
        %v7497 = vld [vmem:[%s6703 + $0x12c] sm:$0xff]
        %v7498 = vld [vmem:[%s6703 + $0x13c] sm:$0xff]
        %v7499 = vld [vmem:[%s6703 + $0x144] sm:$0xff]
        %v7500 = vld [vmem:[%s6703 + $0x154] sm:$0xff]
        %v7501 = vld [vmem:[%s6703 + $0x15c] sm:$0xff]
        %v7502 = vld [vmem:[%s6703 + $0x16c] sm:$0xff]
        %v7503 = vld [vmem:[%s6703 + $0x174] sm:$0xff]
        %7536 = vrot.lane.b32.xlu0 %v7472, 28
        %v7537 = vpop.permute.xlu0 %7536
        %7538 = vrot.lane.b32.xlu0 %v7473, 28
        %v7539 = vpop.permute.xlu0 %7538
        %7540 = vrot.lane.b32.xlu0 %v7474, 28
        %v7541 = vpop.permute.xlu0 %7540
        %7542 = vrot.lane.b32.xlu0 %v7475, 28
        %v7543 = vpop.permute.xlu0 %7542
        %7544 = vrot.lane.b32.xlu0 %v7476, 28
        %v7545 = vpop.permute.xlu0 %7544
        %7546 = vrot.lane.b32.xlu0 %v7477, 28
        %v7547 = vpop.permute.xlu0 %7546
        %7548 = vrot.lane.b32.xlu0 %v7478, 28
        %v7549 = vpop.permute.xlu0 %7548
        %7550 = vrot.lane.b32.xlu0 %v7479, 28
        %v7551 = vpop.permute.xlu0 %7550
        %7552 = vrot.lane.b32.xlu0 %v7480, 28
        %v7553 = vpop.permute.xlu0 %7552
        %7554 = vrot.lane.b32.xlu0 %v7481, 28
        %v7555 = vpop.permute.xlu0 %7554
        %7556 = vrot.lane.b32.xlu0 %v7482, 28
        %v7557 = vpop.permute.xlu0 %7556
        %7558 = vrot.lane.b32.xlu0 %v7483, 28
        %v7559 = vpop.permute.xlu0 %7558
        %7560 = vrot.lane.b32.xlu0 %v7484, 28
        %v7561 = vpop.permute.xlu0 %7560
        %7562 = vrot.lane.b32.xlu0 %v7485, 28
        %v7563 = vpop.permute.xlu0 %7562
        %7564 = vrot.lane.b32.xlu0 %v7486, 28
        %v7565 = vpop.permute.xlu0 %7564
        %7566 = vrot.lane.b32.xlu0 %v7487, 28
        %v7567 = vpop.permute.xlu0 %7566
        %7568 = vrot.lane.b32.xlu0 %v7488, 28
        %v7569 = vpop.permute.xlu0 %7568
        %7570 = vrot.lane.b32.xlu0 %v7489, 28
        %v7571 = vpop.permute.xlu0 %7570
        %7572 = vrot.lane.b32.xlu0 %v7490, 28
        %v7573 = vpop.permute.xlu0 %7572
        %7574 = vrot.lane.b32.xlu0 %v7491, 28
        %v7575 = vpop.permute.xlu0 %7574
        %7576 = vrot.lane.b32.xlu0 %v7492, 28
        %v7577 = vpop.permute.xlu0 %7576
        %7578 = vrot.lane.b32.xlu0 %v7493, 28
        %v7579 = vpop.permute.xlu0 %7578
        %7580 = vrot.lane.b32.xlu0 %v7494, 28
        %v7581 = vpop.permute.xlu0 %7580
        %7582 = vrot.lane.b32.xlu0 %v7495, 28
        %v7583 = vpop.permute.xlu0 %7582
        %7584 = vrot.lane.b32.xlu0 %v7496, 28
        %v7585 = vpop.permute.xlu0 %7584
        %7586 = vrot.lane.b32.xlu0 %v7497, 28
        %v7587 = vpop.permute.xlu0 %7586
        %7588 = vrot.lane.b32.xlu0 %v7498, 28
        %v7589 = vpop.permute.xlu0 %7588
        %7590 = vrot.lane.b32.xlu0 %v7499, 28
        %v7591 = vpop.permute.xlu0 %7590
        %7592 = vrot.lane.b32.xlu0 %v7500, 28
        %v7593 = vpop.permute.xlu0 %7592
        %7594 = vrot.lane.b32.xlu0 %v7501, 28
        %v7595 = vpop.permute.xlu0 %7594
        %7596 = vrot.lane.b32.xlu0 %v7502, 28
        %v7597 = vpop.permute.xlu0 %7596
        %7598 = vrot.lane.b32.xlu0 %v7503, 28
        %v7599 = vpop.permute.xlu0 %7598
        %7632 = vst.msk [vmem:[#allocation2 + $0x8] sm:$0xff] %vm1587, %v7537
        %7633 = vst.msk [vmem:[#allocation2 + $0x18] sm:$0xff] %vm1587, %v7539
        %7634 = vst.msk [vmem:[#allocation2 + $0x28] sm:$0xff] %vm1587, %v7541
        %7635 = vst.msk [vmem:[#allocation2 + $0x38] sm:$0xff] %vm1587, %v7543
        %7636 = vst.msk [vmem:[#allocation2 + $0x48] sm:$0xff] %vm1587, %v7545
        %7637 = vst.msk [vmem:[#allocation2 + $0x58] sm:$0xff] %vm1587, %v7547
        %7638 = vst.msk [vmem:[#allocation2 + $0x68] sm:$0xff] %vm1587, %v7549
        %7639 = vst.msk [vmem:[#allocation2 + $0x78] sm:$0xff] %vm1587, %v7551
        %7640 = vst.msk [vmem:[#allocation2 + $0x88] sm:$0xff] %vm1587, %v7553
        %7641 = vst.msk [vmem:[#allocation2 + $0x98] sm:$0xff] %vm1587, %v7555
        %7642 = vst.msk [vmem:[#allocation2 + $0xa8] sm:$0xff] %vm1587, %v7557
        %7643 = vst.msk [vmem:[#allocation2 + $0xb8] sm:$0xff] %vm1587, %v7559
        %7644 = vst.msk [vmem:[#allocation2 + $0xc8] sm:$0xff] %vm1587, %v7561
        %7645 = vst.msk [vmem:[#allocation2 + $0xd8] sm:$0xff] %vm1587, %v7563
        %7646 = vst.msk [vmem:[#allocation2 + $0xe8] sm:$0xff] %vm1587, %v7565
        %7647 = vst.msk [vmem:[#allocation2 + $0xf8] sm:$0xff] %vm1587, %v7567
        %7648 = vst.msk [vmem:[#allocation2 + $0x108] sm:$0xff] %vm1587, %v7569
        %7649 = vst.msk [vmem:[#allocation2 + $0x118] sm:$0xff] %vm1587, %v7571
        %7650 = vst.msk [vmem:[#allocation2 + $0x128] sm:$0xff] %vm1587, %v7573
        %7651 = vst.msk [vmem:[#allocation2 + $0x138] sm:$0xff] %vm1587, %v7575
        %7652 = vst.msk [vmem:[#allocation2 + $0x148] sm:$0xff] %vm1587, %v7577
        %7653 = vst.msk [vmem:[#allocation2 + $0x158] sm:$0xff] %vm1587, %v7579
        %7654 = vst.msk [vmem:[#allocation2 + $0x168] sm:$0xff] %vm1587, %v7581
        %7655 = vst.msk [vmem:[#allocation2 + $0x178] sm:$0xff] %vm1587, %v7583
        %7656 = vst.msk [vmem:[#allocation2 + $0x188] sm:$0xff] %vm1587, %v7585
        %7657 = vst.msk [vmem:[#allocation2 + $0x198] sm:$0xff] %vm1587, %v7587
        %7658 = vst.msk [vmem:[#allocation2 + $0x1a8] sm:$0xff] %vm1587, %v7589
        %7659 = vst.msk [vmem:[#allocation2 + $0x1b8] sm:$0xff] %vm1587, %v7591
        %7660 = vst.msk [vmem:[#allocation2 + $0x1c8] sm:$0xff] %vm1587, %v7593
        %7661 = vst.msk [vmem:[#allocation2 + $0x1d8] sm:$0xff] %vm1587, %v7595
        %7662 = vst.msk [vmem:[#allocation2 + $0x1e8] sm:$0xff] %vm1587, %v7597
        %7663 = vst.msk [vmem:[#allocation2 + $0x1f8] sm:$0xff] %vm1587, %v7599
        %v7664 = vld [vmem:[%s6703 + $0x5] sm:$0xff]
        %v7665 = vld [vmem:[%s6703 + $0xd] sm:$0xff]
        %v7666 = vld [vmem:[%s6703 + $0x1d] sm:$0xff]
        %v7667 = vld [vmem:[%s6703 + $0x25] sm:$0xff]
        %v7668 = vld [vmem:[%s6703 + $0x35] sm:$0xff]
        %v7669 = vld [vmem:[%s6703 + $0x3d] sm:$0xff]
        %v7670 = vld [vmem:[%s6703 + $0x4d] sm:$0xff]
        %v7671 = vld [vmem:[%s6703 + $0x55] sm:$0xff]
        %v7672 = vld [vmem:[%s6703 + $0x65] sm:$0xff]
        %v7673 = vld [vmem:[%s6703 + $0x6d] sm:$0xff]
        %v7674 = vld [vmem:[%s6703 + $0x7d] sm:$0xff]
        %v7675 = vld [vmem:[%s6703 + $0x85] sm:$0xff]
        %v7676 = vld [vmem:[%s6703 + $0x95] sm:$0xff]
        %v7677 = vld [vmem:[%s6703 + $0x9d] sm:$0xff]
        %v7678 = vld [vmem:[%s6703 + $0xad] sm:$0xff]
        %v7679 = vld [vmem:[%s6703 + $0xb5] sm:$0xff]
        %v7680 = vld [vmem:[%s6703 + $0xc5] sm:$0xff]
        %v7681 = vld [vmem:[%s6703 + $0xcd] sm:$0xff]
        %v7682 = vld [vmem:[%s6703 + $0xdd] sm:$0xff]
        %v7683 = vld [vmem:[%s6703 + $0xe5] sm:$0xff]
        %v7684 = vld [vmem:[%s6703 + $0xf5] sm:$0xff]
        %v7685 = vld [vmem:[%s6703 + $0xfd] sm:$0xff]
        %v7686 = vld [vmem:[%s6703 + $0x10d] sm:$0xff]
        %v7687 = vld [vmem:[%s6703 + $0x115] sm:$0xff]
        %v7688 = vld [vmem:[%s6703 + $0x125] sm:$0xff]
        %v7689 = vld [vmem:[%s6703 + $0x12d] sm:$0xff]
        %v7690 = vld [vmem:[%s6703 + $0x13d] sm:$0xff]
        %v7691 = vld [vmem:[%s6703 + $0x145] sm:$0xff]
        %v7692 = vld [vmem:[%s6703 + $0x155] sm:$0xff]
        %v7693 = vld [vmem:[%s6703 + $0x15d] sm:$0xff]
        %v7694 = vld [vmem:[%s6703 + $0x16d] sm:$0xff]
        %v7695 = vld [vmem:[%s6703 + $0x175] sm:$0xff]
        %7728 = vrot.lane.b32.xlu0 %v7664, 32
        %v7729 = vpop.permute.xlu0 %7728
        %7730 = vrot.lane.b32.xlu0 %v7665, 32
        %v7731 = vpop.permute.xlu0 %7730
        %7732 = vrot.lane.b32.xlu0 %v7666, 32
        %v7733 = vpop.permute.xlu0 %7732
        %7734 = vrot.lane.b32.xlu0 %v7667, 32
        %v7735 = vpop.permute.xlu0 %7734
        %7736 = vrot.lane.b32.xlu0 %v7668, 32
        %v7737 = vpop.permute.xlu0 %7736
        %7738 = vrot.lane.b32.xlu0 %v7669, 32
        %v7739 = vpop.permute.xlu0 %7738
        %7740 = vrot.lane.b32.xlu0 %v7670, 32
        %v7741 = vpop.permute.xlu0 %7740
        %7742 = vrot.lane.b32.xlu0 %v7671, 32
        %v7743 = vpop.permute.xlu0 %7742
        %7744 = vrot.lane.b32.xlu0 %v7672, 32
        %v7745 = vpop.permute.xlu0 %7744
        %7746 = vrot.lane.b32.xlu0 %v7673, 32
        %v7747 = vpop.permute.xlu0 %7746
        %7748 = vrot.lane.b32.xlu0 %v7674, 32
        %v7749 = vpop.permute.xlu0 %7748
        %7750 = vrot.lane.b32.xlu0 %v7675, 32
        %v7751 = vpop.permute.xlu0 %7750
        %7752 = vrot.lane.b32.xlu0 %v7676, 32
        %v7753 = vpop.permute.xlu0 %7752
        %7754 = vrot.lane.b32.xlu0 %v7677, 32
        %v7755 = vpop.permute.xlu0 %7754
        %7756 = vrot.lane.b32.xlu0 %v7678, 32
        %v7757 = vpop.permute.xlu0 %7756
        %7758 = vrot.lane.b32.xlu0 %v7679, 32
        %v7759 = vpop.permute.xlu0 %7758
        %7760 = vrot.lane.b32.xlu0 %v7680, 32
        %v7761 = vpop.permute.xlu0 %7760
        %7762 = vrot.lane.b32.xlu0 %v7681, 32
        %v7763 = vpop.permute.xlu0 %7762
        %7764 = vrot.lane.b32.xlu0 %v7682, 32
        %v7765 = vpop.permute.xlu0 %7764
        %7766 = vrot.lane.b32.xlu0 %v7683, 32
        %v7767 = vpop.permute.xlu0 %7766
        %7768 = vrot.lane.b32.xlu0 %v7684, 32
        %v7769 = vpop.permute.xlu0 %7768
        %7770 = vrot.lane.b32.xlu0 %v7685, 32
        %v7771 = vpop.permute.xlu0 %7770
        %7772 = vrot.lane.b32.xlu0 %v7686, 32
        %v7773 = vpop.permute.xlu0 %7772
        %7774 = vrot.lane.b32.xlu0 %v7687, 32
        %v7775 = vpop.permute.xlu0 %7774
        %7776 = vrot.lane.b32.xlu0 %v7688, 32
        %v7777 = vpop.permute.xlu0 %7776
        %7778 = vrot.lane.b32.xlu0 %v7689, 32
        %v7779 = vpop.permute.xlu0 %7778
        %7780 = vrot.lane.b32.xlu0 %v7690, 32
        %v7781 = vpop.permute.xlu0 %7780
        %7782 = vrot.lane.b32.xlu0 %v7691, 32
        %v7783 = vpop.permute.xlu0 %7782
        %7784 = vrot.lane.b32.xlu0 %v7692, 32
        %v7785 = vpop.permute.xlu0 %7784
        %7786 = vrot.lane.b32.xlu0 %v7693, 32
        %v7787 = vpop.permute.xlu0 %7786
        %7788 = vrot.lane.b32.xlu0 %v7694, 32
        %v7789 = vpop.permute.xlu0 %7788
        %7790 = vrot.lane.b32.xlu0 %v7695, 32
        %v7791 = vpop.permute.xlu0 %7790
        %7824 = vst.msk [vmem:[#allocation2 + $0x8] sm:$0xff] %vm1780, %v7729
        %7825 = vst.msk [vmem:[#allocation2 + $0x18] sm:$0xff] %vm1780, %v7731
        %7826 = vst.msk [vmem:[#allocation2 + $0x28] sm:$0xff] %vm1780, %v7733
        %7827 = vst.msk [vmem:[#allocation2 + $0x38] sm:$0xff] %vm1780, %v7735
        %7828 = vst.msk [vmem:[#allocation2 + $0x48] sm:$0xff] %vm1780, %v7737
        %7829 = vst.msk [vmem:[#allocation2 + $0x58] sm:$0xff] %vm1780, %v7739
        %7830 = vst.msk [vmem:[#allocation2 + $0x68] sm:$0xff] %vm1780, %v7741
        %7831 = vst.msk [vmem:[#allocation2 + $0x78] sm:$0xff] %vm1780, %v7743
        %7832 = vst.msk [vmem:[#allocation2 + $0x88] sm:$0xff] %vm1780, %v7745
        %7833 = vst.msk [vmem:[#allocation2 + $0x98] sm:$0xff] %vm1780, %v7747
        %7834 = vst.msk [vmem:[#allocation2 + $0xa8] sm:$0xff] %vm1780, %v7749
        %7835 = vst.msk [vmem:[#allocation2 + $0xb8] sm:$0xff] %vm1780, %v7751
        %7836 = vst.msk [vmem:[#allocation2 + $0xc8] sm:$0xff] %vm1780, %v7753
        %7837 = vst.msk [vmem:[#allocation2 + $0xd8] sm:$0xff] %vm1780, %v7755
        %7838 = vst.msk [vmem:[#allocation2 + $0xe8] sm:$0xff] %vm1780, %v7757
        %7839 = vst.msk [vmem:[#allocation2 + $0xf8] sm:$0xff] %vm1780, %v7759
        %7840 = vst.msk [vmem:[#allocation2 + $0x108] sm:$0xff] %vm1780, %v7761
        %7841 = vst.msk [vmem:[#allocation2 + $0x118] sm:$0xff] %vm1780, %v7763
        %7842 = vst.msk [vmem:[#allocation2 + $0x128] sm:$0xff] %vm1780, %v7765
        %7843 = vst.msk [vmem:[#allocation2 + $0x138] sm:$0xff] %vm1780, %v7767
        %7844 = vst.msk [vmem:[#allocation2 + $0x148] sm:$0xff] %vm1780, %v7769
        %7845 = vst.msk [vmem:[#allocation2 + $0x158] sm:$0xff] %vm1780, %v7771
        %7846 = vst.msk [vmem:[#allocation2 + $0x168] sm:$0xff] %vm1780, %v7773
        %7847 = vst.msk [vmem:[#allocation2 + $0x178] sm:$0xff] %vm1780, %v7775
        %7848 = vst.msk [vmem:[#allocation2 + $0x188] sm:$0xff] %vm1780, %v7777
        %7849 = vst.msk [vmem:[#allocation2 + $0x198] sm:$0xff] %vm1780, %v7779
        %7850 = vst.msk [vmem:[#allocation2 + $0x1a8] sm:$0xff] %vm1780, %v7781
        %7851 = vst.msk [vmem:[#allocation2 + $0x1b8] sm:$0xff] %vm1780, %v7783
        %7852 = vst.msk [vmem:[#allocation2 + $0x1c8] sm:$0xff] %vm1780, %v7785
        %7853 = vst.msk [vmem:[#allocation2 + $0x1d8] sm:$0xff] %vm1780, %v7787
        %7854 = vst.msk [vmem:[#allocation2 + $0x1e8] sm:$0xff] %vm1780, %v7789
        %7855 = vst.msk [vmem:[#allocation2 + $0x1f8] sm:$0xff] %vm1780, %v7791
        %v7856 = vld [vmem:[%s6703 + $0x6] sm:$0xff]
        %v7857 = vld [vmem:[%s6703 + $0xe] sm:$0xff]
        %v7858 = vld [vmem:[%s6703 + $0x1e] sm:$0xff]
        %v7859 = vld [vmem:[%s6703 + $0x26] sm:$0xff]
        %v7860 = vld [vmem:[%s6703 + $0x36] sm:$0xff]
        %v7861 = vld [vmem:[%s6703 + $0x3e] sm:$0xff]
        %v7862 = vld [vmem:[%s6703 + $0x4e] sm:$0xff]
        %v7863 = vld [vmem:[%s6703 + $0x56] sm:$0xff]
        %v7864 = vld [vmem:[%s6703 + $0x66] sm:$0xff]
        %v7865 = vld [vmem:[%s6703 + $0x6e] sm:$0xff]
        %v7866 = vld [vmem:[%s6703 + $0x7e] sm:$0xff]
        %v7867 = vld [vmem:[%s6703 + $0x86] sm:$0xff]
        %v7868 = vld [vmem:[%s6703 + $0x96] sm:$0xff]
        %v7869 = vld [vmem:[%s6703 + $0x9e] sm:$0xff]
        %v7870 = vld [vmem:[%s6703 + $0xae] sm:$0xff]
        %v7871 = vld [vmem:[%s6703 + $0xb6] sm:$0xff]
        %v7872 = vld [vmem:[%s6703 + $0xc6] sm:$0xff]
        %v7873 = vld [vmem:[%s6703 + $0xce] sm:$0xff]
        %v7874 = vld [vmem:[%s6703 + $0xde] sm:$0xff]
        %v7875 = vld [vmem:[%s6703 + $0xe6] sm:$0xff]
        %v7876 = vld [vmem:[%s6703 + $0xf6] sm:$0xff]
        %v7877 = vld [vmem:[%s6703 + $0xfe] sm:$0xff]
        %v7878 = vld [vmem:[%s6703 + $0x10e] sm:$0xff]
        %v7879 = vld [vmem:[%s6703 + $0x116] sm:$0xff]
        %v7880 = vld [vmem:[%s6703 + $0x126] sm:$0xff]
        %v7881 = vld [vmem:[%s6703 + $0x12e] sm:$0xff]
        %v7882 = vld [vmem:[%s6703 + $0x13e] sm:$0xff]
        %v7883 = vld [vmem:[%s6703 + $0x146] sm:$0xff]
        %v7884 = vld [vmem:[%s6703 + $0x156] sm:$0xff]
        %v7885 = vld [vmem:[%s6703 + $0x15e] sm:$0xff]
        %v7886 = vld [vmem:[%s6703 + $0x16e] sm:$0xff]
        %v7887 = vld [vmem:[%s6703 + $0x176] sm:$0xff]
        %7920 = vrot.lane.b32.xlu0 %v7856, 36
        %v7921 = vpop.permute.xlu0 %7920
        %7922 = vrot.lane.b32.xlu0 %v7857, 36
        %v7923 = vpop.permute.xlu0 %7922
        %7924 = vrot.lane.b32.xlu0 %v7858, 36
        %v7925 = vpop.permute.xlu0 %7924
        %7926 = vrot.lane.b32.xlu0 %v7859, 36
        %v7927 = vpop.permute.xlu0 %7926
        %7928 = vrot.lane.b32.xlu0 %v7860, 36
        %v7929 = vpop.permute.xlu0 %7928
        %7930 = vrot.lane.b32.xlu0 %v7861, 36
        %v7931 = vpop.permute.xlu0 %7930
        %7932 = vrot.lane.b32.xlu0 %v7862, 36
        %v7933 = vpop.permute.xlu0 %7932
        %7934 = vrot.lane.b32.xlu0 %v7863, 36
        %v7935 = vpop.permute.xlu0 %7934
        %7936 = vrot.lane.b32.xlu0 %v7864, 36
        %v7937 = vpop.permute.xlu0 %7936
        %7938 = vrot.lane.b32.xlu0 %v7865, 36
        %v7939 = vpop.permute.xlu0 %7938
        %7940 = vrot.lane.b32.xlu0 %v7866, 36
        %v7941 = vpop.permute.xlu0 %7940
        %7942 = vrot.lane.b32.xlu0 %v7867, 36
        %v7943 = vpop.permute.xlu0 %7942
        %7944 = vrot.lane.b32.xlu0 %v7868, 36
        %v7945 = vpop.permute.xlu0 %7944
        %7946 = vrot.lane.b32.xlu0 %v7869, 36
        %v7947 = vpop.permute.xlu0 %7946
        %7948 = vrot.lane.b32.xlu0 %v7870, 36
        %v7949 = vpop.permute.xlu0 %7948
        %7950 = vrot.lane.b32.xlu0 %v7871, 36
        %v7951 = vpop.permute.xlu0 %7950
        %7952 = vrot.lane.b32.xlu0 %v7872, 36
        %v7953 = vpop.permute.xlu0 %7952
        %7954 = vrot.lane.b32.xlu0 %v7873, 36
        %v7955 = vpop.permute.xlu0 %7954
        %7956 = vrot.lane.b32.xlu0 %v7874, 36
        %v7957 = vpop.permute.xlu0 %7956
        %7958 = vrot.lane.b32.xlu0 %v7875, 36
        %v7959 = vpop.permute.xlu0 %7958
        %7960 = vrot.lane.b32.xlu0 %v7876, 36
        %v7961 = vpop.permute.xlu0 %7960
        %7962 = vrot.lane.b32.xlu0 %v7877, 36
        %v7963 = vpop.permute.xlu0 %7962
        %7964 = vrot.lane.b32.xlu0 %v7878, 36
        %v7965 = vpop.permute.xlu0 %7964
        %7966 = vrot.lane.b32.xlu0 %v7879, 36
        %v7967 = vpop.permute.xlu0 %7966
        %7968 = vrot.lane.b32.xlu0 %v7880, 36
        %v7969 = vpop.permute.xlu0 %7968
        %7970 = vrot.lane.b32.xlu0 %v7881, 36
        %v7971 = vpop.permute.xlu0 %7970
        %7972 = vrot.lane.b32.xlu0 %v7882, 36
        %v7973 = vpop.permute.xlu0 %7972
        %7974 = vrot.lane.b32.xlu0 %v7883, 36
        %v7975 = vpop.permute.xlu0 %7974
        %7976 = vrot.lane.b32.xlu0 %v7884, 36
        %v7977 = vpop.permute.xlu0 %7976
        %7978 = vrot.lane.b32.xlu0 %v7885, 36
        %v7979 = vpop.permute.xlu0 %7978
        %7980 = vrot.lane.b32.xlu0 %v7886, 36
        %v7981 = vpop.permute.xlu0 %7980
        %7982 = vrot.lane.b32.xlu0 %v7887, 36
        %v7983 = vpop.permute.xlu0 %7982
        %8016 = vst.msk [vmem:[#allocation2 + $0x8] sm:$0xff] %vm1973, %v7921
        %8017 = vst.msk [vmem:[#allocation2 + $0x18] sm:$0xff] %vm1973, %v7923
        %8018 = vst.msk [vmem:[#allocation2 + $0x28] sm:$0xff] %vm1973, %v7925
        %8019 = vst.msk [vmem:[#allocation2 + $0x38] sm:$0xff] %vm1973, %v7927
        %8020 = vst.msk [vmem:[#allocation2 + $0x48] sm:$0xff] %vm1973, %v7929
        %8021 = vst.msk [vmem:[#allocation2 + $0x58] sm:$0xff] %vm1973, %v7931
        %8022 = vst.msk [vmem:[#allocation2 + $0x68] sm:$0xff] %vm1973, %v7933
        %8023 = vst.msk [vmem:[#allocation2 + $0x78] sm:$0xff] %vm1973, %v7935
        %8024 = vst.msk [vmem:[#allocation2 + $0x88] sm:$0xff] %vm1973, %v7937
        %8025 = vst.msk [vmem:[#allocation2 + $0x98] sm:$0xff] %vm1973, %v7939
        %8026 = vst.msk [vmem:[#allocation2 + $0xa8] sm:$0xff] %vm1973, %v7941
        %8027 = vst.msk [vmem:[#allocation2 + $0xb8] sm:$0xff] %vm1973, %v7943
        %8028 = vst.msk [vmem:[#allocation2 + $0xc8] sm:$0xff] %vm1973, %v7945
        %8029 = vst.msk [vmem:[#allocation2 + $0xd8] sm:$0xff] %vm1973, %v7947
        %8030 = vst.msk [vmem:[#allocation2 + $0xe8] sm:$0xff] %vm1973, %v7949
        %8031 = vst.msk [vmem:[#allocation2 + $0xf8] sm:$0xff] %vm1973, %v7951
        %8032 = vst.msk [vmem:[#allocation2 + $0x108] sm:$0xff] %vm1973, %v7953
        %8033 = vst.msk [vmem:[#allocation2 + $0x118] sm:$0xff] %vm1973, %v7955
        %8034 = vst.msk [vmem:[#allocation2 + $0x128] sm:$0xff] %vm1973, %v7957
        %8035 = vst.msk [vmem:[#allocation2 + $0x138] sm:$0xff] %vm1973, %v7959
        %8036 = vst.msk [vmem:[#allocation2 + $0x148] sm:$0xff] %vm1973, %v7961
        %8037 = vst.msk [vmem:[#allocation2 + $0x158] sm:$0xff] %vm1973, %v7963
        %8038 = vst.msk [vmem:[#allocation2 + $0x168] sm:$0xff] %vm1973, %v7965
        %8039 = vst.msk [vmem:[#allocation2 + $0x178] sm:$0xff] %vm1973, %v7967
        %8040 = vst.msk [vmem:[#allocation2 + $0x188] sm:$0xff] %vm1973, %v7969
        %8041 = vst.msk [vmem:[#allocation2 + $0x198] sm:$0xff] %vm1973, %v7971
        %8042 = vst.msk [vmem:[#allocation2 + $0x1a8] sm:$0xff] %vm1973, %v7973
        %8043 = vst.msk [vmem:[#allocation2 + $0x1b8] sm:$0xff] %vm1973, %v7975
        %8044 = vst.msk [vmem:[#allocation2 + $0x1c8] sm:$0xff] %vm1973, %v7977
        %8045 = vst.msk [vmem:[#allocation2 + $0x1d8] sm:$0xff] %vm1973, %v7979
        %8046 = vst.msk [vmem:[#allocation2 + $0x1e8] sm:$0xff] %vm1973, %v7981
        %8047 = vst.msk [vmem:[#allocation2 + $0x1f8] sm:$0xff] %vm1973, %v7983
        %s8048 = scalar_lea.vmem %s197, 144
        %v8049 = vld [vmem:[%s8048] sm:$0xff]
        %v8050 = vld [vmem:[%s8048 + $0x8] sm:$0xff]
        %v8051 = vld [vmem:[%s8048 + $0x18] sm:$0xff]
        %v8052 = vld [vmem:[%s8048 + $0x20] sm:$0xff]
        %v8053 = vld [vmem:[%s8048 + $0x30] sm:$0xff]
        %v8054 = vld [vmem:[%s8048 + $0x38] sm:$0xff]
        %v8055 = vld [vmem:[%s8048 + $0x48] sm:$0xff]
        %v8056 = vld [vmem:[%s8048 + $0x50] sm:$0xff]
        %v8057 = vld [vmem:[%s8048 + $0x60] sm:$0xff]
        %v8058 = vld [vmem:[%s8048 + $0x68] sm:$0xff]
        %v8059 = vld [vmem:[%s8048 + $0x78] sm:$0xff]
        %v8060 = vld [vmem:[%s8048 + $0x80] sm:$0xff]
        %v8061 = vld [vmem:[%s8048 + $0x90] sm:$0xff]
        %v8062 = vld [vmem:[%s8048 + $0x98] sm:$0xff]
        %v8063 = vld [vmem:[%s8048 + $0xa8] sm:$0xff]
        %v8064 = vld [vmem:[%s8048 + $0xb0] sm:$0xff]
        %v8065 = vld [vmem:[%s8048 + $0xc0] sm:$0xff]
        %v8066 = vld [vmem:[%s8048 + $0xc8] sm:$0xff]
        %v8067 = vld [vmem:[%s8048 + $0xd8] sm:$0xff]
        %v8068 = vld [vmem:[%s8048 + $0xe0] sm:$0xff]
        %v8069 = vld [vmem:[%s8048 + $0xf0] sm:$0xff]
        %v8070 = vld [vmem:[%s8048 + $0xf8] sm:$0xff]
        %v8071 = vld [vmem:[%s8048 + $0x108] sm:$0xff]
        %v8072 = vld [vmem:[%s8048 + $0x110] sm:$0xff]
        %v8073 = vld [vmem:[%s8048 + $0x120] sm:$0xff]
        %v8074 = vld [vmem:[%s8048 + $0x128] sm:$0xff]
        %v8075 = vld [vmem:[%s8048 + $0x138] sm:$0xff]
        %v8076 = vld [vmem:[%s8048 + $0x140] sm:$0xff]
        %v8077 = vld [vmem:[%s8048 + $0x150] sm:$0xff]
        %v8078 = vld [vmem:[%s8048 + $0x158] sm:$0xff]
        %v8079 = vld [vmem:[%s8048 + $0x168] sm:$0xff]
        %v8080 = vld [vmem:[%s8048 + $0x170] sm:$0xff]
        %8113 = vrot.lane.b32.xlu0 %v8049, 40
        %v8114 = vpop.permute.xlu0 %8113
        %8115 = vrot.lane.b32.xlu0 %v8050, 40
        %v8116 = vpop.permute.xlu0 %8115
        %8117 = vrot.lane.b32.xlu0 %v8051, 40
        %v8118 = vpop.permute.xlu0 %8117
        %8119 = vrot.lane.b32.xlu0 %v8052, 40
        %v8120 = vpop.permute.xlu0 %8119
        %8121 = vrot.lane.b32.xlu0 %v8053, 40
        %v8122 = vpop.permute.xlu0 %8121
        %8123 = vrot.lane.b32.xlu0 %v8054, 40
        %v8124 = vpop.permute.xlu0 %8123
        %8125 = vrot.lane.b32.xlu0 %v8055, 40
        %v8126 = vpop.permute.xlu0 %8125
        %8127 = vrot.lane.b32.xlu0 %v8056, 40
        %v8128 = vpop.permute.xlu0 %8127
        %8129 = vrot.lane.b32.xlu0 %v8057, 40
        %v8130 = vpop.permute.xlu0 %8129
        %8131 = vrot.lane.b32.xlu0 %v8058, 40
        %v8132 = vpop.permute.xlu0 %8131
        %8133 = vrot.lane.b32.xlu0 %v8059, 40
        %v8134 = vpop.permute.xlu0 %8133
        %8135 = vrot.lane.b32.xlu0 %v8060, 40
        %v8136 = vpop.permute.xlu0 %8135
        %8137 = vrot.lane.b32.xlu0 %v8061, 40
        %v8138 = vpop.permute.xlu0 %8137
        %8139 = vrot.lane.b32.xlu0 %v8062, 40
        %v8140 = vpop.permute.xlu0 %8139
        %8141 = vrot.lane.b32.xlu0 %v8063, 40
        %v8142 = vpop.permute.xlu0 %8141
        %8143 = vrot.lane.b32.xlu0 %v8064, 40
        %v8144 = vpop.permute.xlu0 %8143
        %8145 = vrot.lane.b32.xlu0 %v8065, 40
        %v8146 = vpop.permute.xlu0 %8145
        %8147 = vrot.lane.b32.xlu0 %v8066, 40
        %v8148 = vpop.permute.xlu0 %8147
        %8149 = vrot.lane.b32.xlu0 %v8067, 40
        %v8150 = vpop.permute.xlu0 %8149
        %8151 = vrot.lane.b32.xlu0 %v8068, 40
        %v8152 = vpop.permute.xlu0 %8151
        %8153 = vrot.lane.b32.xlu0 %v8069, 40
        %v8154 = vpop.permute.xlu0 %8153
        %8155 = vrot.lane.b32.xlu0 %v8070, 40
        %v8156 = vpop.permute.xlu0 %8155
        %8157 = vrot.lane.b32.xlu0 %v8071, 40
        %v8158 = vpop.permute.xlu0 %8157
        %8159 = vrot.lane.b32.xlu0 %v8072, 40
        %v8160 = vpop.permute.xlu0 %8159
        %8161 = vrot.lane.b32.xlu0 %v8073, 40
        %v8162 = vpop.permute.xlu0 %8161
        %8163 = vrot.lane.b32.xlu0 %v8074, 40
        %v8164 = vpop.permute.xlu0 %8163
        %8165 = vrot.lane.b32.xlu0 %v8075, 40
        %v8166 = vpop.permute.xlu0 %8165
        %8167 = vrot.lane.b32.xlu0 %v8076, 40
        %v8168 = vpop.permute.xlu0 %8167
        %8169 = vrot.lane.b32.xlu0 %v8077, 40
        %v8170 = vpop.permute.xlu0 %8169
        %8171 = vrot.lane.b32.xlu0 %v8078, 40
        %v8172 = vpop.permute.xlu0 %8171
        %8173 = vrot.lane.b32.xlu0 %v8079, 40
        %v8174 = vpop.permute.xlu0 %8173
        %8175 = vrot.lane.b32.xlu0 %v8080, 40
        %v8176 = vpop.permute.xlu0 %8175
        %8209 = vst.msk [vmem:[#allocation2 + $0x8] sm:$0xff] %vm2166, %v8114
        %8210 = vst.msk [vmem:[#allocation2 + $0x18] sm:$0xff] %vm2166, %v8116
        %8211 = vst.msk [vmem:[#allocation2 + $0x28] sm:$0xff] %vm2166, %v8118
        %8212 = vst.msk [vmem:[#allocation2 + $0x38] sm:$0xff] %vm2166, %v8120
        %8213 = vst.msk [vmem:[#allocation2 + $0x48] sm:$0xff] %vm2166, %v8122
        %8214 = vst.msk [vmem:[#allocation2 + $0x58] sm:$0xff] %vm2166, %v8124
        %8215 = vst.msk [vmem:[#allocation2 + $0x68] sm:$0xff] %vm2166, %v8126
        %8216 = vst.msk [vmem:[#allocation2 + $0x78] sm:$0xff] %vm2166, %v8128
        %8217 = vst.msk [vmem:[#allocation2 + $0x88] sm:$0xff] %vm2166, %v8130
        %8218 = vst.msk [vmem:[#allocation2 + $0x98] sm:$0xff] %vm2166, %v8132
        %8219 = vst.msk [vmem:[#allocation2 + $0xa8] sm:$0xff] %vm2166, %v8134
        %8220 = vst.msk [vmem:[#allocation2 + $0xb8] sm:$0xff] %vm2166, %v8136
        %8221 = vst.msk [vmem:[#allocation2 + $0xc8] sm:$0xff] %vm2166, %v8138
        %8222 = vst.msk [vmem:[#allocation2 + $0xd8] sm:$0xff] %vm2166, %v8140
        %8223 = vst.msk [vmem:[#allocation2 + $0xe8] sm:$0xff] %vm2166, %v8142
        %8224 = vst.msk [vmem:[#allocation2 + $0xf8] sm:$0xff] %vm2166, %v8144
        %8225 = vst.msk [vmem:[#allocation2 + $0x108] sm:$0xff] %vm2166, %v8146
        %8226 = vst.msk [vmem:[#allocation2 + $0x118] sm:$0xff] %vm2166, %v8148
        %8227 = vst.msk [vmem:[#allocation2 + $0x128] sm:$0xff] %vm2166, %v8150
        %8228 = vst.msk [vmem:[#allocation2 + $0x138] sm:$0xff] %vm2166, %v8152
        %8229 = vst.msk [vmem:[#allocation2 + $0x148] sm:$0xff] %vm2166, %v8154
        %8230 = vst.msk [vmem:[#allocation2 + $0x158] sm:$0xff] %vm2166, %v8156
        %8231 = vst.msk [vmem:[#allocation2 + $0x168] sm:$0xff] %vm2166, %v8158
        %8232 = vst.msk [vmem:[#allocation2 + $0x178] sm:$0xff] %vm2166, %v8160
        %8233 = vst.msk [vmem:[#allocation2 + $0x188] sm:$0xff] %vm2166, %v8162
        %8234 = vst.msk [vmem:[#allocation2 + $0x198] sm:$0xff] %vm2166, %v8164
        %8235 = vst.msk [vmem:[#allocation2 + $0x1a8] sm:$0xff] %vm2166, %v8166
        %8236 = vst.msk [vmem:[#allocation2 + $0x1b8] sm:$0xff] %vm2166, %v8168
        %8237 = vst.msk [vmem:[#allocation2 + $0x1c8] sm:$0xff] %vm2166, %v8170
        %8238 = vst.msk [vmem:[#allocation2 + $0x1d8] sm:$0xff] %vm2166, %v8172
        %8239 = vst.msk [vmem:[#allocation2 + $0x1e8] sm:$0xff] %vm2166, %v8174
        %8240 = vst.msk [vmem:[#allocation2 + $0x1f8] sm:$0xff] %vm2166, %v8176
        %v8241 = vld [vmem:[%s8048 + $0x1] sm:$0xff]
        %v8242 = vld [vmem:[%s8048 + $0x9] sm:$0xff]
        %v8243 = vld [vmem:[%s8048 + $0x19] sm:$0xff]
        %v8244 = vld [vmem:[%s8048 + $0x21] sm:$0xff]
        %v8245 = vld [vmem:[%s8048 + $0x31] sm:$0xff]
        %v8246 = vld [vmem:[%s8048 + $0x39] sm:$0xff]
        %v8247 = vld [vmem:[%s8048 + $0x49] sm:$0xff]
        %v8248 = vld [vmem:[%s8048 + $0x51] sm:$0xff]
        %v8249 = vld [vmem:[%s8048 + $0x61] sm:$0xff]
        %v8250 = vld [vmem:[%s8048 + $0x69] sm:$0xff]
        %v8251 = vld [vmem:[%s8048 + $0x79] sm:$0xff]
        %v8252 = vld [vmem:[%s8048 + $0x81] sm:$0xff]
        %v8253 = vld [vmem:[%s8048 + $0x91] sm:$0xff]
        %v8254 = vld [vmem:[%s8048 + $0x99] sm:$0xff]
        %v8255 = vld [vmem:[%s8048 + $0xa9] sm:$0xff]
        %v8256 = vld [vmem:[%s8048 + $0xb1] sm:$0xff]
        %v8257 = vld [vmem:[%s8048 + $0xc1] sm:$0xff]
        %v8258 = vld [vmem:[%s8048 + $0xc9] sm:$0xff]
        %v8259 = vld [vmem:[%s8048 + $0xd9] sm:$0xff]
        %v8260 = vld [vmem:[%s8048 + $0xe1] sm:$0xff]
        %v8261 = vld [vmem:[%s8048 + $0xf1] sm:$0xff]
        %v8262 = vld [vmem:[%s8048 + $0xf9] sm:$0xff]
        %v8263 = vld [vmem:[%s8048 + $0x109] sm:$0xff]
        %v8264 = vld [vmem:[%s8048 + $0x111] sm:$0xff]
        %v8265 = vld [vmem:[%s8048 + $0x121] sm:$0xff]
        %v8266 = vld [vmem:[%s8048 + $0x129] sm:$0xff]
        %v8267 = vld [vmem:[%s8048 + $0x139] sm:$0xff]
        %v8268 = vld [vmem:[%s8048 + $0x141] sm:$0xff]
        %v8269 = vld [vmem:[%s8048 + $0x151] sm:$0xff]
        %v8270 = vld [vmem:[%s8048 + $0x159] sm:$0xff]
        %v8271 = vld [vmem:[%s8048 + $0x169] sm:$0xff]
        %v8272 = vld [vmem:[%s8048 + $0x171] sm:$0xff]
        %8305 = vrot.lane.b32.xlu0 %v8241, 44
        %v8306 = vpop.permute.xlu0 %8305
        %8307 = vrot.lane.b32.xlu0 %v8242, 44
        %v8308 = vpop.permute.xlu0 %8307
        %8309 = vrot.lane.b32.xlu0 %v8243, 44
        %v8310 = vpop.permute.xlu0 %8309
        %8311 = vrot.lane.b32.xlu0 %v8244, 44
        %v8312 = vpop.permute.xlu0 %8311
        %8313 = vrot.lane.b32.xlu0 %v8245, 44
        %v8314 = vpop.permute.xlu0 %8313
        %8315 = vrot.lane.b32.xlu0 %v8246, 44
        %v8316 = vpop.permute.xlu0 %8315
        %8317 = vrot.lane.b32.xlu0 %v8247, 44
        %v8318 = vpop.permute.xlu0 %8317
        %8319 = vrot.lane.b32.xlu0 %v8248, 44
        %v8320 = vpop.permute.xlu0 %8319
        %8321 = vrot.lane.b32.xlu0 %v8249, 44
        %v8322 = vpop.permute.xlu0 %8321
        %8323 = vrot.lane.b32.xlu0 %v8250, 44
        %v8324 = vpop.permute.xlu0 %8323
        %8325 = vrot.lane.b32.xlu0 %v8251, 44
        %v8326 = vpop.permute.xlu0 %8325
        %8327 = vrot.lane.b32.xlu0 %v8252, 44
        %v8328 = vpop.permute.xlu0 %8327
        %8329 = vrot.lane.b32.xlu0 %v8253, 44
        %v8330 = vpop.permute.xlu0 %8329
        %8331 = vrot.lane.b32.xlu0 %v8254, 44
        %v8332 = vpop.permute.xlu0 %8331
        %8333 = vrot.lane.b32.xlu0 %v8255, 44
        %v8334 = vpop.permute.xlu0 %8333
        %8335 = vrot.lane.b32.xlu0 %v8256, 44
        %v8336 = vpop.permute.xlu0 %8335
        %8337 = vrot.lane.b32.xlu0 %v8257, 44
        %v8338 = vpop.permute.xlu0 %8337
        %8339 = vrot.lane.b32.xlu0 %v8258, 44
        %v8340 = vpop.permute.xlu0 %8339
        %8341 = vrot.lane.b32.xlu0 %v8259, 44
        %v8342 = vpop.permute.xlu0 %8341
        %8343 = vrot.lane.b32.xlu0 %v8260, 44
        %v8344 = vpop.permute.xlu0 %8343
        %8345 = vrot.lane.b32.xlu0 %v8261, 44
        %v8346 = vpop.permute.xlu0 %8345
        %8347 = vrot.lane.b32.xlu0 %v8262, 44
        %v8348 = vpop.permute.xlu0 %8347
        %8349 = vrot.lane.b32.xlu0 %v8263, 44
        %v8350 = vpop.permute.xlu0 %8349
        %8351 = vrot.lane.b32.xlu0 %v8264, 44
        %v8352 = vpop.permute.xlu0 %8351
        %8353 = vrot.lane.b32.xlu0 %v8265, 44
        %v8354 = vpop.permute.xlu0 %8353
        %8355 = vrot.lane.b32.xlu0 %v8266, 44
        %v8356 = vpop.permute.xlu0 %8355
        %8357 = vrot.lane.b32.xlu0 %v8267, 44
        %v8358 = vpop.permute.xlu0 %8357
        %8359 = vrot.lane.b32.xlu0 %v8268, 44
        %v8360 = vpop.permute.xlu0 %8359
        %8361 = vrot.lane.b32.xlu0 %v8269, 44
        %v8362 = vpop.permute.xlu0 %8361
        %8363 = vrot.lane.b32.xlu0 %v8270, 44
        %v8364 = vpop.permute.xlu0 %8363
        %8365 = vrot.lane.b32.xlu0 %v8271, 44
        %v8366 = vpop.permute.xlu0 %8365
        %8367 = vrot.lane.b32.xlu0 %v8272, 44
        %v8368 = vpop.permute.xlu0 %8367
        %8401 = vst.msk [vmem:[#allocation2 + $0x8] sm:$0xff] %vm2359, %v8306
        %8402 = vst.msk [vmem:[#allocation2 + $0x18] sm:$0xff] %vm2359, %v8308
        %8403 = vst.msk [vmem:[#allocation2 + $0x28] sm:$0xff] %vm2359, %v8310
        %8404 = vst.msk [vmem:[#allocation2 + $0x38] sm:$0xff] %vm2359, %v8312
        %8405 = vst.msk [vmem:[#allocation2 + $0x48] sm:$0xff] %vm2359, %v8314
        %8406 = vst.msk [vmem:[#allocation2 + $0x58] sm:$0xff] %vm2359, %v8316
        %8407 = vst.msk [vmem:[#allocation2 + $0x68] sm:$0xff] %vm2359, %v8318
        %8408 = vst.msk [vmem:[#allocation2 + $0x78] sm:$0xff] %vm2359, %v8320
        %8409 = vst.msk [vmem:[#allocation2 + $0x88] sm:$0xff] %vm2359, %v8322
        %8410 = vst.msk [vmem:[#allocation2 + $0x98] sm:$0xff] %vm2359, %v8324
        %8411 = vst.msk [vmem:[#allocation2 + $0xa8] sm:$0xff] %vm2359, %v8326
        %8412 = vst.msk [vmem:[#allocation2 + $0xb8] sm:$0xff] %vm2359, %v8328
        %8413 = vst.msk [vmem:[#allocation2 + $0xc8] sm:$0xff] %vm2359, %v8330
        %8414 = vst.msk [vmem:[#allocation2 + $0xd8] sm:$0xff] %vm2359, %v8332
        %8415 = vst.msk [vmem:[#allocation2 + $0xe8] sm:$0xff] %vm2359, %v8334
        %8416 = vst.msk [vmem:[#allocation2 + $0xf8] sm:$0xff] %vm2359, %v8336
        %8417 = vst.msk [vmem:[#allocation2 + $0x108] sm:$0xff] %vm2359, %v8338
        %8418 = vst.msk [vmem:[#allocation2 + $0x118] sm:$0xff] %vm2359, %v8340
        %8419 = vst.msk [vmem:[#allocation2 + $0x128] sm:$0xff] %vm2359, %v8342
        %8420 = vst.msk [vmem:[#allocation2 + $0x138] sm:$0xff] %vm2359, %v8344
        %8421 = vst.msk [vmem:[#allocation2 + $0x148] sm:$0xff] %vm2359, %v8346
        %8422 = vst.msk [vmem:[#allocation2 + $0x158] sm:$0xff] %vm2359, %v8348
        %8423 = vst.msk [vmem:[#allocation2 + $0x168] sm:$0xff] %vm2359, %v8350
        %8424 = vst.msk [vmem:[#allocation2 + $0x178] sm:$0xff] %vm2359, %v8352
        %8425 = vst.msk [vmem:[#allocation2 + $0x188] sm:$0xff] %vm2359, %v8354
        %8426 = vst.msk [vmem:[#allocation2 + $0x198] sm:$0xff] %vm2359, %v8356
        %8427 = vst.msk [vmem:[#allocation2 + $0x1a8] sm:$0xff] %vm2359, %v8358
        %8428 = vst.msk [vmem:[#allocation2 + $0x1b8] sm:$0xff] %vm2359, %v8360
        %8429 = vst.msk [vmem:[#allocation2 + $0x1c8] sm:$0xff] %vm2359, %v8362
        %8430 = vst.msk [vmem:[#allocation2 + $0x1d8] sm:$0xff] %vm2359, %v8364
        %8431 = vst.msk [vmem:[#allocation2 + $0x1e8] sm:$0xff] %vm2359, %v8366
        %8432 = vst.msk [vmem:[#allocation2 + $0x1f8] sm:$0xff] %vm2359, %v8368
        %v8433 = vld [vmem:[%s8048 + $0x2] sm:$0xff]
        %v8434 = vld [vmem:[%s8048 + $0xa] sm:$0xff]
        %v8435 = vld [vmem:[%s8048 + $0x1a] sm:$0xff]
        %v8436 = vld [vmem:[%s8048 + $0x22] sm:$0xff]
        %v8437 = vld [vmem:[%s8048 + $0x32] sm:$0xff]
        %v8438 = vld [vmem:[%s8048 + $0x3a] sm:$0xff]
        %v8439 = vld [vmem:[%s8048 + $0x4a] sm:$0xff]
        %v8440 = vld [vmem:[%s8048 + $0x52] sm:$0xff]
        %v8441 = vld [vmem:[%s8048 + $0x62] sm:$0xff]
        %v8442 = vld [vmem:[%s8048 + $0x6a] sm:$0xff]
        %v8443 = vld [vmem:[%s8048 + $0x7a] sm:$0xff]
        %v8444 = vld [vmem:[%s8048 + $0x82] sm:$0xff]
        %v8445 = vld [vmem:[%s8048 + $0x92] sm:$0xff]
        %v8446 = vld [vmem:[%s8048 + $0x9a] sm:$0xff]
        %v8447 = vld [vmem:[%s8048 + $0xaa] sm:$0xff]
        %v8448 = vld [vmem:[%s8048 + $0xb2] sm:$0xff]
        %v8449 = vld [vmem:[%s8048 + $0xc2] sm:$0xff]
        %v8450 = vld [vmem:[%s8048 + $0xca] sm:$0xff]
        %v8451 = vld [vmem:[%s8048 + $0xda] sm:$0xff]
        %v8452 = vld [vmem:[%s8048 + $0xe2] sm:$0xff]
        %v8453 = vld [vmem:[%s8048 + $0xf2] sm:$0xff]
        %v8454 = vld [vmem:[%s8048 + $0xfa] sm:$0xff]
        %v8455 = vld [vmem:[%s8048 + $0x10a] sm:$0xff]
        %v8456 = vld [vmem:[%s8048 + $0x112] sm:$0xff]
        %v8457 = vld [vmem:[%s8048 + $0x122] sm:$0xff]
        %v8458 = vld [vmem:[%s8048 + $0x12a] sm:$0xff]
        %v8459 = vld [vmem:[%s8048 + $0x13a] sm:$0xff]
        %v8460 = vld [vmem:[%s8048 + $0x142] sm:$0xff]
        %v8461 = vld [vmem:[%s8048 + $0x152] sm:$0xff]
        %v8462 = vld [vmem:[%s8048 + $0x15a] sm:$0xff]
        %v8463 = vld [vmem:[%s8048 + $0x16a] sm:$0xff]
        %v8464 = vld [vmem:[%s8048 + $0x172] sm:$0xff]
        %8497 = vrot.lane.b32.xlu0 %v8433, 48
        %v8498 = vpop.permute.xlu0 %8497
        %8499 = vrot.lane.b32.xlu0 %v8434, 48
        %v8500 = vpop.permute.xlu0 %8499
        %8501 = vrot.lane.b32.xlu0 %v8435, 48
        %v8502 = vpop.permute.xlu0 %8501
        %8503 = vrot.lane.b32.xlu0 %v8436, 48
        %v8504 = vpop.permute.xlu0 %8503
        %8505 = vrot.lane.b32.xlu0 %v8437, 48
        %v8506 = vpop.permute.xlu0 %8505
        %8507 = vrot.lane.b32.xlu0 %v8438, 48
        %v8508 = vpop.permute.xlu0 %8507
        %8509 = vrot.lane.b32.xlu0 %v8439, 48
        %v8510 = vpop.permute.xlu0 %8509
        %8511 = vrot.lane.b32.xlu0 %v8440, 48
        %v8512 = vpop.permute.xlu0 %8511
        %8513 = vrot.lane.b32.xlu0 %v8441, 48
        %v8514 = vpop.permute.xlu0 %8513
        %8515 = vrot.lane.b32.xlu0 %v8442, 48
        %v8516 = vpop.permute.xlu0 %8515
        %8517 = vrot.lane.b32.xlu0 %v8443, 48
        %v8518 = vpop.permute.xlu0 %8517
        %8519 = vrot.lane.b32.xlu0 %v8444, 48
        %v8520 = vpop.permute.xlu0 %8519
        %8521 = vrot.lane.b32.xlu0 %v8445, 48
        %v8522 = vpop.permute.xlu0 %8521
        %8523 = vrot.lane.b32.xlu0 %v8446, 48
        %v8524 = vpop.permute.xlu0 %8523
        %8525 = vrot.lane.b32.xlu0 %v8447, 48
        %v8526 = vpop.permute.xlu0 %8525
        %8527 = vrot.lane.b32.xlu0 %v8448, 48
        %v8528 = vpop.permute.xlu0 %8527
        %8529 = vrot.lane.b32.xlu0 %v8449, 48
        %v8530 = vpop.permute.xlu0 %8529
        %8531 = vrot.lane.b32.xlu0 %v8450, 48
        %v8532 = vpop.permute.xlu0 %8531
        %8533 = vrot.lane.b32.xlu0 %v8451, 48
        %v8534 = vpop.permute.xlu0 %8533
        %8535 = vrot.lane.b32.xlu0 %v8452, 48
        %v8536 = vpop.permute.xlu0 %8535
        %8537 = vrot.lane.b32.xlu0 %v8453, 48
        %v8538 = vpop.permute.xlu0 %8537
        %8539 = vrot.lane.b32.xlu0 %v8454, 48
        %v8540 = vpop.permute.xlu0 %8539
        %8541 = vrot.lane.b32.xlu0 %v8455, 48
        %v8542 = vpop.permute.xlu0 %8541
        %8543 = vrot.lane.b32.xlu0 %v8456, 48
        %v8544 = vpop.permute.xlu0 %8543
        %8545 = vrot.lane.b32.xlu0 %v8457, 48
        %v8546 = vpop.permute.xlu0 %8545
        %8547 = vrot.lane.b32.xlu0 %v8458, 48
        %v8548 = vpop.permute.xlu0 %8547
        %8549 = vrot.lane.b32.xlu0 %v8459, 48
        %v8550 = vpop.permute.xlu0 %8549
        %8551 = vrot.lane.b32.xlu0 %v8460, 48
        %v8552 = vpop.permute.xlu0 %8551
        %8553 = vrot.lane.b32.xlu0 %v8461, 48
        %v8554 = vpop.permute.xlu0 %8553
        %8555 = vrot.lane.b32.xlu0 %v8462, 48
        %v8556 = vpop.permute.xlu0 %8555
        %8557 = vrot.lane.b32.xlu0 %v8463, 48
        %v8558 = vpop.permute.xlu0 %8557
        %8559 = vrot.lane.b32.xlu0 %v8464, 48
        %v8560 = vpop.permute.xlu0 %8559
        %8593 = vst.msk [vmem:[#allocation2 + $0x8] sm:$0xff] %vm2552, %v8498
        %8594 = vst.msk [vmem:[#allocation2 + $0x18] sm:$0xff] %vm2552, %v8500
        %8595 = vst.msk [vmem:[#allocation2 + $0x28] sm:$0xff] %vm2552, %v8502
        %8596 = vst.msk [vmem:[#allocation2 + $0x38] sm:$0xff] %vm2552, %v8504
        %8597 = vst.msk [vmem:[#allocation2 + $0x48] sm:$0xff] %vm2552, %v8506
        %8598 = vst.msk [vmem:[#allocation2 + $0x58] sm:$0xff] %vm2552, %v8508
        %8599 = vst.msk [vmem:[#allocation2 + $0x68] sm:$0xff] %vm2552, %v8510
        %8600 = vst.msk [vmem:[#allocation2 + $0x78] sm:$0xff] %vm2552, %v8512
        %8601 = vst.msk [vmem:[#allocation2 + $0x88] sm:$0xff] %vm2552, %v8514
        %8602 = vst.msk [vmem:[#allocation2 + $0x98] sm:$0xff] %vm2552, %v8516
        %8603 = vst.msk [vmem:[#allocation2 + $0xa8] sm:$0xff] %vm2552, %v8518
        %8604 = vst.msk [vmem:[#allocation2 + $0xb8] sm:$0xff] %vm2552, %v8520
        %8605 = vst.msk [vmem:[#allocation2 + $0xc8] sm:$0xff] %vm2552, %v8522
        %8606 = vst.msk [vmem:[#allocation2 + $0xd8] sm:$0xff] %vm2552, %v8524
        %8607 = vst.msk [vmem:[#allocation2 + $0xe8] sm:$0xff] %vm2552, %v8526
        %8608 = vst.msk [vmem:[#allocation2 + $0xf8] sm:$0xff] %vm2552, %v8528
        %8609 = vst.msk [vmem:[#allocation2 + $0x108] sm:$0xff] %vm2552, %v8530
        %8610 = vst.msk [vmem:[#allocation2 + $0x118] sm:$0xff] %vm2552, %v8532
        %8611 = vst.msk [vmem:[#allocation2 + $0x128] sm:$0xff] %vm2552, %v8534
        %8612 = vst.msk [vmem:[#allocation2 + $0x138] sm:$0xff] %vm2552, %v8536
        %8613 = vst.msk [vmem:[#allocation2 + $0x148] sm:$0xff] %vm2552, %v8538
        %8614 = vst.msk [vmem:[#allocation2 + $0x158] sm:$0xff] %vm2552, %v8540
        %8615 = vst.msk [vmem:[#allocation2 + $0x168] sm:$0xff] %vm2552, %v8542
        %8616 = vst.msk [vmem:[#allocation2 + $0x178] sm:$0xff] %vm2552, %v8544
        %8617 = vst.msk [vmem:[#allocation2 + $0x188] sm:$0xff] %vm2552, %v8546
        %8618 = vst.msk [vmem:[#allocation2 + $0x198] sm:$0xff] %vm2552, %v8548
        %8619 = vst.msk [vmem:[#allocation2 + $0x1a8] sm:$0xff] %vm2552, %v8550
        %8620 = vst.msk [vmem:[#allocation2 + $0x1b8] sm:$0xff] %vm2552, %v8552
        %8621 = vst.msk [vmem:[#allocation2 + $0x1c8] sm:$0xff] %vm2552, %v8554
        %8622 = vst.msk [vmem:[#allocation2 + $0x1d8] sm:$0xff] %vm2552, %v8556
        %8623 = vst.msk [vmem:[#allocation2 + $0x1e8] sm:$0xff] %vm2552, %v8558
        %8624 = vst.msk [vmem:[#allocation2 + $0x1f8] sm:$0xff] %vm2552, %v8560
        %v8625 = vld [vmem:[%s8048 + $0x3] sm:$0xff]
        %v8626 = vld [vmem:[%s8048 + $0xb] sm:$0xff]
        %v8627 = vld [vmem:[%s8048 + $0x1b] sm:$0xff]
        %v8628 = vld [vmem:[%s8048 + $0x23] sm:$0xff]
        %v8629 = vld [vmem:[%s8048 + $0x33] sm:$0xff]
        %v8630 = vld [vmem:[%s8048 + $0x3b] sm:$0xff]
        %v8631 = vld [vmem:[%s8048 + $0x4b] sm:$0xff]
        %v8632 = vld [vmem:[%s8048 + $0x53] sm:$0xff]
        %v8633 = vld [vmem:[%s8048 + $0x63] sm:$0xff]
        %v8634 = vld [vmem:[%s8048 + $0x6b] sm:$0xff]
        %v8635 = vld [vmem:[%s8048 + $0x7b] sm:$0xff]
        %v8636 = vld [vmem:[%s8048 + $0x83] sm:$0xff]
        %v8637 = vld [vmem:[%s8048 + $0x93] sm:$0xff]
        %v8638 = vld [vmem:[%s8048 + $0x9b] sm:$0xff]
        %v8639 = vld [vmem:[%s8048 + $0xab] sm:$0xff]
        %v8640 = vld [vmem:[%s8048 + $0xb3] sm:$0xff]
        %v8641 = vld [vmem:[%s8048 + $0xc3] sm:$0xff]
        %v8642 = vld [vmem:[%s8048 + $0xcb] sm:$0xff]
        %v8643 = vld [vmem:[%s8048 + $0xdb] sm:$0xff]
        %v8644 = vld [vmem:[%s8048 + $0xe3] sm:$0xff]
        %v8645 = vld [vmem:[%s8048 + $0xf3] sm:$0xff]
        %v8646 = vld [vmem:[%s8048 + $0xfb] sm:$0xff]
        %v8647 = vld [vmem:[%s8048 + $0x10b] sm:$0xff]
        %v8648 = vld [vmem:[%s8048 + $0x113] sm:$0xff]
        %v8649 = vld [vmem:[%s8048 + $0x123] sm:$0xff]
        %v8650 = vld [vmem:[%s8048 + $0x12b] sm:$0xff]
        %v8651 = vld [vmem:[%s8048 + $0x13b] sm:$0xff]
        %v8652 = vld [vmem:[%s8048 + $0x143] sm:$0xff]
        %v8653 = vld [vmem:[%s8048 + $0x153] sm:$0xff]
        %v8654 = vld [vmem:[%s8048 + $0x15b] sm:$0xff]
        %v8655 = vld [vmem:[%s8048 + $0x16b] sm:$0xff]
        %v8656 = vld [vmem:[%s8048 + $0x173] sm:$0xff]
        %8689 = vrot.lane.b32.xlu0 %v8625, 52
        %v8690 = vpop.permute.xlu0 %8689
        %8691 = vrot.lane.b32.xlu0 %v8626, 52
        %v8692 = vpop.permute.xlu0 %8691
        %8693 = vrot.lane.b32.xlu0 %v8627, 52
        %v8694 = vpop.permute.xlu0 %8693
        %8695 = vrot.lane.b32.xlu0 %v8628, 52
        %v8696 = vpop.permute.xlu0 %8695
        %8697 = vrot.lane.b32.xlu0 %v8629, 52
        %v8698 = vpop.permute.xlu0 %8697
        %8699 = vrot.lane.b32.xlu0 %v8630, 52
        %v8700 = vpop.permute.xlu0 %8699
        %8701 = vrot.lane.b32.xlu0 %v8631, 52
        %v8702 = vpop.permute.xlu0 %8701
        %8703 = vrot.lane.b32.xlu0 %v8632, 52
        %v8704 = vpop.permute.xlu0 %8703
        %8705 = vrot.lane.b32.xlu0 %v8633, 52
        %v8706 = vpop.permute.xlu0 %8705
        %8707 = vrot.lane.b32.xlu0 %v8634, 52
        %v8708 = vpop.permute.xlu0 %8707
        %8709 = vrot.lane.b32.xlu0 %v8635, 52
        %v8710 = vpop.permute.xlu0 %8709
        %8711 = vrot.lane.b32.xlu0 %v8636, 52
        %v8712 = vpop.permute.xlu0 %8711
        %8713 = vrot.lane.b32.xlu0 %v8637, 52
        %v8714 = vpop.permute.xlu0 %8713
        %8715 = vrot.lane.b32.xlu0 %v8638, 52
        %v8716 = vpop.permute.xlu0 %8715
        %8717 = vrot.lane.b32.xlu0 %v8639, 52
        %v8718 = vpop.permute.xlu0 %8717
        %8719 = vrot.lane.b32.xlu0 %v8640, 52
        %v8720 = vpop.permute.xlu0 %8719
        %8721 = vrot.lane.b32.xlu0 %v8641, 52
        %v8722 = vpop.permute.xlu0 %8721
        %8723 = vrot.lane.b32.xlu0 %v8642, 52
        %v8724 = vpop.permute.xlu0 %8723
        %8725 = vrot.lane.b32.xlu0 %v8643, 52
        %v8726 = vpop.permute.xlu0 %8725
        %8727 = vrot.lane.b32.xlu0 %v8644, 52
        %v8728 = vpop.permute.xlu0 %8727
        %8729 = vrot.lane.b32.xlu0 %v8645, 52
        %v8730 = vpop.permute.xlu0 %8729
        %8731 = vrot.lane.b32.xlu0 %v8646, 52
        %v8732 = vpop.permute.xlu0 %8731
        %8733 = vrot.lane.b32.xlu0 %v8647, 52
        %v8734 = vpop.permute.xlu0 %8733
        %8735 = vrot.lane.b32.xlu0 %v8648, 52
        %v8736 = vpop.permute.xlu0 %8735
        %8737 = vrot.lane.b32.xlu0 %v8649, 52
        %v8738 = vpop.permute.xlu0 %8737
        %8739 = vrot.lane.b32.xlu0 %v8650, 52
        %v8740 = vpop.permute.xlu0 %8739
        %8741 = vrot.lane.b32.xlu0 %v8651, 52
        %v8742 = vpop.permute.xlu0 %8741
        %8743 = vrot.lane.b32.xlu0 %v8652, 52
        %v8744 = vpop.permute.xlu0 %8743
        %8745 = vrot.lane.b32.xlu0 %v8653, 52
        %v8746 = vpop.permute.xlu0 %8745
        %8747 = vrot.lane.b32.xlu0 %v8654, 52
        %v8748 = vpop.permute.xlu0 %8747
        %8749 = vrot.lane.b32.xlu0 %v8655, 52
        %v8750 = vpop.permute.xlu0 %8749
        %8751 = vrot.lane.b32.xlu0 %v8656, 52
        %v8752 = vpop.permute.xlu0 %8751
        %8785 = vst.msk [vmem:[#allocation2 + $0x8] sm:$0xff] %vm2745, %v8690
        %8786 = vst.msk [vmem:[#allocation2 + $0x18] sm:$0xff] %vm2745, %v8692
        %8787 = vst.msk [vmem:[#allocation2 + $0x28] sm:$0xff] %vm2745, %v8694
        %8788 = vst.msk [vmem:[#allocation2 + $0x38] sm:$0xff] %vm2745, %v8696
        %8789 = vst.msk [vmem:[#allocation2 + $0x48] sm:$0xff] %vm2745, %v8698
        %8790 = vst.msk [vmem:[#allocation2 + $0x58] sm:$0xff] %vm2745, %v8700
        %8791 = vst.msk [vmem:[#allocation2 + $0x68] sm:$0xff] %vm2745, %v8702
        %8792 = vst.msk [vmem:[#allocation2 + $0x78] sm:$0xff] %vm2745, %v8704
        %8793 = vst.msk [vmem:[#allocation2 + $0x88] sm:$0xff] %vm2745, %v8706
        %8794 = vst.msk [vmem:[#allocation2 + $0x98] sm:$0xff] %vm2745, %v8708
        %8795 = vst.msk [vmem:[#allocation2 + $0xa8] sm:$0xff] %vm2745, %v8710
        %8796 = vst.msk [vmem:[#allocation2 + $0xb8] sm:$0xff] %vm2745, %v8712
        %8797 = vst.msk [vmem:[#allocation2 + $0xc8] sm:$0xff] %vm2745, %v8714
        %8798 = vst.msk [vmem:[#allocation2 + $0xd8] sm:$0xff] %vm2745, %v8716
        %8799 = vst.msk [vmem:[#allocation2 + $0xe8] sm:$0xff] %vm2745, %v8718
        %8800 = vst.msk [vmem:[#allocation2 + $0xf8] sm:$0xff] %vm2745, %v8720
        %8801 = vst.msk [vmem:[#allocation2 + $0x108] sm:$0xff] %vm2745, %v8722
        %8802 = vst.msk [vmem:[#allocation2 + $0x118] sm:$0xff] %vm2745, %v8724
        %8803 = vst.msk [vmem:[#allocation2 + $0x128] sm:$0xff] %vm2745, %v8726
        %8804 = vst.msk [vmem:[#allocation2 + $0x138] sm:$0xff] %vm2745, %v8728
        %8805 = vst.msk [vmem:[#allocation2 + $0x148] sm:$0xff] %vm2745, %v8730
        %8806 = vst.msk [vmem:[#allocation2 + $0x158] sm:$0xff] %vm2745, %v8732
        %8807 = vst.msk [vmem:[#allocation2 + $0x168] sm:$0xff] %vm2745, %v8734
        %8808 = vst.msk [vmem:[#allocation2 + $0x178] sm:$0xff] %vm2745, %v8736
        %8809 = vst.msk [vmem:[#allocation2 + $0x188] sm:$0xff] %vm2745, %v8738
        %8810 = vst.msk [vmem:[#allocation2 + $0x198] sm:$0xff] %vm2745, %v8740
        %8811 = vst.msk [vmem:[#allocation2 + $0x1a8] sm:$0xff] %vm2745, %v8742
        %8812 = vst.msk [vmem:[#allocation2 + $0x1b8] sm:$0xff] %vm2745, %v8744
        %8813 = vst.msk [vmem:[#allocation2 + $0x1c8] sm:$0xff] %vm2745, %v8746
        %8814 = vst.msk [vmem:[#allocation2 + $0x1d8] sm:$0xff] %vm2745, %v8748
        %8815 = vst.msk [vmem:[#allocation2 + $0x1e8] sm:$0xff] %vm2745, %v8750
        %8816 = vst.msk [vmem:[#allocation2 + $0x1f8] sm:$0xff] %vm2745, %v8752
        %v8817 = vld [vmem:[%s8048 + $0x4] sm:$0xff]
        %v8818 = vld [vmem:[%s8048 + $0xc] sm:$0xff]
        %v8819 = vld [vmem:[%s8048 + $0x1c] sm:$0xff]
        %v8820 = vld [vmem:[%s8048 + $0x24] sm:$0xff]
        %v8821 = vld [vmem:[%s8048 + $0x34] sm:$0xff]
        %v8822 = vld [vmem:[%s8048 + $0x3c] sm:$0xff]
        %v8823 = vld [vmem:[%s8048 + $0x4c] sm:$0xff]
        %v8824 = vld [vmem:[%s8048 + $0x54] sm:$0xff]
        %v8825 = vld [vmem:[%s8048 + $0x64] sm:$0xff]
        %v8826 = vld [vmem:[%s8048 + $0x6c] sm:$0xff]
        %v8827 = vld [vmem:[%s8048 + $0x7c] sm:$0xff]
        %v8828 = vld [vmem:[%s8048 + $0x84] sm:$0xff]
        %v8829 = vld [vmem:[%s8048 + $0x94] sm:$0xff]
        %v8830 = vld [vmem:[%s8048 + $0x9c] sm:$0xff]
        %v8831 = vld [vmem:[%s8048 + $0xac] sm:$0xff]
        %v8832 = vld [vmem:[%s8048 + $0xb4] sm:$0xff]
        %v8833 = vld [vmem:[%s8048 + $0xc4] sm:$0xff]
        %v8834 = vld [vmem:[%s8048 + $0xcc] sm:$0xff]
        %v8835 = vld [vmem:[%s8048 + $0xdc] sm:$0xff]
        %v8836 = vld [vmem:[%s8048 + $0xe4] sm:$0xff]
        %v8837 = vld [vmem:[%s8048 + $0xf4] sm:$0xff]
        %v8838 = vld [vmem:[%s8048 + $0xfc] sm:$0xff]
        %v8839 = vld [vmem:[%s8048 + $0x10c] sm:$0xff]
        %v8840 = vld [vmem:[%s8048 + $0x114] sm:$0xff]
        %v8841 = vld [vmem:[%s8048 + $0x124] sm:$0xff]
        %v8842 = vld [vmem:[%s8048 + $0x12c] sm:$0xff]
        %v8843 = vld [vmem:[%s8048 + $0x13c] sm:$0xff]
        %v8844 = vld [vmem:[%s8048 + $0x144] sm:$0xff]
        %v8845 = vld [vmem:[%s8048 + $0x154] sm:$0xff]
        %v8846 = vld [vmem:[%s8048 + $0x15c] sm:$0xff]
        %v8847 = vld [vmem:[%s8048 + $0x16c] sm:$0xff]
        %v8848 = vld [vmem:[%s8048 + $0x174] sm:$0xff]
        %8881 = vrot.lane.b32.xlu0 %v8817, 56
        %v8882 = vpop.permute.xlu0 %8881
        %8883 = vrot.lane.b32.xlu0 %v8818, 56
        %v8884 = vpop.permute.xlu0 %8883
        %8885 = vrot.lane.b32.xlu0 %v8819, 56
        %v8886 = vpop.permute.xlu0 %8885
        %8887 = vrot.lane.b32.xlu0 %v8820, 56
        %v8888 = vpop.permute.xlu0 %8887
        %8889 = vrot.lane.b32.xlu0 %v8821, 56
        %v8890 = vpop.permute.xlu0 %8889
        %8891 = vrot.lane.b32.xlu0 %v8822, 56
        %v8892 = vpop.permute.xlu0 %8891
        %8893 = vrot.lane.b32.xlu0 %v8823, 56
        %v8894 = vpop.permute.xlu0 %8893
        %8895 = vrot.lane.b32.xlu0 %v8824, 56
        %v8896 = vpop.permute.xlu0 %8895
        %8897 = vrot.lane.b32.xlu0 %v8825, 56
        %v8898 = vpop.permute.xlu0 %8897
        %8899 = vrot.lane.b32.xlu0 %v8826, 56
        %v8900 = vpop.permute.xlu0 %8899
        %8901 = vrot.lane.b32.xlu0 %v8827, 56
        %v8902 = vpop.permute.xlu0 %8901
        %8903 = vrot.lane.b32.xlu0 %v8828, 56
        %v8904 = vpop.permute.xlu0 %8903
        %8905 = vrot.lane.b32.xlu0 %v8829, 56
        %v8906 = vpop.permute.xlu0 %8905
        %8907 = vrot.lane.b32.xlu0 %v8830, 56
        %v8908 = vpop.permute.xlu0 %8907
        %8909 = vrot.lane.b32.xlu0 %v8831, 56
        %v8910 = vpop.permute.xlu0 %8909
        %8911 = vrot.lane.b32.xlu0 %v8832, 56
        %v8912 = vpop.permute.xlu0 %8911
        %8913 = vrot.lane.b32.xlu0 %v8833, 56
        %v8914 = vpop.permute.xlu0 %8913
        %8915 = vrot.lane.b32.xlu0 %v8834, 56
        %v8916 = vpop.permute.xlu0 %8915
        %8917 = vrot.lane.b32.xlu0 %v8835, 56
        %v8918 = vpop.permute.xlu0 %8917
        %8919 = vrot.lane.b32.xlu0 %v8836, 56
        %v8920 = vpop.permute.xlu0 %8919
        %8921 = vrot.lane.b32.xlu0 %v8837, 56
        %v8922 = vpop.permute.xlu0 %8921
        %8923 = vrot.lane.b32.xlu0 %v8838, 56
        %v8924 = vpop.permute.xlu0 %8923
        %8925 = vrot.lane.b32.xlu0 %v8839, 56
        %v8926 = vpop.permute.xlu0 %8925
        %8927 = vrot.lane.b32.xlu0 %v8840, 56
        %v8928 = vpop.permute.xlu0 %8927
        %8929 = vrot.lane.b32.xlu0 %v8841, 56
        %v8930 = vpop.permute.xlu0 %8929
        %8931 = vrot.lane.b32.xlu0 %v8842, 56
        %v8932 = vpop.permute.xlu0 %8931
        %8933 = vrot.lane.b32.xlu0 %v8843, 56
        %v8934 = vpop.permute.xlu0 %8933
        %8935 = vrot.lane.b32.xlu0 %v8844, 56
        %v8936 = vpop.permute.xlu0 %8935
        %8937 = vrot.lane.b32.xlu0 %v8845, 56
        %v8938 = vpop.permute.xlu0 %8937
        %8939 = vrot.lane.b32.xlu0 %v8846, 56
        %v8940 = vpop.permute.xlu0 %8939
        %8941 = vrot.lane.b32.xlu0 %v8847, 56
        %v8942 = vpop.permute.xlu0 %8941
        %8943 = vrot.lane.b32.xlu0 %v8848, 56
        %v8944 = vpop.permute.xlu0 %8943
        %8977 = vst.msk [vmem:[#allocation2 + $0x8] sm:$0xff] %vm2939, %v8882
        %8978 = vst.msk [vmem:[#allocation2 + $0x18] sm:$0xff] %vm2939, %v8884
        %8979 = vst.msk [vmem:[#allocation2 + $0x28] sm:$0xff] %vm2939, %v8886
        %8980 = vst.msk [vmem:[#allocation2 + $0x38] sm:$0xff] %vm2939, %v8888
        %8981 = vst.msk [vmem:[#allocation2 + $0x48] sm:$0xff] %vm2939, %v8890
        %8982 = vst.msk [vmem:[#allocation2 + $0x58] sm:$0xff] %vm2939, %v8892
        %8983 = vst.msk [vmem:[#allocation2 + $0x68] sm:$0xff] %vm2939, %v8894
        %8984 = vst.msk [vmem:[#allocation2 + $0x78] sm:$0xff] %vm2939, %v8896
        %8985 = vst.msk [vmem:[#allocation2 + $0x88] sm:$0xff] %vm2939, %v8898
        %8986 = vst.msk [vmem:[#allocation2 + $0x98] sm:$0xff] %vm2939, %v8900
        %8987 = vst.msk [vmem:[#allocation2 + $0xa8] sm:$0xff] %vm2939, %v8902
        %8988 = vst.msk [vmem:[#allocation2 + $0xb8] sm:$0xff] %vm2939, %v8904
        %8989 = vst.msk [vmem:[#allocation2 + $0xc8] sm:$0xff] %vm2939, %v8906
        %8990 = vst.msk [vmem:[#allocation2 + $0xd8] sm:$0xff] %vm2939, %v8908
        %8991 = vst.msk [vmem:[#allocation2 + $0xe8] sm:$0xff] %vm2939, %v8910
        %8992 = vst.msk [vmem:[#allocation2 + $0xf8] sm:$0xff] %vm2939, %v8912
        %8993 = vst.msk [vmem:[#allocation2 + $0x108] sm:$0xff] %vm2939, %v8914
        %8994 = vst.msk [vmem:[#allocation2 + $0x118] sm:$0xff] %vm2939, %v8916
        %8995 = vst.msk [vmem:[#allocation2 + $0x128] sm:$0xff] %vm2939, %v8918
        %8996 = vst.msk [vmem:[#allocation2 + $0x138] sm:$0xff] %vm2939, %v8920
        %8997 = vst.msk [vmem:[#allocation2 + $0x148] sm:$0xff] %vm2939, %v8922
        %8998 = vst.msk [vmem:[#allocation2 + $0x158] sm:$0xff] %vm2939, %v8924
        %8999 = vst.msk [vmem:[#allocation2 + $0x168] sm:$0xff] %vm2939, %v8926
        %9000 = vst.msk [vmem:[#allocation2 + $0x178] sm:$0xff] %vm2939, %v8928
        %9001 = vst.msk [vmem:[#allocation2 + $0x188] sm:$0xff] %vm2939, %v8930
        %9002 = vst.msk [vmem:[#allocation2 + $0x198] sm:$0xff] %vm2939, %v8932
        %9003 = vst.msk [vmem:[#allocation2 + $0x1a8] sm:$0xff] %vm2939, %v8934
        %9004 = vst.msk [vmem:[#allocation2 + $0x1b8] sm:$0xff] %vm2939, %v8936
        %9005 = vst.msk [vmem:[#allocation2 + $0x1c8] sm:$0xff] %vm2939, %v8938
        %9006 = vst.msk [vmem:[#allocation2 + $0x1d8] sm:$0xff] %vm2939, %v8940
        %9007 = vst.msk [vmem:[#allocation2 + $0x1e8] sm:$0xff] %vm2939, %v8942
        %9008 = vst.msk [vmem:[#allocation2 + $0x1f8] sm:$0xff] %vm2939, %v8944
        %v9009 = vld [vmem:[%s8048 + $0x5] sm:$0xff]
        %v9010 = vld [vmem:[%s8048 + $0xd] sm:$0xff]
        %v9011 = vld [vmem:[%s8048 + $0x1d] sm:$0xff]
        %v9012 = vld [vmem:[%s8048 + $0x25] sm:$0xff]
        %v9013 = vld [vmem:[%s8048 + $0x35] sm:$0xff]
        %v9014 = vld [vmem:[%s8048 + $0x3d] sm:$0xff]
        %v9015 = vld [vmem:[%s8048 + $0x4d] sm:$0xff]
        %v9016 = vld [vmem:[%s8048 + $0x55] sm:$0xff]
        %v9017 = vld [vmem:[%s8048 + $0x65] sm:$0xff]
        %v9018 = vld [vmem:[%s8048 + $0x6d] sm:$0xff]
        %v9019 = vld [vmem:[%s8048 + $0x7d] sm:$0xff]
        %v9020 = vld [vmem:[%s8048 + $0x85] sm:$0xff]
        %v9021 = vld [vmem:[%s8048 + $0x95] sm:$0xff]
        %v9022 = vld [vmem:[%s8048 + $0x9d] sm:$0xff]
        %v9023 = vld [vmem:[%s8048 + $0xad] sm:$0xff]
        %v9024 = vld [vmem:[%s8048 + $0xb5] sm:$0xff]
        %v9025 = vld [vmem:[%s8048 + $0xc5] sm:$0xff]
        %v9026 = vld [vmem:[%s8048 + $0xcd] sm:$0xff]
        %v9027 = vld [vmem:[%s8048 + $0xdd] sm:$0xff]
        %v9028 = vld [vmem:[%s8048 + $0xe5] sm:$0xff]
        %v9029 = vld [vmem:[%s8048 + $0xf5] sm:$0xff]
        %v9030 = vld [vmem:[%s8048 + $0xfd] sm:$0xff]
        %v9031 = vld [vmem:[%s8048 + $0x10d] sm:$0xff]
        %v9032 = vld [vmem:[%s8048 + $0x115] sm:$0xff]
        %v9033 = vld [vmem:[%s8048 + $0x125] sm:$0xff]
        %v9034 = vld [vmem:[%s8048 + $0x12d] sm:$0xff]
        %v9035 = vld [vmem:[%s8048 + $0x13d] sm:$0xff]
        %v9036 = vld [vmem:[%s8048 + $0x145] sm:$0xff]
        %v9037 = vld [vmem:[%s8048 + $0x155] sm:$0xff]
        %v9038 = vld [vmem:[%s8048 + $0x15d] sm:$0xff]
        %v9039 = vld [vmem:[%s8048 + $0x16d] sm:$0xff]
        %v9040 = vld [vmem:[%s8048 + $0x175] sm:$0xff]
        %9073 = vrot.lane.b32.xlu0 %v9009, 60
        %v9074 = vpop.permute.xlu0 %9073
        %9075 = vrot.lane.b32.xlu0 %v9010, 60
        %v9076 = vpop.permute.xlu0 %9075
        %9077 = vrot.lane.b32.xlu0 %v9011, 60
        %v9078 = vpop.permute.xlu0 %9077
        %9079 = vrot.lane.b32.xlu0 %v9012, 60
        %v9080 = vpop.permute.xlu0 %9079
        %9081 = vrot.lane.b32.xlu0 %v9013, 60
        %v9082 = vpop.permute.xlu0 %9081
        %9083 = vrot.lane.b32.xlu0 %v9014, 60
        %v9084 = vpop.permute.xlu0 %9083
        %9085 = vrot.lane.b32.xlu0 %v9015, 60
        %v9086 = vpop.permute.xlu0 %9085
        %9087 = vrot.lane.b32.xlu0 %v9016, 60
        %v9088 = vpop.permute.xlu0 %9087
        %9089 = vrot.lane.b32.xlu0 %v9017, 60
        %v9090 = vpop.permute.xlu0 %9089
        %9091 = vrot.lane.b32.xlu0 %v9018, 60
        %v9092 = vpop.permute.xlu0 %9091
        %9093 = vrot.lane.b32.xlu0 %v9019, 60
        %v9094 = vpop.permute.xlu0 %9093
        %9095 = vrot.lane.b32.xlu0 %v9020, 60
        %v9096 = vpop.permute.xlu0 %9095
        %9097 = vrot.lane.b32.xlu0 %v9021, 60
        %v9098 = vpop.permute.xlu0 %9097
        %9099 = vrot.lane.b32.xlu0 %v9022, 60
        %v9100 = vpop.permute.xlu0 %9099
        %9101 = vrot.lane.b32.xlu0 %v9023, 60
        %v9102 = vpop.permute.xlu0 %9101
        %9103 = vrot.lane.b32.xlu0 %v9024, 60
        %v9104 = vpop.permute.xlu0 %9103
        %9105 = vrot.lane.b32.xlu0 %v9025, 60
        %v9106 = vpop.permute.xlu0 %9105
        %9107 = vrot.lane.b32.xlu0 %v9026, 60
        %v9108 = vpop.permute.xlu0 %9107
        %9109 = vrot.lane.b32.xlu0 %v9027, 60
        %v9110 = vpop.permute.xlu0 %9109
        %9111 = vrot.lane.b32.xlu0 %v9028, 60
        %v9112 = vpop.permute.xlu0 %9111
        %9113 = vrot.lane.b32.xlu0 %v9029, 60
        %v9114 = vpop.permute.xlu0 %9113
        %9115 = vrot.lane.b32.xlu0 %v9030, 60
        %v9116 = vpop.permute.xlu0 %9115
        %9117 = vrot.lane.b32.xlu0 %v9031, 60
        %v9118 = vpop.permute.xlu0 %9117
        %9119 = vrot.lane.b32.xlu0 %v9032, 60
        %v9120 = vpop.permute.xlu0 %9119
        %9121 = vrot.lane.b32.xlu0 %v9033, 60
        %v9122 = vpop.permute.xlu0 %9121
        %9123 = vrot.lane.b32.xlu0 %v9034, 60
        %v9124 = vpop.permute.xlu0 %9123
        %9125 = vrot.lane.b32.xlu0 %v9035, 60
        %v9126 = vpop.permute.xlu0 %9125
        %9127 = vrot.lane.b32.xlu0 %v9036, 60
        %v9128 = vpop.permute.xlu0 %9127
        %9129 = vrot.lane.b32.xlu0 %v9037, 60
        %v9130 = vpop.permute.xlu0 %9129
        %9131 = vrot.lane.b32.xlu0 %v9038, 60
        %v9132 = vpop.permute.xlu0 %9131
        %9133 = vrot.lane.b32.xlu0 %v9039, 60
        %v9134 = vpop.permute.xlu0 %9133
        %9135 = vrot.lane.b32.xlu0 %v9040, 60
        %v9136 = vpop.permute.xlu0 %9135
        %9169 = vst.msk [vmem:[#allocation2 + $0x8] sm:$0xff] %vm3132, %v9074
        %9170 = vst.msk [vmem:[#allocation2 + $0x18] sm:$0xff] %vm3132, %v9076
        %9171 = vst.msk [vmem:[#allocation2 + $0x28] sm:$0xff] %vm3132, %v9078
        %9172 = vst.msk [vmem:[#allocation2 + $0x38] sm:$0xff] %vm3132, %v9080
        %9173 = vst.msk [vmem:[#allocation2 + $0x48] sm:$0xff] %vm3132, %v9082
        %9174 = vst.msk [vmem:[#allocation2 + $0x58] sm:$0xff] %vm3132, %v9084
        %9175 = vst.msk [vmem:[#allocation2 + $0x68] sm:$0xff] %vm3132, %v9086
        %9176 = vst.msk [vmem:[#allocation2 + $0x78] sm:$0xff] %vm3132, %v9088
        %9177 = vst.msk [vmem:[#allocation2 + $0x88] sm:$0xff] %vm3132, %v9090
        %9178 = vst.msk [vmem:[#allocation2 + $0x98] sm:$0xff] %vm3132, %v9092
        %9179 = vst.msk [vmem:[#allocation2 + $0xa8] sm:$0xff] %vm3132, %v9094
        %9180 = vst.msk [vmem:[#allocation2 + $0xb8] sm:$0xff] %vm3132, %v9096
        %9181 = vst.msk [vmem:[#allocation2 + $0xc8] sm:$0xff] %vm3132, %v9098
        %9182 = vst.msk [vmem:[#allocation2 + $0xd8] sm:$0xff] %vm3132, %v9100
        %9183 = vst.msk [vmem:[#allocation2 + $0xe8] sm:$0xff] %vm3132, %v9102
        %9184 = vst.msk [vmem:[#allocation2 + $0xf8] sm:$0xff] %vm3132, %v9104
        %9185 = vst.msk [vmem:[#allocation2 + $0x108] sm:$0xff] %vm3132, %v9106
        %9186 = vst.msk [vmem:[#allocation2 + $0x118] sm:$0xff] %vm3132, %v9108
        %9187 = vst.msk [vmem:[#allocation2 + $0x128] sm:$0xff] %vm3132, %v9110
        %9188 = vst.msk [vmem:[#allocation2 + $0x138] sm:$0xff] %vm3132, %v9112
        %9189 = vst.msk [vmem:[#allocation2 + $0x148] sm:$0xff] %vm3132, %v9114
        %9190 = vst.msk [vmem:[#allocation2 + $0x158] sm:$0xff] %vm3132, %v9116
        %9191 = vst.msk [vmem:[#allocation2 + $0x168] sm:$0xff] %vm3132, %v9118
        %9192 = vst.msk [vmem:[#allocation2 + $0x178] sm:$0xff] %vm3132, %v9120
        %9193 = vst.msk [vmem:[#allocation2 + $0x188] sm:$0xff] %vm3132, %v9122
        %9194 = vst.msk [vmem:[#allocation2 + $0x198] sm:$0xff] %vm3132, %v9124
        %9195 = vst.msk [vmem:[#allocation2 + $0x1a8] sm:$0xff] %vm3132, %v9126
        %9196 = vst.msk [vmem:[#allocation2 + $0x1b8] sm:$0xff] %vm3132, %v9128
        %9197 = vst.msk [vmem:[#allocation2 + $0x1c8] sm:$0xff] %vm3132, %v9130
        %9198 = vst.msk [vmem:[#allocation2 + $0x1d8] sm:$0xff] %vm3132, %v9132
        %9199 = vst.msk [vmem:[#allocation2 + $0x1e8] sm:$0xff] %vm3132, %v9134
        %9200 = vst.msk [vmem:[#allocation2 + $0x1f8] sm:$0xff] %vm3132, %v9136
        %v9201 = vld [vmem:[%s8048 + $0x6] sm:$0xff]
        %v9202 = vld [vmem:[%s8048 + $0xe] sm:$0xff]
        %v9203 = vld [vmem:[%s8048 + $0x1e] sm:$0xff]
        %v9204 = vld [vmem:[%s8048 + $0x26] sm:$0xff]
        %v9205 = vld [vmem:[%s8048 + $0x36] sm:$0xff]
        %v9206 = vld [vmem:[%s8048 + $0x3e] sm:$0xff]
        %v9207 = vld [vmem:[%s8048 + $0x4e] sm:$0xff]
        %v9208 = vld [vmem:[%s8048 + $0x56] sm:$0xff]
        %v9209 = vld [vmem:[%s8048 + $0x66] sm:$0xff]
        %v9210 = vld [vmem:[%s8048 + $0x6e] sm:$0xff]
        %v9211 = vld [vmem:[%s8048 + $0x7e] sm:$0xff]
        %v9212 = vld [vmem:[%s8048 + $0x86] sm:$0xff]
        %v9213 = vld [vmem:[%s8048 + $0x96] sm:$0xff]
        %v9214 = vld [vmem:[%s8048 + $0x9e] sm:$0xff]
        %v9215 = vld [vmem:[%s8048 + $0xae] sm:$0xff]
        %v9216 = vld [vmem:[%s8048 + $0xb6] sm:$0xff]
        %v9217 = vld [vmem:[%s8048 + $0xc6] sm:$0xff]
        %v9218 = vld [vmem:[%s8048 + $0xce] sm:$0xff]
        %v9219 = vld [vmem:[%s8048 + $0xde] sm:$0xff]
        %v9220 = vld [vmem:[%s8048 + $0xe6] sm:$0xff]
        %v9221 = vld [vmem:[%s8048 + $0xf6] sm:$0xff]
        %v9222 = vld [vmem:[%s8048 + $0xfe] sm:$0xff]
        %v9223 = vld [vmem:[%s8048 + $0x10e] sm:$0xff]
        %v9224 = vld [vmem:[%s8048 + $0x116] sm:$0xff]
        %v9225 = vld [vmem:[%s8048 + $0x126] sm:$0xff]
        %v9226 = vld [vmem:[%s8048 + $0x12e] sm:$0xff]
        %v9227 = vld [vmem:[%s8048 + $0x13e] sm:$0xff]
        %v9228 = vld [vmem:[%s8048 + $0x146] sm:$0xff]
        %v9229 = vld [vmem:[%s8048 + $0x156] sm:$0xff]
        %v9230 = vld [vmem:[%s8048 + $0x15e] sm:$0xff]
        %v9231 = vld [vmem:[%s8048 + $0x16e] sm:$0xff]
        %v9232 = vld [vmem:[%s8048 + $0x176] sm:$0xff]
        %9265 = vrot.lane.b32.xlu0 %v9201, 64
        %v9266 = vpop.permute.xlu0 %9265
        %9267 = vrot.lane.b32.xlu0 %v9202, 64
        %v9268 = vpop.permute.xlu0 %9267
        %9269 = vrot.lane.b32.xlu0 %v9203, 64
        %v9270 = vpop.permute.xlu0 %9269
        %9271 = vrot.lane.b32.xlu0 %v9204, 64
        %v9272 = vpop.permute.xlu0 %9271
        %9273 = vrot.lane.b32.xlu0 %v9205, 64
        %v9274 = vpop.permute.xlu0 %9273
        %9275 = vrot.lane.b32.xlu0 %v9206, 64
        %v9276 = vpop.permute.xlu0 %9275
        %9277 = vrot.lane.b32.xlu0 %v9207, 64
        %v9278 = vpop.permute.xlu0 %9277
        %9279 = vrot.lane.b32.xlu0 %v9208, 64
        %v9280 = vpop.permute.xlu0 %9279
        %9281 = vrot.lane.b32.xlu0 %v9209, 64
        %v9282 = vpop.permute.xlu0 %9281
        %9283 = vrot.lane.b32.xlu0 %v9210, 64
        %v9284 = vpop.permute.xlu0 %9283
        %9285 = vrot.lane.b32.xlu0 %v9211, 64
        %v9286 = vpop.permute.xlu0 %9285
        %9287 = vrot.lane.b32.xlu0 %v9212, 64
        %v9288 = vpop.permute.xlu0 %9287
        %9289 = vrot.lane.b32.xlu0 %v9213, 64
        %v9290 = vpop.permute.xlu0 %9289
        %9291 = vrot.lane.b32.xlu0 %v9214, 64
        %v9292 = vpop.permute.xlu0 %9291
        %9293 = vrot.lane.b32.xlu0 %v9215, 64
        %v9294 = vpop.permute.xlu0 %9293
        %9295 = vrot.lane.b32.xlu0 %v9216, 64
        %v9296 = vpop.permute.xlu0 %9295
        %9297 = vrot.lane.b32.xlu0 %v9217, 64
        %v9298 = vpop.permute.xlu0 %9297
        %9299 = vrot.lane.b32.xlu0 %v9218, 64
        %v9300 = vpop.permute.xlu0 %9299
        %9301 = vrot.lane.b32.xlu0 %v9219, 64
        %v9302 = vpop.permute.xlu0 %9301
        %9303 = vrot.lane.b32.xlu0 %v9220, 64
        %v9304 = vpop.permute.xlu0 %9303
        %9305 = vrot.lane.b32.xlu0 %v9221, 64
        %v9306 = vpop.permute.xlu0 %9305
        %9307 = vrot.lane.b32.xlu0 %v9222, 64
        %v9308 = vpop.permute.xlu0 %9307
        %9309 = vrot.lane.b32.xlu0 %v9223, 64
        %v9310 = vpop.permute.xlu0 %9309
        %9311 = vrot.lane.b32.xlu0 %v9224, 64
        %v9312 = vpop.permute.xlu0 %9311
        %9313 = vrot.lane.b32.xlu0 %v9225, 64
        %v9314 = vpop.permute.xlu0 %9313
        %9315 = vrot.lane.b32.xlu0 %v9226, 64
        %v9316 = vpop.permute.xlu0 %9315
        %9317 = vrot.lane.b32.xlu0 %v9227, 64
        %v9318 = vpop.permute.xlu0 %9317
        %9319 = vrot.lane.b32.xlu0 %v9228, 64
        %v9320 = vpop.permute.xlu0 %9319
        %9321 = vrot.lane.b32.xlu0 %v9229, 64
        %v9322 = vpop.permute.xlu0 %9321
        %9323 = vrot.lane.b32.xlu0 %v9230, 64
        %v9324 = vpop.permute.xlu0 %9323
        %9325 = vrot.lane.b32.xlu0 %v9231, 64
        %v9326 = vpop.permute.xlu0 %9325
        %9327 = vrot.lane.b32.xlu0 %v9232, 64
        %v9328 = vpop.permute.xlu0 %9327
        %9361 = vst.msk [vmem:[#allocation2 + $0x8] sm:$0xff] %vm3325, %v9266
        %9362 = vst.msk [vmem:[#allocation2 + $0x18] sm:$0xff] %vm3325, %v9268
        %9363 = vst.msk [vmem:[#allocation2 + $0x28] sm:$0xff] %vm3325, %v9270
        %9364 = vst.msk [vmem:[#allocation2 + $0x38] sm:$0xff] %vm3325, %v9272
        %9365 = vst.msk [vmem:[#allocation2 + $0x48] sm:$0xff] %vm3325, %v9274
        %9366 = vst.msk [vmem:[#allocation2 + $0x58] sm:$0xff] %vm3325, %v9276
        %9367 = vst.msk [vmem:[#allocation2 + $0x68] sm:$0xff] %vm3325, %v9278
        %9368 = vst.msk [vmem:[#allocation2 + $0x78] sm:$0xff] %vm3325, %v9280
        %9369 = vst.msk [vmem:[#allocation2 + $0x88] sm:$0xff] %vm3325, %v9282
        %9370 = vst.msk [vmem:[#allocation2 + $0x98] sm:$0xff] %vm3325, %v9284
        %9371 = vst.msk [vmem:[#allocation2 + $0xa8] sm:$0xff] %vm3325, %v9286
        %9372 = vst.msk [vmem:[#allocation2 + $0xb8] sm:$0xff] %vm3325, %v9288
        %9373 = vst.msk [vmem:[#allocation2 + $0xc8] sm:$0xff] %vm3325, %v9290
        %9374 = vst.msk [vmem:[#allocation2 + $0xd8] sm:$0xff] %vm3325, %v9292
        %9375 = vst.msk [vmem:[#allocation2 + $0xe8] sm:$0xff] %vm3325, %v9294
        %9376 = vst.msk [vmem:[#allocation2 + $0xf8] sm:$0xff] %vm3325, %v9296
        %9377 = vst.msk [vmem:[#allocation2 + $0x108] sm:$0xff] %vm3325, %v9298
        %9378 = vst.msk [vmem:[#allocation2 + $0x118] sm:$0xff] %vm3325, %v9300
        %9379 = vst.msk [vmem:[#allocation2 + $0x128] sm:$0xff] %vm3325, %v9302
        %9380 = vst.msk [vmem:[#allocation2 + $0x138] sm:$0xff] %vm3325, %v9304
        %9381 = vst.msk [vmem:[#allocation2 + $0x148] sm:$0xff] %vm3325, %v9306
        %9382 = vst.msk [vmem:[#allocation2 + $0x158] sm:$0xff] %vm3325, %v9308
        %9383 = vst.msk [vmem:[#allocation2 + $0x168] sm:$0xff] %vm3325, %v9310
        %9384 = vst.msk [vmem:[#allocation2 + $0x178] sm:$0xff] %vm3325, %v9312
        %9385 = vst.msk [vmem:[#allocation2 + $0x188] sm:$0xff] %vm3325, %v9314
        %9386 = vst.msk [vmem:[#allocation2 + $0x198] sm:$0xff] %vm3325, %v9316
        %9387 = vst.msk [vmem:[#allocation2 + $0x1a8] sm:$0xff] %vm3325, %v9318
        %9388 = vst.msk [vmem:[#allocation2 + $0x1b8] sm:$0xff] %vm3325, %v9320
        %9389 = vst.msk [vmem:[#allocation2 + $0x1c8] sm:$0xff] %vm3325, %v9322
        %9390 = vst.msk [vmem:[#allocation2 + $0x1d8] sm:$0xff] %vm3325, %v9324
        %9391 = vst.msk [vmem:[#allocation2 + $0x1e8] sm:$0xff] %vm3325, %v9326
        %9392 = vst.msk [vmem:[#allocation2 + $0x1f8] sm:$0xff] %vm3325, %v9328
        %v9393 = vld [vmem:[%s202] sm:$0xff]
        %v9394 = vld [vmem:[%s202 + $0x8] sm:$0xff]
        %v9395 = vld [vmem:[%s202 + $0x10] sm:$0xff]
        %v9396 = vld [vmem:[%s202 + $0x18] sm:$0xff]
        %v9397 = vld [vmem:[#allocation2] sm:$0xff]
        %v9398 = vld [vmem:[#allocation2 + $0x8] sm:$0xff]
        %v9399 = vld [vmem:[#allocation2 + $0x10] sm:$0xff]
        %v9400 = vld [vmem:[#allocation2 + $0x18] sm:$0xff]
        %v9401 = vld [vmem:[#allocation2 + $0x20] sm:$0xff]
        %v9402 = vld [vmem:[#allocation2 + $0x28] sm:$0xff]
        %v9403 = vld [vmem:[#allocation2 + $0x30] sm:$0xff]
        %v9404 = vld [vmem:[#allocation2 + $0x38] sm:$0xff]
        %v9405 = vld [vmem:[#allocation2 + $0x40] sm:$0xff]
        %v9406 = vld [vmem:[#allocation2 + $0x48] sm:$0xff]
        %v9407 = vld [vmem:[#allocation2 + $0x50] sm:$0xff]
        %v9408 = vld [vmem:[#allocation2 + $0x58] sm:$0xff]
        %v9409 = vld [vmem:[#allocation2 + $0x60] sm:$0xff]
        %v9410 = vld [vmem:[#allocation2 + $0x68] sm:$0xff]
        %v9411 = vld [vmem:[#allocation2 + $0x70] sm:$0xff]
        %v9412 = vld [vmem:[#allocation2 + $0x78] sm:$0xff]
        %v9413 = vld [vmem:[#allocation2 + $0x80] sm:$0xff]
        %v9414 = vld [vmem:[#allocation2 + $0x88] sm:$0xff]
        %v9415 = vld [vmem:[#allocation2 + $0x90] sm:$0xff]
        %v9416 = vld [vmem:[#allocation2 + $0x98] sm:$0xff]
        %v9417 = vld [vmem:[#allocation2 + $0xa0] sm:$0xff]
        %v9418 = vld [vmem:[#allocation2 + $0xa8] sm:$0xff]
        %v9419 = vld [vmem:[#allocation2 + $0xb0] sm:$0xff]
        %v9420 = vld [vmem:[#allocation2 + $0xb8] sm:$0xff]
        %v9421 = vld [vmem:[#allocation2 + $0xc0] sm:$0xff]
        %v9422 = vld [vmem:[#allocation2 + $0xc8] sm:$0xff]
        %v9423 = vld [vmem:[#allocation2 + $0xd0] sm:$0xff]
        %v9424 = vld [vmem:[#allocation2 + $0xd8] sm:$0xff]
        %v9425 = vld [vmem:[#allocation2 + $0xe0] sm:$0xff]
        %v9426 = vld [vmem:[#allocation2 + $0xe8] sm:$0xff]
        %v9427 = vld [vmem:[#allocation2 + $0xf0] sm:$0xff]
        %v9428 = vld [vmem:[#allocation2 + $0xf8] sm:$0xff]
        %v9429 = vld [vmem:[#allocation2 + $0x100] sm:$0xff]
        %v9430 = vld [vmem:[#allocation2 + $0x108] sm:$0xff]
        %v9431 = vld [vmem:[#allocation2 + $0x110] sm:$0xff]
        %v9432 = vld [vmem:[#allocation2 + $0x118] sm:$0xff]
        %v9433 = vld [vmem:[#allocation2 + $0x120] sm:$0xff]
        %v9434 = vld [vmem:[#allocation2 + $0x128] sm:$0xff]
        %v9435 = vld [vmem:[#allocation2 + $0x130] sm:$0xff]
        %v9436 = vld [vmem:[#allocation2 + $0x138] sm:$0xff]
        %v9437 = vld [vmem:[#allocation2 + $0x140] sm:$0xff]
        %v9438 = vld [vmem:[#allocation2 + $0x148] sm:$0xff]
        %v9439 = vld [vmem:[#allocation2 + $0x150] sm:$0xff]
        %v9440 = vld [vmem:[#allocation2 + $0x158] sm:$0xff]
        %v9441 = vld [vmem:[#allocation2 + $0x160] sm:$0xff]
        %v9442 = vld [vmem:[#allocation2 + $0x168] sm:$0xff]
        %v9443 = vld [vmem:[#allocation2 + $0x170] sm:$0xff]
        %v9444 = vld [vmem:[#allocation2 + $0x178] sm:$0xff]
        %v9445 = vld [vmem:[#allocation2 + $0x180] sm:$0xff]
        %v9446 = vld [vmem:[#allocation2 + $0x188] sm:$0xff]
        %v9447 = vld [vmem:[#allocation2 + $0x190] sm:$0xff]
        %v9448 = vld [vmem:[#allocation2 + $0x198] sm:$0xff]
        %v9449 = vld [vmem:[#allocation2 + $0x1a0] sm:$0xff]
        %v9450 = vld [vmem:[#allocation2 + $0x1a8] sm:$0xff]
        %v9451 = vld [vmem:[#allocation2 + $0x1b0] sm:$0xff]
        %v9452 = vld [vmem:[#allocation2 + $0x1b8] sm:$0xff]
        %v9453 = vld [vmem:[#allocation2 + $0x1c0] sm:$0xff]
        %v9454 = vld [vmem:[#allocation2 + $0x1c8] sm:$0xff]
        %v9455 = vld [vmem:[#allocation2 + $0x1d0] sm:$0xff]
        %v9456 = vld [vmem:[#allocation2 + $0x1d8] sm:$0xff]
        %v9457 = vld [vmem:[#allocation2 + $0x1e0] sm:$0xff]
        %v9458 = vld [vmem:[#allocation2 + $0x1e8] sm:$0xff]
        %v9459 = vld [vmem:[#allocation2 + $0x1f0] sm:$0xff]
        %v9460 = vld [vmem:[#allocation2 + $0x1f8] sm:$0xff]
        %v9461 = vld [vmem:[%s2] sm:$0xff]
        %v9462 = vld [vmem:[%s2 + $0x8] sm:$0xff]
        %9464 = vset.pattern.permute.xlu0 0
        %9465 = vperm.xlu0 %9464, %v9461
        %v9466 = vpop.permute.xlu0 %9465
        %9469 = vset.pattern.permute.xlu0 0
        %9470 = vperm.xlu0 %9469, %v9462
        %v9471 = vpop.permute.xlu0 %9470
        %vm9473 = vcmask 556032
        %v9475 = vsel %vm9473, %v9394, 0
        %v9478 = vsel %vm9473, %v9396, 0
        %v9481 = vsel %vm9473, %v9398, 0
        %v9484 = vsel %vm9473, %v9400, 0
        %v9487 = vsel %vm9473, %v9402, 0
        %v9490 = vsel %vm9473, %v9404, 0
        %v9493 = vsel %vm9473, %v9406, 0
        %v9496 = vsel %vm9473, %v9408, 0
        %v9499 = vsel %vm9473, %v9410, 0
        %v9502 = vsel %vm9473, %v9412, 0
        %v9505 = vsel %vm9473, %v9414, 0
        %v9508 = vsel %vm9473, %v9416, 0
        %v9511 = vsel %vm9473, %v9418, 0
        %v9514 = vsel %vm9473, %v9420, 0
        %v9517 = vsel %vm9473, %v9422, 0
        %v9520 = vsel %vm9473, %v9424, 0
        %v9523 = vsel %vm9473, %v9426, 0
        %v9526 = vsel %vm9473, %v9428, 0
        %v9529 = vsel %vm9473, %v9430, 0
        %v9532 = vsel %vm9473, %v9432, 0
        %v9535 = vsel %vm9473, %v9434, 0
        %v9538 = vsel %vm9473, %v9436, 0
        %v9541 = vsel %vm9473, %v9438, 0
        %v9544 = vsel %vm9473, %v9440, 0
        %v9547 = vsel %vm9473, %v9442, 0
        %v9550 = vsel %vm9473, %v9444, 0
        %v9553 = vsel %vm9473, %v9446, 0
        %v9556 = vsel %vm9473, %v9448, 0
        %v9559 = vsel %vm9473, %v9450, 0
        %v9562 = vsel %vm9473, %v9452, 0
        %v9565 = vsel %vm9473, %v9454, 0
        %v9568 = vsel %vm9473, %v9456, 0
        %v9571 = vsel %vm9473, %v9458, 0
        %v9574 = vsel %vm9473, %v9460, 0
        %9576 = vmatprep.subr.mxu0 %v9481
        %9577 = vmatpush1.xpose.msra.mxu0 %v9397
        %9578 = vmatprep.subr.mxu0 %v9484
        %9579 = vmatpush1.xpose.msra.mxu0 %v9399
        %9580 = vmatprep.subr.mxu0 %v9487
        %9581 = vmatpush1.xpose.msra.mxu0 %v9401
        %9582 = vmatprep.subr.mxu0 %v9490
        %9583 = vmatpush1.xpose.msra.mxu0 %v9403
        %9584 = vmatprep.subr.mxu0 %v9493
        %9585 = vmatpush1.xpose.msra.mxu0 %v9405
        %9586 = vmatprep.subr.mxu0 %v9496
        %9587 = vmatpush1.xpose.msra.mxu0 %v9407
        %9588 = vmatprep.subr.mxu0 %v9499
        %9589 = vmatpush1.xpose.msra.mxu0 %v9409
        %9590 = vmatprep.subr.mxu0 %v9502
        %9591 = vmatpush1.xpose.msra.mxu0 %v9411
        %9592 = vmatprep.subr.mxu0 %v9505
        %9593 = vmatpush1.xpose.msra.mxu0 %v9413
        %9594 = vmatprep.subr.mxu0 %v9508
        %9595 = vmatpush1.xpose.msra.mxu0 %v9415
        %9596 = vmatprep.subr.mxu0 %v9511
        %9597 = vmatpush1.xpose.msra.mxu0 %v9417
        %9598 = vmatprep.subr.mxu0 %v9514
        %9599 = vmatpush1.xpose.msra.mxu0 %v9419
        %9600 = vmatprep.subr.mxu0 %v9517
        %9601 = vmatpush1.xpose.msra.mxu0 %v9421
        %9602 = vmatprep.subr.mxu0 %v9520
        %9603 = vmatpush1.xpose.msra.mxu0 %v9423
        %9604 = vmatprep.subr.mxu0 %v9523
        %9605 = vmatpush1.xpose.msra.mxu0 %v9425
        %9606 = vmatprep.subr.mxu0 %v9526
        %9607 = vmatpush1.xpose.msra.mxu0 %v9427
        %9608 = vmatprep.subr.mxu0 %v9529
        %9609 = vmatpush1.xpose.msra.mxu0 %v9429
        %9610 = vmatprep.subr.mxu0 %v9532
        %9611 = vmatpush1.xpose.msra.mxu0 %v9431
        %9612 = vmatprep.subr.mxu0 %v9535
        %9613 = vmatpush1.xpose.msra.mxu0 %v9433
        %9614 = vmatprep.subr.mxu0 %v9538
        %9615 = vmatpush1.xpose.msra.mxu0 %v9435
        %9616 = vmatprep.subr.mxu0 %v9541
        %9617 = vmatpush1.xpose.msra.mxu0 %v9437
        %9618 = vmatprep.subr.mxu0 %v9544
        %9619 = vmatpush1.xpose.msra.mxu0 %v9439
        %9620 = vmatprep.subr.mxu0 %v9547
        %9621 = vmatpush1.xpose.msra.mxu0 %v9441
        %9622 = vmatprep.subr.mxu0 %v9550
        %9623 = vmatpush1.xpose.msra.mxu0 %v9443
        %9624 = vmatprep.subr.mxu0 %v9553
        %9625 = vmatpush1.xpose.msra.mxu0 %v9445
        %9626 = vmatprep.subr.mxu0 %v9556
        %9627 = vmatpush1.xpose.msra.mxu0 %v9447
        %9628 = vmatprep.subr.mxu0 %v9559
        %9629 = vmatpush1.xpose.msra.mxu0 %v9449
        %9630 = vmatprep.subr.mxu0 %v9562
        %9631 = vmatpush1.xpose.msra.mxu0 %v9451
        %9632 = vmatprep.subr.mxu0 %v9565
        %9633 = vmatpush1.xpose.msra.mxu0 %v9453
        %9634 = vmatprep.subr.mxu0 %v9568
        %9635 = vmatpush1.xpose.msra.mxu0 %v9455
        %9636 = vmatprep.subr.mxu0 %v9571
        %9637 = vmatpush1.xpose.msra.mxu0 %v9457
        %9638 = vmatprep.subr.mxu0 %v9574
        %9639 = vmatpush1.xpose.msra.mxu0 %v9459
        %9640 = vmatprep.mubr.f32.mxu0 %v9475
        %9641 = vmatmul.mubr.f32.gmra.mrb[0].mxu0 %v9393
        %v9642 = vpop.f32.mrb[0].mxu0
        %v9643 = vadd.f32 %v9466, %v9642
        %v9644 = vpop.f32.mrb[0].mxu0
        %v9645 = vadd.f32 %v9466, %v9644
        %9646 = vmatprep.mubr.f32.mxu0 %v9478
        %9647 = vmatmul.mubr.f32.gmra.mrb[0].mxu0 %v9395
        %v9648 = vpop.f32.mrb[0].mxu0
        %v9649 = vadd.f32 %v9471, %v9648
        %v9650 = vpop.f32.mrb[0].mxu0
        %v9651 = vadd.f32 %v9471, %v9650
        %9652 = vdwg.mxu0
        %v9653 = vmax.f32 %v9643, 0.0
        %v9654 = vmax.f32 %v9645, 0.0
        %v9655 = vmax.f32 %v9649, 0.0
        %v9656 = vmax.f32 %v9651, 0.0
        %9657 = vst [vmem:[%s192] sm:$0xff] %v9653
        %9658 = vst [vmem:[%s192 + $0x8] sm:$0xff] %v9654
        %9659 = vst [vmem:[%s192 + $0x10] sm:$0xff] %v9655
        %9660 = vst [vmem:[%s192 + $0x18] sm:$0xff] %v9656
        %s9661 = sand.u32 %s112, 1
        %s9662 = scalar_lea.sflag [#allocation4], %s9661
        %s9663 = sand.u32 %s112, 1
        %s9664 = smul.addr %s9663, 32
        %s9665 = scalar_lea.vmem [#allocation3], %s9664
        // Predicated region
        $region33: #{tpu_custom_call.1} parent=31 // pred_check
          %p9666 = pneg %p122
        $region34: #{tpu_custom_call.1} parent=31 // pred_check_branch
          %9668 = sbr.rel (%p9666) target = $region36
        $region35: #{tpu_custom_call.1} parent=31 // pred_region
          %s9670 = ssub.s32 512, 512
          %9671 = vsyncadd %s9662, %s9670
          %s9672 = smul.addr %s21, 4
          %s9673 = smul.addr %s22, 8
          %s9674 = sadd.s32 %s9672, %s9673
          %s9675 = smul.addr %s9674, 128
          %s9676 = scalar_lea.hbm %s3, %s9675
          %s9677 = sshll.u32 %s9665, 4
          %s9678 = int_to_ptr.vmem [resolvable:$true] %s9677
          %9683 = dma.vmem_to_hbm [thread:$0]  %s9678, 512, %s9676, %s9662, 256, 256, 16
        $region36: #{tpu_custom_call.1} parent=31 // pred_fallthru
          _
      $region32: #{tpu_custom_call.1} parent=5 // pred_fallthru
        _
      %p9684 = scmp.le.s32.totalorder 2, %s12
      // Predicated region
      $region37: #{tpu_custom_call.1} parent=5 // pred_check
        %p9685 = pneg %p9684
      $region38: #{tpu_custom_call.1} parent=5 // pred_check_branch
        %9687 = sbr.rel (%p9685) target = $region40
      $region39: #{tpu_custom_call.1} parent=5 // pred_region
        %s9688 = ssub.s32 %s12, 2
        // Predicated region
        $region41: #{tpu_custom_call.1} parent=39 // pred_check
          %p9689 = pneg %p128
        $region42: #{tpu_custom_call.1} parent=39 // pred_check_branch
          %9691 = sbr.rel (%p9689) target = $region44
        $region43: #{tpu_custom_call.1} parent=39 // pred_region
          %s9692 = sand.u32 %s113, 1
          %s9693 = scalar_lea.sflag [#allocation4], %s9692
          %s9694 = sand.u32 %s113, 1
          %s9695 = smul.addr %s9694, 32
          %s9696 = scalar_lea.vmem [#allocation3], %s9695
          %9697 = dma.done %s9693, 512
        $region44: #{tpu_custom_call.1} parent=39 // pred_fallthru
          _
      $region40: #{tpu_custom_call.1} parent=5 // pred_fallthru
        _
    $region6: #{tpu_custom_call.1} parent=1 // loop_footer
      %s16 = sadd.s32 1, %s12
    $region7: #{tpu_custom_call.1} parent=1 // loop_footer_branch
      %11 = sbr.rel target = $region3
    $region8: #{tpu_custom_call.1} parent=1 // loop_exit
      _
    %9698 = vsyncpa [#allocation4], 1
    %s9699 = scalar_lea.sflag [#allocation4], 1
    %9700 = vsyncpa %s9699, 1

</llo_original>
